<compile_context>
chip_gen: v5e
topology: v5e:2x2
jax: 0.10.0
libtpu: 0.0.40
codegen_flags: <defaults>
</compile_context>

<pallas_src>
import functools

import jax
import jax.numpy as jnp
from jax.experimental import pallas as pl
from jax.experimental.pallas import tpu as pltpu

NUM_CLASSES = 7
NUM_FEATURE = 32               # scaled down from 256
BB_CH = (32, 64, 128, 256)     # scaled down from (256, 512, 1024, 2048)
BN_EPS = 1e-5
LANE = 128
MIN_PALLAS_ROWS = 64           # below this a standalone pallas_call is overhead

_PARALLEL_1D = pltpu.CompilerParams(dimension_semantics=("parallel",))
_PARALLEL_2D = pltpu.CompilerParams(dimension_semantics=("parallel", "parallel"))


def _round_up(x, m):
    return (x + m - 1) // m * m


def _pick_row_tile(rows, cap=512):
    """Row tile (multiple of 8); aims for >=2 grid steps (v7x has 2 TCs)."""
    t = min(cap, _round_up(rows, 8))
    if _round_up(rows, t) // t < 2 and rows >= 16:
        t = _round_up(_round_up(rows, 16) // 2, 8)
    return t


# ---------------------------------------------------------------------------
# Pallas kernels
# ---------------------------------------------------------------------------
def _mm_bias_kernel(x_ref, w_ref, b_ref, o_ref, *, relu):
    # x: (TN, K) -> bf16 MXU dot, f32 accumulate; w: (K, Cout) bf16; b: (1, Cout)
    y = jnp.dot(x_ref[...].astype(jnp.bfloat16), w_ref[...],
                preferred_element_type=jnp.float32)
    y = y + b_ref[...]
    if relu:
        y = jnp.maximum(y, 0.0)
    o_ref[...] = y.astype(o_ref.dtype)


def _mm_bias_add_halve_kernel(x_ref, w_ref, b_ref, a_ref, o_ref):
    # fused lateral merge: (x @ w + b + a) * 0.5
    y = jnp.dot(x_ref[...].astype(jnp.bfloat16), w_ref[...],
                preferred_element_type=jnp.float32)
    y = y + b_ref[...]
    o_ref[...] = ((y + a_ref[...]) * 0.5).astype(o_ref.dtype)


def _fs_kernel(v_ref, w1_ref, b1_ref, w2_ref, b2_ref, u_ref, o_ref):
    # fused FSModule: x = relu(v@w1+b1); k = relu(v@w2+b2); z = k*sigmoid(x*u)
    v = v_ref[0].astype(jnp.bfloat16)                       # (TN, C)
    x = jnp.dot(v, w1_ref[...], preferred_element_type=jnp.float32) + b1_ref[...]
    x = jnp.maximum(x, 0.0)
    k = jnp.dot(v, w2_ref[...], preferred_element_type=jnp.float32) + b2_ref[...]
    k = jnp.maximum(k, 0.0)
    r = x * u_ref[0]                                        # (TN, C) * (1, C)
    o_ref[0] = (k / (1.0 + jnp.exp(-r))).astype(o_ref.dtype)


def _avg4_kernel(a_ref, b_ref, c_ref, d_ref, o_ref):
    # lane-dense elementwise mean of 4 tensors
    o_ref[...] = (a_ref[...] + b_ref[...] + c_ref[...] + d_ref[...]) * 0.25


# ---------------------------------------------------------------------------
# Pallas wrappers
# ---------------------------------------------------------------------------
def matmul_bias(x2d, w2d, b, *, relu=False, add=None):
    """y = x2d @ w2d + b ; optionally fused (y + add) * 0.5 or ReLU."""
    rows, k = x2d.shape
    cout = w2d.shape[-1]

    if rows < MIN_PALLAS_ROWS:
        # Tiny stage: (8,128) padding + launch overhead dwarf the work -> XLA.
        y = jnp.dot(x2d.astype(jnp.bfloat16), w2d.astype(jnp.bfloat16),
                    preferred_element_type=jnp.float32) + b.reshape(1, cout)
        if add is not None:
            return (y + add) * 0.5
        return jnp.maximum(y, 0.0) if relu else y

    tn = _pick_row_tile(rows)
    rows_p = _round_up(rows, tn)
    if rows_p != rows:
        x2d = jnp.pad(x2d, ((0, rows_p - rows), (0, 0)))
        if add is not None:
            add = jnp.pad(add, ((0, rows_p - rows), (0, 0)))

    w_bf = w2d.astype(jnp.bfloat16)
    b2 = b.reshape(1, cout).astype(jnp.float32)

    in_specs = [
        pl.BlockSpec((tn, k), lambda i: (i, 0)),       # activation row tile
        pl.BlockSpec((k, cout), lambda i: (0, 0)),     # weights resident
        pl.BlockSpec((1, cout), lambda i: (0, 0)),     # bias resident
    ]
    args = [x2d, w_bf, b2]
    if add is None:
        kernel = functools.partial(_mm_bias_kernel, relu=relu)
    else:
        kernel = _mm_bias_add_halve_kernel
        in_specs.append(pl.BlockSpec((tn, cout), lambda i: (i, 0)))
        args.append(add.astype(jnp.float32))

    y = pl.pallas_call(
        kernel,
        out_shape=jax.ShapeDtypeStruct((rows_p, cout), jnp.float32),
        grid=(rows_p // tn,),
        in_specs=in_specs,
        out_specs=pl.BlockSpec((tn, cout), lambda i: (i, 0)),
        compiler_params=_PARALLEL_1D,
    )(*args)
    return y[:rows]


def conv1x1(x, w, b, relu=False):
    # x: (B, H, W, Cin), w: (1, 1, Cin, Cout)
    bsz, h, wd, cin = x.shape
    y = matmul_bias(x.reshape(bsz * h * wd, cin), w[0, 0], b, relu=relu)
    return y.reshape(bsz, h, wd, -1)


def conv3x3(x, w, b, relu=False, pad_cout_to=None):
    # x: (B, H, W, Cin), w: (3, 3, Cin, Cout), padding=1, stride=1.
    # Channel-packed im2col (taps along the lane axis, bf16) so the whole conv
    # is ONE K = 9*Cin MXU dot per row tile.
    bsz, h, wd, cin = x.shape
    cout = w.shape[-1]
    xp = jnp.pad(x, ((0, 0), (1, 1), (1, 1), (0, 0)))
    taps = [xp[:, ky:ky + h, kx:kx + wd, :] for ky in range(3) for kx in range(3)]
    xcol = jnp.concatenate(taps, axis=-1).reshape(bsz * h * wd, 9 * cin)
    xcol = xcol.astype(jnp.bfloat16)
    w9 = w.reshape(9 * cin, cout)
    if pad_cout_to is not None and pad_cout_to > cout:
        # lane-dense output store; padded columns are zero-weight, zero-bias
        w9 = jnp.pad(w9, ((0, 0), (0, pad_cout_to - cout)))
        b = jnp.pad(b, (0, pad_cout_to - cout))
    y = matmul_bias(xcol, w9, b, relu=relu)
    return y[:, :cout].reshape(bsz, h, wd, cout)


def lateral_merge(c, w, b, p_coarse):
    """(conv1x1(c) + interpolate(p_coarse, x2, nearest)) / 2 — conv+add+halve fused."""
    bsz, h, wd, cin = c.shape
    cout = w.shape[-1]
    up = jnp.repeat(jnp.repeat(p_coarse, 2, axis=1), 2, axis=2)   # nearest x2 glue
    y = matmul_bias(c.reshape(bsz * h * wd, cin), w[0, 0], b,
                    add=up.reshape(bsz * h * wd, cout))
    return y.reshape(bsz, h, wd, cout)


def fs_module(params, v, u):
    # z = relu(conv2(v)) * sigmoid(relu(conv1(v)) * u), both convs 1x1 (BN folded)
    w1, b1 = params["conv1"]
    w2, b2 = params["conv2"]
    bsz, h, wd, c = v.shape
    hw = h * wd

    if bsz * hw < MIN_PALLAS_ROWS:
        # tiny pyramid level (2x2 / 4x4): leave to XLA per perf review.
        vb = v.astype(jnp.bfloat16)
        x = jnp.einsum("bhwc,cd->bhwd", vb, w1[0, 0].astype(jnp.bfloat16),
                       preferred_element_type=jnp.float32) + b1
        x = jnp.maximum(x, 0.0)
        k = jnp.einsum("bhwc,cd->bhwd", vb, w2[0, 0].astype(jnp.bfloat16),
                       preferred_element_type=jnp.float32) + b2
        k = jnp.maximum(k, 0.0)
        return k / (1.0 + jnp.exp(-(x * u)))

    tn = _pick_row_tile(hw)
    hw_p = _round_up(hw, tn)
    v2 = v.reshape(bsz, hw, c)
    if hw_p != hw:
        v2 = jnp.pad(v2, ((0, 0), (0, hw_p - hw), (0, 0)))

    out = pl.pallas_call(
        _fs_kernel,
        out_shape=jax.ShapeDtypeStruct((bsz, hw_p, c), jnp.float32),
        grid=(bsz, hw_p // tn),
        in_specs=[
            pl.BlockSpec((1, tn, c), lambda bi, ti: (bi, ti, 0)),
            pl.BlockSpec((c, c), lambda bi, ti: (0, 0)),
            pl.BlockSpec((1, c), lambda bi, ti: (0, 0)),
            pl.BlockSpec((c, c), lambda bi, ti: (0, 0)),
            pl.BlockSpec((1, c), lambda bi, ti: (0, 0)),
            pl.BlockSpec((1, 1, c), lambda bi, ti: (bi, 0, 0)),
        ],
        out_specs=pl.BlockSpec((1, tn, c), lambda bi, ti: (bi, ti, 0)),
        compiler_params=_PARALLEL_2D,
    )(v2, w1[0, 0].astype(jnp.bfloat16), b1.reshape(1, c),
      w2[0, 0].astype(jnp.bfloat16), b2.reshape(1, c), u.reshape(bsz, 1, c))
    return out[:, :hw, :].reshape(bsz, h, wd, c)


def avg4(a, b, c, d):
    # (o5 + o4 + o3 + o2) / 4 on lane-dense (rows, 128) blocks
    shape, total = a.shape, a.size
    rows = _round_up(total, LANE) // LANE
    tr = _pick_row_tile(rows, cap=256)
    rows_p = _round_up(rows, tr)

    def prep(t):
        flat = t.reshape(-1)
        return jnp.pad(flat, (0, rows_p * LANE - total)).reshape(rows_p, LANE)

    spec = pl.BlockSpec((tr, LANE), lambda i: (i, 0))
    y = pl.pallas_call(
        _avg4_kernel,
        out_shape=jax.ShapeDtypeStruct((rows_p, LANE), jnp.float32),
        grid=(rows_p // tr,),
        in_specs=[spec, spec, spec, spec],
        out_specs=spec,
        compiler_params=_PARALLEL_1D,
    )(prep(a), prep(b), prep(c), prep(d))
    return y.reshape(-1)[:total].reshape(shape)


# ---------------------------------------------------------------------------
# Plain-JAX glue: interpolation and pooling
# ---------------------------------------------------------------------------
def bilinear_resize_ac(x, oh, ow):
    # torch interpolate(mode='bilinear', align_corners=True)
    _, h, w, _ = x.shape

    def axis(insz, outsz):
        src = jnp.arange(outsz, dtype=jnp.float32) * (
            (insz - 1) / (outsz - 1) if outsz > 1 else 0.0)
        i0 = jnp.clip(jnp.floor(src).astype(jnp.int32), 0, insz - 1)
        i1 = jnp.clip(i0 + 1, 0, insz - 1)
        frac = src - i0.astype(jnp.float32)
        return i0, i1, frac

    r0, r1, fr = axis(h, oh)
    c0, c1, fc = axis(w, ow)
    xr = (x[:, r0] * (1.0 - fr)[None, :, None, None]
          + x[:, r1] * fr[None, :, None, None])
    y = (xr[:, :, c0] * (1.0 - fc)[None, None, :, None]
         + xr[:, :, c1] * fc[None, None, :, None])
    return y


def bilinear_up(x, factor):
    _, h, w, _ = x.shape
    return bilinear_resize_ac(x, h * factor, w * factor)


def avgpool2(x):
    bsz, h, w, c = x.shape
    return x.reshape(bsz, h // 2, 2, w // 2, 2, c).mean(axis=(2, 4))


# ---------------------------------------------------------------------------
# Deterministic parameter initialization (eval-mode BN folded into conv)
# ---------------------------------------------------------------------------
def _init_conv(key, cin, cout, ksz):
    kw, kb = jax.random.split(key)
    bound = 1.0 / jnp.sqrt(jnp.float32(cin * ksz * ksz))
    w = jax.random.uniform(kw, (ksz, ksz, cin, cout), jnp.float32, -bound, bound)
    b = jax.random.uniform(kb, (cout,), jnp.float32, -bound, bound)
    return w, b


def _init_conv_bn(key, cin, cout, ksz):
    kc, k1, k2, k3, k4 = jax.random.split(key, 5)
    w, b = _init_conv(kc, cin, cout, ksz)
    gamma = 1.0 + 0.1 * jax.random.normal(k1, (cout,), jnp.float32)
    beta = 0.1 * jax.random.normal(k2, (cout,), jnp.float32)
    mean = 0.1 * jax.random.normal(k3, (cout,), jnp.float32)
    var = 1.0 + 0.1 * jnp.abs(jax.random.normal(k4, (cout,), jnp.float32))
    s = gamma / jnp.sqrt(var + BN_EPS)
    return w * s, b * s + (beta - mean * s)


def init_params(key):
    keys = iter(jax.random.split(key, 32))
    f = NUM_FEATURE
    p = {}
    # backbone stub (see TODO at top)
    p["bb2"] = _init_conv(next(keys), 3, BB_CH[0], 1)
    p["bb3"] = _init_conv(next(keys), BB_CH[0], BB_CH[1], 1)
    p["bb4"] = _init_conv(next(keys), BB_CH[1], BB_CH[2], 1)
    p["bb5"] = _init_conv(next(keys), BB_CH[2], BB_CH[3], 1)
    # lateral 1x1 convs
    p["conv_c6"] = _init_conv(next(keys), BB_CH[3], f, 1)
    p["conv_c5"] = _init_conv(next(keys), BB_CH[3], f, 1)
    p["conv_c4"] = _init_conv(next(keys), BB_CH[2], f, 1)
    p["conv_c3"] = _init_conv(next(keys), BB_CH[1], f, 1)
    p["conv_c2"] = _init_conv(next(keys), BB_CH[0], f, 1)
    # FS modules: two Conv2dBN(1x1) each
    for name in ("fs5", "fs4", "fs3", "fs2"):
        p[name] = {"conv1": _init_conv_bn(next(keys), f, f, 1),
                   "conv2": _init_conv_bn(next(keys), f, f, 1)}
    # decoders: Conv2dBN(3x3, pad=1)
    p["up5"] = {"conv1": _init_conv_bn(next(keys), f, f, 3),
                "conv2": _init_conv_bn(next(keys), f, f, 3),
                "conv3": _init_conv_bn(next(keys), f, f, 3)}
    p["up4"] = {"conv1": _init_conv_bn(next(keys), f, f, 3),
                "conv2": _init_conv_bn(next(keys), f, f, 3)}
    p["up3"] = {"conv1": _init_conv_bn(next(keys), f, f, 3)}
    p["up2"] = {"conv1": _init_conv_bn(next(keys), f, f, 3)}
    p["classify"] = _init_conv(next(keys), f, NUM_CLASSES, 3)
    return p


# ---------------------------------------------------------------------------
# FarNet forward
# ---------------------------------------------------------------------------
def backbone_stub(params, x):
    h = avgpool2(avgpool2(x))                               # stride 4
    c2 = conv1x1(h, *params["bb2"], relu=True)
    c3 = conv1x1(avgpool2(c2), *params["bb3"], relu=True)   # stride 8
    c4 = conv1x1(avgpool2(c3), *params["bb4"], relu=True)   # stride 16
    c5 = conv1x1(avgpool2(c4), *params["bb5"], relu=True)   # stride 32
    return c2, c3, c4, c5


def decoder(params, x, scale):
    x = conv3x3(x, *params["conv1"], relu=True)
    if scale == 1:
        return x
    x = bilinear_up(x, 2)
    if scale >= 4:
        x = conv3x3(x, *params["conv2"], relu=True)
        x = bilinear_up(x, 2)
    if scale >= 8:
        x = conv3x3(x, *params["conv3"], relu=True)
        x = bilinear_up(x, 2)
    return x


def farnet_forward(params, x_nchw):
    x = jnp.transpose(x_nchw, (0, 2, 3, 1)).astype(jnp.float32)   # NCHW -> NHWC

    c2, c3, c4, c5 = backbone_stub(params, x)
    # adaptive_avg_pool2d(c5, (1,1)) on a tiny 2x2 map: left to XLA (perf review)
    c6 = jnp.mean(c5, axis=(1, 2), keepdims=True)

    u = conv1x1(c6, *params["conv_c6"])
    p5 = conv1x1(c5, *params["conv_c5"])
    p4 = lateral_merge(c4, *params["conv_c4"], p5)
    p3 = lateral_merge(c3, *params["conv_c3"], p4)
    p2 = lateral_merge(c2, *params["conv_c2"], p3)

    z5 = fs_module(params["fs5"], p5, u)
    z4 = fs_module(params["fs4"], p4, u)
    z3 = fs_module(params["fs3"], p3, u)
    z2 = fs_module(params["fs2"], p2, u)

    o5 = decoder(params["up5"], z5, 8)
    o4 = decoder(params["up4"], z4, 4)
    o3 = decoder(params["up3"], z3, 2)
    o2 = decoder(params["up2"], z2, 1)

    x = avg4(o5, o4, o3, o2)
    x = bilinear_up(x, 4)
    logit = conv3x3(x, *params["classify"], relu=False, pad_cout_to=LANE)

    return jnp.transpose(logit, (0, 3, 1, 2))   # back to NCHW


# ---------------------------------------------------------------------------
if __name__ == "__main__":
    key = jax.random.PRNGKey(0)
    kx, kp = jax.random.split(key)
    x = jax.random.normal(kx, (2, 3, 64, 64), jnp.float32)   # NCHW like PyTorch
    params = init_params(kp)

    fwd = jax.jit(farnet_forward)
    logit = fwd(params, x)
    jax.block_until_ready(logit)

    assert logit.shape == (2, NUM_CLASSES, 64, 64), logit.shape
    assert bool(jnp.all(jnp.isfinite(logit)))
    print("KERNEL_OK")
</pallas_src>

<mosaic_0001>
module attributes {stable_mosaic.version = 11 : i64} {
  func.func @_mm_bias_kernel(%arg0: i32, %arg1: memref<256x3xf32, #tpu.memory_space<vmem>>, %arg2: memref<3x32xbf16, #tpu.memory_space<vmem>>, %arg3: memref<1x32xf32, #tpu.memory_space<vmem>>, %arg4: memref<256x32xf32, #tpu.memory_space<vmem>>) attributes {dimension_semantics = [#tpu.dimension_semantics<parallel>], iteration_bounds = array<i64: 2>, scalar_prefetch = 0 : i64, scratch_operands = 0 : i64, tpu.core_type = #tpu.core_type<tc>, window_params = [{transform_indices = @transform_0, window_bounds = array<i64: 256, 3>}, {pipeline_mode = #tpu.pipeline_mode<synchronous>, transform_indices = @transform_1, window_bounds = array<i64: 3, 32>}, {pipeline_mode = #tpu.pipeline_mode<synchronous>, transform_indices = @transform_2, window_bounds = array<i64: 1, 32>}, {transform_indices = @transform_3, window_bounds = array<i64: 256, 32>}]} {
    %c0 = arith.constant 0 : index
    %c0_0 = arith.constant 0 : index
    %0 = vector.load %arg1[%c0, %c0_0] : memref<256x3xf32, #tpu.memory_space<vmem>>, vector<256x3xf32>
    %1 = arith.truncf %0 : vector<256x3xf32> to vector<256x3xbf16>
    %c0_1 = arith.constant 0 : index
    %c0_2 = arith.constant 0 : index
    %2 = vector.load %arg2[%c0_1, %c0_2] : memref<3x32xbf16, #tpu.memory_space<vmem>>, vector<3x32xbf16>
    %cst = arith.constant dense<0.000000e+00> : vector<256x32xf32>
    %3 = tpu.matmul %1, %2, %cst {dimension_numbers = #tpu.dot_dimension_numbers<[1], [0], [0], [1], [0, 0, 1, 1], [], []>} : vector<256x3xbf16>, vector<3x32xbf16>, vector<256x32xf32> -> vector<256x32xf32>
    %c0_3 = arith.constant 0 : index
    %c0_4 = arith.constant 0 : index
    %4 = vector.load %arg3[%c0_3, %c0_4] : memref<1x32xf32, #tpu.memory_space<vmem>>, vector<1x32xf32>
    %5 = vector.broadcast %4 : vector<1x32xf32> to vector<256x32xf32>
    %6 = arith.addf %3, %5 : vector<256x32xf32>
    %cst_5 = arith.constant 0.000000e+00 : f32
    %7 = vector.broadcast %cst_5 : f32 to vector<256x32xf32>
    %8 = arith.maximumf %6, %7 : vector<256x32xf32>
    %c0_6 = arith.constant 0 : index
    %c0_7 = arith.constant 0 : index
    %9 = vector.load %arg4[%c0_6, %c0_7] : memref<256x32xf32, #tpu.memory_space<vmem>>, vector<256x32xf32>
    tpu.vector_store %arg4[%c0_6, %c0_7], %8 {strides = array<i32>} : memref<256x32xf32, #tpu.memory_space<vmem>>, vector<256x32xf32>,
    return
  }
  func.func @transform_0(%arg0: i32) -> (i32, i32) {
    %c0_i32 = arith.constant 0 : i32
    %c0_i32_0 = arith.constant 0 : i32
    return %arg0, %c0_i32 : i32, i32
  }
  func.func @transform_1(%arg0: i32) -> (i32, i32) {
    %c0_i32 = arith.constant 0 : i32
    %c0_i32_0 = arith.constant 0 : i32
    %c0_i32_1 = arith.constant 0 : i32
    return %c0_i32, %c0_i32_0 : i32, i32
  }
  func.func @transform_2(%arg0: i32) -> (i32, i32) {
    %c0_i32 = arith.constant 0 : i32
    %c0_i32_0 = arith.constant 0 : i32
    %c0_i32_1 = arith.constant 0 : i32
    return %c0_i32, %c0_i32_0 : i32, i32
  }
  func.func @transform_3(%arg0: i32) -> (i32, i32) {
    %c0_i32 = arith.constant 0 : i32
    %c0_i32_0 = arith.constant 0 : i32
    return %arg0, %c0_i32 : i32, i32
  }
}

module attributes {stable_mosaic.version = 11 : i64} {
  func.func @_mm_bias_kernel(%arg0: i32, %arg1: memref<64x32xf32, #tpu.memory_space<vmem>>, %arg2: memref<32x64xbf16, #tpu.memory_space<vmem>>, %arg3: memref<1x64xf32, #tpu.memory_space<vmem>>, %arg4: memref<64x64xf32, #tpu.memory_space<vmem>>) attributes {dimension_semantics = [#tpu.dimension_semantics<parallel>], iteration_bounds = array<i64: 2>, scalar_prefetch = 0 : i64, scratch_operands = 0 : i64, tpu.core_type = #tpu.core_type<tc>, window_params = [{transform_indices = @transform_0, window_bounds = array<i64: 64, 32>}, {pipeline_mode = #tpu.pipeline_mode<synchronous>, transform_indices = @transform_1, window_bounds = array<i64: 32, 64>}, {pipeline_mode = #tpu.pipeline_mode<synchronous>, transform_indices = @transform_2, window_bounds = array<i64: 1, 64>}, {transform_indices = @transform_3, window_bounds = array<i64: 64, 64>}]} {
    %c0 = arith.constant 0 : index
    %c0_0 = arith.constant 0 : index
    %0 = vector.load %arg1[%c0, %c0_0] : memref<64x32xf32, #tpu.memory_space<vmem>>, vector<64x32xf32>
    %1 = arith.truncf %0 : vector<64x32xf32> to vector<64x32xbf16>
    %c0_1 = arith.constant 0 : index
    %c0_2 = arith.constant 0 : index
    %2 = vector.load %arg2[%c0_1, %c0_2] : memref<32x64xbf16, #tpu.memory_space<vmem>>, vector<32x64xbf16>
    %cst = arith.constant dense<0.000000e+00> : vector<64x64xf32>
    %3 = tpu.matmul %1, %2, %cst {dimension_numbers = #tpu.dot_dimension_numbers<[1], [0], [0], [1], [0, 0, 1, 1], [], []>} : vector<64x32xbf16>, vector<32x64xbf16>, vector<64x64xf32> -> vector<64x64xf32>
    %c0_3 = arith.constant 0 : index
    %c0_4 = arith.constant 0 : index
    %4 = vector.load %arg3[%c0_3, %c0_4] : memref<1x64xf32, #tpu.memory_space<vmem>>, vector<1x64xf32>
    %5 = vector.broadcast %4 : vector<1x64xf32> to vector<64x64xf32>
    %6 = arith.addf %3, %5 : vector<64x64xf32>
    %cst_5 = arith.constant 0.000000e+00 : f32
    %7 = vector.broadcast %cst_5 : f32 to vector<64x64xf32>
    %8 = arith.maximumf %6, %7 : vector<64x64xf32>
    %c0_6 = arith.constant 0 : index
    %c0_7 = arith.constant 0 : index
    %9 = vector.load %arg4[%c0_6, %c0_7] : memref<64x64xf32, #tpu.memory_space<vmem>>, vector<64x64xf32>
    tpu.vector_store %arg4[%c0_6, %c0_7], %8 {strides = array<i32>} : memref<64x64xf32, #tpu.memory_space<vmem>>, vector<64x64xf32>,
    return
  }
  func.func @transform_0(%arg0: i32) -> (i32, i32) {
    %c0_i32 = arith.constant 0 : i32
    %c0_i32_0 = arith.constant 0 : i32
    return %arg0, %c0_i32 : i32, i32
  }
  func.func @transform_1(%arg0: i32) -> (i32, i32) {
    %c0_i32 = arith.constant 0 : i32
    %c0_i32_0 = arith.constant 0 : i32
    %c0_i32_1 = arith.constant 0 : i32
    return %c0_i32, %c0_i32_0 : i32, i32
  }
  func.func @transform_2(%arg0: i32) -> (i32, i32) {
    %c0_i32 = arith.constant 0 : i32
    %c0_i32_0 = arith.constant 0 : i32
    %c0_i32_1 = arith.constant 0 : i32
    return %c0_i32, %c0_i32_0 : i32, i32
  }
  func.func @transform_3(%arg0: i32) -> (i32, i32) {
    %c0_i32 = arith.constant 0 : i32
    %c0_i32_0 = arith.constant 0 : i32
    return %arg0, %c0_i32 : i32, i32
  }
}

module attributes {stable_mosaic.version = 11 : i64} {
  func.func @_mm_bias_kernel(%arg0: i32, %arg1: memref<64x288xbf16, #tpu.memory_space<vmem>>, %arg2: memref<288x32xbf16, #tpu.memory_space<vmem>>, %arg3: memref<1x32xf32, #tpu.memory_space<vmem>>, %arg4: memref<64x32xf32, #tpu.memory_space<vmem>>) attributes {dimension_semantics = [#tpu.dimension_semantics<parallel>], iteration_bounds = array<i64: 2>, scalar_prefetch = 0 : i64, scratch_operands = 0 : i64, tpu.core_type = #tpu.core_type<tc>, window_params = [{transform_indices = @transform_0, window_bounds = array<i64: 64, 288>}, {pipeline_mode = #tpu.pipeline_mode<synchronous>, transform_indices = @transform_1, window_bounds = array<i64: 288, 32>}, {pipeline_mode = #tpu.pipeline_mode<synchronous>, transform_indices = @transform_2, window_bounds = array<i64: 1, 32>}, {transform_indices = @transform_3, window_bounds = array<i64: 64, 32>}]} {
    %c0 = arith.constant 0 : index
    %c0_0 = arith.constant 0 : index
    %0 = vector.load %arg1[%c0, %c0_0] : memref<64x288xbf16, #tpu.memory_space<vmem>>, vector<64x288xbf16>
    %c0_1 = arith.constant 0 : index
    %c0_2 = arith.constant 0 : index
    %1 = vector.load %arg2[%c0_1, %c0_2] : memref<288x32xbf16, #tpu.memory_space<vmem>>, vector<288x32xbf16>
    %cst = arith.constant dense<0.000000e+00> : vector<64x32xf32>
    %2 = tpu.matmul %0, %1, %cst {dimension_numbers = #tpu.dot_dimension_numbers<[1], [0], [0], [1], [0, 0, 1, 1], [], []>} : vector<64x288xbf16>, vector<288x32xbf16>, vector<64x32xf32> -> vector<64x32xf32>
    %c0_3 = arith.constant 0 : index
    %c0_4 = arith.constant 0 : index
    %3 = vector.load %arg3[%c0_3, %c0_4] : memref<1x32xf32, #tpu.memory_space<vmem>>, vector<1x32xf32>
    %4 = vector.broadcast %3 : vector<1x32xf32> to vector<64x32xf32>
    %5 = arith.addf %2, %4 : vector<64x32xf32>
    %cst_5 = arith.constant 0.000000e+00 : f32
    %6 = vector.broadcast %cst_5 : f32 to vector<64x32xf32>
    %7 = arith.maximumf %5, %6 : vector<64x32xf32>
    %c0_6 = arith.constant 0 : index
    %c0_7 = arith.constant 0 : index
    %8 = vector.load %arg4[%c0_6, %c0_7] : memref<64x32xf32, #tpu.memory_space<vmem>>, vector<64x32xf32>
    tpu.vector_store %arg4[%c0_6, %c0_7], %7 {strides = array<i32>} : memref<64x32xf32, #tpu.memory_space<vmem>>, vector<64x32xf32>,
    return
  }
  func.func @transform_0(%arg0: i32) -> (i32, i32) {
    %c0_i32 = arith.constant 0 : i32
    %c0_i32_0 = arith.constant 0 : i32
    return %arg0, %c0_i32 : i32, i32
  }
  func.func @transform_1(%arg0: i32) -> (i32, i32) {
    %c0_i32 = arith.constant 0 : i32
    %c0_i32_0 = arith.constant 0 : i32
    %c0_i32_1 = arith.constant 0 : i32
    return %c0_i32, %c0_i32_0 : i32, i32
  }
  func.func @transform_2(%arg0: i32) -> (i32, i32) {
    %c0_i32 = arith.constant 0 : i32
    %c0_i32_0 = arith.constant 0 : i32
    %c0_i32_1 = arith.constant 0 : i32
    return %c0_i32, %c0_i32_0 : i32, i32
  }
  func.func @transform_3(%arg0: i32) -> (i32, i32) {
    %c0_i32 = arith.constant 0 : i32
    %c0_i32_0 = arith.constant 0 : i32
    return %arg0, %c0_i32 : i32, i32
  }
}

module attributes {stable_mosaic.version = 11 : i64} {
  func.func @_fs_kernel(%arg0: i32, %arg1: i32, %arg2: memref<1x32x32xf32, #tpu.memory_space<vmem>>, %arg3: memref<32x32xbf16, #tpu.memory_space<vmem>>, %arg4: memref<1x32xf32, #tpu.memory_space<vmem>>, %arg5: memref<32x32xbf16, #tpu.memory_space<vmem>>, %arg6: memref<1x32xf32, #tpu.memory_space<vmem>>, %arg7: memref<1x1x32xf32, #tpu.memory_space<vmem>>, %arg8: memref<1x32x32xf32, #tpu.memory_space<vmem>>) attributes {dimension_semantics = [#tpu.dimension_semantics<parallel>, #tpu.dimension_semantics<parallel>], iteration_bounds = array<i64: 2, 2>, scalar_prefetch = 0 : i64, scratch_operands = 0 : i64, tpu.core_type = #tpu.core_type<tc>, window_params = [{transform_indices = @transform_0, window_bounds = array<i64: 1, 32, 32>}, {pipeline_mode = #tpu.pipeline_mode<synchronous>, transform_indices = @transform_1, window_bounds = array<i64: 32, 32>}, {pipeline_mode = #tpu.pipeline_mode<synchronous>, transform_indices = @transform_2, window_bounds = array<i64: 1, 32>}, {pipeline_mode = #tpu.pipeline_mode<synchronous>, transform_indices = @transform_3, window_bounds = array<i64: 32, 32>}, {pipeline_mode = #tpu.pipeline_mode<synchronous>, transform_indices = @transform_4, window_bounds = array<i64: 1, 32>}, {transform_indices = @transform_5, window_bounds = array<i64: 1, 1, 32>}, {transform_indices = @transform_6, window_bounds = array<i64: 1, 32, 32>}]} {
    %c0 = arith.constant 0 : index
    %c0_0 = arith.constant 0 : index
    %c0_1 = arith.constant 0 : index
    %0 = vector.load %arg2[%c0, %c0_0, %c0_1] : memref<1x32x32xf32, #tpu.memory_space<vmem>>, vector<1x32x32xf32>
    %1 = vector.shape_cast %0 : vector<1x32x32xf32> to vector<32x32xf32>
    %2 = arith.truncf %1 : vector<32x32xf32> to vector<32x32xbf16>
    %c0_2 = arith.constant 0 : index
    %c0_3 = arith.constant 0 : index
    %3 = vector.load %arg3[%c0_2, %c0_3] : memref<32x32xbf16, #tpu.memory_space<vmem>>, vector<32x32xbf16>
    %cst = arith.constant dense<0.000000e+00> : vector<32x32xf32>
    %4 = tpu.matmul %2, %3, %cst {dimension_numbers = #tpu.dot_dimension_numbers<[1], [0], [0], [1], [0, 0, 1, 1], [], []>} : vector<32x32xbf16>, vector<32x32xbf16>, vector<32x32xf32> -> vector<32x32xf32>
    %c0_4 = arith.constant 0 : index
    %c0_5 = arith.constant 0 : index
    %5 = vector.load %arg4[%c0_4, %c0_5] : memref<1x32xf32, #tpu.memory_space<vmem>>, vector<1x32xf32>
    %6 = vector.broadcast %5 : vector<1x32xf32> to vector<32x32xf32>
    %7 = arith.addf %4, %6 : vector<32x32xf32>
    %cst_6 = arith.constant 0.000000e+00 : f32
    %8 = vector.broadcast %cst_6 : f32 to vector<32x32xf32>
    %9 = arith.maximumf %7, %8 : vector<32x32xf32>
    %c0_7 = arith.constant 0 : index
    %c0_8 = arith.constant 0 : index
    %10 = vector.load %arg5[%c0_7, %c0_8] : memref<32x32xbf16, #tpu.memory_space<vmem>>, vector<32x32xbf16>
    %cst_9 = arith.constant dense<0.000000e+00> : vector<32x32xf32>
    %11 = tpu.matmul %2, %10, %cst_9 {dimension_numbers = #tpu.dot_dimension_numbers<[1], [0], [0], [1], [0, 0, 1, 1], [], []>} : vector<32x32xbf16>, vector<32x32xbf16>, vector<32x32xf32> -> vector<32x32xf32>
    %c0_10 = arith.constant 0 : index
    %c0_11 = arith.constant 0 : index
    %12 = vector.load %arg6[%c0_10, %c0_11] : memref<1x32xf32, #tpu.memory_space<vmem>>, vector<1x32xf32>
    %13 = vector.broadcast %12 : vector<1x32xf32> to vector<32x32xf32>
    %14 = arith.addf %11, %13 : vector<32x32xf32>
    %cst_12 = arith.constant 0.000000e+00 : f32
    %15 = vector.broadcast %cst_12 : f32 to vector<32x32xf32>
    %16 = arith.maximumf %14, %15 : vector<32x32xf32>
    %c0_13 = arith.constant 0 : index
    %c0_14 = arith.constant 0 : index
    %c0_15 = arith.constant 0 : index
    %17 = vector.load %arg7[%c0_13, %c0_14, %c0_15] : memref<1x1x32xf32, #tpu.memory_space<vmem>>, vector<1x1x32xf32>
    %18 = vector.shape_cast %17 : vector<1x1x32xf32> to vector<1x32xf32>
    %19 = vector.broadcast %18 : vector<1x32xf32> to vector<32x32xf32>
    %20 = arith.mulf %9, %19 : vector<32x32xf32>
    %cst_16 = arith.constant 0.000000e+00 : f32
    %21 = vector.broadcast %cst_16 : f32 to vector<32x32xf32>
    %22 = arith.subf %21, %20 : vector<32x32xf32>
    %23 = math.exp %22 : vector<32x32xf32>
    %cst_17 = arith.constant 1.000000e+00 : f32
    %24 = vector.broadcast %cst_17 : f32 to vector<32x32xf32>
    %25 = arith.addf %24, %23 : vector<32x32xf32>
    %26 = arith.divf %16, %25 : vector<32x32xf32>
    %c0_18 = arith.constant 0 : index
    %c0_19 = arith.constant 0 : index
    %c0_20 = arith.constant 0 : index
    %27 = vector.load %arg8[%c0_18, %c0_19, %c0_20] : memref<1x32x32xf32, #tpu.memory_space<vmem>>, vector<1x32x32xf32>
    %28 = vector.shape_cast %27 : vector<1x32x32xf32> to vector<32x32xf32>
    %29 = vector.shape_cast %26 : vector<32x32xf32> to vector<1x32x32xf32>
    tpu.vector_store %arg8[%c0_18, %c0_19, %c0_20], %29 {strides = array<i32>} : memref<1x32x32xf32, #tpu.memory_space<vmem>>, vector<1x32x32xf32>,
    return
  }
  func.func @transform_0(%arg0: i32, %arg1: i32) -> (i32, i32, i32) {
    %c0_i32 = arith.constant 0 : i32
    %c0_i32_0 = arith.constant 0 : i32
    return %arg0, %arg1, %c0_i32 : i32, i32, i32
  }
  func.func @transform_1(%arg0: i32, %arg1: i32) -> (i32, i32) {
    %c0_i32 = arith.constant 0 : i32
    %c0_i32_0 = arith.constant 0 : i32
    %c0_i32_1 = arith.constant 0 : i32
    return %c0_i32, %c0_i32_0 : i32, i32
  }
  func.func @transform_2(%arg0: i32, %arg1: i32) -> (i32, i32) {
    %c0_i32 = arith.constant 0 : i32
    %c0_i32_0 = arith.constant 0 : i32
    %c0_i32_1 = arith.constant 0 : i32
    return %c0_i32, %c0_i32_0 : i32, i32
  }
  func.func @transform_3(%arg0: i32, %arg1: i32) -> (i32, i32) {
    %c0_i32 = arith.constant 0 : i32
    %c0_i32_0 = arith.constant 0 : i32
    %c0_i32_1 = arith.constant 0 : i32
    return %c0_i32, %c0_i32_0 : i32, i32
  }
  func.func @transform_4(%arg0: i32, %arg1: i32) -> (i32, i32) {
    %c0_i32 = arith.constant 0 : i32
    %c0_i32_0 = arith.constant 0 : i32
    %c0_i32_1 = arith.constant 0 : i32
    return %c0_i32, %c0_i32_0 : i32, i32
  }
  func.func @transform_5(%arg0: i32, %arg1: i32) -> (i32, i32, i32) {
    %c0_i32 = arith.constant 0 : i32
    %c0_i32_0 = arith.constant 0 : i32
    %c0_i32_1 = arith.constant 0 : i32
    return %arg0, %c0_i32, %c0_i32_0 : i32, i32, i32
  }
  func.func @transform_6(%arg0: i32, %arg1: i32) -> (i32, i32, i32) {
    %c0_i32 = arith.constant 0 : i32
    %c0_i32_0 = arith.constant 0 : i32
    return %arg0, %arg1, %c0_i32 : i32, i32, i32
  }
}

module attributes {stable_mosaic.version = 11 : i64} {
  func.func @_mm_bias_add_halve_kernel(%arg0: i32, %arg1: memref<64x64xf32, #tpu.memory_space<vmem>>, %arg2: memref<64x32xbf16, #tpu.memory_space<vmem>>, %arg3: memref<1x32xf32, #tpu.memory_space<vmem>>, %arg4: memref<64x32xf32, #tpu.memory_space<vmem>>, %arg5: memref<64x32xf32, #tpu.memory_space<vmem>>) attributes {dimension_semantics = [#tpu.dimension_semantics<parallel>], iteration_bounds = array<i64: 2>, scalar_prefetch = 0 : i64, scratch_operands = 0 : i64, tpu.core_type = #tpu.core_type<tc>, window_params = [{transform_indices = @transform_0, window_bounds = array<i64: 64, 64>}, {pipeline_mode = #tpu.pipeline_mode<synchronous>, transform_indices = @transform_1, window_bounds = array<i64: 64, 32>}, {pipeline_mode = #tpu.pipeline_mode<synchronous>, transform_indices = @transform_2, window_bounds = array<i64: 1, 32>}, {transform_indices = @transform_3, window_bounds = array<i64: 64, 32>}, {transform_indices = @transform_4, window_bounds = array<i64: 64, 32>}]} {
    %c0 = arith.constant 0 : index
    %c0_0 = arith.constant 0 : index
    %0 = vector.load %arg1[%c0, %c0_0] : memref<64x64xf32, #tpu.memory_space<vmem>>, vector<64x64xf32>
    %1 = arith.truncf %0 : vector<64x64xf32> to vector<64x64xbf16>
    %c0_1 = arith.constant 0 : index
    %c0_2 = arith.constant 0 : index
    %2 = vector.load %arg2[%c0_1, %c0_2] : memref<64x32xbf16, #tpu.memory_space<vmem>>, vector<64x32xbf16>
    %cst = arith.constant dense<0.000000e+00> : vector<64x32xf32>
    %3 = tpu.matmul %1, %2, %cst {dimension_numbers = #tpu.dot_dimension_numbers<[1], [0], [0], [1], [0, 0, 1, 1], [], []>} : vector<64x64xbf16>, vector<64x32xbf16>, vector<64x32xf32> -> vector<64x32xf32>
    %c0_3 = arith.constant 0 : index
    %c0_4 = arith.constant 0 : index
    %4 = vector.load %arg3[%c0_3, %c0_4] : memref<1x32xf32, #tpu.memory_space<vmem>>, vector<1x32xf32>
    %5 = vector.broadcast %4 : vector<1x32xf32> to vector<64x32xf32>
    %6 = arith.addf %3, %5 : vector<64x32xf32>
    %c0_5 = arith.constant 0 : index
    %c0_6 = arith.constant 0 : index
    %7 = vector.load %arg4[%c0_5, %c0_6] : memref<64x32xf32, #tpu.memory_space<vmem>>, vector<64x32xf32>
    %8 = arith.addf %6, %7 : vector<64x32xf32>
    %cst_7 = arith.constant 5.000000e-01 : f32
    %9 = vector.broadcast %cst_7 : f32 to vector<64x32xf32>
    %10 = arith.mulf %8, %9 : vector<64x32xf32>
    %c0_8 = arith.constant 0 : index
    %c0_9 = arith.constant 0 : index
    %11 = vector.load %arg5[%c0_8, %c0_9] : memref<64x32xf32, #tpu.memory_space<vmem>>, vector<64x32xf32>
    tpu.vector_store %arg5[%c0_8, %c0_9], %10 {strides = array<i32>} : memref<64x32xf32, #tpu.memory_space<vmem>>, vector<64x32xf32>,
    return
  }
  func.func @transform_0(%arg0: i32) -> (i32, i32) {
    %c0_i32 = arith.constant 0 : i32
    %c0_i32_0 = arith.constant 0 : i32
    return %arg0, %c0_i32 : i32, i32
  }
  func.func @transform_1(%arg0: i32) -> (i32, i32) {
    %c0_i32 = arith.constant 0 : i32
    %c0_i32_0 = arith.constant 0 : i32
    %c0_i32_1 = arith.constant 0 : i32
    return %c0_i32, %c0_i32_0 : i32, i32
  }
  func.func @transform_2(%arg0: i32) -> (i32, i32) {
    %c0_i32 = arith.constant 0 : i32
    %c0_i32_0 = arith.constant 0 : i32
    %c0_i32_1 = arith.constant 0 : i32
    return %c0_i32, %c0_i32_0 : i32, i32
  }
  func.func @transform_3(%arg0: i32) -> (i32, i32) {
    %c0_i32 = arith.constant 0 : i32
    %c0_i32_0 = arith.constant 0 : i32
    return %arg0, %c0_i32 : i32, i32
  }
  func.func @transform_4(%arg0: i32) -> (i32, i32) {
    %c0_i32 = arith.constant 0 : i32
    %c0_i32_0 = arith.constant 0 : i32
    return %arg0, %c0_i32 : i32, i32
  }
}

module attributes {stable_mosaic.version = 11 : i64} {
  func.func @_fs_kernel(%arg0: i32, %arg1: i32, %arg2: memref<1x128x32xf32, #tpu.memory_space<vmem>>, %arg3: memref<32x32xbf16, #tpu.memory_space<vmem>>, %arg4: memref<1x32xf32, #tpu.memory_space<vmem>>, %arg5: memref<32x32xbf16, #tpu.memory_space<vmem>>, %arg6: memref<1x32xf32, #tpu.memory_space<vmem>>, %arg7: memref<1x1x32xf32, #tpu.memory_space<vmem>>, %arg8: memref<1x128x32xf32, #tpu.memory_space<vmem>>) attributes {dimension_semantics = [#tpu.dimension_semantics<parallel>, #tpu.dimension_semantics<parallel>], iteration_bounds = array<i64: 2, 2>, scalar_prefetch = 0 : i64, scratch_operands = 0 : i64, tpu.core_type = #tpu.core_type<tc>, window_params = [{transform_indices = @transform_0, window_bounds = array<i64: 1, 128, 32>}, {pipeline_mode = #tpu.pipeline_mode<synchronous>, transform_indices = @transform_1, window_bounds = array<i64: 32, 32>}, {pipeline_mode = #tpu.pipeline_mode<synchronous>, transform_indices = @transform_2, window_bounds = array<i64: 1, 32>}, {pipeline_mode = #tpu.pipeline_mode<synchronous>, transform_indices = @transform_3, window_bounds = array<i64: 32, 32>}, {pipeline_mode = #tpu.pipeline_mode<synchronous>, transform_indices = @transform_4, window_bounds = array<i64: 1, 32>}, {transform_indices = @transform_5, window_bounds = array<i64: 1, 1, 32>}, {transform_indices = @transform_6, window_bounds = array<i64: 1, 128, 32>}]} {
    %c0 = arith.constant 0 : index
    %c0_0 = arith.constant 0 : index
    %c0_1 = arith.constant 0 : index
    %0 = vector.load %arg2[%c0, %c0_0, %c0_1] : memref<1x128x32xf32, #tpu.memory_space<vmem>>, vector<1x128x32xf32>
    %1 = vector.shape_cast %0 : vector<1x128x32xf32> to vector<128x32xf32>
    %2 = arith.truncf %1 : vector<128x32xf32> to vector<128x32xbf16>
    %c0_2 = arith.constant 0 : index
    %c0_3 = arith.constant 0 : index
    %3 = vector.load %arg3[%c0_2, %c0_3] : memref<32x32xbf16, #tpu.memory_space<vmem>>, vector<32x32xbf16>
    %cst = arith.constant dense<0.000000e+00> : vector<128x32xf32>
    %4 = tpu.matmul %2, %3, %cst {dimension_numbers = #tpu.dot_dimension_numbers<[1], [0], [0], [1], [0, 0, 1, 1], [], []>} : vector<128x32xbf16>, vector<32x32xbf16>, vector<128x32xf32> -> vector<128x32xf32>
    %c0_4 = arith.constant 0 : index
    %c0_5 = arith.constant 0 : index
    %5 = vector.load %arg4[%c0_4, %c0_5] : memref<1x32xf32, #tpu.memory_space<vmem>>, vector<1x32xf32>
    %6 = vector.broadcast %5 : vector<1x32xf32> to vector<128x32xf32>
    %7 = arith.addf %4, %6 : vector<128x32xf32>
    %cst_6 = arith.constant 0.000000e+00 : f32
    %8 = vector.broadcast %cst_6 : f32 to vector<128x32xf32>
    %9 = arith.maximumf %7, %8 : vector<128x32xf32>
    %c0_7 = arith.constant 0 : index
    %c0_8 = arith.constant 0 : index
    %10 = vector.load %arg5[%c0_7, %c0_8] : memref<32x32xbf16, #tpu.memory_space<vmem>>, vector<32x32xbf16>
    %cst_9 = arith.constant dense<0.000000e+00> : vector<128x32xf32>
    %11 = tpu.matmul %2, %10, %cst_9 {dimension_numbers = #tpu.dot_dimension_numbers<[1], [0], [0], [1], [0, 0, 1, 1], [], []>} : vector<128x32xbf16>, vector<32x32xbf16>, vector<128x32xf32> -> vector<128x32xf32>
    %c0_10 = arith.constant 0 : index
    %c0_11 = arith.constant 0 : index
    %12 = vector.load %arg6[%c0_10, %c0_11] : memref<1x32xf32, #tpu.memory_space<vmem>>, vector<1x32xf32>
    %13 = vector.broadcast %12 : vector<1x32xf32> to vector<128x32xf32>
    %14 = arith.addf %11, %13 : vector<128x32xf32>
    %cst_12 = arith.constant 0.000000e+00 : f32
    %15 = vector.broadcast %cst_12 : f32 to vector<128x32xf32>
    %16 = arith.maximumf %14, %15 : vector<128x32xf32>
    %c0_13 = arith.constant 0 : index
    %c0_14 = arith.constant 0 : index
    %c0_15 = arith.constant 0 : index
    %17 = vector.load %arg7[%c0_13, %c0_14, %c0_15] : memref<1x1x32xf32, #tpu.memory_space<vmem>>, vector<1x1x32xf32>
    %18 = vector.shape_cast %17 : vector<1x1x32xf32> to vector<1x32xf32>
    %19 = vector.broadcast %18 : vector<1x32xf32> to vector<128x32xf32>
    %20 = arith.mulf %9, %19 : vector<128x32xf32>
    %cst_16 = arith.constant 0.000000e+00 : f32
    %21 = vector.broadcast %cst_16 : f32 to vector<128x32xf32>
    %22 = arith.subf %21, %20 : vector<128x32xf32>
    %23 = math.exp %22 : vector<128x32xf32>
    %cst_17 = arith.constant 1.000000e+00 : f32
    %24 = vector.broadcast %cst_17 : f32 to vector<128x32xf32>
    %25 = arith.addf %24, %23 : vector<128x32xf32>
    %26 = arith.divf %16, %25 : vector<128x32xf32>
    %c0_18 = arith.constant 0 : index
    %c0_19 = arith.constant 0 : index
    %c0_20 = arith.constant 0 : index
    %27 = vector.load %arg8[%c0_18, %c0_19, %c0_20] : memref<1x128x32xf32, #tpu.memory_space<vmem>>, vector<1x128x32xf32>
    %28 = vector.shape_cast %27 : vector<1x128x32xf32> to vector<128x32xf32>
    %29 = vector.shape_cast %26 : vector<128x32xf32> to vector<1x128x32xf32>
    tpu.vector_store %arg8[%c0_18, %c0_19, %c0_20], %29 {strides = array<i32>} : memref<1x128x32xf32, #tpu.memory_space<vmem>>, vector<1x128x32xf32>,
    return
  }
  func.func @transform_0(%arg0: i32, %arg1: i32) -> (i32, i32, i32) {
    %c0_i32 = arith.constant 0 : i32
    %c0_i32_0 = arith.constant 0 : i32
    return %arg0, %arg1, %c0_i32 : i32, i32, i32
  }
  func.func @transform_1(%arg0: i32, %arg1: i32) -> (i32, i32) {
    %c0_i32 = arith.constant 0 : i32
    %c0_i32_0 = arith.constant 0 : i32
    %c0_i32_1 = arith.constant 0 : i32
    return %c0_i32, %c0_i32_0 : i32, i32
  }
  func.func @transform_2(%arg0: i32, %arg1: i32) -> (i32, i32) {
    %c0_i32 = arith.constant 0 : i32
    %c0_i32_0 = arith.constant 0 : i32
    %c0_i32_1 = arith.constant 0 : i32
    return %c0_i32, %c0_i32_0 : i32, i32
  }
  func.func @transform_3(%arg0: i32, %arg1: i32) -> (i32, i32) {
    %c0_i32 = arith.constant 0 : i32
    %c0_i32_0 = arith.constant 0 : i32
    %c0_i32_1 = arith.constant 0 : i32
    return %c0_i32, %c0_i32_0 : i32, i32
  }
  func.func @transform_4(%arg0: i32, %arg1: i32) -> (i32, i32) {
    %c0_i32 = arith.constant 0 : i32
    %c0_i32_0 = arith.constant 0 : i32
    %c0_i32_1 = arith.constant 0 : i32
    return %c0_i32, %c0_i32_0 : i32, i32
  }
  func.func @transform_5(%arg0: i32, %arg1: i32) -> (i32, i32, i32) {
    %c0_i32 = arith.constant 0 : i32
    %c0_i32_0 = arith.constant 0 : i32
    %c0_i32_1 = arith.constant 0 : i32
    return %arg0, %c0_i32, %c0_i32_0 : i32, i32, i32
  }
  func.func @transform_6(%arg0: i32, %arg1: i32) -> (i32, i32, i32) {
    %c0_i32 = arith.constant 0 : i32
    %c0_i32_0 = arith.constant 0 : i32
    return %arg0, %arg1, %c0_i32 : i32, i32, i32
  }
}

module attributes {stable_mosaic.version = 11 : i64} {
  func.func @_mm_bias_add_halve_kernel(%arg0: i32, %arg1: memref<256x32xf32, #tpu.memory_space<vmem>>, %arg2: memref<32x32xbf16, #tpu.memory_space<vmem>>, %arg3: memref<1x32xf32, #tpu.memory_space<vmem>>, %arg4: memref<256x32xf32, #tpu.memory_space<vmem>>, %arg5: memref<256x32xf32, #tpu.memory_space<vmem>>) attributes {dimension_semantics = [#tpu.dimension_semantics<parallel>], iteration_bounds = array<i64: 2>, scalar_prefetch = 0 : i64, scratch_operands = 0 : i64, tpu.core_type = #tpu.core_type<tc>, window_params = [{transform_indices = @transform_0, window_bounds = array<i64: 256, 32>}, {pipeline_mode = #tpu.pipeline_mode<synchronous>, transform_indices = @transform_1, window_bounds = array<i64: 32, 32>}, {pipeline_mode = #tpu.pipeline_mode<synchronous>, transform_indices = @transform_2, window_bounds = array<i64: 1, 32>}, {transform_indices = @transform_3, window_bounds = array<i64: 256, 32>}, {transform_indices = @transform_4, window_bounds = array<i64: 256, 32>}]} {
    %c0 = arith.constant 0 : index
    %c0_0 = arith.constant 0 : index
    %0 = vector.load %arg1[%c0, %c0_0] : memref<256x32xf32, #tpu.memory_space<vmem>>, vector<256x32xf32>
    %1 = arith.truncf %0 : vector<256x32xf32> to vector<256x32xbf16>
    %c0_1 = arith.constant 0 : index
    %c0_2 = arith.constant 0 : index
    %2 = vector.load %arg2[%c0_1, %c0_2] : memref<32x32xbf16, #tpu.memory_space<vmem>>, vector<32x32xbf16>
    %cst = arith.constant dense<0.000000e+00> : vector<256x32xf32>
    %3 = tpu.matmul %1, %2, %cst {dimension_numbers = #tpu.dot_dimension_numbers<[1], [0], [0], [1], [0, 0, 1, 1], [], []>} : vector<256x32xbf16>, vector<32x32xbf16>, vector<256x32xf32> -> vector<256x32xf32>
    %c0_3 = arith.constant 0 : index
    %c0_4 = arith.constant 0 : index
    %4 = vector.load %arg3[%c0_3, %c0_4] : memref<1x32xf32, #tpu.memory_space<vmem>>, vector<1x32xf32>
    %5 = vector.broadcast %4 : vector<1x32xf32> to vector<256x32xf32>
    %6 = arith.addf %3, %5 : vector<256x32xf32>
    %c0_5 = arith.constant 0 : index
    %c0_6 = arith.constant 0 : index
    %7 = vector.load %arg4[%c0_5, %c0_6] : memref<256x32xf32, #tpu.memory_space<vmem>>, vector<256x32xf32>
    %8 = arith.addf %6, %7 : vector<256x32xf32>
    %cst_7 = arith.constant 5.000000e-01 : f32
    %9 = vector.broadcast %cst_7 : f32 to vector<256x32xf32>
    %10 = arith.mulf %8, %9 : vector<256x32xf32>
    %c0_8 = arith.constant 0 : index
    %c0_9 = arith.constant 0 : index
    %11 = vector.load %arg5[%c0_8, %c0_9] : memref<256x32xf32, #tpu.memory_space<vmem>>, vector<256x32xf32>
    tpu.vector_store %arg5[%c0_8, %c0_9], %10 {strides = array<i32>} : memref<256x32xf32, #tpu.memory_space<vmem>>, vector<256x32xf32>,
    return
  }
  func.func @transform_0(%arg0: i32) -> (i32, i32) {
    %c0_i32 = arith.constant 0 : i32
    %c0_i32_0 = arith.constant 0 : i32
    return %arg0, %c0_i32 : i32, i32
  }
  func.func @transform_1(%arg0: i32) -> (i32, i32) {
    %c0_i32 = arith.constant 0 : i32
    %c0_i32_0 = arith.constant 0 : i32
    %c0_i32_1 = arith.constant 0 : i32
    return %c0_i32, %c0_i32_0 : i32, i32
  }
  func.func @transform_2(%arg0: i32) -> (i32, i32) {
    %c0_i32 = arith.constant 0 : i32
    %c0_i32_0 = arith.constant 0 : i32
    %c0_i32_1 = arith.constant 0 : i32
    return %c0_i32, %c0_i32_0 : i32, i32
  }
  func.func @transform_3(%arg0: i32) -> (i32, i32) {
    %c0_i32 = arith.constant 0 : i32
    %c0_i32_0 = arith.constant 0 : i32
    return %arg0, %c0_i32 : i32, i32
  }
  func.func @transform_4(%arg0: i32) -> (i32, i32) {
    %c0_i32 = arith.constant 0 : i32
    %c0_i32_0 = arith.constant 0 : i32
    return %arg0, %c0_i32 : i32, i32
  }
}

module attributes {stable_mosaic.version = 11 : i64} {
  func.func @_mm_bias_kernel(%arg0: i32, %arg1: memref<256x288xbf16, #tpu.memory_space<vmem>>, %arg2: memref<288x32xbf16, #tpu.memory_space<vmem>>, %arg3: memref<1x32xf32, #tpu.memory_space<vmem>>, %arg4: memref<256x32xf32, #tpu.memory_space<vmem>>) attributes {dimension_semantics = [#tpu.dimension_semantics<parallel>], iteration_bounds = array<i64: 2>, scalar_prefetch = 0 : i64, scratch_operands = 0 : i64, tpu.core_type = #tpu.core_type<tc>, window_params = [{transform_indices = @transform_0, window_bounds = array<i64: 256, 288>}, {pipeline_mode = #tpu.pipeline_mode<synchronous>, transform_indices = @transform_1, window_bounds = array<i64: 288, 32>}, {pipeline_mode = #tpu.pipeline_mode<synchronous>, transform_indices = @transform_2, window_bounds = array<i64: 1, 32>}, {transform_indices = @transform_3, window_bounds = array<i64: 256, 32>}]} {
    %c0 = arith.constant 0 : index
    %c0_0 = arith.constant 0 : index
    %0 = vector.load %arg1[%c0, %c0_0] : memref<256x288xbf16, #tpu.memory_space<vmem>>, vector<256x288xbf16>
    %c0_1 = arith.constant 0 : index
    %c0_2 = arith.constant 0 : index
    %1 = vector.load %arg2[%c0_1, %c0_2] : memref<288x32xbf16, #tpu.memory_space<vmem>>, vector<288x32xbf16>
    %cst = arith.constant dense<0.000000e+00> : vector<256x32xf32>
    %2 = tpu.matmul %0, %1, %cst {dimension_numbers = #tpu.dot_dimension_numbers<[1], [0], [0], [1], [0, 0, 1, 1], [], []>} : vector<256x288xbf16>, vector<288x32xbf16>, vector<256x32xf32> -> vector<256x32xf32>
    %c0_3 = arith.constant 0 : index
    %c0_4 = arith.constant 0 : index
    %3 = vector.load %arg3[%c0_3, %c0_4] : memref<1x32xf32, #tpu.memory_space<vmem>>, vector<1x32xf32>
    %4 = vector.broadcast %3 : vector<1x32xf32> to vector<256x32xf32>
    %5 = arith.addf %2, %4 : vector<256x32xf32>
    %cst_5 = arith.constant 0.000000e+00 : f32
    %6 = vector.broadcast %cst_5 : f32 to vector<256x32xf32>
    %7 = arith.maximumf %5, %6 : vector<256x32xf32>
    %c0_6 = arith.constant 0 : index
    %c0_7 = arith.constant 0 : index
    %8 = vector.load %arg4[%c0_6, %c0_7] : memref<256x32xf32, #tpu.memory_space<vmem>>, vector<256x32xf32>
    tpu.vector_store %arg4[%c0_6, %c0_7], %7 {strides = array<i32>} : memref<256x32xf32, #tpu.memory_space<vmem>>, vector<256x32xf32>,
    return
  }
  func.func @transform_0(%arg0: i32) -> (i32, i32) {
    %c0_i32 = arith.constant 0 : i32
    %c0_i32_0 = arith.constant 0 : i32
    return %arg0, %c0_i32 : i32, i32
  }
  func.func @transform_1(%arg0: i32) -> (i32, i32) {
    %c0_i32 = arith.constant 0 : i32
    %c0_i32_0 = arith.constant 0 : i32
    %c0_i32_1 = arith.constant 0 : i32
    return %c0_i32, %c0_i32_0 : i32, i32
  }
  func.func @transform_2(%arg0: i32) -> (i32, i32) {
    %c0_i32 = arith.constant 0 : i32
    %c0_i32_0 = arith.constant 0 : i32
    %c0_i32_1 = arith.constant 0 : i32
    return %c0_i32, %c0_i32_0 : i32, i32
  }
  func.func @transform_3(%arg0: i32) -> (i32, i32) {
    %c0_i32 = arith.constant 0 : i32
    %c0_i32_0 = arith.constant 0 : i32
    return %arg0, %c0_i32 : i32, i32
  }
}

module attributes {stable_mosaic.version = 11 : i64} {
  func.func @_avg4_kernel(%arg0: i32, %arg1: memref<64x128xf32, #tpu.memory_space<vmem>>, %arg2: memref<64x128xf32, #tpu.memory_space<vmem>>, %arg3: memref<64x128xf32, #tpu.memory_space<vmem>>, %arg4: memref<64x128xf32, #tpu.memory_space<vmem>>, %arg5: memref<64x128xf32, #tpu.memory_space<vmem>>) attributes {dimension_semantics = [#tpu.dimension_semantics<parallel>], iteration_bounds = array<i64: 2>, scalar_prefetch = 0 : i64, scratch_operands = 0 : i64, tpu.core_type = #tpu.core_type<tc>, window_params = [{transform_indices = @transform_0, window_bounds = array<i64: 64, 128>}, {transform_indices = @transform_1, window_bounds = array<i64: 64, 128>}, {transform_indices = @transform_2, window_bounds = array<i64: 64, 128>}, {transform_indices = @transform_3, window_bounds = array<i64: 64, 128>}, {transform_indices = @transform_4, window_bounds = array<i64: 64, 128>}]} {
    %c0 = arith.constant 0 : index
    %c0_0 = arith.constant 0 : index
    %0 = vector.load %arg1[%c0, %c0_0] : memref<64x128xf32, #tpu.memory_space<vmem>>, vector<64x128xf32>
    %c0_1 = arith.constant 0 : index
    %c0_2 = arith.constant 0 : index
    %1 = vector.load %arg2[%c0_1, %c0_2] : memref<64x128xf32, #tpu.memory_space<vmem>>, vector<64x128xf32>
    %2 = arith.addf %0, %1 : vector<64x128xf32>
    %c0_3 = arith.constant 0 : index
    %c0_4 = arith.constant 0 : index
    %3 = vector.load %arg3[%c0_3, %c0_4] : memref<64x128xf32, #tpu.memory_space<vmem>>, vector<64x128xf32>
    %4 = arith.addf %2, %3 : vector<64x128xf32>
    %c0_5 = arith.constant 0 : index
    %c0_6 = arith.constant 0 : index
    %5 = vector.load %arg4[%c0_5, %c0_6] : memref<64x128xf32, #tpu.memory_space<vmem>>, vector<64x128xf32>
    %6 = arith.addf %4, %5 : vector<64x128xf32>
    %cst = arith.constant 2.500000e-01 : f32
    %7 = vector.broadcast %cst : f32 to vector<64x128xf32>
    %8 = arith.mulf %6, %7 : vector<64x128xf32>
    %c0_7 = arith.constant 0 : index
    %c0_8 = arith.constant 0 : index
    %9 = vector.load %arg5[%c0_7, %c0_8] : memref<64x128xf32, #tpu.memory_space<vmem>>, vector<64x128xf32>
    tpu.vector_store %arg5[%c0_7, %c0_8], %8 {strides = array<i32>} : memref<64x128xf32, #tpu.memory_space<vmem>>, vector<64x128xf32>,
    return
  }
  func.func @transform_0(%arg0: i32) -> (i32, i32) {
    %c0_i32 = arith.constant 0 : i32
    %c0_i32_0 = arith.constant 0 : i32
    return %arg0, %c0_i32 : i32, i32
  }
  func.func @transform_1(%arg0: i32) -> (i32, i32) {
    %c0_i32 = arith.constant 0 : i32
    %c0_i32_0 = arith.constant 0 : i32
    return %arg0, %c0_i32 : i32, i32
  }
  func.func @transform_2(%arg0: i32) -> (i32, i32) {
    %c0_i32 = arith.constant 0 : i32
    %c0_i32_0 = arith.constant 0 : i32
    return %arg0, %c0_i32 : i32, i32
  }
  func.func @transform_3(%arg0: i32) -> (i32, i32) {
    %c0_i32 = arith.constant 0 : i32
    %c0_i32_0 = arith.constant 0 : i32
    return %arg0, %c0_i32 : i32, i32
  }
  func.func @transform_4(%arg0: i32) -> (i32, i32) {
    %c0_i32 = arith.constant 0 : i32
    %c0_i32_0 = arith.constant 0 : i32
    return %arg0, %c0_i32 : i32, i32
  }
}

module attributes {stable_mosaic.version = 11 : i64} {
  func.func @_mm_bias_kernel(%arg0: i32, %arg1: memref<512x288xbf16, #tpu.memory_space<vmem>>, %arg2: memref<288x128xbf16, #tpu.memory_space<vmem>>, %arg3: memref<1x128xf32, #tpu.memory_space<vmem>>, %arg4: memref<512x128xf32, #tpu.memory_space<vmem>>) attributes {dimension_semantics = [#tpu.dimension_semantics<parallel>], iteration_bounds = array<i64: 16>, scalar_prefetch = 0 : i64, scratch_operands = 0 : i64, tpu.core_type = #tpu.core_type<tc>, window_params = [{transform_indices = @transform_0, window_bounds = array<i64: 512, 288>}, {pipeline_mode = #tpu.pipeline_mode<synchronous>, transform_indices = @transform_1, window_bounds = array<i64: 288, 128>}, {pipeline_mode = #tpu.pipeline_mode<synchronous>, transform_indices = @transform_2, window_bounds = array<i64: 1, 128>}, {transform_indices = @transform_3, window_bounds = array<i64: 512, 128>}]} {
    %c0 = arith.constant 0 : index
    %c0_0 = arith.constant 0 : index
    %0 = vector.load %arg1[%c0, %c0_0] : memref<512x288xbf16, #tpu.memory_space<vmem>>, vector<512x288xbf16>
    %c0_1 = arith.constant 0 : index
    %c0_2 = arith.constant 0 : index
    %1 = vector.load %arg2[%c0_1, %c0_2] : memref<288x128xbf16, #tpu.memory_space<vmem>>, vector<288x128xbf16>
    %cst = arith.constant dense<0.000000e+00> : vector<512x128xf32>
    %2 = tpu.matmul %0, %1, %cst {dimension_numbers = #tpu.dot_dimension_numbers<[1], [0], [0], [1], [0, 0, 1, 1], [], []>} : vector<512x288xbf16>, vector<288x128xbf16>, vector<512x128xf32> -> vector<512x128xf32>
    %c0_3 = arith.constant 0 : index
    %c0_4 = arith.constant 0 : index
    %3 = vector.load %arg3[%c0_3, %c0_4] : memref<1x128xf32, #tpu.memory_space<vmem>>, vector<1x128xf32>
    %4 = vector.broadcast %3 : vector<1x128xf32> to vector<512x128xf32>
    %5 = arith.addf %2, %4 : vector<512x128xf32>
    %c0_5 = arith.constant 0 : index
    %c0_6 = arith.constant 0 : index
    %6 = vector.load %arg4[%c0_5, %c0_6] : memref<512x128xf32, #tpu.memory_space<vmem>>, vector<512x128xf32>
    tpu.vector_store %arg4[%c0_5, %c0_6], %5 {strides = array<i32>} : memref<512x128xf32, #tpu.memory_space<vmem>>, vector<512x128xf32>,
    return
  }
  func.func @transform_0(%arg0: i32) -> (i32, i32) {
    %c0_i32 = arith.constant 0 : i32
    %c0_i32_0 = arith.constant 0 : i32
    return %arg0, %c0_i32 : i32, i32
  }
  func.func @transform_1(%arg0: i32) -> (i32, i32) {
    %c0_i32 = arith.constant 0 : i32
    %c0_i32_0 = arith.constant 0 : i32
    %c0_i32_1 = arith.constant 0 : i32
    return %c0_i32, %c0_i32_0 : i32, i32
  }
  func.func @transform_2(%arg0: i32) -> (i32, i32) {
    %c0_i32 = arith.constant 0 : i32
    %c0_i32_0 = arith.constant 0 : i32
    %c0_i32_1 = arith.constant 0 : i32
    return %c0_i32, %c0_i32_0 : i32, i32
  }
  func.func @transform_3(%arg0: i32) -> (i32, i32) {
    %c0_i32 = arith.constant 0 : i32
    %c0_i32_0 = arith.constant 0 : i32
    return %arg0, %c0_i32 : i32, i32
  }
}

</mosaic_0001>

<llo_original>
// kernel: farnet_forward.12
$region0: #{farnet_forward.12}
  #allocation0 [shape = 'u32[]', space=smem, size = 0x4, offset = 0x4, fixed_abs, tag = 'smem constant byte address 0x4 - core index']
  #allocation1 [shape = 'u32[72,128]{1,0:T(1,128)}', space=vmem, size = 0x9000, scoped, tag = 'internal scratch']
  %s0 = inlined_call_operand.vmem [shape: f32[512,3], index: 0, kind: input, shape index: {}]
  %s1 = inlined_call_operand.vmem [shape: bf16[3,32], index: 1, kind: input, shape index: {}]
  %s2 = inlined_call_operand.vmem [shape: f32[1,32], index: 2, kind: input, shape index: {}]
  %s3 = inlined_call_operand.vmem [shape: f32[512,32], index: 3, kind: output, shape index: {}]
  %s4 = sld [smem:[#allocation0]]
  $region45: #{farnet_forward.12} parent=0
    _
  %s6 = ssub.s32 1, %s4
  %s7 = scalar_select 0, %s6, %s4
  loop: start=0, step=1, limit=4
  $region2: #{farnet_forward.12} parent=0 // loop_pre_header
    _
  $region3: #{farnet_forward.12} parent=0 // loop_header
    %s9 = sphi 0, %s13
    %p10 = scmp.ge.s32.totalorder %s9, 4
    %s19 = sphi 0, %s21
    %s22 = sphi 0, %s19
    %s23 = sphi 0, %s22
    %s39 = sphi 0, %s23
    %s43 = sphi 0, %s43
    %s45 = sphi 0, %s43
    %s46 = sphi 0, %s45
    %s60 = sphi 0, %s46
    %s64 = sphi 0, %s64
    %s66 = sphi 0, %s64
    %s67 = sphi 0, %s66
    %s81 = sphi 0, %s67
    %s87 = sphi 0, %s89
    %s90 = sphi 0, %s87
    %s91 = sphi 0, %s90
    %s107 = sphi 0, %s91
  $region4: #{farnet_forward.12} parent=0 // loop_header_branch
    %12 = sbr.rel (%p10) target = $region8
  $region5: #{farnet_forward.12} parent=0 // loop_body
    %s14 = ssub.s32 %s9, 1
    %s15 = ssub.s32 %s9, 2
    %s16 = sadd.s32 %s9, 1
    %s17 = ssub.s32 %s9, %s16
    %p18 = scmp.eq.s32.totalorder %s17, 0
    %s20 = sadd.s32 %s19, 1
    %s21 = scalar_select %p18, %s19, %s20
    %p24 = pneg %p18
    %p25 = scmp.eq.s32.totalorder %s9, 1
    %p26 = por %p24, %p25
    %p27 = scmp.ne.s32.totalorder %s19, %s22
    %p28 = scmp.eq.s32.totalorder %s9, 0
    %p29 = por %p27, %p28
    %p30 = scmp.ne.s32.totalorder %s19, %s22
    %p31 = scmp.eq.s32.totalorder %s14, 1
    %p32 = por %p30, %p31
    %p33 = scmp.ne.s32.totalorder %s22, %s23
    %p34 = scmp.eq.s32.totalorder %s14, 0
    %p35 = por %p33, %p34
    %p36 = scmp.ne.s32.totalorder %s22, %s23
    %p37 = scmp.eq.s32.totalorder %s15, 1
    %p38 = por %p36, %p37
    %p40 = scmp.ne.s32.totalorder %s23, %s39
    %p41 = scmp.eq.s32.totalorder %s15, 0
    %p42 = por %p40, %p41
    %s44 = sadd.s32 %s43, 1
    %p47 = scmp.eq.s32.totalorder %s9, 1
    %p48 = scmp.ne.s32.totalorder %s43, %s45
    %p49 = scmp.eq.s32.totalorder %s9, 0
    %p50 = por %p48, %p49
    %p51 = scmp.ne.s32.totalorder %s43, %s45
    %p52 = scmp.eq.s32.totalorder %s14, 1
    %p53 = por %p51, %p52
    %p54 = scmp.ne.s32.totalorder %s45, %s46
    %p55 = scmp.eq.s32.totalorder %s14, 0
    %p56 = por %p54, %p55
    %p57 = scmp.ne.s32.totalorder %s45, %s46
    %p58 = scmp.eq.s32.totalorder %s15, 1
    %p59 = por %p57, %p58
    %p61 = scmp.ne.s32.totalorder %s46, %s60
    %p62 = scmp.eq.s32.totalorder %s15, 0
    %p63 = por %p61, %p62
    %s65 = sadd.s32 %s64, 1
    %p68 = scmp.eq.s32.totalorder %s9, 1
    %p69 = scmp.ne.s32.totalorder %s64, %s66
    %p70 = scmp.eq.s32.totalorder %s9, 0
    %p71 = por %p69, %p70
    %p72 = scmp.ne.s32.totalorder %s64, %s66
    %p73 = scmp.eq.s32.totalorder %s14, 1
    %p74 = por %p72, %p73
    %p75 = scmp.ne.s32.totalorder %s66, %s67
    %p76 = scmp.eq.s32.totalorder %s14, 0
    %p77 = por %p75, %p76
    %p78 = scmp.ne.s32.totalorder %s66, %s67
    %p79 = scmp.eq.s32.totalorder %s15, 1
    %p80 = por %p78, %p79
    %p82 = scmp.ne.s32.totalorder %s67, %s81
    %p83 = scmp.eq.s32.totalorder %s15, 0
    %p84 = por %p82, %p83
    %s85 = ssub.s32 %s9, %s16
    %p86 = scmp.eq.s32.totalorder %s85, 0
    %s88 = sadd.s32 %s87, 1
    %s89 = scalar_select %p86, %s87, %s88
    %p92 = pneg %p86
    %p93 = scmp.eq.s32.totalorder %s9, 1
    %p94 = por %p92, %p93
    %p95 = scmp.ne.s32.totalorder %s87, %s90
    %p96 = scmp.eq.s32.totalorder %s9, 0
    %p97 = por %p95, %p96
    %p98 = scmp.ne.s32.totalorder %s87, %s90
    %p99 = scmp.eq.s32.totalorder %s14, 1
    %p100 = por %p98, %p99
    %p101 = scmp.ne.s32.totalorder %s90, %s91
    %p102 = scmp.eq.s32.totalorder %s14, 0
    %p103 = por %p101, %p102
    %p104 = scmp.ne.s32.totalorder %s90, %s91
    %p105 = scmp.eq.s32.totalorder %s15, 1
    %p106 = por %p104, %p105
    %p108 = scmp.ne.s32.totalorder %s91, %s107
    %p109 = scmp.eq.s32.totalorder %s15, 0
    %p110 = por %p108, %p109
    %p111 = scmp.le.s32.totalorder 1, %s9
    %p112 = scmp.lt.s32.totalorder %s9, 3
    %p113 = pnand %p111, %p112
    %p114 = pneg %p113
    // Predicated region
    $region9: #{farnet_forward.12} parent=5 // pred_check
      _
    $region10: #{farnet_forward.12} parent=5 // pred_check_branch
      %116 = sbr.rel (%p113) target = $region12
    $region11: #{farnet_forward.12} parent=5 // pred_region
      %s117 = ssub.s32 %s9, 1
      // Predicated region
      $region13: #{farnet_forward.12} parent=11 // pred_check
        %p118 = pneg %p56
      $region14: #{farnet_forward.12} parent=11 // pred_check_branch
        %120 = sbr.rel (%p118) target = $region16
      $region15: #{farnet_forward.12} parent=11 // pred_region
        _
      $region16: #{farnet_forward.12} parent=11 // pred_fallthru
        _
      // Predicated region
      $region17: #{farnet_forward.12} parent=11 // pred_check
        %p121 = pneg %p77
      $region18: #{farnet_forward.12} parent=11 // pred_check_branch
        %123 = sbr.rel (%p121) target = $region20
      $region19: #{farnet_forward.12} parent=11 // pred_region
        _
      $region20: #{farnet_forward.12} parent=11 // pred_fallthru
        _
    $region12: #{farnet_forward.12} parent=5 // pred_fallthru
      _
    %p124 = scmp.lt.s32.totalorder %s9, 2
    // Predicated region
    $region21: #{farnet_forward.12} parent=5 // pred_check
      %p125 = pneg %p124
    $region22: #{farnet_forward.12} parent=5 // pred_check_branch
      %127 = sbr.rel (%p125) target = $region24
    $region23: #{farnet_forward.12} parent=5 // pred_region
      // Predicated region
      $region25: #{farnet_forward.12} parent=23 // pred_check
        %p128 = pneg %p29
      $region26: #{farnet_forward.12} parent=23 // pred_check_branch
        %130 = sbr.rel (%p128) target = $region28
      $region27: #{farnet_forward.12} parent=23 // pred_region
        %s131 = smul.u32 32, %s9
        %p132 = scmp.lt.s32.totalorder %s131, 63
        %s133 = scalar_select %p132, %s131, 63
        %s134 = smul.addr %s133, 8
        %s135 = scalar_lea.vmem %s0, %s134
        %s136 = smul.u32 32, %s9
      $region28: #{farnet_forward.12} parent=23 // pred_fallthru
        _
    $region24: #{farnet_forward.12} parent=5 // pred_fallthru
      _
    %p137 = scmp.le.s32.totalorder 1, %s9
    %p138 = scmp.lt.s32.totalorder %s9, 3
    %p139 = pnand %p137, %p138
    %p140 = pneg %p139
    // Predicated region
    $region29: #{farnet_forward.12} parent=5 // pred_check
      _
    $region30: #{farnet_forward.12} parent=5 // pred_check_branch
      %142 = sbr.rel (%p139) target = $region32
    $region31: #{farnet_forward.12} parent=5 // pred_region
      %s143 = ssub.s32 %s9, 1
      %s144 = smul.u32 32, %s14
      %p145 = scmp.lt.s32.totalorder %s144, 63
      %s146 = scalar_select %p145, %s144, 63
      %s147 = smul.addr %s146, 8
      %s148 = scalar_lea.vmem %s0, %s147
      %p149 = pneg %p35
      %p150 = pneg %p32
      %p151 = pneg %p56
      %p152 = pneg %p53
      %p153 = pneg %p77
      %p154 = pneg %p74
      %p155 = pneg %p103
      %p156 = pneg %p100
      %s157 = smul.u32 32, %s14
      %p158 = scmp.lt.s32.totalorder %s157, 63
      %s159 = scalar_select %p158, %s157, 63
      %s160 = smul.addr %s159, 8
      %s161 = scalar_lea.vmem %s3, %s160
      %s162 = smul.u32 32, %s14
      %p163 = scmp.lt.s32.totalorder %s162, 63
      %s164 = scalar_select %p163, %s162, 63
      %s165 = smul.addr %s164, 8
      %s166 = scalar_lea.vmem %s0, %s165
      %s167 = smul.u32 32, %s14
      %s168 = smul.u32 32, %s14
      %p169 = scmp.lt.s32.totalorder %s168, 63
      %s170 = scalar_select %p169, %s168, 63
      %s171 = smul.addr %s170, 8
      %s172 = scalar_lea.vmem %s3, %s171
      %s173 = smul.u32 32, %s14
      %v175 = vld [vmem:[%s166] sm:$0xff]
      %v176 = vld [vmem:[%s166 + $0x8] sm:$0xff]
      %v177 = vld [vmem:[%s166 + $0x10] sm:$0xff]
      %v178 = vld [vmem:[%s166 + $0x18] sm:$0xff]
      %v179 = vld [vmem:[%s166 + $0x20] sm:$0xff]
      %v180 = vld [vmem:[%s166 + $0x28] sm:$0xff]
      %v181 = vld [vmem:[%s166 + $0x30] sm:$0xff]
      %v182 = vld [vmem:[%s166 + $0x38] sm:$0xff]
      %v183 = vld [vmem:[%s166 + $0x40] sm:$0xff]
      %v184 = vld [vmem:[%s166 + $0x48] sm:$0xff]
      %v185 = vld [vmem:[%s166 + $0x50] sm:$0xff]
      %v186 = vld [vmem:[%s166 + $0x58] sm:$0xff]
      %v187 = vld [vmem:[%s166 + $0x60] sm:$0xff]
      %v188 = vld [vmem:[%s166 + $0x68] sm:$0xff]
      %v189 = vld [vmem:[%s166 + $0x70] sm:$0xff]
      %v190 = vld [vmem:[%s166 + $0x78] sm:$0xff]
      %v191 = vld [vmem:[%s166 + $0x80] sm:$0xff]
      %v192 = vld [vmem:[%s166 + $0x88] sm:$0xff]
      %v193 = vld [vmem:[%s166 + $0x90] sm:$0xff]
      %v194 = vld [vmem:[%s166 + $0x98] sm:$0xff]
      %v195 = vld [vmem:[%s166 + $0xa0] sm:$0xff]
      %v196 = vld [vmem:[%s166 + $0xa8] sm:$0xff]
      %v197 = vld [vmem:[%s166 + $0xb0] sm:$0xff]
      %v198 = vld [vmem:[%s166 + $0xb8] sm:$0xff]
      %v199 = vld [vmem:[%s166 + $0xc0] sm:$0xff]
      %v200 = vld [vmem:[%s166 + $0xc8] sm:$0xff]
      %v201 = vld [vmem:[%s166 + $0xd0] sm:$0xff]
      %v202 = vld [vmem:[%s166 + $0xd8] sm:$0xff]
      %v203 = vld [vmem:[%s166 + $0xe0] sm:$0xff]
      %v204 = vld [vmem:[%s166 + $0xe8] sm:$0xff]
      %v205 = vld [vmem:[%s166 + $0xf0] sm:$0xff]
      %v206 = vld [vmem:[%s166 + $0xf8] sm:$0xff]
      %v207 = vpack.c.bf16 %v176, %v175
      %v208 = vpack.c.bf16 %v178, %v177
      %v209 = vpack.c.bf16 %v180, %v179
      %v210 = vpack.c.bf16 %v182, %v181
      %v211 = vpack.c.bf16 %v184, %v183
      %v212 = vpack.c.bf16 %v186, %v185
      %v213 = vpack.c.bf16 %v188, %v187
      %v214 = vpack.c.bf16 %v190, %v189
      %v215 = vpack.c.bf16 %v192, %v191
      %v216 = vpack.c.bf16 %v194, %v193
      %v217 = vpack.c.bf16 %v196, %v195
      %v218 = vpack.c.bf16 %v198, %v197
      %v219 = vpack.c.bf16 %v200, %v199
      %v220 = vpack.c.bf16 %v202, %v201
      %v221 = vpack.c.bf16 %v204, %v203
      %v222 = vpack.c.bf16 %v206, %v205
      %v223 = vld [vmem:[%s1] sm:$0x3]
      %v224 = vld [vmem:[%s2] sm:$0x1]
      %v226 = vperm.slane %v224, 0
      %vm228 = vcmask 23552
      %v230 = vsel %vm228, %v207, 0
      %v233 = vsel %vm228, %v208, 0
      %v236 = vsel %vm228, %v209, 0
      %v239 = vsel %vm228, %v210, 0
      %v242 = vsel %vm228, %v211, 0
      %v245 = vsel %vm228, %v212, 0
      %v248 = vsel %vm228, %v213, 0
      %v251 = vsel %vm228, %v214, 0
      %v254 = vsel %vm228, %v215, 0
      %v257 = vsel %vm228, %v216, 0
      %v260 = vsel %vm228, %v217, 0
      %v263 = vsel %vm228, %v218, 0
      %v266 = vsel %vm228, %v219, 0
      %v269 = vsel %vm228, %v220, 0
      %v272 = vsel %vm228, %v221, 0
      %v275 = vsel %vm228, %v222, 0
      %vm277 = vcmask 1040384
      %vm278 = vcmask 1041408
      %v279 = vsel %vm277, 4294967295, 65535
      %v280 = vsel %vm278, %v279, 0
      %v282 = vand.u32 %v223, %v280
      %284 = vmatpush.bf16.msra.mxu0 0
      %285 = vmatpush.bf16.msra.mxu0 0
      %286 = vmatpush.bf16.msra.mxu0 0
      %287 = vmatpush.bf16.msra.mxu0 0
      %288 = vmatpush.bf16.msra.mxu0 0
      %289 = vmatpush.bf16.msra.mxu0 0
      %290 = vmatpush.bf16.msra.mxu0 0
      %291 = vmatpush.bf16.msra.mxu0 %v282
      %292 = vmatmul.bf16.gmra.mxu0 %v230
      %v293 = vpop.f32.mrf.mxu0
      %v294 = vadd.f32 %v226, %v293
      %v295 = vpop.f32.mrf.mxu0
      %v296 = vadd.f32 %v226, %v295
      %297 = vmatmul.bf16.gmra.mxu0 %v233
      %v298 = vpop.f32.mrf.mxu0
      %v299 = vadd.f32 %v226, %v298
      %v300 = vpop.f32.mrf.mxu0
      %v301 = vadd.f32 %v226, %v300
      %302 = vmatmul.bf16.gmra.mxu0 %v236
      %v303 = vpop.f32.mrf.mxu0
      %v304 = vadd.f32 %v226, %v303
      %v305 = vpop.f32.mrf.mxu0
      %v306 = vadd.f32 %v226, %v305
      %307 = vmatmul.bf16.gmra.mxu0 %v239
      %v308 = vpop.f32.mrf.mxu0
      %v309 = vadd.f32 %v226, %v308
      %v310 = vpop.f32.mrf.mxu0
      %v311 = vadd.f32 %v226, %v310
      %312 = vmatmul.bf16.gmra.mxu0 %v242
      %v313 = vpop.f32.mrf.mxu0
      %v314 = vadd.f32 %v226, %v313
      %v315 = vpop.f32.mrf.mxu0
      %v316 = vadd.f32 %v226, %v315
      %317 = vmatmul.bf16.gmra.mxu0 %v245
      %v318 = vpop.f32.mrf.mxu0
      %v319 = vadd.f32 %v226, %v318
      %v320 = vpop.f32.mrf.mxu0
      %v321 = vadd.f32 %v226, %v320
      %322 = vmatmul.bf16.gmra.mxu0 %v248
      %v323 = vpop.f32.mrf.mxu0
      %v324 = vadd.f32 %v226, %v323
      %v325 = vpop.f32.mrf.mxu0
      %v326 = vadd.f32 %v226, %v325
      %327 = vmatmul.bf16.gmra.mxu0 %v251
      %v328 = vpop.f32.mrf.mxu0
      %v329 = vadd.f32 %v226, %v328
      %v330 = vpop.f32.mrf.mxu0
      %v331 = vadd.f32 %v226, %v330
      %332 = vmatmul.bf16.gmra.mxu0 %v254
      %v333 = vpop.f32.mrf.mxu0
      %v334 = vadd.f32 %v226, %v333
      %v335 = vpop.f32.mrf.mxu0
      %v336 = vadd.f32 %v226, %v335
      %337 = vmatmul.bf16.gmra.mxu0 %v257
      %v338 = vpop.f32.mrf.mxu0
      %v339 = vadd.f32 %v226, %v338
      %v340 = vpop.f32.mrf.mxu0
      %v341 = vadd.f32 %v226, %v340
      %342 = vmatmul.bf16.gmra.mxu0 %v260
      %v343 = vpop.f32.mrf.mxu0
      %v344 = vadd.f32 %v226, %v343
      %v345 = vpop.f32.mrf.mxu0
      %v346 = vadd.f32 %v226, %v345
      %347 = vmatmul.bf16.gmra.mxu0 %v263
      %v348 = vpop.f32.mrf.mxu0
      %v349 = vadd.f32 %v226, %v348
      %v350 = vpop.f32.mrf.mxu0
      %v351 = vadd.f32 %v226, %v350
      %352 = vmatmul.bf16.gmra.mxu0 %v266
      %v353 = vpop.f32.mrf.mxu0
      %v354 = vadd.f32 %v226, %v353
      %v355 = vpop.f32.mrf.mxu0
      %v356 = vadd.f32 %v226, %v355
      %357 = vmatmul.bf16.gmra.mxu0 %v269
      %v358 = vpop.f32.mrf.mxu0
      %v359 = vadd.f32 %v226, %v358
      %v360 = vpop.f32.mrf.mxu0
      %v361 = vadd.f32 %v226, %v360
      %362 = vmatmul.bf16.gmra.mxu0 %v272
      %v363 = vpop.f32.mrf.mxu0
      %v364 = vadd.f32 %v226, %v363
      %v365 = vpop.f32.mrf.mxu0
      %v366 = vadd.f32 %v226, %v365
      %367 = vmatmul.bf16.gmra.mxu0 %v275
      %v368 = vpop.f32.mrf.mxu0
      %v369 = vadd.f32 %v226, %v368
      %v370 = vpop.f32.mrf.mxu0
      %v371 = vadd.f32 %v226, %v370
      %372 = vdwg.mxu0
      %v373 = vmax.f32 %v294, 0.0
      %v374 = vmax.f32 %v296, 0.0
      %v375 = vmax.f32 %v299, 0.0
      %v376 = vmax.f32 %v301, 0.0
      %v377 = vmax.f32 %v304, 0.0
      %v378 = vmax.f32 %v306, 0.0
      %v379 = vmax.f32 %v309, 0.0
      %v380 = vmax.f32 %v311, 0.0
      %v381 = vmax.f32 %v314, 0.0
      %v382 = vmax.f32 %v316, 0.0
      %v383 = vmax.f32 %v319, 0.0
      %v384 = vmax.f32 %v321, 0.0
      %v385 = vmax.f32 %v324, 0.0
      %v386 = vmax.f32 %v326, 0.0
      %v387 = vmax.f32 %v329, 0.0
      %v388 = vmax.f32 %v331, 0.0
      %v389 = vmax.f32 %v334, 0.0
      %v390 = vmax.f32 %v336, 0.0
      %v391 = vmax.f32 %v339, 0.0
      %v392 = vmax.f32 %v341, 0.0
      %v393 = vmax.f32 %v344, 0.0
      %v394 = vmax.f32 %v346, 0.0
      %v395 = vmax.f32 %v349, 0.0
      %v396 = vmax.f32 %v351, 0.0
      %v397 = vmax.f32 %v354, 0.0
      %v398 = vmax.f32 %v356, 0.0
      %v399 = vmax.f32 %v359, 0.0
      %v400 = vmax.f32 %v361, 0.0
      %v401 = vmax.f32 %v364, 0.0
      %v402 = vmax.f32 %v366, 0.0
      %v403 = vmax.f32 %v369, 0.0
      %v404 = vmax.f32 %v371, 0.0
      %vm405 = vcmask 261120
      %406 = vst.msk [vmem:[%s172] sm:$0xff] %vm405, %v373
      %407 = vst.msk [vmem:[%s172 + $0x8] sm:$0xff] %vm405, %v374
      %408 = vst.msk [vmem:[%s172 + $0x10] sm:$0xff] %vm405, %v375
      %409 = vst.msk [vmem:[%s172 + $0x18] sm:$0xff] %vm405, %v376
      %410 = vst.msk [vmem:[%s172 + $0x20] sm:$0xff] %vm405, %v377
      %411 = vst.msk [vmem:[%s172 + $0x28] sm:$0xff] %vm405, %v378
      %412 = vst.msk [vmem:[%s172 + $0x30] sm:$0xff] %vm405, %v379
      %413 = vst.msk [vmem:[%s172 + $0x38] sm:$0xff] %vm405, %v380
      %414 = vst.msk [vmem:[%s172 + $0x40] sm:$0xff] %vm405, %v381
      %415 = vst.msk [vmem:[%s172 + $0x48] sm:$0xff] %vm405, %v382
      %416 = vst.msk [vmem:[%s172 + $0x50] sm:$0xff] %vm405, %v383
      %417 = vst.msk [vmem:[%s172 + $0x58] sm:$0xff] %vm405, %v384
      %418 = vst.msk [vmem:[%s172 + $0x60] sm:$0xff] %vm405, %v385
      %419 = vst.msk [vmem:[%s172 + $0x68] sm:$0xff] %vm405, %v386
      %420 = vst.msk [vmem:[%s172 + $0x70] sm:$0xff] %vm405, %v387
      %421 = vst.msk [vmem:[%s172 + $0x78] sm:$0xff] %vm405, %v388
      %422 = vst.msk [vmem:[%s172 + $0x80] sm:$0xff] %vm405, %v389
      %423 = vst.msk [vmem:[%s172 + $0x88] sm:$0xff] %vm405, %v390
      %424 = vst.msk [vmem:[%s172 + $0x90] sm:$0xff] %vm405, %v391
      %425 = vst.msk [vmem:[%s172 + $0x98] sm:$0xff] %vm405, %v392
      %426 = vst.msk [vmem:[%s172 + $0xa0] sm:$0xff] %vm405, %v393
      %427 = vst.msk [vmem:[%s172 + $0xa8] sm:$0xff] %vm405, %v394
      %428 = vst.msk [vmem:[%s172 + $0xb0] sm:$0xff] %vm405, %v395
      %429 = vst.msk [vmem:[%s172 + $0xb8] sm:$0xff] %vm405, %v396
      %430 = vst.msk [vmem:[%s172 + $0xc0] sm:$0xff] %vm405, %v397
      %431 = vst.msk [vmem:[%s172 + $0xc8] sm:$0xff] %vm405, %v398
      %432 = vst.msk [vmem:[%s172 + $0xd0] sm:$0xff] %vm405, %v399
      %433 = vst.msk [vmem:[%s172 + $0xd8] sm:$0xff] %vm405, %v400
      %434 = vst.msk [vmem:[%s172 + $0xe0] sm:$0xff] %vm405, %v401
      %435 = vst.msk [vmem:[%s172 + $0xe8] sm:$0xff] %vm405, %v402
      %436 = vst.msk [vmem:[%s172 + $0xf0] sm:$0xff] %vm405, %v403
      %437 = vst.msk [vmem:[%s172 + $0xf8] sm:$0xff] %vm405, %v404
      %s438 = smul.u32 32, %s14
      %p439 = scmp.lt.s32.totalorder %s438, 63
      %s440 = scalar_select %p439, %s438, 63
      %s441 = smul.addr %s440, 8
      %s442 = scalar_lea.vmem %s3, %s441
      // Predicated region
      $region33: #{farnet_forward.12} parent=31 // pred_check
        %p443 = pneg %p100
      $region34: #{farnet_forward.12} parent=31 // pred_check_branch
        %445 = sbr.rel (%p443) target = $region36
      $region35: #{farnet_forward.12} parent=31 // pred_region
        %s446 = smul.u32 32, %s14
      $region36: #{farnet_forward.12} parent=31 // pred_fallthru
        _
    $region32: #{farnet_forward.12} parent=5 // pred_fallthru
      _
    %p447 = scmp.le.s32.totalorder 2, %s9
    // Predicated region
    $region37: #{farnet_forward.12} parent=5 // pred_check
      %p448 = pneg %p447
    $region38: #{farnet_forward.12} parent=5 // pred_check_branch
      %450 = sbr.rel (%p448) target = $region40
    $region39: #{farnet_forward.12} parent=5 // pred_region
      %s451 = ssub.s32 %s9, 2
      // Predicated region
      $region41: #{farnet_forward.12} parent=39 // pred_check
        %p452 = pneg %p106
      $region42: #{farnet_forward.12} parent=39 // pred_check_branch
        %454 = sbr.rel (%p452) target = $region44
      $region43: #{farnet_forward.12} parent=39 // pred_region
        %s455 = smul.u32 32, %s15
        %p456 = scmp.lt.s32.totalorder %s455, 63
        %s457 = scalar_select %p456, %s455, 63
        %s458 = smul.addr %s457, 8
        %s459 = scalar_lea.vmem %s3, %s458
      $region44: #{farnet_forward.12} parent=39 // pred_fallthru
        _
    $region40: #{farnet_forward.12} parent=5 // pred_fallthru
      _
  $region6: #{farnet_forward.12} parent=0 // loop_footer
    %s13 = sadd.s32 1, %s9
  $region7: #{farnet_forward.12} parent=0 // loop_footer_branch
    %8 = sbr.rel target = $region3
  $region8: #{farnet_forward.12} parent=0 // loop_exit
    _

// kernel: farnet_forward.13
$region0: #{farnet_forward.13}
  #allocation0 [shape = 'u32[]', space=smem, size = 0x4, offset = 0x4, fixed_abs, tag = 'smem constant byte address 0x4 - core index']
  #allocation1 [shape = 'u32[72,128]{1,0:T(1,128)}', space=vmem, size = 0x9000, scoped, tag = 'internal scratch']
  %s0 = inlined_call_operand.vmem [shape: f32[128,32], index: 0, kind: input, shape index: {}]
  %s1 = inlined_call_operand.vmem [shape: bf16[32,64], index: 1, kind: input, shape index: {}]
  %s2 = inlined_call_operand.vmem [shape: f32[1,64], index: 2, kind: input, shape index: {}]
  %s3 = inlined_call_operand.vmem [shape: f32[128,64], index: 3, kind: output, shape index: {}]
  %s4 = sld [smem:[#allocation0]]
  $region45: #{farnet_forward.13} parent=0
    _
  %s6 = ssub.s32 1, %s4
  %s7 = scalar_select 0, %s6, %s4
  loop: start=0, step=1, limit=4
  $region2: #{farnet_forward.13} parent=0 // loop_pre_header
    _
  $region3: #{farnet_forward.13} parent=0 // loop_header
    %s9 = sphi 0, %s13
    %p10 = scmp.ge.s32.totalorder %s9, 4
    %s19 = sphi 0, %s21
    %s22 = sphi 0, %s19
    %s23 = sphi 0, %s22
    %s39 = sphi 0, %s23
    %s43 = sphi 0, %s43
    %s45 = sphi 0, %s43
    %s46 = sphi 0, %s45
    %s60 = sphi 0, %s46
    %s64 = sphi 0, %s64
    %s66 = sphi 0, %s64
    %s67 = sphi 0, %s66
    %s81 = sphi 0, %s67
    %s87 = sphi 0, %s89
    %s90 = sphi 0, %s87
    %s91 = sphi 0, %s90
    %s107 = sphi 0, %s91
  $region4: #{farnet_forward.13} parent=0 // loop_header_branch
    %12 = sbr.rel (%p10) target = $region8
  $region5: #{farnet_forward.13} parent=0 // loop_body
    %s14 = ssub.s32 %s9, 1
    %s15 = ssub.s32 %s9, 2
    %s16 = sadd.s32 %s9, 1
    %s17 = ssub.s32 %s9, %s16
    %p18 = scmp.eq.s32.totalorder %s17, 0
    %s20 = sadd.s32 %s19, 1
    %s21 = scalar_select %p18, %s19, %s20
    %p24 = pneg %p18
    %p25 = scmp.eq.s32.totalorder %s9, 1
    %p26 = por %p24, %p25
    %p27 = scmp.ne.s32.totalorder %s19, %s22
    %p28 = scmp.eq.s32.totalorder %s9, 0
    %p29 = por %p27, %p28
    %p30 = scmp.ne.s32.totalorder %s19, %s22
    %p31 = scmp.eq.s32.totalorder %s14, 1
    %p32 = por %p30, %p31
    %p33 = scmp.ne.s32.totalorder %s22, %s23
    %p34 = scmp.eq.s32.totalorder %s14, 0
    %p35 = por %p33, %p34
    %p36 = scmp.ne.s32.totalorder %s22, %s23
    %p37 = scmp.eq.s32.totalorder %s15, 1
    %p38 = por %p36, %p37
    %p40 = scmp.ne.s32.totalorder %s23, %s39
    %p41 = scmp.eq.s32.totalorder %s15, 0
    %p42 = por %p40, %p41
    %s44 = sadd.s32 %s43, 1
    %p47 = scmp.eq.s32.totalorder %s9, 1
    %p48 = scmp.ne.s32.totalorder %s43, %s45
    %p49 = scmp.eq.s32.totalorder %s9, 0
    %p50 = por %p48, %p49
    %p51 = scmp.ne.s32.totalorder %s43, %s45
    %p52 = scmp.eq.s32.totalorder %s14, 1
    %p53 = por %p51, %p52
    %p54 = scmp.ne.s32.totalorder %s45, %s46
    %p55 = scmp.eq.s32.totalorder %s14, 0
    %p56 = por %p54, %p55
    %p57 = scmp.ne.s32.totalorder %s45, %s46
    %p58 = scmp.eq.s32.totalorder %s15, 1
    %p59 = por %p57, %p58
    %p61 = scmp.ne.s32.totalorder %s46, %s60
    %p62 = scmp.eq.s32.totalorder %s15, 0
    %p63 = por %p61, %p62
    %s65 = sadd.s32 %s64, 1
    %p68 = scmp.eq.s32.totalorder %s9, 1
    %p69 = scmp.ne.s32.totalorder %s64, %s66
    %p70 = scmp.eq.s32.totalorder %s9, 0
    %p71 = por %p69, %p70
    %p72 = scmp.ne.s32.totalorder %s64, %s66
    %p73 = scmp.eq.s32.totalorder %s14, 1
    %p74 = por %p72, %p73
    %p75 = scmp.ne.s32.totalorder %s66, %s67
    %p76 = scmp.eq.s32.totalorder %s14, 0
    %p77 = por %p75, %p76
    %p78 = scmp.ne.s32.totalorder %s66, %s67
    %p79 = scmp.eq.s32.totalorder %s15, 1
    %p80 = por %p78, %p79
    %p82 = scmp.ne.s32.totalorder %s67, %s81
    %p83 = scmp.eq.s32.totalorder %s15, 0
    %p84 = por %p82, %p83
    %s85 = ssub.s32 %s9, %s16
    %p86 = scmp.eq.s32.totalorder %s85, 0
    %s88 = sadd.s32 %s87, 1
    %s89 = scalar_select %p86, %s87, %s88
    %p92 = pneg %p86
    %p93 = scmp.eq.s32.totalorder %s9, 1
    %p94 = por %p92, %p93
    %p95 = scmp.ne.s32.totalorder %s87, %s90
    %p96 = scmp.eq.s32.totalorder %s9, 0
    %p97 = por %p95, %p96
    %p98 = scmp.ne.s32.totalorder %s87, %s90
    %p99 = scmp.eq.s32.totalorder %s14, 1
    %p100 = por %p98, %p99
    %p101 = scmp.ne.s32.totalorder %s90, %s91
    %p102 = scmp.eq.s32.totalorder %s14, 0
    %p103 = por %p101, %p102
    %p104 = scmp.ne.s32.totalorder %s90, %s91
    %p105 = scmp.eq.s32.totalorder %s15, 1
    %p106 = por %p104, %p105
    %p108 = scmp.ne.s32.totalorder %s91, %s107
    %p109 = scmp.eq.s32.totalorder %s15, 0
    %p110 = por %p108, %p109
    %p111 = scmp.le.s32.totalorder 1, %s9
    %p112 = scmp.lt.s32.totalorder %s9, 3
    %p113 = pnand %p111, %p112
    %p114 = pneg %p113
    // Predicated region
    $region9: #{farnet_forward.13} parent=5 // pred_check
      _
    $region10: #{farnet_forward.13} parent=5 // pred_check_branch
      %116 = sbr.rel (%p113) target = $region12
    $region11: #{farnet_forward.13} parent=5 // pred_region
      %s117 = ssub.s32 %s9, 1
      // Predicated region
      $region13: #{farnet_forward.13} parent=11 // pred_check
        %p118 = pneg %p56
      $region14: #{farnet_forward.13} parent=11 // pred_check_branch
        %120 = sbr.rel (%p118) target = $region16
      $region15: #{farnet_forward.13} parent=11 // pred_region
        _
      $region16: #{farnet_forward.13} parent=11 // pred_fallthru
        _
      // Predicated region
      $region17: #{farnet_forward.13} parent=11 // pred_check
        %p121 = pneg %p77
      $region18: #{farnet_forward.13} parent=11 // pred_check_branch
        %123 = sbr.rel (%p121) target = $region20
      $region19: #{farnet_forward.13} parent=11 // pred_region
        _
      $region20: #{farnet_forward.13} parent=11 // pred_fallthru
        _
    $region12: #{farnet_forward.13} parent=5 // pred_fallthru
      _
    %p124 = scmp.lt.s32.totalorder %s9, 2
    // Predicated region
    $region21: #{farnet_forward.13} parent=5 // pred_check
      %p125 = pneg %p124
    $region22: #{farnet_forward.13} parent=5 // pred_check_branch
      %127 = sbr.rel (%p125) target = $region24
    $region23: #{farnet_forward.13} parent=5 // pred_region
      // Predicated region
      $region25: #{farnet_forward.13} parent=23 // pred_check
        %p128 = pneg %p29
      $region26: #{farnet_forward.13} parent=23 // pred_check_branch
        %130 = sbr.rel (%p128) target = $region28
      $region27: #{farnet_forward.13} parent=23 // pred_region
        %s131 = smul.u32 8, %s9
        %p132 = scmp.lt.s32.totalorder %s131, 15
        %s133 = scalar_select %p132, %s131, 15
        %s134 = smul.addr %s133, 8
        %s135 = scalar_lea.vmem %s0, %s134
        %s136 = smul.u32 8, %s9
      $region28: #{farnet_forward.13} parent=23 // pred_fallthru
        _
    $region24: #{farnet_forward.13} parent=5 // pred_fallthru
      _
    %p137 = scmp.le.s32.totalorder 1, %s9
    %p138 = scmp.lt.s32.totalorder %s9, 3
    %p139 = pnand %p137, %p138
    %p140 = pneg %p139
    // Predicated region
    $region29: #{farnet_forward.13} parent=5 // pred_check
      _
    $region30: #{farnet_forward.13} parent=5 // pred_check_branch
      %142 = sbr.rel (%p139) target = $region32
    $region31: #{farnet_forward.13} parent=5 // pred_region
      %s143 = ssub.s32 %s9, 1
      %s144 = smul.u32 8, %s14
      %p145 = scmp.lt.s32.totalorder %s144, 15
      %s146 = scalar_select %p145, %s144, 15
      %s147 = smul.addr %s146, 8
      %s148 = scalar_lea.vmem %s0, %s147
      %p149 = pneg %p35
      %p150 = pneg %p32
      %p151 = pneg %p56
      %p152 = pneg %p53
      %p153 = pneg %p77
      %p154 = pneg %p74
      %p155 = pneg %p103
      %p156 = pneg %p100
      %s157 = smul.u32 8, %s14
      %p158 = scmp.lt.s32.totalorder %s157, 15
      %s159 = scalar_select %p158, %s157, 15
      %s160 = smul.addr %s159, 8
      %s161 = scalar_lea.vmem %s3, %s160
      %s162 = smul.u32 8, %s14
      %p163 = scmp.lt.s32.totalorder %s162, 15
      %s164 = scalar_select %p163, %s162, 15
      %s165 = smul.addr %s164, 8
      %s166 = scalar_lea.vmem %s0, %s165
      %s167 = smul.u32 8, %s14
      %s168 = smul.u32 8, %s14
      %p169 = scmp.lt.s32.totalorder %s168, 15
      %s170 = scalar_select %p169, %s168, 15
      %s171 = smul.addr %s170, 8
      %s172 = scalar_lea.vmem %s3, %s171
      %s173 = smul.u32 8, %s14
      %v175 = vld [vmem:[%s166] sm:$0xff]
      %v176 = vld [vmem:[%s166 + $0x8] sm:$0xff]
      %v177 = vld [vmem:[%s166 + $0x10] sm:$0xff]
      %v178 = vld [vmem:[%s166 + $0x18] sm:$0xff]
      %v179 = vld [vmem:[%s166 + $0x20] sm:$0xff]
      %v180 = vld [vmem:[%s166 + $0x28] sm:$0xff]
      %v181 = vld [vmem:[%s166 + $0x30] sm:$0xff]
      %v182 = vld [vmem:[%s166 + $0x38] sm:$0xff]
      %v183 = vpack.c.bf16 %v176, %v175
      %v184 = vpack.c.bf16 %v178, %v177
      %v185 = vpack.c.bf16 %v180, %v179
      %v186 = vpack.c.bf16 %v182, %v181
      %v187 = vld [vmem:[%s1] sm:$0xf]
      %v188 = vld [vmem:[%s1 + $0x4] sm:$0xf]
      %v189 = vld [vmem:[%s1 + $0x8] sm:$0xf]
      %v190 = vld [vmem:[%s1 + $0xc] sm:$0xf]
      %v191 = vld [vmem:[%s2] sm:$0x1]
      %v193 = vperm.slane %v191, 0
      %v199 = vunpack.c.l.b16 %v187
      %v200 = vunpack.c.l.b16 %v188
      %v201 = vunpack.c.l.b16 %v189
      %v202 = vunpack.c.l.b16 %v190
      %v203 = vpack.c.b16 %v200, %v199
      %v204 = vpack.c.b16 %v202, %v201
      %vm207 = vcmask 261120
      %v209 = vsel %vm207, %v183, 0
      %v212 = vsel %vm207, %v184, 0
      %v215 = vsel %vm207, %v185, 0
      %v218 = vsel %vm207, %v186, 0
      %220 = vmatpush.bf16.msra.mxu0 0
      %221 = vmatpush.bf16.msra.mxu0 0
      %222 = vmatpush.bf16.msra.mxu0 0
      %223 = vmatpush.bf16.msra.mxu0 0
      %224 = vmatpush.bf16.msra.mxu0 0
      %225 = vmatpush.bf16.msra.mxu0 0
      %226 = vmatpush.bf16.msra.mxu0 %v204
      %227 = vmatpush.bf16.msra.mxu0 %v203
      %228 = vmatmul.bf16.gmra.mxu0 %v209
      %v229 = vpop.f32.mrf.mxu0
      %v230 = vadd.f32 %v193, %v229
      %v231 = vpop.f32.mrf.mxu0
      %v232 = vadd.f32 %v193, %v231
      %233 = vmatmul.bf16.gmra.mxu0 %v212
      %v234 = vpop.f32.mrf.mxu0
      %v235 = vadd.f32 %v193, %v234
      %v236 = vpop.f32.mrf.mxu0
      %v237 = vadd.f32 %v193, %v236
      %238 = vmatmul.bf16.gmra.mxu0 %v215
      %v239 = vpop.f32.mrf.mxu0
      %v240 = vadd.f32 %v193, %v239
      %v241 = vpop.f32.mrf.mxu0
      %v242 = vadd.f32 %v193, %v241
      %243 = vmatmul.bf16.gmra.mxu0 %v218
      %v244 = vpop.f32.mrf.mxu0
      %v245 = vadd.f32 %v193, %v244
      %v246 = vpop.f32.mrf.mxu0
      %v247 = vadd.f32 %v193, %v246
      %248 = vdwg.mxu0
      %v249 = vmax.f32 %v230, 0.0
      %v250 = vmax.f32 %v232, 0.0
      %v251 = vmax.f32 %v235, 0.0
      %v252 = vmax.f32 %v237, 0.0
      %v253 = vmax.f32 %v240, 0.0
      %v254 = vmax.f32 %v242, 0.0
      %v255 = vmax.f32 %v245, 0.0
      %v256 = vmax.f32 %v247, 0.0
      %vm257 = vcmask 523264
      %258 = vst.msk [vmem:[%s172] sm:$0xff] %vm257, %v249
      %259 = vst.msk [vmem:[%s172 + $0x8] sm:$0xff] %vm257, %v250
      %260 = vst.msk [vmem:[%s172 + $0x10] sm:$0xff] %vm257, %v251
      %261 = vst.msk [vmem:[%s172 + $0x18] sm:$0xff] %vm257, %v252
      %262 = vst.msk [vmem:[%s172 + $0x20] sm:$0xff] %vm257, %v253
      %263 = vst.msk [vmem:[%s172 + $0x28] sm:$0xff] %vm257, %v254
      %264 = vst.msk [vmem:[%s172 + $0x30] sm:$0xff] %vm257, %v255
      %265 = vst.msk [vmem:[%s172 + $0x38] sm:$0xff] %vm257, %v256
      %s266 = smul.u32 8, %s14
      %p267 = scmp.lt.s32.totalorder %s266, 15
      %s268 = scalar_select %p267, %s266, 15
      %s269 = smul.addr %s268, 8
      %s270 = scalar_lea.vmem %s3, %s269
      // Predicated region
      $region33: #{farnet_forward.13} parent=31 // pred_check
        %p271 = pneg %p100
      $region34: #{farnet_forward.13} parent=31 // pred_check_branch
        %273 = sbr.rel (%p271) target = $region36
      $region35: #{farnet_forward.13} parent=31 // pred_region
        %s274 = smul.u32 8, %s14
      $region36: #{farnet_forward.13} parent=31 // pred_fallthru
        _
    $region32: #{farnet_forward.13} parent=5 // pred_fallthru
      _
    %p275 = scmp.le.s32.totalorder 2, %s9
    // Predicated region
    $region37: #{farnet_forward.13} parent=5 // pred_check
      %p276 = pneg %p275
    $region38: #{farnet_forward.13} parent=5 // pred_check_branch
      %278 = sbr.rel (%p276) target = $region40
    $region39: #{farnet_forward.13} parent=5 // pred_region
      %s279 = ssub.s32 %s9, 2
      // Predicated region
      $region41: #{farnet_forward.13} parent=39 // pred_check
        %p280 = pneg %p106
      $region42: #{farnet_forward.13} parent=39 // pred_check_branch
        %282 = sbr.rel (%p280) target = $region44
      $region43: #{farnet_forward.13} parent=39 // pred_region
        %s283 = smul.u32 8, %s15
        %p284 = scmp.lt.s32.totalorder %s283, 15
        %s285 = scalar_select %p284, %s283, 15
        %s286 = smul.addr %s285, 8
        %s287 = scalar_lea.vmem %s3, %s286
      $region44: #{farnet_forward.13} parent=39 // pred_fallthru
        _
    $region40: #{farnet_forward.13} parent=5 // pred_fallthru
      _
  $region6: #{farnet_forward.13} parent=0 // loop_footer
    %s13 = sadd.s32 1, %s9
  $region7: #{farnet_forward.13} parent=0 // loop_footer_branch
    %8 = sbr.rel target = $region3
  $region8: #{farnet_forward.13} parent=0 // loop_exit
    _

// kernel: farnet_forward.19
$region0: #{farnet_forward.19}
  #allocation0 [shape = 'u32[]', space=smem, size = 0x4, offset = 0x4, fixed_abs, tag = 'smem constant byte address 0x4 - core index']
  #allocation1 [shape = 'u32[72,128]{1,0:T(1,128)}', space=vmem, size = 0x9000, scoped, tag = 'internal scratch']
  %s0 = inlined_call_operand.vmem [shape: bf16[128,288], index: 0, kind: input, shape index: {}]
  %s1 = inlined_call_operand.vmem [shape: bf16[288,32], index: 1, kind: input, shape index: {}]
  %s2 = inlined_call_operand.vmem [shape: f32[1,32], index: 2, kind: input, shape index: {}]
  %s3 = inlined_call_operand.vmem [shape: f32[128,32], index: 3, kind: output, shape index: {}]
  %s4 = sld [smem:[#allocation0]]
  $region45: #{farnet_forward.19} parent=0
    _
  %s6 = ssub.s32 1, %s4
  %s7 = scalar_select 0, %s6, %s4
  loop: start=0, step=1, limit=4
  $region2: #{farnet_forward.19} parent=0 // loop_pre_header
    _
  $region3: #{farnet_forward.19} parent=0 // loop_header
    %s9 = sphi 0, %s13
    %p10 = scmp.ge.s32.totalorder %s9, 4
    %s19 = sphi 0, %s21
    %s22 = sphi 0, %s19
    %s23 = sphi 0, %s22
    %s39 = sphi 0, %s23
    %s43 = sphi 0, %s43
    %s45 = sphi 0, %s43
    %s46 = sphi 0, %s45
    %s60 = sphi 0, %s46
    %s64 = sphi 0, %s64
    %s66 = sphi 0, %s64
    %s67 = sphi 0, %s66
    %s81 = sphi 0, %s67
    %s87 = sphi 0, %s89
    %s90 = sphi 0, %s87
    %s91 = sphi 0, %s90
    %s107 = sphi 0, %s91
  $region4: #{farnet_forward.19} parent=0 // loop_header_branch
    %12 = sbr.rel (%p10) target = $region8
  $region5: #{farnet_forward.19} parent=0 // loop_body
    %s14 = ssub.s32 %s9, 1
    %s15 = ssub.s32 %s9, 2
    %s16 = sadd.s32 %s9, 1
    %s17 = ssub.s32 %s9, %s16
    %p18 = scmp.eq.s32.totalorder %s17, 0
    %s20 = sadd.s32 %s19, 1
    %s21 = scalar_select %p18, %s19, %s20
    %p24 = pneg %p18
    %p25 = scmp.eq.s32.totalorder %s9, 1
    %p26 = por %p24, %p25
    %p27 = scmp.ne.s32.totalorder %s19, %s22
    %p28 = scmp.eq.s32.totalorder %s9, 0
    %p29 = por %p27, %p28
    %p30 = scmp.ne.s32.totalorder %s19, %s22
    %p31 = scmp.eq.s32.totalorder %s14, 1
    %p32 = por %p30, %p31
    %p33 = scmp.ne.s32.totalorder %s22, %s23
    %p34 = scmp.eq.s32.totalorder %s14, 0
    %p35 = por %p33, %p34
    %p36 = scmp.ne.s32.totalorder %s22, %s23
    %p37 = scmp.eq.s32.totalorder %s15, 1
    %p38 = por %p36, %p37
    %p40 = scmp.ne.s32.totalorder %s23, %s39
    %p41 = scmp.eq.s32.totalorder %s15, 0
    %p42 = por %p40, %p41
    %s44 = sadd.s32 %s43, 1
    %p47 = scmp.eq.s32.totalorder %s9, 1
    %p48 = scmp.ne.s32.totalorder %s43, %s45
    %p49 = scmp.eq.s32.totalorder %s9, 0
    %p50 = por %p48, %p49
    %p51 = scmp.ne.s32.totalorder %s43, %s45
    %p52 = scmp.eq.s32.totalorder %s14, 1
    %p53 = por %p51, %p52
    %p54 = scmp.ne.s32.totalorder %s45, %s46
    %p55 = scmp.eq.s32.totalorder %s14, 0
    %p56 = por %p54, %p55
    %p57 = scmp.ne.s32.totalorder %s45, %s46
    %p58 = scmp.eq.s32.totalorder %s15, 1
    %p59 = por %p57, %p58
    %p61 = scmp.ne.s32.totalorder %s46, %s60
    %p62 = scmp.eq.s32.totalorder %s15, 0
    %p63 = por %p61, %p62
    %s65 = sadd.s32 %s64, 1
    %p68 = scmp.eq.s32.totalorder %s9, 1
    %p69 = scmp.ne.s32.totalorder %s64, %s66
    %p70 = scmp.eq.s32.totalorder %s9, 0
    %p71 = por %p69, %p70
    %p72 = scmp.ne.s32.totalorder %s64, %s66
    %p73 = scmp.eq.s32.totalorder %s14, 1
    %p74 = por %p72, %p73
    %p75 = scmp.ne.s32.totalorder %s66, %s67
    %p76 = scmp.eq.s32.totalorder %s14, 0
    %p77 = por %p75, %p76
    %p78 = scmp.ne.s32.totalorder %s66, %s67
    %p79 = scmp.eq.s32.totalorder %s15, 1
    %p80 = por %p78, %p79
    %p82 = scmp.ne.s32.totalorder %s67, %s81
    %p83 = scmp.eq.s32.totalorder %s15, 0
    %p84 = por %p82, %p83
    %s85 = ssub.s32 %s9, %s16
    %p86 = scmp.eq.s32.totalorder %s85, 0
    %s88 = sadd.s32 %s87, 1
    %s89 = scalar_select %p86, %s87, %s88
    %p92 = pneg %p86
    %p93 = scmp.eq.s32.totalorder %s9, 1
    %p94 = por %p92, %p93
    %p95 = scmp.ne.s32.totalorder %s87, %s90
    %p96 = scmp.eq.s32.totalorder %s9, 0
    %p97 = por %p95, %p96
    %p98 = scmp.ne.s32.totalorder %s87, %s90
    %p99 = scmp.eq.s32.totalorder %s14, 1
    %p100 = por %p98, %p99
    %p101 = scmp.ne.s32.totalorder %s90, %s91
    %p102 = scmp.eq.s32.totalorder %s14, 0
    %p103 = por %p101, %p102
    %p104 = scmp.ne.s32.totalorder %s90, %s91
    %p105 = scmp.eq.s32.totalorder %s15, 1
    %p106 = por %p104, %p105
    %p108 = scmp.ne.s32.totalorder %s91, %s107
    %p109 = scmp.eq.s32.totalorder %s15, 0
    %p110 = por %p108, %p109
    %p111 = scmp.le.s32.totalorder 1, %s9
    %p112 = scmp.lt.s32.totalorder %s9, 3
    %p113 = pnand %p111, %p112
    %p114 = pneg %p113
    // Predicated region
    $region9: #{farnet_forward.19} parent=5 // pred_check
      _
    $region10: #{farnet_forward.19} parent=5 // pred_check_branch
      %116 = sbr.rel (%p113) target = $region12
    $region11: #{farnet_forward.19} parent=5 // pred_region
      %s117 = ssub.s32 %s9, 1
      // Predicated region
      $region13: #{farnet_forward.19} parent=11 // pred_check
        %p118 = pneg %p56
      $region14: #{farnet_forward.19} parent=11 // pred_check_branch
        %120 = sbr.rel (%p118) target = $region16
      $region15: #{farnet_forward.19} parent=11 // pred_region
        _
      $region16: #{farnet_forward.19} parent=11 // pred_fallthru
        _
      // Predicated region
      $region17: #{farnet_forward.19} parent=11 // pred_check
        %p121 = pneg %p77
      $region18: #{farnet_forward.19} parent=11 // pred_check_branch
        %123 = sbr.rel (%p121) target = $region20
      $region19: #{farnet_forward.19} parent=11 // pred_region
        _
      $region20: #{farnet_forward.19} parent=11 // pred_fallthru
        _
    $region12: #{farnet_forward.19} parent=5 // pred_fallthru
      _
    %p124 = scmp.lt.s32.totalorder %s9, 2
    // Predicated region
    $region21: #{farnet_forward.19} parent=5 // pred_check
      %p125 = pneg %p124
    $region22: #{farnet_forward.19} parent=5 // pred_check_branch
      %127 = sbr.rel (%p125) target = $region24
    $region23: #{farnet_forward.19} parent=5 // pred_region
      // Predicated region
      $region25: #{farnet_forward.19} parent=23 // pred_check
        %p128 = pneg %p29
      $region26: #{farnet_forward.19} parent=23 // pred_check_branch
        %130 = sbr.rel (%p128) target = $region28
      $region27: #{farnet_forward.19} parent=23 // pred_region
        %s131 = smul.u32 8, %s9
        %p132 = scmp.lt.s32.totalorder %s131, 15
        %s133 = scalar_select %p132, %s131, 15
        %s134 = smul.addr %s133, 3
        %s135 = smul.addr %s134, 4
        %s136 = scalar_lea.vmem %s0, %s135
        %s137 = smul.u32 8, %s9
      $region28: #{farnet_forward.19} parent=23 // pred_fallthru
        _
    $region24: #{farnet_forward.19} parent=5 // pred_fallthru
      _
    %p138 = scmp.le.s32.totalorder 1, %s9
    %p139 = scmp.lt.s32.totalorder %s9, 3
    %p140 = pnand %p138, %p139
    %p141 = pneg %p140
    // Predicated region
    $region29: #{farnet_forward.19} parent=5 // pred_check
      _
    $region30: #{farnet_forward.19} parent=5 // pred_check_branch
      %143 = sbr.rel (%p140) target = $region32
    $region31: #{farnet_forward.19} parent=5 // pred_region
      %s144 = ssub.s32 %s9, 1
      %s145 = smul.u32 8, %s14
      %p146 = scmp.lt.s32.totalorder %s145, 15
      %s147 = scalar_select %p146, %s145, 15
      %s148 = smul.addr %s147, 3
      %s149 = smul.addr %s148, 4
      %s150 = scalar_lea.vmem %s0, %s149
      %p151 = pneg %p35
      %p152 = pneg %p32
      %p153 = pneg %p56
      %p154 = pneg %p53
      %p155 = pneg %p77
      %p156 = pneg %p74
      %p157 = pneg %p103
      %p158 = pneg %p100
      %s159 = smul.u32 8, %s14
      %p160 = scmp.lt.s32.totalorder %s159, 15
      %s161 = scalar_select %p160, %s159, 15
      %s162 = smul.addr %s161, 8
      %s163 = scalar_lea.vmem %s3, %s162
      %s164 = smul.u32 8, %s14
      %p165 = scmp.lt.s32.totalorder %s164, 15
      %s166 = scalar_select %p165, %s164, 15
      %s167 = smul.addr %s166, 3
      %s168 = smul.addr %s167, 4
      %s169 = scalar_lea.vmem %s0, %s168
      %s170 = smul.u32 8, %s14
      %s171 = smul.u32 8, %s14
      %p172 = scmp.lt.s32.totalorder %s171, 15
      %s173 = scalar_select %p172, %s171, 15
      %s174 = smul.addr %s173, 8
      %s175 = scalar_lea.vmem %s3, %s174
      %s176 = smul.u32 8, %s14
      %v178 = vld [vmem:[%s169] sm:$0xff]
      %v179 = vld [vmem:[%s169 + $0x8] sm:$0xf]
      %v180 = vld [vmem:[%s169 + $0xc] sm:$0xff]
      %v181 = vld [vmem:[%s169 + $0x14] sm:$0xf]
      %v182 = vld [vmem:[%s169 + $0x18] sm:$0xff]
      %v183 = vld [vmem:[%s169 + $0x20] sm:$0xf]
      %v184 = vld [vmem:[%s169 + $0x24] sm:$0xff]
      %v185 = vld [vmem:[%s169 + $0x2c] sm:$0xf]
      %v186 = vld [vmem:[%s169 + $0x30] sm:$0xff]
      %v187 = vld [vmem:[%s169 + $0x38] sm:$0xf]
      %v188 = vld [vmem:[%s169 + $0x3c] sm:$0xff]
      %v189 = vld [vmem:[%s169 + $0x44] sm:$0xf]
      %v190 = vld [vmem:[%s169 + $0x48] sm:$0xff]
      %v191 = vld [vmem:[%s169 + $0x50] sm:$0xf]
      %v192 = vld [vmem:[%s169 + $0x54] sm:$0xff]
      %v193 = vld [vmem:[%s169 + $0x5c] sm:$0xf]
      %v194 = vld [vmem:[%s1] sm:$0xf]
      %v195 = vld [vmem:[%s1 + $0x4] sm:$0xf]
      %v196 = vld [vmem:[%s1 + $0x8] sm:$0xf]
      %v197 = vld [vmem:[%s1 + $0xc] sm:$0xf]
      %v198 = vld [vmem:[%s1 + $0x10] sm:$0xf]
      %v199 = vld [vmem:[%s1 + $0x14] sm:$0xf]
      %v200 = vld [vmem:[%s1 + $0x18] sm:$0xf]
      %v201 = vld [vmem:[%s1 + $0x1c] sm:$0xf]
      %v202 = vld [vmem:[%s1 + $0x20] sm:$0xf]
      %v203 = vld [vmem:[%s1 + $0x24] sm:$0xf]
      %v204 = vld [vmem:[%s1 + $0x28] sm:$0xf]
      %v205 = vld [vmem:[%s1 + $0x2c] sm:$0xf]
      %v206 = vld [vmem:[%s1 + $0x30] sm:$0xf]
      %v207 = vld [vmem:[%s1 + $0x34] sm:$0xf]
      %v208 = vld [vmem:[%s1 + $0x38] sm:$0xf]
      %v209 = vld [vmem:[%s1 + $0x3c] sm:$0xf]
      %v210 = vld [vmem:[%s1 + $0x40] sm:$0xf]
      %v211 = vld [vmem:[%s1 + $0x44] sm:$0xf]
      %v212 = vld [vmem:[%s1 + $0x48] sm:$0xf]
      %v213 = vld [vmem:[%s1 + $0x4c] sm:$0xf]
      %v214 = vld [vmem:[%s1 + $0x50] sm:$0xf]
      %v215 = vld [vmem:[%s1 + $0x54] sm:$0xf]
      %v216 = vld [vmem:[%s1 + $0x58] sm:$0xf]
      %v217 = vld [vmem:[%s1 + $0x5c] sm:$0xf]
      %v218 = vld [vmem:[%s1 + $0x60] sm:$0xf]
      %v219 = vld [vmem:[%s1 + $0x64] sm:$0xf]
      %v220 = vld [vmem:[%s1 + $0x68] sm:$0xf]
      %v221 = vld [vmem:[%s1 + $0x6c] sm:$0xf]
      %v222 = vld [vmem:[%s1 + $0x70] sm:$0xf]
      %v223 = vld [vmem:[%s1 + $0x74] sm:$0xf]
      %v224 = vld [vmem:[%s1 + $0x78] sm:$0xf]
      %v225 = vld [vmem:[%s1 + $0x7c] sm:$0xf]
      %v226 = vld [vmem:[%s1 + $0x80] sm:$0xf]
      %v227 = vld [vmem:[%s1 + $0x84] sm:$0xf]
      %v228 = vld [vmem:[%s1 + $0x88] sm:$0xf]
      %v229 = vld [vmem:[%s1 + $0x8c] sm:$0xf]
      %v230 = vld [vmem:[%s2] sm:$0x1]
      %v232 = vperm.slane %v230, 0
      %v250 = vunpack.c.l.b16 %v178
      %v251 = vunpack.c.h.b16 %v178
      %v252 = vunpack.c.l.b16 %v179
      %v253 = vunpack.c.l.b16 %v180
      %v254 = vunpack.c.h.b16 %v180
      %v255 = vunpack.c.l.b16 %v181
      %v256 = vunpack.c.l.b16 %v182
      %v257 = vunpack.c.h.b16 %v182
      %v258 = vunpack.c.l.b16 %v183
      %v259 = vunpack.c.l.b16 %v184
      %v260 = vunpack.c.h.b16 %v184
      %v261 = vunpack.c.l.b16 %v185
      %v262 = vunpack.c.l.b16 %v186
      %v263 = vunpack.c.h.b16 %v186
      %v264 = vunpack.c.l.b16 %v187
      %v265 = vunpack.c.l.b16 %v188
      %v266 = vunpack.c.h.b16 %v188
      %v267 = vunpack.c.l.b16 %v189
      %v268 = vunpack.c.l.b16 %v190
      %v269 = vunpack.c.h.b16 %v190
      %v270 = vunpack.c.l.b16 %v191
      %v271 = vunpack.c.l.b16 %v192
      %v272 = vunpack.c.h.b16 %v192
      %v273 = vunpack.c.l.b16 %v193
      %v274 = vpack.c.b16 %v253, %v250
      %v275 = vpack.c.b16 %v254, %v251
      %v276 = vpack.c.b16 %v255, %v252
      %v277 = vpack.c.b16 %v259, %v256
      %v278 = vpack.c.b16 %v260, %v257
      %v279 = vpack.c.b16 %v261, %v258
      %v280 = vpack.c.b16 %v265, %v262
      %v281 = vpack.c.b16 %v266, %v263
      %v282 = vpack.c.b16 %v267, %v264
      %v283 = vpack.c.b16 %v271, %v268
      %v284 = vpack.c.b16 %v272, %v269
      %v285 = vpack.c.b16 %v273, %v270
      %v330 = vunpack.c.l.b16 %v194
      %v331 = vunpack.c.l.b16 %v195
      %v332 = vunpack.c.l.b16 %v196
      %v333 = vunpack.c.l.b16 %v197
      %v334 = vunpack.c.l.b16 %v198
      %v335 = vunpack.c.l.b16 %v199
      %v336 = vunpack.c.l.b16 %v200
      %v337 = vunpack.c.l.b16 %v201
      %v338 = vunpack.c.l.b16 %v202
      %v339 = vunpack.c.l.b16 %v203
      %v340 = vunpack.c.l.b16 %v204
      %v341 = vunpack.c.l.b16 %v205
      %v342 = vunpack.c.l.b16 %v206
      %v343 = vunpack.c.l.b16 %v207
      %v344 = vunpack.c.l.b16 %v208
      %v345 = vunpack.c.l.b16 %v209
      %v346 = vunpack.c.l.b16 %v210
      %v347 = vunpack.c.l.b16 %v211
      %v348 = vunpack.c.l.b16 %v212
      %v349 = vunpack.c.l.b16 %v213
      %v350 = vunpack.c.l.b16 %v214
      %v351 = vunpack.c.l.b16 %v215
      %v352 = vunpack.c.l.b16 %v216
      %v353 = vunpack.c.l.b16 %v217
      %v354 = vunpack.c.l.b16 %v218
      %v355 = vunpack.c.l.b16 %v219
      %v356 = vunpack.c.l.b16 %v220
      %v357 = vunpack.c.l.b16 %v221
      %v358 = vunpack.c.l.b16 %v222
      %v359 = vunpack.c.l.b16 %v223
      %v360 = vunpack.c.l.b16 %v224
      %v361 = vunpack.c.l.b16 %v225
      %v362 = vunpack.c.l.b16 %v226
      %v363 = vunpack.c.l.b16 %v227
      %v364 = vunpack.c.l.b16 %v228
      %v365 = vunpack.c.l.b16 %v229
      %v366 = vpack.c.b16 %v331, %v330
      %v367 = vpack.c.b16 %v333, %v332
      %v368 = vpack.c.b16 %v335, %v334
      %v369 = vpack.c.b16 %v337, %v336
      %v370 = vpack.c.b16 %v339, %v338
      %v371 = vpack.c.b16 %v341, %v340
      %v372 = vpack.c.b16 %v343, %v342
      %v373 = vpack.c.b16 %v345, %v344
      %v374 = vpack.c.b16 %v347, %v346
      %v375 = vpack.c.b16 %v349, %v348
      %v376 = vpack.c.b16 %v351, %v350
      %v377 = vpack.c.b16 %v353, %v352
      %v378 = vpack.c.b16 %v355, %v354
      %v379 = vpack.c.b16 %v357, %v356
      %v380 = vpack.c.b16 %v359, %v358
      %v381 = vpack.c.b16 %v361, %v360
      %v382 = vpack.c.b16 %v363, %v362
      %v383 = vpack.c.b16 %v365, %v364
      %vm402 = vcmask 261120
      %v404 = vsel %vm402, %v276, 0
      %v407 = vsel %vm402, %v279, 0
      %v410 = vsel %vm402, %v282, 0
      %v413 = vsel %vm402, %v285, 0
      %415 = vmatpush.bf16.msra.mxu0 %v373
      %416 = vmatpush.bf16.msra.mxu0 %v372
      %417 = vmatpush.bf16.msra.mxu0 %v371
      %418 = vmatpush.bf16.msra.mxu0 %v370
      %419 = vmatpush.bf16.msra.mxu0 %v369
      %420 = vmatpush.bf16.msra.mxu0 %v368
      %421 = vmatpush.bf16.msra.mxu0 %v367
      %422 = vmatpush.bf16.msra.mxu0 %v366
      %423 = vmatmul.bf16.gmra.mxu0 %v274
      %v424 = vpop.f32.mrf.mxu0
      %v425 = vadd.f32 %v232, %v424
      %v426 = vpop.f32.mrf.mxu0
      %v427 = vadd.f32 %v232, %v426
      %428 = vmatmul.bf16.gmra.mxu0 %v277
      %v429 = vpop.f32.mrf.mxu0
      %v430 = vadd.f32 %v232, %v429
      %v431 = vpop.f32.mrf.mxu0
      %v432 = vadd.f32 %v232, %v431
      %433 = vmatmul.bf16.gmra.mxu0 %v280
      %v434 = vpop.f32.mrf.mxu0
      %v435 = vadd.f32 %v232, %v434
      %v436 = vpop.f32.mrf.mxu0
      %v437 = vadd.f32 %v232, %v436
      %438 = vmatmul.bf16.gmra.mxu0 %v283
      %v439 = vpop.f32.mrf.mxu0
      %v440 = vadd.f32 %v232, %v439
      %v441 = vpop.f32.mrf.mxu0
      %v442 = vadd.f32 %v232, %v441
      %443 = vdwg.mxu0
      %444 = vmatpush.bf16.msra.mxu0 %v381
      %445 = vmatpush.bf16.msra.mxu0 %v380
      %446 = vmatpush.bf16.msra.mxu0 %v379
      %447 = vmatpush.bf16.msra.mxu0 %v378
      %448 = vmatpush.bf16.msra.mxu0 %v377
      %449 = vmatpush.bf16.msra.mxu0 %v376
      %450 = vmatpush.bf16.msra.mxu0 %v375
      %451 = vmatpush.bf16.msra.mxu0 %v374
      %452 = vmatmul.bf16.gmra.mxu0 %v275
      %v453 = vpop.f32.mrf.mxu0
      %v454 = vadd.f32 %v425, %v453
      %v455 = vpop.f32.mrf.mxu0
      %v456 = vadd.f32 %v427, %v455
      %457 = vmatmul.bf16.gmra.mxu0 %v278
      %v458 = vpop.f32.mrf.mxu0
      %v459 = vadd.f32 %v430, %v458
      %v460 = vpop.f32.mrf.mxu0
      %v461 = vadd.f32 %v432, %v460
      %462 = vmatmul.bf16.gmra.mxu0 %v281
      %v463 = vpop.f32.mrf.mxu0
      %v464 = vadd.f32 %v435, %v463
      %v465 = vpop.f32.mrf.mxu0
      %v466 = vadd.f32 %v437, %v465
      %467 = vmatmul.bf16.gmra.mxu0 %v284
      %v468 = vpop.f32.mrf.mxu0
      %v469 = vadd.f32 %v440, %v468
      %v470 = vpop.f32.mrf.mxu0
      %v471 = vadd.f32 %v442, %v470
      %472 = vdwg.mxu0
      %473 = vmatpush.bf16.msra.mxu0 0
      %474 = vmatpush.bf16.msra.mxu0 0
      %475 = vmatpush.bf16.msra.mxu0 0
      %476 = vmatpush.bf16.msra.mxu0 0
      %477 = vmatpush.bf16.msra.mxu0 0
      %478 = vmatpush.bf16.msra.mxu0 0
      %479 = vmatpush.bf16.msra.mxu0 %v383
      %480 = vmatpush.bf16.msra.mxu0 %v382
      %481 = vmatmul.bf16.gmra.mxu0 %v404
      %v482 = vpop.f32.mrf.mxu0
      %v483 = vadd.f32 %v454, %v482
      %v484 = vpop.f32.mrf.mxu0
      %v485 = vadd.f32 %v456, %v484
      %486 = vmatmul.bf16.gmra.mxu0 %v407
      %v487 = vpop.f32.mrf.mxu0
      %v488 = vadd.f32 %v459, %v487
      %v489 = vpop.f32.mrf.mxu0
      %v490 = vadd.f32 %v461, %v489
      %491 = vmatmul.bf16.gmra.mxu0 %v410
      %v492 = vpop.f32.mrf.mxu0
      %v493 = vadd.f32 %v464, %v492
      %v494 = vpop.f32.mrf.mxu0
      %v495 = vadd.f32 %v466, %v494
      %496 = vmatmul.bf16.gmra.mxu0 %v413
      %v497 = vpop.f32.mrf.mxu0
      %v498 = vadd.f32 %v469, %v497
      %v499 = vpop.f32.mrf.mxu0
      %v500 = vadd.f32 %v471, %v499
      %501 = vdwg.mxu0
      %v502 = vmax.f32 %v483, 0.0
      %v503 = vmax.f32 %v485, 0.0
      %v504 = vmax.f32 %v488, 0.0
      %v505 = vmax.f32 %v490, 0.0
      %v506 = vmax.f32 %v493, 0.0
      %v507 = vmax.f32 %v495, 0.0
      %v508 = vmax.f32 %v498, 0.0
      %v509 = vmax.f32 %v500, 0.0
      %510 = vst.msk [vmem:[%s175] sm:$0xff] %vm402, %v502
      %511 = vst.msk [vmem:[%s175 + $0x8] sm:$0xff] %vm402, %v503
      %512 = vst.msk [vmem:[%s175 + $0x10] sm:$0xff] %vm402, %v504
      %513 = vst.msk [vmem:[%s175 + $0x18] sm:$0xff] %vm402, %v505
      %514 = vst.msk [vmem:[%s175 + $0x20] sm:$0xff] %vm402, %v506
      %515 = vst.msk [vmem:[%s175 + $0x28] sm:$0xff] %vm402, %v507
      %516 = vst.msk [vmem:[%s175 + $0x30] sm:$0xff] %vm402, %v508
      %517 = vst.msk [vmem:[%s175 + $0x38] sm:$0xff] %vm402, %v509
      %s518 = smul.u32 8, %s14
      %p519 = scmp.lt.s32.totalorder %s518, 15
      %s520 = scalar_select %p519, %s518, 15
      %s521 = smul.addr %s520, 8
      %s522 = scalar_lea.vmem %s3, %s521
      // Predicated region
      $region33: #{farnet_forward.19} parent=31 // pred_check
        %p523 = pneg %p100
      $region34: #{farnet_forward.19} parent=31 // pred_check_branch
        %525 = sbr.rel (%p523) target = $region36
      $region35: #{farnet_forward.19} parent=31 // pred_region
        %s526 = smul.u32 8, %s14
      $region36: #{farnet_forward.19} parent=31 // pred_fallthru
        _
    $region32: #{farnet_forward.19} parent=5 // pred_fallthru
      _
    %p527 = scmp.le.s32.totalorder 2, %s9
    // Predicated region
    $region37: #{farnet_forward.19} parent=5 // pred_check
      %p528 = pneg %p527
    $region38: #{farnet_forward.19} parent=5 // pred_check_branch
      %530 = sbr.rel (%p528) target = $region40
    $region39: #{farnet_forward.19} parent=5 // pred_region
      %s531 = ssub.s32 %s9, 2
      // Predicated region
      $region41: #{farnet_forward.19} parent=39 // pred_check
        %p532 = pneg %p106
      $region42: #{farnet_forward.19} parent=39 // pred_check_branch
        %534 = sbr.rel (%p532) target = $region44
      $region43: #{farnet_forward.19} parent=39 // pred_region
        %s535 = smul.u32 8, %s15
        %p536 = scmp.lt.s32.totalorder %s535, 15
        %s537 = scalar_select %p536, %s535, 15
        %s538 = smul.addr %s537, 8
        %s539 = scalar_lea.vmem %s3, %s538
      $region44: #{farnet_forward.19} parent=39 // pred_fallthru
        _
    $region40: #{farnet_forward.19} parent=5 // pred_fallthru
      _
  $region6: #{farnet_forward.19} parent=0 // loop_footer
    %s13 = sadd.s32 1, %s9
  $region7: #{farnet_forward.19} parent=0 // loop_footer_branch
    %8 = sbr.rel target = $region3
  $region8: #{farnet_forward.19} parent=0 // loop_exit
    _

// kernel: farnet_forward.16
$region0: #{farnet_forward.16}
  #allocation0 [shape = 'u32[]', space=smem, size = 0x4, offset = 0x4, fixed_abs, tag = 'smem constant byte address 0x4 - core index']
  #allocation1 [shape = 'u32[72,128]{1,0:T(1,128)}', space=vmem, size = 0x9000, scoped, tag = 'internal scratch']
  %s0 = inlined_call_operand.vmem [shape: f32[2,64,32], index: 0, kind: input, shape index: {}]
  %s1 = inlined_call_operand.vmem [shape: bf16[32,32], index: 1, kind: input, shape index: {}]
  %s2 = inlined_call_operand.vmem [shape: f32[1,32], index: 2, kind: input, shape index: {}]
  %s3 = inlined_call_operand.vmem [shape: bf16[32,32], index: 3, kind: input, shape index: {}]
  %s4 = inlined_call_operand.vmem [shape: f32[1,32], index: 4, kind: input, shape index: {}]
  %s5 = inlined_call_operand.vmem [shape: f32[2,1,32], index: 5, kind: input, shape index: {}]
  %s6 = inlined_call_operand.vmem [shape: f32[2,64,32], index: 6, kind: output, shape index: {}]
  %s7 = sld [smem:[#allocation0]]
  $region57: #{farnet_forward.16} parent=0
    _
  %s9 = ssub.s32 1, %s7
  %s10 = scalar_select 0, %s9, %s7
  loop: start=0, step=1, limit=6
  $region2: #{farnet_forward.16} parent=0 // loop_pre_header
    _
  $region3: #{farnet_forward.16} parent=0 // loop_header
    %s12 = sphi 0, %s16
    %p13 = scmp.ge.s32.totalorder %s12, 6
    %s19 = sphi 0, %s31
    %s20 = sphi 0, %s27
    %s21 = sphi 0, %s19
    %s22 = sphi 0, %s20
    %s23 = sphi 0, %s21
    %s24 = sphi 0, %s22
    %s36 = sphi 0, %s38
    %s39 = sphi 0, %s36
    %s40 = sphi 0, %s39
    %s56 = sphi 0, %s40
    %s60 = sphi 0, %s60
    %s62 = sphi 0, %s60
    %s63 = sphi 0, %s62
    %s77 = sphi 0, %s63
    %s81 = sphi 0, %s81
    %s83 = sphi 0, %s81
    %s84 = sphi 0, %s83
    %s98 = sphi 0, %s84
    %s102 = sphi 0, %s102
    %s104 = sphi 0, %s102
    %s105 = sphi 0, %s104
    %s119 = sphi 0, %s105
    %s123 = sphi 0, %s123
    %s125 = sphi 0, %s123
    %s126 = sphi 0, %s125
    %s140 = sphi 0, %s126
    %s146 = sphi 0, %s148
    %s149 = sphi 0, %s146
    %s150 = sphi 0, %s149
    %s166 = sphi 0, %s150
    %s174 = sphi 0, %s176
    %s177 = sphi 0, %s174
    %s178 = sphi 0, %s177
    %s194 = sphi 0, %s178
  $region4: #{farnet_forward.16} parent=0 // loop_header_branch
    %15 = sbr.rel (%p13) target = $region8
  $region5: #{farnet_forward.16} parent=0 // loop_body
    %s17 = ssub.s32 %s12, 1
    %s18 = ssub.s32 %s12, 2
    %s25 = sadd.s32 1, %s20
    %p26 = scmp.ge.s32.totalorder %s25, 2
    %s27 = scalar_select %p26, 0, %s25
    %s28 = sadd.s32 1, %s19
    %s29 = scalar_select %p26, %s28, %s19
    %p30 = scmp.ge.s32.totalorder %s29, 2
    %s31 = scalar_select %p30, 0, %s29
    %s32 = ssub.s32 %s19, %s31
    %s33 = ssub.s32 %s20, %s27
    %s34 = sor.u32 %s32, %s33
    %p35 = scmp.eq.s32.totalorder %s34, 0
    %s37 = sadd.s32 %s36, 1
    %s38 = scalar_select %p35, %s36, %s37
    %p41 = pneg %p35
    %p42 = scmp.eq.s32.totalorder %s12, 3
    %p43 = por %p41, %p42
    %p44 = scmp.ne.s32.totalorder %s36, %s39
    %p45 = scmp.eq.s32.totalorder %s12, 0
    %p46 = por %p44, %p45
    %p47 = scmp.ne.s32.totalorder %s36, %s39
    %p48 = scmp.eq.s32.totalorder %s17, 3
    %p49 = por %p47, %p48
    %p50 = scmp.ne.s32.totalorder %s39, %s40
    %p51 = scmp.eq.s32.totalorder %s17, 0
    %p52 = por %p50, %p51
    %p53 = scmp.ne.s32.totalorder %s39, %s40
    %p54 = scmp.eq.s32.totalorder %s18, 3
    %p55 = por %p53, %p54
    %p57 = scmp.ne.s32.totalorder %s40, %s56
    %p58 = scmp.eq.s32.totalorder %s18, 0
    %p59 = por %p57, %p58
    %s61 = sadd.s32 %s60, 1
    %p64 = scmp.eq.s32.totalorder %s12, 3
    %p65 = scmp.ne.s32.totalorder %s60, %s62
    %p66 = scmp.eq.s32.totalorder %s12, 0
    %p67 = por %p65, %p66
    %p68 = scmp.ne.s32.totalorder %s60, %s62
    %p69 = scmp.eq.s32.totalorder %s17, 3
    %p70 = por %p68, %p69
    %p71 = scmp.ne.s32.totalorder %s62, %s63
    %p72 = scmp.eq.s32.totalorder %s17, 0
    %p73 = por %p71, %p72
    %p74 = scmp.ne.s32.totalorder %s62, %s63
    %p75 = scmp.eq.s32.totalorder %s18, 3
    %p76 = por %p74, %p75
    %p78 = scmp.ne.s32.totalorder %s63, %s77
    %p79 = scmp.eq.s32.totalorder %s18, 0
    %p80 = por %p78, %p79
    %s82 = sadd.s32 %s81, 1
    %p85 = scmp.eq.s32.totalorder %s12, 3
    %p86 = scmp.ne.s32.totalorder %s81, %s83
    %p87 = scmp.eq.s32.totalorder %s12, 0
    %p88 = por %p86, %p87
    %p89 = scmp.ne.s32.totalorder %s81, %s83
    %p90 = scmp.eq.s32.totalorder %s17, 3
    %p91 = por %p89, %p90
    %p92 = scmp.ne.s32.totalorder %s83, %s84
    %p93 = scmp.eq.s32.totalorder %s17, 0
    %p94 = por %p92, %p93
    %p95 = scmp.ne.s32.totalorder %s83, %s84
    %p96 = scmp.eq.s32.totalorder %s18, 3
    %p97 = por %p95, %p96
    %p99 = scmp.ne.s32.totalorder %s84, %s98
    %p100 = scmp.eq.s32.totalorder %s18, 0
    %p101 = por %p99, %p100
    %s103 = sadd.s32 %s102, 1
    %p106 = scmp.eq.s32.totalorder %s12, 3
    %p107 = scmp.ne.s32.totalorder %s102, %s104
    %p108 = scmp.eq.s32.totalorder %s12, 0
    %p109 = por %p107, %p108
    %p110 = scmp.ne.s32.totalorder %s102, %s104
    %p111 = scmp.eq.s32.totalorder %s17, 3
    %p112 = por %p110, %p111
    %p113 = scmp.ne.s32.totalorder %s104, %s105
    %p114 = scmp.eq.s32.totalorder %s17, 0
    %p115 = por %p113, %p114
    %p116 = scmp.ne.s32.totalorder %s104, %s105
    %p117 = scmp.eq.s32.totalorder %s18, 3
    %p118 = por %p116, %p117
    %p120 = scmp.ne.s32.totalorder %s105, %s119
    %p121 = scmp.eq.s32.totalorder %s18, 0
    %p122 = por %p120, %p121
    %s124 = sadd.s32 %s123, 1
    %p127 = scmp.eq.s32.totalorder %s12, 3
    %p128 = scmp.ne.s32.totalorder %s123, %s125
    %p129 = scmp.eq.s32.totalorder %s12, 0
    %p130 = por %p128, %p129
    %p131 = scmp.ne.s32.totalorder %s123, %s125
    %p132 = scmp.eq.s32.totalorder %s17, 3
    %p133 = por %p131, %p132
    %p134 = scmp.ne.s32.totalorder %s125, %s126
    %p135 = scmp.eq.s32.totalorder %s17, 0
    %p136 = por %p134, %p135
    %p137 = scmp.ne.s32.totalorder %s125, %s126
    %p138 = scmp.eq.s32.totalorder %s18, 3
    %p139 = por %p137, %p138
    %p141 = scmp.ne.s32.totalorder %s126, %s140
    %p142 = scmp.eq.s32.totalorder %s18, 0
    %p143 = por %p141, %p142
    %s144 = ssub.s32 %s19, %s31
    %p145 = scmp.eq.s32.totalorder %s144, 0
    %s147 = sadd.s32 %s146, 1
    %s148 = scalar_select %p145, %s146, %s147
    %p151 = pneg %p145
    %p152 = scmp.eq.s32.totalorder %s12, 3
    %p153 = por %p151, %p152
    %p154 = scmp.ne.s32.totalorder %s146, %s149
    %p155 = scmp.eq.s32.totalorder %s12, 0
    %p156 = por %p154, %p155
    %p157 = scmp.ne.s32.totalorder %s146, %s149
    %p158 = scmp.eq.s32.totalorder %s17, 3
    %p159 = por %p157, %p158
    %p160 = scmp.ne.s32.totalorder %s149, %s150
    %p161 = scmp.eq.s32.totalorder %s17, 0
    %p162 = por %p160, %p161
    %p163 = scmp.ne.s32.totalorder %s149, %s150
    %p164 = scmp.eq.s32.totalorder %s18, 3
    %p165 = por %p163, %p164
    %p167 = scmp.ne.s32.totalorder %s150, %s166
    %p168 = scmp.eq.s32.totalorder %s18, 0
    %p169 = por %p167, %p168
    %s170 = ssub.s32 %s19, %s31
    %s171 = ssub.s32 %s20, %s27
    %s172 = sor.u32 %s170, %s171
    %p173 = scmp.eq.s32.totalorder %s172, 0
    %s175 = sadd.s32 %s174, 1
    %s176 = scalar_select %p173, %s174, %s175
    %p179 = pneg %p173
    %p180 = scmp.eq.s32.totalorder %s12, 3
    %p181 = por %p179, %p180
    %p182 = scmp.ne.s32.totalorder %s174, %s177
    %p183 = scmp.eq.s32.totalorder %s12, 0
    %p184 = por %p182, %p183
    %p185 = scmp.ne.s32.totalorder %s174, %s177
    %p186 = scmp.eq.s32.totalorder %s17, 3
    %p187 = por %p185, %p186
    %p188 = scmp.ne.s32.totalorder %s177, %s178
    %p189 = scmp.eq.s32.totalorder %s17, 0
    %p190 = por %p188, %p189
    %p191 = scmp.ne.s32.totalorder %s177, %s178
    %p192 = scmp.eq.s32.totalorder %s18, 3
    %p193 = por %p191, %p192
    %p195 = scmp.ne.s32.totalorder %s178, %s194
    %p196 = scmp.eq.s32.totalorder %s18, 0
    %p197 = por %p195, %p196
    %p198 = scmp.le.s32.totalorder 1, %s12
    %p199 = scmp.lt.s32.totalorder %s12, 5
    %p200 = pnand %p198, %p199
    %p201 = pneg %p200
    // Predicated region
    $region9: #{farnet_forward.16} parent=5 // pred_check
      _
    $region10: #{farnet_forward.16} parent=5 // pred_check_branch
      %203 = sbr.rel (%p200) target = $region12
    $region11: #{farnet_forward.16} parent=5 // pred_region
      %s204 = ssub.s32 %s12, 1
      // Predicated region
      $region13: #{farnet_forward.16} parent=11 // pred_check
        %p205 = pneg %p73
      $region14: #{farnet_forward.16} parent=11 // pred_check_branch
        %207 = sbr.rel (%p205) target = $region16
      $region15: #{farnet_forward.16} parent=11 // pred_region
        _
      $region16: #{farnet_forward.16} parent=11 // pred_fallthru
        _
      // Predicated region
      $region17: #{farnet_forward.16} parent=11 // pred_check
        %p208 = pneg %p94
      $region18: #{farnet_forward.16} parent=11 // pred_check_branch
        %210 = sbr.rel (%p208) target = $region20
      $region19: #{farnet_forward.16} parent=11 // pred_region
        _
      $region20: #{farnet_forward.16} parent=11 // pred_fallthru
        _
      // Predicated region
      $region21: #{farnet_forward.16} parent=11 // pred_check
        %p211 = pneg %p115
      $region22: #{farnet_forward.16} parent=11 // pred_check_branch
        %213 = sbr.rel (%p211) target = $region24
      $region23: #{farnet_forward.16} parent=11 // pred_region
        _
      $region24: #{farnet_forward.16} parent=11 // pred_fallthru
        _
      // Predicated region
      $region25: #{farnet_forward.16} parent=11 // pred_check
        %p214 = pneg %p136
      $region26: #{farnet_forward.16} parent=11 // pred_check_branch
        %216 = sbr.rel (%p214) target = $region28
      $region27: #{farnet_forward.16} parent=11 // pred_region
        _
      $region28: #{farnet_forward.16} parent=11 // pred_fallthru
        _
    $region12: #{farnet_forward.16} parent=5 // pred_fallthru
      _
    %p217 = scmp.lt.s32.totalorder %s12, 4
    // Predicated region
    $region29: #{farnet_forward.16} parent=5 // pred_check
      %p218 = pneg %p217
    $region30: #{farnet_forward.16} parent=5 // pred_check_branch
      %220 = sbr.rel (%p218) target = $region32
    $region31: #{farnet_forward.16} parent=5 // pred_region
      // Predicated region
      $region33: #{farnet_forward.16} parent=31 // pred_check
        %p221 = pneg %p46
      $region34: #{farnet_forward.16} parent=31 // pred_check_branch
        %223 = sbr.rel (%p221) target = $region36
      $region35: #{farnet_forward.16} parent=31 // pred_region
        %s224 = smul.u32 4, %s20
        %p225 = scmp.lt.s32.totalorder %s19, 1
        %s226 = scalar_select %p225, %s19, 1
        %p227 = scmp.lt.s32.totalorder %s224, 7
        %s228 = scalar_select %p227, %s224, 7
        %s229 = smul.addr %s226, 8
        %s230 = sadd.s32 %s228, %s229
        %s231 = smul.addr %s230, 8
        %s232 = scalar_lea.vmem %s0, %s231
        %s233 = smul.u32 4, %s20
      $region36: #{farnet_forward.16} parent=31 // pred_fallthru
        _
      // Predicated region
      $region37: #{farnet_forward.16} parent=31 // pred_check
        %p234 = pneg %p156
      $region38: #{farnet_forward.16} parent=31 // pred_check_branch
        %236 = sbr.rel (%p234) target = $region40
      $region39: #{farnet_forward.16} parent=31 // pred_region
        %p237 = scmp.lt.s32.totalorder %s19, 1
        %s238 = scalar_select %p237, %s19, 1
        %s239 = scalar_lea.vmem %s5, %s238
      $region40: #{farnet_forward.16} parent=31 // pred_fallthru
        _
    $region32: #{farnet_forward.16} parent=5 // pred_fallthru
      _
    %p240 = scmp.le.s32.totalorder 1, %s12
    %p241 = scmp.lt.s32.totalorder %s12, 5
    %p242 = pnand %p240, %p241
    %p243 = pneg %p242
    // Predicated region
    $region41: #{farnet_forward.16} parent=5 // pred_check
      _
    $region42: #{farnet_forward.16} parent=5 // pred_check_branch
      %245 = sbr.rel (%p242) target = $region44
    $region43: #{farnet_forward.16} parent=5 // pred_region
      %s246 = ssub.s32 %s12, 1
      %s247 = smul.u32 4, %s22
      %p248 = scmp.lt.s32.totalorder %s21, 1
      %s249 = scalar_select %p248, %s21, 1
      %p250 = scmp.lt.s32.totalorder %s247, 7
      %s251 = scalar_select %p250, %s247, 7
      %s252 = smul.addr %s249, 8
      %s253 = sadd.s32 %s251, %s252
      %s254 = smul.addr %s253, 8
      %s255 = scalar_lea.vmem %s0, %s254
      %p256 = pneg %p52
      %p257 = pneg %p49
      %p258 = pneg %p73
      %p259 = pneg %p70
      %p260 = pneg %p94
      %p261 = pneg %p91
      %p262 = pneg %p115
      %p263 = pneg %p112
      %p264 = pneg %p136
      %p265 = pneg %p133
      %p266 = scmp.lt.s32.totalorder %s21, 1
      %s267 = scalar_select %p266, %s21, 1
      %s268 = scalar_lea.vmem %s5, %s267
      %p269 = pneg %p162
      %p270 = pneg %p159
      %p271 = pneg %p190
      %p272 = pneg %p187
      %s273 = smul.u32 4, %s22
      %p274 = scmp.lt.s32.totalorder %s21, 1
      %s275 = scalar_select %p274, %s21, 1
      %p276 = scmp.lt.s32.totalorder %s273, 7
      %s277 = scalar_select %p276, %s273, 7
      %s278 = smul.addr %s275, 8
      %s279 = sadd.s32 %s277, %s278
      %s280 = smul.addr %s279, 8
      %s281 = scalar_lea.vmem %s6, %s280
      %s282 = smul.u32 4, %s22
      %p283 = scmp.lt.s32.totalorder %s21, 1
      %s284 = scalar_select %p283, %s21, 1
      %p285 = scmp.lt.s32.totalorder %s282, 7
      %s286 = scalar_select %p285, %s282, 7
      %s287 = smul.addr %s284, 8
      %s288 = sadd.s32 %s286, %s287
      %s289 = smul.addr %s288, 8
      %s290 = scalar_lea.vmem %s0, %s289
      %s291 = smul.u32 4, %s22
      %p292 = scmp.lt.s32.totalorder %s21, 1
      %s293 = scalar_select %p292, %s21, 1
      %s294 = scalar_lea.vmem %s5, %s293
      %s295 = smul.u32 4, %s22
      %p296 = scmp.lt.s32.totalorder %s21, 1
      %s297 = scalar_select %p296, %s21, 1
      %p298 = scmp.lt.s32.totalorder %s295, 7
      %s299 = scalar_select %p298, %s295, 7
      %s300 = smul.addr %s297, 8
      %s301 = sadd.s32 %s299, %s300
      %s302 = smul.addr %s301, 8
      %s303 = scalar_lea.vmem %s6, %s302
      %s304 = smul.u32 4, %s22
      %v306 = vld [vmem:[%s290] sm:$0xff]
      %v307 = vld [vmem:[%s290 + $0x8] sm:$0xff]
      %v308 = vld [vmem:[%s290 + $0x10] sm:$0xff]
      %v309 = vld [vmem:[%s290 + $0x18] sm:$0xff]
      %v310 = vpack.c.bf16 %v307, %v306
      %v311 = vpack.c.bf16 %v309, %v308
      %v312 = vld [vmem:[%s1] sm:$0xf]
      %v313 = vld [vmem:[%s1 + $0x4] sm:$0xf]
      %v314 = vld [vmem:[%s1 + $0x8] sm:$0xf]
      %v315 = vld [vmem:[%s1 + $0xc] sm:$0xf]
      %v316 = vld [vmem:[%s2] sm:$0x1]
      %v318 = vperm.slane %v316, 0
      %v324 = vunpack.c.l.b16 %v312
      %v325 = vunpack.c.l.b16 %v313
      %v326 = vunpack.c.l.b16 %v314
      %v327 = vunpack.c.l.b16 %v315
      %v328 = vpack.c.b16 %v325, %v324
      %v329 = vpack.c.b16 %v327, %v326
      %vm332 = vcmask 261120
      %v334 = vsel %vm332, %v310, 0
      %v337 = vsel %vm332, %v311, 0
      %339 = vmatpush.bf16.msra.mxu0 0
      %340 = vmatpush.bf16.msra.mxu0 0
      %341 = vmatpush.bf16.msra.mxu0 0
      %342 = vmatpush.bf16.msra.mxu0 0
      %343 = vmatpush.bf16.msra.mxu0 0
      %344 = vmatpush.bf16.msra.mxu0 0
      %345 = vmatpush.bf16.msra.mxu0 %v329
      %346 = vmatpush.bf16.msra.mxu0 %v328
      %347 = vmatmul.bf16.gmra.mxu0 %v334
      %v348 = vpop.f32.mrf.mxu0
      %v349 = vadd.f32 %v318, %v348
      %v350 = vpop.f32.mrf.mxu0
      %v351 = vadd.f32 %v318, %v350
      %352 = vmatmul.bf16.gmra.mxu0 %v337
      %v353 = vpop.f32.mrf.mxu0
      %v354 = vadd.f32 %v318, %v353
      %v355 = vpop.f32.mrf.mxu0
      %v356 = vadd.f32 %v318, %v355
      %357 = vdwg.mxu0
      %v358 = vmax.f32 %v349, 0.0
      %v359 = vmax.f32 %v351, 0.0
      %v360 = vmax.f32 %v354, 0.0
      %v361 = vmax.f32 %v356, 0.0
      %v362 = vld [vmem:[%s3] sm:$0xf]
      %v363 = vld [vmem:[%s3 + $0x4] sm:$0xf]
      %v364 = vld [vmem:[%s3 + $0x8] sm:$0xf]
      %v365 = vld [vmem:[%s3 + $0xc] sm:$0xf]
      %v366 = vld [vmem:[%s4] sm:$0x1]
      %v368 = vperm.slane %v366, 0
      %v374 = vunpack.c.l.b16 %v362
      %v375 = vunpack.c.l.b16 %v363
      %v376 = vunpack.c.l.b16 %v364
      %v377 = vunpack.c.l.b16 %v365
      %v378 = vpack.c.b16 %v375, %v374
      %v379 = vpack.c.b16 %v377, %v376
      %382 = vmatpush.bf16.msra.mxu0 0
      %383 = vmatpush.bf16.msra.mxu0 0
      %384 = vmatpush.bf16.msra.mxu0 0
      %385 = vmatpush.bf16.msra.mxu0 0
      %386 = vmatpush.bf16.msra.mxu0 0
      %387 = vmatpush.bf16.msra.mxu0 0
      %388 = vmatpush.bf16.msra.mxu0 %v379
      %389 = vmatpush.bf16.msra.mxu0 %v378
      %390 = vmatmul.bf16.gmra.mxu0 %v334
      %v391 = vpop.f32.mrf.mxu0
      %v392 = vadd.f32 %v368, %v391
      %v393 = vpop.f32.mrf.mxu0
      %v394 = vadd.f32 %v368, %v393
      %395 = vmatmul.bf16.gmra.mxu0 %v337
      %v396 = vpop.f32.mrf.mxu0
      %v397 = vadd.f32 %v368, %v396
      %v398 = vpop.f32.mrf.mxu0
      %v399 = vadd.f32 %v368, %v398
      %400 = vdwg.mxu0
      %v401 = vmax.f32 %v392, 0.0
      %v402 = vmax.f32 %v394, 0.0
      %v403 = vmax.f32 %v397, 0.0
      %v404 = vmax.f32 %v399, 0.0
      %v405 = vld [vmem:[%s294] sm:$0x1]
      %v407 = vperm.slane %v405, 0
      %v409 = vmul.f32 %v358, %v407
      %v410 = vmul.f32 %v359, %v407
      %v411 = vmul.f32 %v360, %v407
      %v412 = vmul.f32 %v361, %v407
      %v413 = vsub.f32 0.0, %v409
      %v414 = vsub.f32 0.0, %v410
      %v415 = vsub.f32 0.0, %v411
      %v416 = vsub.f32 0.0, %v412
      %v417 = vmul.f32 %v413, 1.442695
      %v418 = vpow.pop %v417
      %v419 = vmul.f32 %v414, 1.442695
      %v420 = vpow.pop %v419
      %v421 = vmul.f32 %v415, 1.442695
      %v422 = vpow.pop %v421
      %v423 = vmul.f32 %v416, 1.442695
      %v424 = vpow.pop %v423
      %v425 = vadd.f32 %v418, 1.0
      %v426 = vadd.f32 %v420, 1.0
      %v427 = vadd.f32 %v422, 1.0
      %v428 = vadd.f32 %v424, 1.0
      %v429 = vrcp.pop %v425
      %v430 = vmul.f32 %v425, %v429
      %v431 = vsub.f32 1.0, %v430
      %v432 = vmul.f32 %v429, %v431
      %v433 = vadd.f32 %v429, %v432
      %vm434 = vweird.f32 %v425
      %vm435 = vweird.f32 %v429
      %vm436 = vmor %vm434, %vm435
      %v437 = vsel %vm436, %v429, %v433
      %v438 = vand.u32 2147483647, %v425
      %vm439 = vcmp.eq.f32.partialorder %v438, 8.507059e+37
      %v440 = vand.u32 %v425, 2147483648
      %v441 = vor.u32 1.1754944e-38, %v440
      %v442 = vsel %vm439, %v441, %v437
      %v443 = vmul.f32 %v401, %v442
      %v444 = vrcp.pop %v426
      %v445 = vmul.f32 %v426, %v444
      %v446 = vsub.f32 1.0, %v445
      %v447 = vmul.f32 %v444, %v446
      %v448 = vadd.f32 %v444, %v447
      %vm449 = vweird.f32 %v426
      %vm450 = vweird.f32 %v444
      %vm451 = vmor %vm449, %vm450
      %v452 = vsel %vm451, %v444, %v448
      %v453 = vand.u32 2147483647, %v426
      %vm454 = vcmp.eq.f32.partialorder %v453, 8.507059e+37
      %v455 = vand.u32 %v426, 2147483648
      %v456 = vor.u32 1.1754944e-38, %v455
      %v457 = vsel %vm454, %v456, %v452
      %v458 = vmul.f32 %v402, %v457
      %v459 = vrcp.pop %v427
      %v460 = vmul.f32 %v427, %v459
      %v461 = vsub.f32 1.0, %v460
      %v462 = vmul.f32 %v459, %v461
      %v463 = vadd.f32 %v459, %v462
      %vm464 = vweird.f32 %v427
      %vm465 = vweird.f32 %v459
      %vm466 = vmor %vm464, %vm465
      %v467 = vsel %vm466, %v459, %v463
      %v468 = vand.u32 2147483647, %v427
      %vm469 = vcmp.eq.f32.partialorder %v468, 8.507059e+37
      %v470 = vand.u32 %v427, 2147483648
      %v471 = vor.u32 1.1754944e-38, %v470
      %v472 = vsel %vm469, %v471, %v467
      %v473 = vmul.f32 %v403, %v472
      %v474 = vrcp.pop %v428
      %v475 = vmul.f32 %v428, %v474
      %v476 = vsub.f32 1.0, %v475
      %v477 = vmul.f32 %v474, %v476
      %v478 = vadd.f32 %v474, %v477
      %vm479 = vweird.f32 %v428
      %vm480 = vweird.f32 %v474
      %vm481 = vmor %vm479, %vm480
      %v482 = vsel %vm481, %v474, %v478
      %v483 = vand.u32 2147483647, %v428
      %vm484 = vcmp.eq.f32.partialorder %v483, 8.507059e+37
      %v485 = vand.u32 %v428, 2147483648
      %v486 = vor.u32 1.1754944e-38, %v485
      %v487 = vsel %vm484, %v486, %v482
      %v488 = vmul.f32 %v404, %v487
      %489 = vst.msk [vmem:[%s303] sm:$0xff] %vm332, %v443
      %490 = vst.msk [vmem:[%s303 + $0x8] sm:$0xff] %vm332, %v458
      %491 = vst.msk [vmem:[%s303 + $0x10] sm:$0xff] %vm332, %v473
      %492 = vst.msk [vmem:[%s303 + $0x18] sm:$0xff] %vm332, %v488
      %s493 = smul.u32 4, %s22
      %p494 = scmp.lt.s32.totalorder %s21, 1
      %s495 = scalar_select %p494, %s21, 1
      %p496 = scmp.lt.s32.totalorder %s493, 7
      %s497 = scalar_select %p496, %s493, 7
      %s498 = smul.addr %s495, 8
      %s499 = sadd.s32 %s497, %s498
      %s500 = smul.addr %s499, 8
      %s501 = scalar_lea.vmem %s6, %s500
      // Predicated region
      $region45: #{farnet_forward.16} parent=43 // pred_check
        %p502 = pneg %p187
      $region46: #{farnet_forward.16} parent=43 // pred_check_branch
        %504 = sbr.rel (%p502) target = $region48
      $region47: #{farnet_forward.16} parent=43 // pred_region
        %s505 = smul.u32 4, %s22
      $region48: #{farnet_forward.16} parent=43 // pred_fallthru
        _
    $region44: #{farnet_forward.16} parent=5 // pred_fallthru
      _
    %p506 = scmp.le.s32.totalorder 2, %s12
    // Predicated region
    $region49: #{farnet_forward.16} parent=5 // pred_check
      %p507 = pneg %p506
    $region50: #{farnet_forward.16} parent=5 // pred_check_branch
      %509 = sbr.rel (%p507) target = $region52
    $region51: #{farnet_forward.16} parent=5 // pred_region
      %s510 = ssub.s32 %s12, 2
      // Predicated region
      $region53: #{farnet_forward.16} parent=51 // pred_check
        %p511 = pneg %p193
      $region54: #{farnet_forward.16} parent=51 // pred_check_branch
        %513 = sbr.rel (%p511) target = $region56
      $region55: #{farnet_forward.16} parent=51 // pred_region
        %s514 = smul.u32 4, %s24
        %p515 = scmp.lt.s32.totalorder %s23, 1
        %s516 = scalar_select %p515, %s23, 1
        %p517 = scmp.lt.s32.totalorder %s514, 7
        %s518 = scalar_select %p517, %s514, 7
        %s519 = smul.addr %s516, 8
        %s520 = sadd.s32 %s518, %s519
        %s521 = smul.addr %s520, 8
        %s522 = scalar_lea.vmem %s6, %s521
      $region56: #{farnet_forward.16} parent=51 // pred_fallthru
        _
    $region52: #{farnet_forward.16} parent=5 // pred_fallthru
      _
  $region6: #{farnet_forward.16} parent=0 // loop_footer
    %s16 = sadd.s32 1, %s12
  $region7: #{farnet_forward.16} parent=0 // loop_footer_branch
    %11 = sbr.rel target = $region3
  $region8: #{farnet_forward.16} parent=0 // loop_exit
    _

// kernel: farnet_forward.14
$region0: #{farnet_forward.14}
  #allocation0 [shape = 'u32[]', space=smem, size = 0x4, offset = 0x4, fixed_abs, tag = 'smem constant byte address 0x4 - core index']
  #allocation1 [shape = 'u32[72,128]{1,0:T(1,128)}', space=vmem, size = 0x9000, scoped, tag = 'internal scratch']
  %s0 = inlined_call_operand.vmem [shape: f32[128,64], index: 0, kind: input, shape index: {}]
  %s1 = inlined_call_operand.vmem [shape: bf16[64,32], index: 1, kind: input, shape index: {}]
  %s2 = inlined_call_operand.vmem [shape: f32[1,32], index: 2, kind: input, shape index: {}]
  %s3 = inlined_call_operand.vmem [shape: f32[128,32], index: 3, kind: input, shape index: {}]
  %s4 = inlined_call_operand.vmem [shape: f32[128,32], index: 4, kind: output, shape index: {}]
  %s5 = sld [smem:[#allocation0]]
  $region49: #{farnet_forward.14} parent=0
    _
  %s7 = ssub.s32 1, %s5
  %s8 = scalar_select 0, %s7, %s5
  loop: start=0, step=1, limit=4
  $region2: #{farnet_forward.14} parent=0 // loop_pre_header
    _
  $region3: #{farnet_forward.14} parent=0 // loop_header
    %s10 = sphi 0, %s14
    %p11 = scmp.ge.s32.totalorder %s10, 4
    %s20 = sphi 0, %s22
    %s23 = sphi 0, %s20
    %s24 = sphi 0, %s23
    %s40 = sphi 0, %s24
    %s44 = sphi 0, %s44
    %s46 = sphi 0, %s44
    %s47 = sphi 0, %s46
    %s61 = sphi 0, %s47
    %s65 = sphi 0, %s65
    %s67 = sphi 0, %s65
    %s68 = sphi 0, %s67
    %s82 = sphi 0, %s68
    %s88 = sphi 0, %s90
    %s91 = sphi 0, %s88
    %s92 = sphi 0, %s91
    %s108 = sphi 0, %s92
    %s114 = sphi 0, %s116
    %s117 = sphi 0, %s114
    %s118 = sphi 0, %s117
    %s134 = sphi 0, %s118
  $region4: #{farnet_forward.14} parent=0 // loop_header_branch
    %13 = sbr.rel (%p11) target = $region8
  $region5: #{farnet_forward.14} parent=0 // loop_body
    %s15 = ssub.s32 %s10, 1
    %s16 = ssub.s32 %s10, 2
    %s17 = sadd.s32 %s10, 1
    %s18 = ssub.s32 %s10, %s17
    %p19 = scmp.eq.s32.totalorder %s18, 0
    %s21 = sadd.s32 %s20, 1
    %s22 = scalar_select %p19, %s20, %s21
    %p25 = pneg %p19
    %p26 = scmp.eq.s32.totalorder %s10, 1
    %p27 = por %p25, %p26
    %p28 = scmp.ne.s32.totalorder %s20, %s23
    %p29 = scmp.eq.s32.totalorder %s10, 0
    %p30 = por %p28, %p29
    %p31 = scmp.ne.s32.totalorder %s20, %s23
    %p32 = scmp.eq.s32.totalorder %s15, 1
    %p33 = por %p31, %p32
    %p34 = scmp.ne.s32.totalorder %s23, %s24
    %p35 = scmp.eq.s32.totalorder %s15, 0
    %p36 = por %p34, %p35
    %p37 = scmp.ne.s32.totalorder %s23, %s24
    %p38 = scmp.eq.s32.totalorder %s16, 1
    %p39 = por %p37, %p38
    %p41 = scmp.ne.s32.totalorder %s24, %s40
    %p42 = scmp.eq.s32.totalorder %s16, 0
    %p43 = por %p41, %p42
    %s45 = sadd.s32 %s44, 1
    %p48 = scmp.eq.s32.totalorder %s10, 1
    %p49 = scmp.ne.s32.totalorder %s44, %s46
    %p50 = scmp.eq.s32.totalorder %s10, 0
    %p51 = por %p49, %p50
    %p52 = scmp.ne.s32.totalorder %s44, %s46
    %p53 = scmp.eq.s32.totalorder %s15, 1
    %p54 = por %p52, %p53
    %p55 = scmp.ne.s32.totalorder %s46, %s47
    %p56 = scmp.eq.s32.totalorder %s15, 0
    %p57 = por %p55, %p56
    %p58 = scmp.ne.s32.totalorder %s46, %s47
    %p59 = scmp.eq.s32.totalorder %s16, 1
    %p60 = por %p58, %p59
    %p62 = scmp.ne.s32.totalorder %s47, %s61
    %p63 = scmp.eq.s32.totalorder %s16, 0
    %p64 = por %p62, %p63
    %s66 = sadd.s32 %s65, 1
    %p69 = scmp.eq.s32.totalorder %s10, 1
    %p70 = scmp.ne.s32.totalorder %s65, %s67
    %p71 = scmp.eq.s32.totalorder %s10, 0
    %p72 = por %p70, %p71
    %p73 = scmp.ne.s32.totalorder %s65, %s67
    %p74 = scmp.eq.s32.totalorder %s15, 1
    %p75 = por %p73, %p74
    %p76 = scmp.ne.s32.totalorder %s67, %s68
    %p77 = scmp.eq.s32.totalorder %s15, 0
    %p78 = por %p76, %p77
    %p79 = scmp.ne.s32.totalorder %s67, %s68
    %p80 = scmp.eq.s32.totalorder %s16, 1
    %p81 = por %p79, %p80
    %p83 = scmp.ne.s32.totalorder %s68, %s82
    %p84 = scmp.eq.s32.totalorder %s16, 0
    %p85 = por %p83, %p84
    %s86 = ssub.s32 %s10, %s17
    %p87 = scmp.eq.s32.totalorder %s86, 0
    %s89 = sadd.s32 %s88, 1
    %s90 = scalar_select %p87, %s88, %s89
    %p93 = pneg %p87
    %p94 = scmp.eq.s32.totalorder %s10, 1
    %p95 = por %p93, %p94
    %p96 = scmp.ne.s32.totalorder %s88, %s91
    %p97 = scmp.eq.s32.totalorder %s10, 0
    %p98 = por %p96, %p97
    %p99 = scmp.ne.s32.totalorder %s88, %s91
    %p100 = scmp.eq.s32.totalorder %s15, 1
    %p101 = por %p99, %p100
    %p102 = scmp.ne.s32.totalorder %s91, %s92
    %p103 = scmp.eq.s32.totalorder %s15, 0
    %p104 = por %p102, %p103
    %p105 = scmp.ne.s32.totalorder %s91, %s92
    %p106 = scmp.eq.s32.totalorder %s16, 1
    %p107 = por %p105, %p106
    %p109 = scmp.ne.s32.totalorder %s92, %s108
    %p110 = scmp.eq.s32.totalorder %s16, 0
    %p111 = por %p109, %p110
    %s112 = ssub.s32 %s10, %s17
    %p113 = scmp.eq.s32.totalorder %s112, 0
    %s115 = sadd.s32 %s114, 1
    %s116 = scalar_select %p113, %s114, %s115
    %p119 = pneg %p113
    %p120 = scmp.eq.s32.totalorder %s10, 1
    %p121 = por %p119, %p120
    %p122 = scmp.ne.s32.totalorder %s114, %s117
    %p123 = scmp.eq.s32.totalorder %s10, 0
    %p124 = por %p122, %p123
    %p125 = scmp.ne.s32.totalorder %s114, %s117
    %p126 = scmp.eq.s32.totalorder %s15, 1
    %p127 = por %p125, %p126
    %p128 = scmp.ne.s32.totalorder %s117, %s118
    %p129 = scmp.eq.s32.totalorder %s15, 0
    %p130 = por %p128, %p129
    %p131 = scmp.ne.s32.totalorder %s117, %s118
    %p132 = scmp.eq.s32.totalorder %s16, 1
    %p133 = por %p131, %p132
    %p135 = scmp.ne.s32.totalorder %s118, %s134
    %p136 = scmp.eq.s32.totalorder %s16, 0
    %p137 = por %p135, %p136
    %p138 = scmp.le.s32.totalorder 1, %s10
    %p139 = scmp.lt.s32.totalorder %s10, 3
    %p140 = pnand %p138, %p139
    %p141 = pneg %p140
    // Predicated region
    $region9: #{farnet_forward.14} parent=5 // pred_check
      _
    $region10: #{farnet_forward.14} parent=5 // pred_check_branch
      %143 = sbr.rel (%p140) target = $region12
    $region11: #{farnet_forward.14} parent=5 // pred_region
      %s144 = ssub.s32 %s10, 1
      // Predicated region
      $region13: #{farnet_forward.14} parent=11 // pred_check
        %p145 = pneg %p57
      $region14: #{farnet_forward.14} parent=11 // pred_check_branch
        %147 = sbr.rel (%p145) target = $region16
      $region15: #{farnet_forward.14} parent=11 // pred_region
        _
      $region16: #{farnet_forward.14} parent=11 // pred_fallthru
        _
      // Predicated region
      $region17: #{farnet_forward.14} parent=11 // pred_check
        %p148 = pneg %p78
      $region18: #{farnet_forward.14} parent=11 // pred_check_branch
        %150 = sbr.rel (%p148) target = $region20
      $region19: #{farnet_forward.14} parent=11 // pred_region
        _
      $region20: #{farnet_forward.14} parent=11 // pred_fallthru
        _
    $region12: #{farnet_forward.14} parent=5 // pred_fallthru
      _
    %p151 = scmp.lt.s32.totalorder %s10, 2
    // Predicated region
    $region21: #{farnet_forward.14} parent=5 // pred_check
      %p152 = pneg %p151
    $region22: #{farnet_forward.14} parent=5 // pred_check_branch
      %154 = sbr.rel (%p152) target = $region24
    $region23: #{farnet_forward.14} parent=5 // pred_region
      // Predicated region
      $region25: #{farnet_forward.14} parent=23 // pred_check
        %p155 = pneg %p30
      $region26: #{farnet_forward.14} parent=23 // pred_check_branch
        %157 = sbr.rel (%p155) target = $region28
      $region27: #{farnet_forward.14} parent=23 // pred_region
        %s158 = smul.u32 8, %s10
        %p159 = scmp.lt.s32.totalorder %s158, 15
        %s160 = scalar_select %p159, %s158, 15
        %s161 = smul.addr %s160, 8
        %s162 = scalar_lea.vmem %s0, %s161
        %s163 = smul.u32 8, %s10
      $region28: #{farnet_forward.14} parent=23 // pred_fallthru
        _
      // Predicated region
      $region29: #{farnet_forward.14} parent=23 // pred_check
        %p164 = pneg %p98
      $region30: #{farnet_forward.14} parent=23 // pred_check_branch
        %166 = sbr.rel (%p164) target = $region32
      $region31: #{farnet_forward.14} parent=23 // pred_region
        %s167 = smul.u32 8, %s10
        %p168 = scmp.lt.s32.totalorder %s167, 15
        %s169 = scalar_select %p168, %s167, 15
        %s170 = smul.addr %s169, 8
        %s171 = scalar_lea.vmem %s3, %s170
        %s172 = smul.u32 8, %s10
      $region32: #{farnet_forward.14} parent=23 // pred_fallthru
        _
    $region24: #{farnet_forward.14} parent=5 // pred_fallthru
      _
    %p173 = scmp.le.s32.totalorder 1, %s10
    %p174 = scmp.lt.s32.totalorder %s10, 3
    %p175 = pnand %p173, %p174
    %p176 = pneg %p175
    // Predicated region
    $region33: #{farnet_forward.14} parent=5 // pred_check
      _
    $region34: #{farnet_forward.14} parent=5 // pred_check_branch
      %178 = sbr.rel (%p175) target = $region36
    $region35: #{farnet_forward.14} parent=5 // pred_region
      %s179 = ssub.s32 %s10, 1
      %s180 = smul.u32 8, %s15
      %p181 = scmp.lt.s32.totalorder %s180, 15
      %s182 = scalar_select %p181, %s180, 15
      %s183 = smul.addr %s182, 8
      %s184 = scalar_lea.vmem %s0, %s183
      %p185 = pneg %p36
      %p186 = pneg %p33
      %p187 = pneg %p57
      %p188 = pneg %p54
      %p189 = pneg %p78
      %p190 = pneg %p75
      %s191 = smul.u32 8, %s15
      %p192 = scmp.lt.s32.totalorder %s191, 15
      %s193 = scalar_select %p192, %s191, 15
      %s194 = smul.addr %s193, 8
      %s195 = scalar_lea.vmem %s3, %s194
      %p196 = pneg %p104
      %p197 = pneg %p101
      %p198 = pneg %p130
      %p199 = pneg %p127
      %s200 = smul.u32 8, %s15
      %p201 = scmp.lt.s32.totalorder %s200, 15
      %s202 = scalar_select %p201, %s200, 15
      %s203 = smul.addr %s202, 8
      %s204 = scalar_lea.vmem %s4, %s203
      %s205 = smul.u32 8, %s15
      %p206 = scmp.lt.s32.totalorder %s205, 15
      %s207 = scalar_select %p206, %s205, 15
      %s208 = smul.addr %s207, 8
      %s209 = scalar_lea.vmem %s0, %s208
      %s210 = smul.u32 8, %s15
      %s211 = smul.u32 8, %s15
      %p212 = scmp.lt.s32.totalorder %s211, 15
      %s213 = scalar_select %p212, %s211, 15
      %s214 = smul.addr %s213, 8
      %s215 = scalar_lea.vmem %s3, %s214
      %s216 = smul.u32 8, %s15
      %s217 = smul.u32 8, %s15
      %p218 = scmp.lt.s32.totalorder %s217, 15
      %s219 = scalar_select %p218, %s217, 15
      %s220 = smul.addr %s219, 8
      %s221 = scalar_lea.vmem %s4, %s220
      %s222 = smul.u32 8, %s15
      %v224 = vld [vmem:[%s209] sm:$0xff]
      %v225 = vld [vmem:[%s209 + $0x8] sm:$0xff]
      %v226 = vld [vmem:[%s209 + $0x10] sm:$0xff]
      %v227 = vld [vmem:[%s209 + $0x18] sm:$0xff]
      %v228 = vld [vmem:[%s209 + $0x20] sm:$0xff]
      %v229 = vld [vmem:[%s209 + $0x28] sm:$0xff]
      %v230 = vld [vmem:[%s209 + $0x30] sm:$0xff]
      %v231 = vld [vmem:[%s209 + $0x38] sm:$0xff]
      %v232 = vpack.c.bf16 %v225, %v224
      %v233 = vpack.c.bf16 %v227, %v226
      %v234 = vpack.c.bf16 %v229, %v228
      %v235 = vpack.c.bf16 %v231, %v230
      %v236 = vld [vmem:[%s1] sm:$0xf]
      %v237 = vld [vmem:[%s1 + $0x4] sm:$0xf]
      %v238 = vld [vmem:[%s1 + $0x8] sm:$0xf]
      %v239 = vld [vmem:[%s1 + $0xc] sm:$0xf]
      %v240 = vld [vmem:[%s1 + $0x10] sm:$0xf]
      %v241 = vld [vmem:[%s1 + $0x14] sm:$0xf]
      %v242 = vld [vmem:[%s1 + $0x18] sm:$0xf]
      %v243 = vld [vmem:[%s1 + $0x1c] sm:$0xf]
      %v244 = vld [vmem:[%s2] sm:$0x1]
      %v246 = vperm.slane %v244, 0
      %v256 = vunpack.c.l.b16 %v236
      %v257 = vunpack.c.l.b16 %v237
      %v258 = vunpack.c.l.b16 %v238
      %v259 = vunpack.c.l.b16 %v239
      %v260 = vunpack.c.l.b16 %v240
      %v261 = vunpack.c.l.b16 %v241
      %v262 = vunpack.c.l.b16 %v242
      %v263 = vunpack.c.l.b16 %v243
      %v264 = vpack.c.b16 %v257, %v256
      %v265 = vpack.c.b16 %v259, %v258
      %v266 = vpack.c.b16 %v261, %v260
      %v267 = vpack.c.b16 %v263, %v262
      %vm272 = vcmask 523264
      %v274 = vsel %vm272, %v232, 0
      %v277 = vsel %vm272, %v233, 0
      %v280 = vsel %vm272, %v234, 0
      %v283 = vsel %vm272, %v235, 0
      %285 = vmatpush.bf16.msra.mxu0 0
      %286 = vmatpush.bf16.msra.mxu0 0
      %287 = vmatpush.bf16.msra.mxu0 0
      %288 = vmatpush.bf16.msra.mxu0 0
      %289 = vmatpush.bf16.msra.mxu0 %v267
      %290 = vmatpush.bf16.msra.mxu0 %v266
      %291 = vmatpush.bf16.msra.mxu0 %v265
      %292 = vmatpush.bf16.msra.mxu0 %v264
      %293 = vmatmul.bf16.gmra.mxu0 %v274
      %v294 = vpop.f32.mrf.mxu0
      %v295 = vadd.f32 %v246, %v294
      %v296 = vpop.f32.mrf.mxu0
      %v297 = vadd.f32 %v246, %v296
      %298 = vmatmul.bf16.gmra.mxu0 %v277
      %v299 = vpop.f32.mrf.mxu0
      %v300 = vadd.f32 %v246, %v299
      %v301 = vpop.f32.mrf.mxu0
      %v302 = vadd.f32 %v246, %v301
      %303 = vmatmul.bf16.gmra.mxu0 %v280
      %v304 = vpop.f32.mrf.mxu0
      %v305 = vadd.f32 %v246, %v304
      %v306 = vpop.f32.mrf.mxu0
      %v307 = vadd.f32 %v246, %v306
      %308 = vmatmul.bf16.gmra.mxu0 %v283
      %v309 = vpop.f32.mrf.mxu0
      %v310 = vadd.f32 %v246, %v309
      %v311 = vpop.f32.mrf.mxu0
      %v312 = vadd.f32 %v246, %v311
      %313 = vdwg.mxu0
      %v314 = vld [vmem:[%s215] sm:$0xff]
      %v315 = vld [vmem:[%s215 + $0x8] sm:$0xff]
      %v316 = vld [vmem:[%s215 + $0x10] sm:$0xff]
      %v317 = vld [vmem:[%s215 + $0x18] sm:$0xff]
      %v318 = vld [vmem:[%s215 + $0x20] sm:$0xff]
      %v319 = vld [vmem:[%s215 + $0x28] sm:$0xff]
      %v320 = vld [vmem:[%s215 + $0x30] sm:$0xff]
      %v321 = vld [vmem:[%s215 + $0x38] sm:$0xff]
      %v322 = vadd.f32 %v295, %v314
      %v323 = vadd.f32 %v297, %v315
      %v324 = vadd.f32 %v300, %v316
      %v325 = vadd.f32 %v302, %v317
      %v326 = vadd.f32 %v305, %v318
      %v327 = vadd.f32 %v307, %v319
      %v328 = vadd.f32 %v310, %v320
      %v329 = vadd.f32 %v312, %v321
      %v330 = vmul.f32 %v322, 0.5
      %v331 = vmul.f32 %v323, 0.5
      %v332 = vmul.f32 %v324, 0.5
      %v333 = vmul.f32 %v325, 0.5
      %v334 = vmul.f32 %v326, 0.5
      %v335 = vmul.f32 %v327, 0.5
      %v336 = vmul.f32 %v328, 0.5
      %v337 = vmul.f32 %v329, 0.5
      %vm338 = vcmask 261120
      %339 = vst.msk [vmem:[%s221] sm:$0xff] %vm338, %v330
      %340 = vst.msk [vmem:[%s221 + $0x8] sm:$0xff] %vm338, %v331
      %341 = vst.msk [vmem:[%s221 + $0x10] sm:$0xff] %vm338, %v332
      %342 = vst.msk [vmem:[%s221 + $0x18] sm:$0xff] %vm338, %v333
      %343 = vst.msk [vmem:[%s221 + $0x20] sm:$0xff] %vm338, %v334
      %344 = vst.msk [vmem:[%s221 + $0x28] sm:$0xff] %vm338, %v335
      %345 = vst.msk [vmem:[%s221 + $0x30] sm:$0xff] %vm338, %v336
      %346 = vst.msk [vmem:[%s221 + $0x38] sm:$0xff] %vm338, %v337
      %s347 = smul.u32 8, %s15
      %p348 = scmp.lt.s32.totalorder %s347, 15
      %s349 = scalar_select %p348, %s347, 15
      %s350 = smul.addr %s349, 8
      %s351 = scalar_lea.vmem %s4, %s350
      // Predicated region
      $region37: #{farnet_forward.14} parent=35 // pred_check
        %p352 = pneg %p127
      $region38: #{farnet_forward.14} parent=35 // pred_check_branch
        %354 = sbr.rel (%p352) target = $region40
      $region39: #{farnet_forward.14} parent=35 // pred_region
        %s355 = smul.u32 8, %s15
      $region40: #{farnet_forward.14} parent=35 // pred_fallthru
        _
    $region36: #{farnet_forward.14} parent=5 // pred_fallthru
      _
    %p356 = scmp.le.s32.totalorder 2, %s10
    // Predicated region
    $region41: #{farnet_forward.14} parent=5 // pred_check
      %p357 = pneg %p356
    $region42: #{farnet_forward.14} parent=5 // pred_check_branch
      %359 = sbr.rel (%p357) target = $region44
    $region43: #{farnet_forward.14} parent=5 // pred_region
      %s360 = ssub.s32 %s10, 2
      // Predicated region
      $region45: #{farnet_forward.14} parent=43 // pred_check
        %p361 = pneg %p133
      $region46: #{farnet_forward.14} parent=43 // pred_check_branch
        %363 = sbr.rel (%p361) target = $region48
      $region47: #{farnet_forward.14} parent=43 // pred_region
        %s364 = smul.u32 8, %s16
        %p365 = scmp.lt.s32.totalorder %s364, 15
        %s366 = scalar_select %p365, %s364, 15
        %s367 = smul.addr %s366, 8
        %s368 = scalar_lea.vmem %s4, %s367
      $region48: #{farnet_forward.14} parent=43 // pred_fallthru
        _
    $region44: #{farnet_forward.14} parent=5 // pred_fallthru
      _
  $region6: #{farnet_forward.14} parent=0 // loop_footer
    %s14 = sadd.s32 1, %s10
  $region7: #{farnet_forward.14} parent=0 // loop_footer_branch
    %9 = sbr.rel target = $region3
  $region8: #{farnet_forward.14} parent=0 // loop_exit
    _

// kernel: farnet_forward.17
$region0: #{farnet_forward.17}
  #allocation0 [shape = 'u32[]', space=smem, size = 0x4, offset = 0x4, fixed_abs, tag = 'smem constant byte address 0x4 - core index']
  #allocation1 [shape = 'u32[72,128]{1,0:T(1,128)}', space=vmem, size = 0x9000, scoped, tag = 'internal scratch']
  %s0 = inlined_call_operand.vmem [shape: f32[2,256,32], index: 0, kind: input, shape index: {}]
  %s1 = inlined_call_operand.vmem [shape: bf16[32,32], index: 1, kind: input, shape index: {}]
  %s2 = inlined_call_operand.vmem [shape: f32[1,32], index: 2, kind: input, shape index: {}]
  %s3 = inlined_call_operand.vmem [shape: bf16[32,32], index: 3, kind: input, shape index: {}]
  %s4 = inlined_call_operand.vmem [shape: f32[1,32], index: 4, kind: input, shape index: {}]
  %s5 = inlined_call_operand.vmem [shape: f32[2,1,32], index: 5, kind: input, shape index: {}]
  %s6 = inlined_call_operand.vmem [shape: f32[2,256,32], index: 6, kind: output, shape index: {}]
  %s7 = sld [smem:[#allocation0]]
  $region57: #{farnet_forward.17} parent=0
    _
  %s9 = ssub.s32 1, %s7
  %s10 = scalar_select 0, %s9, %s7
  loop: start=0, step=1, limit=6
  $region2: #{farnet_forward.17} parent=0 // loop_pre_header
    _
  $region3: #{farnet_forward.17} parent=0 // loop_header
    %s12 = sphi 0, %s16
    %p13 = scmp.ge.s32.totalorder %s12, 6
    %s19 = sphi 0, %s31
    %s20 = sphi 0, %s27
    %s21 = sphi 0, %s19
    %s22 = sphi 0, %s20
    %s23 = sphi 0, %s21
    %s24 = sphi 0, %s22
    %s36 = sphi 0, %s38
    %s39 = sphi 0, %s36
    %s40 = sphi 0, %s39
    %s56 = sphi 0, %s40
    %s60 = sphi 0, %s60
    %s62 = sphi 0, %s60
    %s63 = sphi 0, %s62
    %s77 = sphi 0, %s63
    %s81 = sphi 0, %s81
    %s83 = sphi 0, %s81
    %s84 = sphi 0, %s83
    %s98 = sphi 0, %s84
    %s102 = sphi 0, %s102
    %s104 = sphi 0, %s102
    %s105 = sphi 0, %s104
    %s119 = sphi 0, %s105
    %s123 = sphi 0, %s123
    %s125 = sphi 0, %s123
    %s126 = sphi 0, %s125
    %s140 = sphi 0, %s126
    %s146 = sphi 0, %s148
    %s149 = sphi 0, %s146
    %s150 = sphi 0, %s149
    %s166 = sphi 0, %s150
    %s174 = sphi 0, %s176
    %s177 = sphi 0, %s174
    %s178 = sphi 0, %s177
    %s194 = sphi 0, %s178
  $region4: #{farnet_forward.17} parent=0 // loop_header_branch
    %15 = sbr.rel (%p13) target = $region8
  $region5: #{farnet_forward.17} parent=0 // loop_body
    %s17 = ssub.s32 %s12, 1
    %s18 = ssub.s32 %s12, 2
    %s25 = sadd.s32 1, %s20
    %p26 = scmp.ge.s32.totalorder %s25, 2
    %s27 = scalar_select %p26, 0, %s25
    %s28 = sadd.s32 1, %s19
    %s29 = scalar_select %p26, %s28, %s19
    %p30 = scmp.ge.s32.totalorder %s29, 2
    %s31 = scalar_select %p30, 0, %s29
    %s32 = ssub.s32 %s19, %s31
    %s33 = ssub.s32 %s20, %s27
    %s34 = sor.u32 %s32, %s33
    %p35 = scmp.eq.s32.totalorder %s34, 0
    %s37 = sadd.s32 %s36, 1
    %s38 = scalar_select %p35, %s36, %s37
    %p41 = pneg %p35
    %p42 = scmp.eq.s32.totalorder %s12, 3
    %p43 = por %p41, %p42
    %p44 = scmp.ne.s32.totalorder %s36, %s39
    %p45 = scmp.eq.s32.totalorder %s12, 0
    %p46 = por %p44, %p45
    %p47 = scmp.ne.s32.totalorder %s36, %s39
    %p48 = scmp.eq.s32.totalorder %s17, 3
    %p49 = por %p47, %p48
    %p50 = scmp.ne.s32.totalorder %s39, %s40
    %p51 = scmp.eq.s32.totalorder %s17, 0
    %p52 = por %p50, %p51
    %p53 = scmp.ne.s32.totalorder %s39, %s40
    %p54 = scmp.eq.s32.totalorder %s18, 3
    %p55 = por %p53, %p54
    %p57 = scmp.ne.s32.totalorder %s40, %s56
    %p58 = scmp.eq.s32.totalorder %s18, 0
    %p59 = por %p57, %p58
    %s61 = sadd.s32 %s60, 1
    %p64 = scmp.eq.s32.totalorder %s12, 3
    %p65 = scmp.ne.s32.totalorder %s60, %s62
    %p66 = scmp.eq.s32.totalorder %s12, 0
    %p67 = por %p65, %p66
    %p68 = scmp.ne.s32.totalorder %s60, %s62
    %p69 = scmp.eq.s32.totalorder %s17, 3
    %p70 = por %p68, %p69
    %p71 = scmp.ne.s32.totalorder %s62, %s63
    %p72 = scmp.eq.s32.totalorder %s17, 0
    %p73 = por %p71, %p72
    %p74 = scmp.ne.s32.totalorder %s62, %s63
    %p75 = scmp.eq.s32.totalorder %s18, 3
    %p76 = por %p74, %p75
    %p78 = scmp.ne.s32.totalorder %s63, %s77
    %p79 = scmp.eq.s32.totalorder %s18, 0
    %p80 = por %p78, %p79
    %s82 = sadd.s32 %s81, 1
    %p85 = scmp.eq.s32.totalorder %s12, 3
    %p86 = scmp.ne.s32.totalorder %s81, %s83
    %p87 = scmp.eq.s32.totalorder %s12, 0
    %p88 = por %p86, %p87
    %p89 = scmp.ne.s32.totalorder %s81, %s83
    %p90 = scmp.eq.s32.totalorder %s17, 3
    %p91 = por %p89, %p90
    %p92 = scmp.ne.s32.totalorder %s83, %s84
    %p93 = scmp.eq.s32.totalorder %s17, 0
    %p94 = por %p92, %p93
    %p95 = scmp.ne.s32.totalorder %s83, %s84
    %p96 = scmp.eq.s32.totalorder %s18, 3
    %p97 = por %p95, %p96
    %p99 = scmp.ne.s32.totalorder %s84, %s98
    %p100 = scmp.eq.s32.totalorder %s18, 0
    %p101 = por %p99, %p100
    %s103 = sadd.s32 %s102, 1
    %p106 = scmp.eq.s32.totalorder %s12, 3
    %p107 = scmp.ne.s32.totalorder %s102, %s104
    %p108 = scmp.eq.s32.totalorder %s12, 0
    %p109 = por %p107, %p108
    %p110 = scmp.ne.s32.totalorder %s102, %s104
    %p111 = scmp.eq.s32.totalorder %s17, 3
    %p112 = por %p110, %p111
    %p113 = scmp.ne.s32.totalorder %s104, %s105
    %p114 = scmp.eq.s32.totalorder %s17, 0
    %p115 = por %p113, %p114
    %p116 = scmp.ne.s32.totalorder %s104, %s105
    %p117 = scmp.eq.s32.totalorder %s18, 3
    %p118 = por %p116, %p117
    %p120 = scmp.ne.s32.totalorder %s105, %s119
    %p121 = scmp.eq.s32.totalorder %s18, 0
    %p122 = por %p120, %p121
    %s124 = sadd.s32 %s123, 1
    %p127 = scmp.eq.s32.totalorder %s12, 3
    %p128 = scmp.ne.s32.totalorder %s123, %s125
    %p129 = scmp.eq.s32.totalorder %s12, 0
    %p130 = por %p128, %p129
    %p131 = scmp.ne.s32.totalorder %s123, %s125
    %p132 = scmp.eq.s32.totalorder %s17, 3
    %p133 = por %p131, %p132
    %p134 = scmp.ne.s32.totalorder %s125, %s126
    %p135 = scmp.eq.s32.totalorder %s17, 0
    %p136 = por %p134, %p135
    %p137 = scmp.ne.s32.totalorder %s125, %s126
    %p138 = scmp.eq.s32.totalorder %s18, 3
    %p139 = por %p137, %p138
    %p141 = scmp.ne.s32.totalorder %s126, %s140
    %p142 = scmp.eq.s32.totalorder %s18, 0
    %p143 = por %p141, %p142
    %s144 = ssub.s32 %s19, %s31
    %p145 = scmp.eq.s32.totalorder %s144, 0
    %s147 = sadd.s32 %s146, 1
    %s148 = scalar_select %p145, %s146, %s147
    %p151 = pneg %p145
    %p152 = scmp.eq.s32.totalorder %s12, 3
    %p153 = por %p151, %p152
    %p154 = scmp.ne.s32.totalorder %s146, %s149
    %p155 = scmp.eq.s32.totalorder %s12, 0
    %p156 = por %p154, %p155
    %p157 = scmp.ne.s32.totalorder %s146, %s149
    %p158 = scmp.eq.s32.totalorder %s17, 3
    %p159 = por %p157, %p158
    %p160 = scmp.ne.s32.totalorder %s149, %s150
    %p161 = scmp.eq.s32.totalorder %s17, 0
    %p162 = por %p160, %p161
    %p163 = scmp.ne.s32.totalorder %s149, %s150
    %p164 = scmp.eq.s32.totalorder %s18, 3
    %p165 = por %p163, %p164
    %p167 = scmp.ne.s32.totalorder %s150, %s166
    %p168 = scmp.eq.s32.totalorder %s18, 0
    %p169 = por %p167, %p168
    %s170 = ssub.s32 %s19, %s31
    %s171 = ssub.s32 %s20, %s27
    %s172 = sor.u32 %s170, %s171
    %p173 = scmp.eq.s32.totalorder %s172, 0
    %s175 = sadd.s32 %s174, 1
    %s176 = scalar_select %p173, %s174, %s175
    %p179 = pneg %p173
    %p180 = scmp.eq.s32.totalorder %s12, 3
    %p181 = por %p179, %p180
    %p182 = scmp.ne.s32.totalorder %s174, %s177
    %p183 = scmp.eq.s32.totalorder %s12, 0
    %p184 = por %p182, %p183
    %p185 = scmp.ne.s32.totalorder %s174, %s177
    %p186 = scmp.eq.s32.totalorder %s17, 3
    %p187 = por %p185, %p186
    %p188 = scmp.ne.s32.totalorder %s177, %s178
    %p189 = scmp.eq.s32.totalorder %s17, 0
    %p190 = por %p188, %p189
    %p191 = scmp.ne.s32.totalorder %s177, %s178
    %p192 = scmp.eq.s32.totalorder %s18, 3
    %p193 = por %p191, %p192
    %p195 = scmp.ne.s32.totalorder %s178, %s194
    %p196 = scmp.eq.s32.totalorder %s18, 0
    %p197 = por %p195, %p196
    %p198 = scmp.le.s32.totalorder 1, %s12
    %p199 = scmp.lt.s32.totalorder %s12, 5
    %p200 = pnand %p198, %p199
    %p201 = pneg %p200
    // Predicated region
    $region9: #{farnet_forward.17} parent=5 // pred_check
      _
    $region10: #{farnet_forward.17} parent=5 // pred_check_branch
      %203 = sbr.rel (%p200) target = $region12
    $region11: #{farnet_forward.17} parent=5 // pred_region
      %s204 = ssub.s32 %s12, 1
      // Predicated region
      $region13: #{farnet_forward.17} parent=11 // pred_check
        %p205 = pneg %p73
      $region14: #{farnet_forward.17} parent=11 // pred_check_branch
        %207 = sbr.rel (%p205) target = $region16
      $region15: #{farnet_forward.17} parent=11 // pred_region
        _
      $region16: #{farnet_forward.17} parent=11 // pred_fallthru
        _
      // Predicated region
      $region17: #{farnet_forward.17} parent=11 // pred_check
        %p208 = pneg %p94
      $region18: #{farnet_forward.17} parent=11 // pred_check_branch
        %210 = sbr.rel (%p208) target = $region20
      $region19: #{farnet_forward.17} parent=11 // pred_region
        _
      $region20: #{farnet_forward.17} parent=11 // pred_fallthru
        _
      // Predicated region
      $region21: #{farnet_forward.17} parent=11 // pred_check
        %p211 = pneg %p115
      $region22: #{farnet_forward.17} parent=11 // pred_check_branch
        %213 = sbr.rel (%p211) target = $region24
      $region23: #{farnet_forward.17} parent=11 // pred_region
        _
      $region24: #{farnet_forward.17} parent=11 // pred_fallthru
        _
      // Predicated region
      $region25: #{farnet_forward.17} parent=11 // pred_check
        %p214 = pneg %p136
      $region26: #{farnet_forward.17} parent=11 // pred_check_branch
        %216 = sbr.rel (%p214) target = $region28
      $region27: #{farnet_forward.17} parent=11 // pred_region
        _
      $region28: #{farnet_forward.17} parent=11 // pred_fallthru
        _
    $region12: #{farnet_forward.17} parent=5 // pred_fallthru
      _
    %p217 = scmp.lt.s32.totalorder %s12, 4
    // Predicated region
    $region29: #{farnet_forward.17} parent=5 // pred_check
      %p218 = pneg %p217
    $region30: #{farnet_forward.17} parent=5 // pred_check_branch
      %220 = sbr.rel (%p218) target = $region32
    $region31: #{farnet_forward.17} parent=5 // pred_region
      // Predicated region
      $region33: #{farnet_forward.17} parent=31 // pred_check
        %p221 = pneg %p46
      $region34: #{farnet_forward.17} parent=31 // pred_check_branch
        %223 = sbr.rel (%p221) target = $region36
      $region35: #{farnet_forward.17} parent=31 // pred_region
        %s224 = smul.u32 16, %s20
        %p225 = scmp.lt.s32.totalorder %s19, 1
        %s226 = scalar_select %p225, %s19, 1
        %p227 = scmp.lt.s32.totalorder %s224, 31
        %s228 = scalar_select %p227, %s224, 31
        %s229 = smul.addr %s226, 32
        %s230 = sadd.s32 %s228, %s229
        %s231 = smul.addr %s230, 8
        %s232 = scalar_lea.vmem %s0, %s231
        %s233 = smul.u32 16, %s20
      $region36: #{farnet_forward.17} parent=31 // pred_fallthru
        _
      // Predicated region
      $region37: #{farnet_forward.17} parent=31 // pred_check
        %p234 = pneg %p156
      $region38: #{farnet_forward.17} parent=31 // pred_check_branch
        %236 = sbr.rel (%p234) target = $region40
      $region39: #{farnet_forward.17} parent=31 // pred_region
        %p237 = scmp.lt.s32.totalorder %s19, 1
        %s238 = scalar_select %p237, %s19, 1
        %s239 = scalar_lea.vmem %s5, %s238
      $region40: #{farnet_forward.17} parent=31 // pred_fallthru
        _
    $region32: #{farnet_forward.17} parent=5 // pred_fallthru
      _
    %p240 = scmp.le.s32.totalorder 1, %s12
    %p241 = scmp.lt.s32.totalorder %s12, 5
    %p242 = pnand %p240, %p241
    %p243 = pneg %p242
    // Predicated region
    $region41: #{farnet_forward.17} parent=5 // pred_check
      _
    $region42: #{farnet_forward.17} parent=5 // pred_check_branch
      %245 = sbr.rel (%p242) target = $region44
    $region43: #{farnet_forward.17} parent=5 // pred_region
      %s246 = ssub.s32 %s12, 1
      %s247 = smul.u32 16, %s22
      %p248 = scmp.lt.s32.totalorder %s21, 1
      %s249 = scalar_select %p248, %s21, 1
      %p250 = scmp.lt.s32.totalorder %s247, 31
      %s251 = scalar_select %p250, %s247, 31
      %s252 = smul.addr %s249, 32
      %s253 = sadd.s32 %s251, %s252
      %s254 = smul.addr %s253, 8
      %s255 = scalar_lea.vmem %s0, %s254
      %p256 = pneg %p52
      %p257 = pneg %p49
      %p258 = pneg %p73
      %p259 = pneg %p70
      %p260 = pneg %p94
      %p261 = pneg %p91
      %p262 = pneg %p115
      %p263 = pneg %p112
      %p264 = pneg %p136
      %p265 = pneg %p133
      %p266 = scmp.lt.s32.totalorder %s21, 1
      %s267 = scalar_select %p266, %s21, 1
      %s268 = scalar_lea.vmem %s5, %s267
      %p269 = pneg %p162
      %p270 = pneg %p159
      %p271 = pneg %p190
      %p272 = pneg %p187
      %s273 = smul.u32 16, %s22
      %p274 = scmp.lt.s32.totalorder %s21, 1
      %s275 = scalar_select %p274, %s21, 1
      %p276 = scmp.lt.s32.totalorder %s273, 31
      %s277 = scalar_select %p276, %s273, 31
      %s278 = smul.addr %s275, 32
      %s279 = sadd.s32 %s277, %s278
      %s280 = smul.addr %s279, 8
      %s281 = scalar_lea.vmem %s6, %s280
      %s282 = smul.u32 16, %s22
      %p283 = scmp.lt.s32.totalorder %s21, 1
      %s284 = scalar_select %p283, %s21, 1
      %p285 = scmp.lt.s32.totalorder %s282, 31
      %s286 = scalar_select %p285, %s282, 31
      %s287 = smul.addr %s284, 32
      %s288 = sadd.s32 %s286, %s287
      %s289 = smul.addr %s288, 8
      %s290 = scalar_lea.vmem %s0, %s289
      %s291 = smul.u32 16, %s22
      %p292 = scmp.lt.s32.totalorder %s21, 1
      %s293 = scalar_select %p292, %s21, 1
      %s294 = scalar_lea.vmem %s5, %s293
      %s295 = smul.u32 16, %s22
      %p296 = scmp.lt.s32.totalorder %s21, 1
      %s297 = scalar_select %p296, %s21, 1
      %p298 = scmp.lt.s32.totalorder %s295, 31
      %s299 = scalar_select %p298, %s295, 31
      %s300 = smul.addr %s297, 32
      %s301 = sadd.s32 %s299, %s300
      %s302 = smul.addr %s301, 8
      %s303 = scalar_lea.vmem %s6, %s302
      %s304 = smul.u32 16, %s22
      %v306 = vld [vmem:[%s290] sm:$0xff]
      %v307 = vld [vmem:[%s290 + $0x8] sm:$0xff]
      %v308 = vld [vmem:[%s290 + $0x10] sm:$0xff]
      %v309 = vld [vmem:[%s290 + $0x18] sm:$0xff]
      %v310 = vld [vmem:[%s290 + $0x20] sm:$0xff]
      %v311 = vld [vmem:[%s290 + $0x28] sm:$0xff]
      %v312 = vld [vmem:[%s290 + $0x30] sm:$0xff]
      %v313 = vld [vmem:[%s290 + $0x38] sm:$0xff]
      %v314 = vld [vmem:[%s290 + $0x40] sm:$0xff]
      %v315 = vld [vmem:[%s290 + $0x48] sm:$0xff]
      %v316 = vld [vmem:[%s290 + $0x50] sm:$0xff]
      %v317 = vld [vmem:[%s290 + $0x58] sm:$0xff]
      %v318 = vld [vmem:[%s290 + $0x60] sm:$0xff]
      %v319 = vld [vmem:[%s290 + $0x68] sm:$0xff]
      %v320 = vld [vmem:[%s290 + $0x70] sm:$0xff]
      %v321 = vld [vmem:[%s290 + $0x78] sm:$0xff]
      %v322 = vpack.c.bf16 %v307, %v306
      %v323 = vpack.c.bf16 %v309, %v308
      %v324 = vpack.c.bf16 %v311, %v310
      %v325 = vpack.c.bf16 %v313, %v312
      %v326 = vpack.c.bf16 %v315, %v314
      %v327 = vpack.c.bf16 %v317, %v316
      %v328 = vpack.c.bf16 %v319, %v318
      %v329 = vpack.c.bf16 %v321, %v320
      %v330 = vld [vmem:[%s1] sm:$0xf]
      %v331 = vld [vmem:[%s1 + $0x4] sm:$0xf]
      %v332 = vld [vmem:[%s1 + $0x8] sm:$0xf]
      %v333 = vld [vmem:[%s1 + $0xc] sm:$0xf]
      %v334 = vld [vmem:[%s2] sm:$0x1]
      %v336 = vperm.slane %v334, 0
      %v342 = vunpack.c.l.b16 %v330
      %v343 = vunpack.c.l.b16 %v331
      %v344 = vunpack.c.l.b16 %v332
      %v345 = vunpack.c.l.b16 %v333
      %v346 = vpack.c.b16 %v343, %v342
      %v347 = vpack.c.b16 %v345, %v344
      %vm350 = vcmask 261120
      %v352 = vsel %vm350, %v322, 0
      %v355 = vsel %vm350, %v323, 0
      %v358 = vsel %vm350, %v324, 0
      %v361 = vsel %vm350, %v325, 0
      %v364 = vsel %vm350, %v326, 0
      %v367 = vsel %vm350, %v327, 0
      %v370 = vsel %vm350, %v328, 0
      %v373 = vsel %vm350, %v329, 0
      %375 = vmatpush.bf16.msra.mxu0 0
      %376 = vmatpush.bf16.msra.mxu0 0
      %377 = vmatpush.bf16.msra.mxu0 0
      %378 = vmatpush.bf16.msra.mxu0 0
      %379 = vmatpush.bf16.msra.mxu0 0
      %380 = vmatpush.bf16.msra.mxu0 0
      %381 = vmatpush.bf16.msra.mxu0 %v347
      %382 = vmatpush.bf16.msra.mxu0 %v346
      %383 = vmatmul.bf16.gmra.mxu0 %v352
      %v384 = vpop.f32.mrf.mxu0
      %v385 = vadd.f32 %v336, %v384
      %v386 = vpop.f32.mrf.mxu0
      %v387 = vadd.f32 %v336, %v386
      %388 = vmatmul.bf16.gmra.mxu0 %v355
      %v389 = vpop.f32.mrf.mxu0
      %v390 = vadd.f32 %v336, %v389
      %v391 = vpop.f32.mrf.mxu0
      %v392 = vadd.f32 %v336, %v391
      %393 = vmatmul.bf16.gmra.mxu0 %v358
      %v394 = vpop.f32.mrf.mxu0
      %v395 = vadd.f32 %v336, %v394
      %v396 = vpop.f32.mrf.mxu0
      %v397 = vadd.f32 %v336, %v396
      %398 = vmatmul.bf16.gmra.mxu0 %v361
      %v399 = vpop.f32.mrf.mxu0
      %v400 = vadd.f32 %v336, %v399
      %v401 = vpop.f32.mrf.mxu0
      %v402 = vadd.f32 %v336, %v401
      %403 = vmatmul.bf16.gmra.mxu0 %v364
      %v404 = vpop.f32.mrf.mxu0
      %v405 = vadd.f32 %v336, %v404
      %v406 = vpop.f32.mrf.mxu0
      %v407 = vadd.f32 %v336, %v406
      %408 = vmatmul.bf16.gmra.mxu0 %v367
      %v409 = vpop.f32.mrf.mxu0
      %v410 = vadd.f32 %v336, %v409
      %v411 = vpop.f32.mrf.mxu0
      %v412 = vadd.f32 %v336, %v411
      %413 = vmatmul.bf16.gmra.mxu0 %v370
      %v414 = vpop.f32.mrf.mxu0
      %v415 = vadd.f32 %v336, %v414
      %v416 = vpop.f32.mrf.mxu0
      %v417 = vadd.f32 %v336, %v416
      %418 = vmatmul.bf16.gmra.mxu0 %v373
      %v419 = vpop.f32.mrf.mxu0
      %v420 = vadd.f32 %v336, %v419
      %v421 = vpop.f32.mrf.mxu0
      %v422 = vadd.f32 %v336, %v421
      %423 = vdwg.mxu0
      %v424 = vmax.f32 %v385, 0.0
      %v425 = vmax.f32 %v387, 0.0
      %v426 = vmax.f32 %v390, 0.0
      %v427 = vmax.f32 %v392, 0.0
      %v428 = vmax.f32 %v395, 0.0
      %v429 = vmax.f32 %v397, 0.0
      %v430 = vmax.f32 %v400, 0.0
      %v431 = vmax.f32 %v402, 0.0
      %v432 = vmax.f32 %v405, 0.0
      %v433 = vmax.f32 %v407, 0.0
      %v434 = vmax.f32 %v410, 0.0
      %v435 = vmax.f32 %v412, 0.0
      %v436 = vmax.f32 %v415, 0.0
      %v437 = vmax.f32 %v417, 0.0
      %v438 = vmax.f32 %v420, 0.0
      %v439 = vmax.f32 %v422, 0.0
      %v440 = vld [vmem:[%s3] sm:$0xf]
      %v441 = vld [vmem:[%s3 + $0x4] sm:$0xf]
      %v442 = vld [vmem:[%s3 + $0x8] sm:$0xf]
      %v443 = vld [vmem:[%s3 + $0xc] sm:$0xf]
      %v444 = vld [vmem:[%s4] sm:$0x1]
      %v446 = vperm.slane %v444, 0
      %v452 = vunpack.c.l.b16 %v440
      %v453 = vunpack.c.l.b16 %v441
      %v454 = vunpack.c.l.b16 %v442
      %v455 = vunpack.c.l.b16 %v443
      %v456 = vpack.c.b16 %v453, %v452
      %v457 = vpack.c.b16 %v455, %v454
      %460 = vmatpush.bf16.msra.mxu0 0
      %461 = vmatpush.bf16.msra.mxu0 0
      %462 = vmatpush.bf16.msra.mxu0 0
      %463 = vmatpush.bf16.msra.mxu0 0
      %464 = vmatpush.bf16.msra.mxu0 0
      %465 = vmatpush.bf16.msra.mxu0 0
      %466 = vmatpush.bf16.msra.mxu0 %v457
      %467 = vmatpush.bf16.msra.mxu0 %v456
      %468 = vmatmul.bf16.gmra.mxu0 %v352
      %v469 = vpop.f32.mrf.mxu0
      %v470 = vadd.f32 %v446, %v469
      %v471 = vpop.f32.mrf.mxu0
      %v472 = vadd.f32 %v446, %v471
      %473 = vmatmul.bf16.gmra.mxu0 %v355
      %v474 = vpop.f32.mrf.mxu0
      %v475 = vadd.f32 %v446, %v474
      %v476 = vpop.f32.mrf.mxu0
      %v477 = vadd.f32 %v446, %v476
      %478 = vmatmul.bf16.gmra.mxu0 %v358
      %v479 = vpop.f32.mrf.mxu0
      %v480 = vadd.f32 %v446, %v479
      %v481 = vpop.f32.mrf.mxu0
      %v482 = vadd.f32 %v446, %v481
      %483 = vmatmul.bf16.gmra.mxu0 %v361
      %v484 = vpop.f32.mrf.mxu0
      %v485 = vadd.f32 %v446, %v484
      %v486 = vpop.f32.mrf.mxu0
      %v487 = vadd.f32 %v446, %v486
      %488 = vmatmul.bf16.gmra.mxu0 %v364
      %v489 = vpop.f32.mrf.mxu0
      %v490 = vadd.f32 %v446, %v489
      %v491 = vpop.f32.mrf.mxu0
      %v492 = vadd.f32 %v446, %v491
      %493 = vmatmul.bf16.gmra.mxu0 %v367
      %v494 = vpop.f32.mrf.mxu0
      %v495 = vadd.f32 %v446, %v494
      %v496 = vpop.f32.mrf.mxu0
      %v497 = vadd.f32 %v446, %v496
      %498 = vmatmul.bf16.gmra.mxu0 %v370
      %v499 = vpop.f32.mrf.mxu0
      %v500 = vadd.f32 %v446, %v499
      %v501 = vpop.f32.mrf.mxu0
      %v502 = vadd.f32 %v446, %v501
      %503 = vmatmul.bf16.gmra.mxu0 %v373
      %v504 = vpop.f32.mrf.mxu0
      %v505 = vadd.f32 %v446, %v504
      %v506 = vpop.f32.mrf.mxu0
      %v507 = vadd.f32 %v446, %v506
      %508 = vdwg.mxu0
      %v509 = vmax.f32 %v470, 0.0
      %v510 = vmax.f32 %v472, 0.0
      %v511 = vmax.f32 %v475, 0.0
      %v512 = vmax.f32 %v477, 0.0
      %v513 = vmax.f32 %v480, 0.0
      %v514 = vmax.f32 %v482, 0.0
      %v515 = vmax.f32 %v485, 0.0
      %v516 = vmax.f32 %v487, 0.0
      %v517 = vmax.f32 %v490, 0.0
      %v518 = vmax.f32 %v492, 0.0
      %v519 = vmax.f32 %v495, 0.0
      %v520 = vmax.f32 %v497, 0.0
      %v521 = vmax.f32 %v500, 0.0
      %v522 = vmax.f32 %v502, 0.0
      %v523 = vmax.f32 %v505, 0.0
      %v524 = vmax.f32 %v507, 0.0
      %v525 = vld [vmem:[%s294] sm:$0x1]
      %v527 = vperm.slane %v525, 0
      %v529 = vmul.f32 %v424, %v527
      %v530 = vmul.f32 %v425, %v527
      %v531 = vmul.f32 %v426, %v527
      %v532 = vmul.f32 %v427, %v527
      %v533 = vmul.f32 %v428, %v527
      %v534 = vmul.f32 %v429, %v527
      %v535 = vmul.f32 %v430, %v527
      %v536 = vmul.f32 %v431, %v527
      %v537 = vmul.f32 %v432, %v527
      %v538 = vmul.f32 %v433, %v527
      %v539 = vmul.f32 %v434, %v527
      %v540 = vmul.f32 %v435, %v527
      %v541 = vmul.f32 %v436, %v527
      %v542 = vmul.f32 %v437, %v527
      %v543 = vmul.f32 %v438, %v527
      %v544 = vmul.f32 %v439, %v527
      %v545 = vsub.f32 0.0, %v529
      %v546 = vsub.f32 0.0, %v530
      %v547 = vsub.f32 0.0, %v531
      %v548 = vsub.f32 0.0, %v532
      %v549 = vsub.f32 0.0, %v533
      %v550 = vsub.f32 0.0, %v534
      %v551 = vsub.f32 0.0, %v535
      %v552 = vsub.f32 0.0, %v536
      %v553 = vsub.f32 0.0, %v537
      %v554 = vsub.f32 0.0, %v538
      %v555 = vsub.f32 0.0, %v539
      %v556 = vsub.f32 0.0, %v540
      %v557 = vsub.f32 0.0, %v541
      %v558 = vsub.f32 0.0, %v542
      %v559 = vsub.f32 0.0, %v543
      %v560 = vsub.f32 0.0, %v544
      %v561 = vmul.f32 %v545, 1.442695
      %v562 = vpow.pop %v561
      %v563 = vmul.f32 %v546, 1.442695
      %v564 = vpow.pop %v563
      %v565 = vmul.f32 %v547, 1.442695
      %v566 = vpow.pop %v565
      %v567 = vmul.f32 %v548, 1.442695
      %v568 = vpow.pop %v567
      %v569 = vmul.f32 %v549, 1.442695
      %v570 = vpow.pop %v569
      %v571 = vmul.f32 %v550, 1.442695
      %v572 = vpow.pop %v571
      %v573 = vmul.f32 %v551, 1.442695
      %v574 = vpow.pop %v573
      %v575 = vmul.f32 %v552, 1.442695
      %v576 = vpow.pop %v575
      %v577 = vmul.f32 %v553, 1.442695
      %v578 = vpow.pop %v577
      %v579 = vmul.f32 %v554, 1.442695
      %v580 = vpow.pop %v579
      %v581 = vmul.f32 %v555, 1.442695
      %v582 = vpow.pop %v581
      %v583 = vmul.f32 %v556, 1.442695
      %v584 = vpow.pop %v583
      %v585 = vmul.f32 %v557, 1.442695
      %v586 = vpow.pop %v585
      %v587 = vmul.f32 %v558, 1.442695
      %v588 = vpow.pop %v587
      %v589 = vmul.f32 %v559, 1.442695
      %v590 = vpow.pop %v589
      %v591 = vmul.f32 %v560, 1.442695
      %v592 = vpow.pop %v591
      %v593 = vadd.f32 %v562, 1.0
      %v594 = vadd.f32 %v564, 1.0
      %v595 = vadd.f32 %v566, 1.0
      %v596 = vadd.f32 %v568, 1.0
      %v597 = vadd.f32 %v570, 1.0
      %v598 = vadd.f32 %v572, 1.0
      %v599 = vadd.f32 %v574, 1.0
      %v600 = vadd.f32 %v576, 1.0
      %v601 = vadd.f32 %v578, 1.0
      %v602 = vadd.f32 %v580, 1.0
      %v603 = vadd.f32 %v582, 1.0
      %v604 = vadd.f32 %v584, 1.0
      %v605 = vadd.f32 %v586, 1.0
      %v606 = vadd.f32 %v588, 1.0
      %v607 = vadd.f32 %v590, 1.0
      %v608 = vadd.f32 %v592, 1.0
      %v609 = vrcp.pop %v593
      %v610 = vmul.f32 %v593, %v609
      %v611 = vsub.f32 1.0, %v610
      %v612 = vmul.f32 %v609, %v611
      %v613 = vadd.f32 %v609, %v612
      %vm614 = vweird.f32 %v593
      %vm615 = vweird.f32 %v609
      %vm616 = vmor %vm614, %vm615
      %v617 = vsel %vm616, %v609, %v613
      %v618 = vand.u32 2147483647, %v593
      %vm619 = vcmp.eq.f32.partialorder %v618, 8.507059e+37
      %v620 = vand.u32 %v593, 2147483648
      %v621 = vor.u32 1.1754944e-38, %v620
      %v622 = vsel %vm619, %v621, %v617
      %v623 = vmul.f32 %v509, %v622
      %v624 = vrcp.pop %v594
      %v625 = vmul.f32 %v594, %v624
      %v626 = vsub.f32 1.0, %v625
      %v627 = vmul.f32 %v624, %v626
      %v628 = vadd.f32 %v624, %v627
      %vm629 = vweird.f32 %v594
      %vm630 = vweird.f32 %v624
      %vm631 = vmor %vm629, %vm630
      %v632 = vsel %vm631, %v624, %v628
      %v633 = vand.u32 2147483647, %v594
      %vm634 = vcmp.eq.f32.partialorder %v633, 8.507059e+37
      %v635 = vand.u32 %v594, 2147483648
      %v636 = vor.u32 1.1754944e-38, %v635
      %v637 = vsel %vm634, %v636, %v632
      %v638 = vmul.f32 %v510, %v637
      %v639 = vrcp.pop %v595
      %v640 = vmul.f32 %v595, %v639
      %v641 = vsub.f32 1.0, %v640
      %v642 = vmul.f32 %v639, %v641
      %v643 = vadd.f32 %v639, %v642
      %vm644 = vweird.f32 %v595
      %vm645 = vweird.f32 %v639
      %vm646 = vmor %vm644, %vm645
      %v647 = vsel %vm646, %v639, %v643
      %v648 = vand.u32 2147483647, %v595
      %vm649 = vcmp.eq.f32.partialorder %v648, 8.507059e+37
      %v650 = vand.u32 %v595, 2147483648
      %v651 = vor.u32 1.1754944e-38, %v650
      %v652 = vsel %vm649, %v651, %v647
      %v653 = vmul.f32 %v511, %v652
      %v654 = vrcp.pop %v596
      %v655 = vmul.f32 %v596, %v654
      %v656 = vsub.f32 1.0, %v655
      %v657 = vmul.f32 %v654, %v656
      %v658 = vadd.f32 %v654, %v657
      %vm659 = vweird.f32 %v596
      %vm660 = vweird.f32 %v654
      %vm661 = vmor %vm659, %vm660
      %v662 = vsel %vm661, %v654, %v658
      %v663 = vand.u32 2147483647, %v596
      %vm664 = vcmp.eq.f32.partialorder %v663, 8.507059e+37
      %v665 = vand.u32 %v596, 2147483648
      %v666 = vor.u32 1.1754944e-38, %v665
      %v667 = vsel %vm664, %v666, %v662
      %v668 = vmul.f32 %v512, %v667
      %v669 = vrcp.pop %v597
      %v670 = vmul.f32 %v597, %v669
      %v671 = vsub.f32 1.0, %v670
      %v672 = vmul.f32 %v669, %v671
      %v673 = vadd.f32 %v669, %v672
      %vm674 = vweird.f32 %v597
      %vm675 = vweird.f32 %v669
      %vm676 = vmor %vm674, %vm675
      %v677 = vsel %vm676, %v669, %v673
      %v678 = vand.u32 2147483647, %v597
      %vm679 = vcmp.eq.f32.partialorder %v678, 8.507059e+37
      %v680 = vand.u32 %v597, 2147483648
      %v681 = vor.u32 1.1754944e-38, %v680
      %v682 = vsel %vm679, %v681, %v677
      %v683 = vmul.f32 %v513, %v682
      %v684 = vrcp.pop %v598
      %v685 = vmul.f32 %v598, %v684
      %v686 = vsub.f32 1.0, %v685
      %v687 = vmul.f32 %v684, %v686
      %v688 = vadd.f32 %v684, %v687
      %vm689 = vweird.f32 %v598
      %vm690 = vweird.f32 %v684
      %vm691 = vmor %vm689, %vm690
      %v692 = vsel %vm691, %v684, %v688
      %v693 = vand.u32 2147483647, %v598
      %vm694 = vcmp.eq.f32.partialorder %v693, 8.507059e+37
      %v695 = vand.u32 %v598, 2147483648
      %v696 = vor.u32 1.1754944e-38, %v695
      %v697 = vsel %vm694, %v696, %v692
      %v698 = vmul.f32 %v514, %v697
      %v699 = vrcp.pop %v599
      %v700 = vmul.f32 %v599, %v699
      %v701 = vsub.f32 1.0, %v700
      %v702 = vmul.f32 %v699, %v701
      %v703 = vadd.f32 %v699, %v702
      %vm704 = vweird.f32 %v599
      %vm705 = vweird.f32 %v699
      %vm706 = vmor %vm704, %vm705
      %v707 = vsel %vm706, %v699, %v703
      %v708 = vand.u32 2147483647, %v599
      %vm709 = vcmp.eq.f32.partialorder %v708, 8.507059e+37
      %v710 = vand.u32 %v599, 2147483648
      %v711 = vor.u32 1.1754944e-38, %v710
      %v712 = vsel %vm709, %v711, %v707
      %v713 = vmul.f32 %v515, %v712
      %v714 = vrcp.pop %v600
      %v715 = vmul.f32 %v600, %v714
      %v716 = vsub.f32 1.0, %v715
      %v717 = vmul.f32 %v714, %v716
      %v718 = vadd.f32 %v714, %v717
      %vm719 = vweird.f32 %v600
      %vm720 = vweird.f32 %v714
      %vm721 = vmor %vm719, %vm720
      %v722 = vsel %vm721, %v714, %v718
      %v723 = vand.u32 2147483647, %v600
      %vm724 = vcmp.eq.f32.partialorder %v723, 8.507059e+37
      %v725 = vand.u32 %v600, 2147483648
      %v726 = vor.u32 1.1754944e-38, %v725
      %v727 = vsel %vm724, %v726, %v722
      %v728 = vmul.f32 %v516, %v727
      %v729 = vrcp.pop %v601
      %v730 = vmul.f32 %v601, %v729
      %v731 = vsub.f32 1.0, %v730
      %v732 = vmul.f32 %v729, %v731
      %v733 = vadd.f32 %v729, %v732
      %vm734 = vweird.f32 %v601
      %vm735 = vweird.f32 %v729
      %vm736 = vmor %vm734, %vm735
      %v737 = vsel %vm736, %v729, %v733
      %v738 = vand.u32 2147483647, %v601
      %vm739 = vcmp.eq.f32.partialorder %v738, 8.507059e+37
      %v740 = vand.u32 %v601, 2147483648
      %v741 = vor.u32 1.1754944e-38, %v740
      %v742 = vsel %vm739, %v741, %v737
      %v743 = vmul.f32 %v517, %v742
      %v744 = vrcp.pop %v602
      %v745 = vmul.f32 %v602, %v744
      %v746 = vsub.f32 1.0, %v745
      %v747 = vmul.f32 %v744, %v746
      %v748 = vadd.f32 %v744, %v747
      %vm749 = vweird.f32 %v602
      %vm750 = vweird.f32 %v744
      %vm751 = vmor %vm749, %vm750
      %v752 = vsel %vm751, %v744, %v748
      %v753 = vand.u32 2147483647, %v602
      %vm754 = vcmp.eq.f32.partialorder %v753, 8.507059e+37
      %v755 = vand.u32 %v602, 2147483648
      %v756 = vor.u32 1.1754944e-38, %v755
      %v757 = vsel %vm754, %v756, %v752
      %v758 = vmul.f32 %v518, %v757
      %v759 = vrcp.pop %v603
      %v760 = vmul.f32 %v603, %v759
      %v761 = vsub.f32 1.0, %v760
      %v762 = vmul.f32 %v759, %v761
      %v763 = vadd.f32 %v759, %v762
      %vm764 = vweird.f32 %v603
      %vm765 = vweird.f32 %v759
      %vm766 = vmor %vm764, %vm765
      %v767 = vsel %vm766, %v759, %v763
      %v768 = vand.u32 2147483647, %v603
      %vm769 = vcmp.eq.f32.partialorder %v768, 8.507059e+37
      %v770 = vand.u32 %v603, 2147483648
      %v771 = vor.u32 1.1754944e-38, %v770
      %v772 = vsel %vm769, %v771, %v767
      %v773 = vmul.f32 %v519, %v772
      %v774 = vrcp.pop %v604
      %v775 = vmul.f32 %v604, %v774
      %v776 = vsub.f32 1.0, %v775
      %v777 = vmul.f32 %v774, %v776
      %v778 = vadd.f32 %v774, %v777
      %vm779 = vweird.f32 %v604
      %vm780 = vweird.f32 %v774
      %vm781 = vmor %vm779, %vm780
      %v782 = vsel %vm781, %v774, %v778
      %v783 = vand.u32 2147483647, %v604
      %vm784 = vcmp.eq.f32.partialorder %v783, 8.507059e+37
      %v785 = vand.u32 %v604, 2147483648
      %v786 = vor.u32 1.1754944e-38, %v785
      %v787 = vsel %vm784, %v786, %v782
      %v788 = vmul.f32 %v520, %v787
      %v789 = vrcp.pop %v605
      %v790 = vmul.f32 %v605, %v789
      %v791 = vsub.f32 1.0, %v790
      %v792 = vmul.f32 %v789, %v791
      %v793 = vadd.f32 %v789, %v792
      %vm794 = vweird.f32 %v605
      %vm795 = vweird.f32 %v789
      %vm796 = vmor %vm794, %vm795
      %v797 = vsel %vm796, %v789, %v793
      %v798 = vand.u32 2147483647, %v605
      %vm799 = vcmp.eq.f32.partialorder %v798, 8.507059e+37
      %v800 = vand.u32 %v605, 2147483648
      %v801 = vor.u32 1.1754944e-38, %v800
      %v802 = vsel %vm799, %v801, %v797
      %v803 = vmul.f32 %v521, %v802
      %v804 = vrcp.pop %v606
      %v805 = vmul.f32 %v606, %v804
      %v806 = vsub.f32 1.0, %v805
      %v807 = vmul.f32 %v804, %v806
      %v808 = vadd.f32 %v804, %v807
      %vm809 = vweird.f32 %v606
      %vm810 = vweird.f32 %v804
      %vm811 = vmor %vm809, %vm810
      %v812 = vsel %vm811, %v804, %v808
      %v813 = vand.u32 2147483647, %v606
      %vm814 = vcmp.eq.f32.partialorder %v813, 8.507059e+37
      %v815 = vand.u32 %v606, 2147483648
      %v816 = vor.u32 1.1754944e-38, %v815
      %v817 = vsel %vm814, %v816, %v812
      %v818 = vmul.f32 %v522, %v817
      %v819 = vrcp.pop %v607
      %v820 = vmul.f32 %v607, %v819
      %v821 = vsub.f32 1.0, %v820
      %v822 = vmul.f32 %v819, %v821
      %v823 = vadd.f32 %v819, %v822
      %vm824 = vweird.f32 %v607
      %vm825 = vweird.f32 %v819
      %vm826 = vmor %vm824, %vm825
      %v827 = vsel %vm826, %v819, %v823
      %v828 = vand.u32 2147483647, %v607
      %vm829 = vcmp.eq.f32.partialorder %v828, 8.507059e+37
      %v830 = vand.u32 %v607, 2147483648
      %v831 = vor.u32 1.1754944e-38, %v830
      %v832 = vsel %vm829, %v831, %v827
      %v833 = vmul.f32 %v523, %v832
      %v834 = vrcp.pop %v608
      %v835 = vmul.f32 %v608, %v834
      %v836 = vsub.f32 1.0, %v835
      %v837 = vmul.f32 %v834, %v836
      %v838 = vadd.f32 %v834, %v837
      %vm839 = vweird.f32 %v608
      %vm840 = vweird.f32 %v834
      %vm841 = vmor %vm839, %vm840
      %v842 = vsel %vm841, %v834, %v838
      %v843 = vand.u32 2147483647, %v608
      %vm844 = vcmp.eq.f32.partialorder %v843, 8.507059e+37
      %v845 = vand.u32 %v608, 2147483648
      %v846 = vor.u32 1.1754944e-38, %v845
      %v847 = vsel %vm844, %v846, %v842
      %v848 = vmul.f32 %v524, %v847
      %849 = vst.msk [vmem:[%s303] sm:$0xff] %vm350, %v623
      %850 = vst.msk [vmem:[%s303 + $0x8] sm:$0xff] %vm350, %v638
      %851 = vst.msk [vmem:[%s303 + $0x10] sm:$0xff] %vm350, %v653
      %852 = vst.msk [vmem:[%s303 + $0x18] sm:$0xff] %vm350, %v668
      %853 = vst.msk [vmem:[%s303 + $0x20] sm:$0xff] %vm350, %v683
      %854 = vst.msk [vmem:[%s303 + $0x28] sm:$0xff] %vm350, %v698
      %855 = vst.msk [vmem:[%s303 + $0x30] sm:$0xff] %vm350, %v713
      %856 = vst.msk [vmem:[%s303 + $0x38] sm:$0xff] %vm350, %v728
      %857 = vst.msk [vmem:[%s303 + $0x40] sm:$0xff] %vm350, %v743
      %858 = vst.msk [vmem:[%s303 + $0x48] sm:$0xff] %vm350, %v758
      %859 = vst.msk [vmem:[%s303 + $0x50] sm:$0xff] %vm350, %v773
      %860 = vst.msk [vmem:[%s303 + $0x58] sm:$0xff] %vm350, %v788
      %861 = vst.msk [vmem:[%s303 + $0x60] sm:$0xff] %vm350, %v803
      %862 = vst.msk [vmem:[%s303 + $0x68] sm:$0xff] %vm350, %v818
      %863 = vst.msk [vmem:[%s303 + $0x70] sm:$0xff] %vm350, %v833
      %864 = vst.msk [vmem:[%s303 + $0x78] sm:$0xff] %vm350, %v848
      %s865 = smul.u32 16, %s22
      %p866 = scmp.lt.s32.totalorder %s21, 1
      %s867 = scalar_select %p866, %s21, 1
      %p868 = scmp.lt.s32.totalorder %s865, 31
      %s869 = scalar_select %p868, %s865, 31
      %s870 = smul.addr %s867, 32
      %s871 = sadd.s32 %s869, %s870
      %s872 = smul.addr %s871, 8
      %s873 = scalar_lea.vmem %s6, %s872
      // Predicated region
      $region45: #{farnet_forward.17} parent=43 // pred_check
        %p874 = pneg %p187
      $region46: #{farnet_forward.17} parent=43 // pred_check_branch
        %876 = sbr.rel (%p874) target = $region48
      $region47: #{farnet_forward.17} parent=43 // pred_region
        %s877 = smul.u32 16, %s22
      $region48: #{farnet_forward.17} parent=43 // pred_fallthru
        _
    $region44: #{farnet_forward.17} parent=5 // pred_fallthru
      _
    %p878 = scmp.le.s32.totalorder 2, %s12
    // Predicated region
    $region49: #{farnet_forward.17} parent=5 // pred_check
      %p879 = pneg %p878
    $region50: #{farnet_forward.17} parent=5 // pred_check_branch
      %881 = sbr.rel (%p879) target = $region52
    $region51: #{farnet_forward.17} parent=5 // pred_region
      %s882 = ssub.s32 %s12, 2
      // Predicated region
      $region53: #{farnet_forward.17} parent=51 // pred_check
        %p883 = pneg %p193
      $region54: #{farnet_forward.17} parent=51 // pred_check_branch
        %885 = sbr.rel (%p883) target = $region56
      $region55: #{farnet_forward.17} parent=51 // pred_region
        %s886 = smul.u32 16, %s24
        %p887 = scmp.lt.s32.totalorder %s23, 1
        %s888 = scalar_select %p887, %s23, 1
        %p889 = scmp.lt.s32.totalorder %s886, 31
        %s890 = scalar_select %p889, %s886, 31
        %s891 = smul.addr %s888, 32
        %s892 = sadd.s32 %s890, %s891
        %s893 = smul.addr %s892, 8
        %s894 = scalar_lea.vmem %s6, %s893
      $region56: #{farnet_forward.17} parent=51 // pred_fallthru
        _
    $region52: #{farnet_forward.17} parent=5 // pred_fallthru
      _
  $region6: #{farnet_forward.17} parent=0 // loop_footer
    %s16 = sadd.s32 1, %s12
  $region7: #{farnet_forward.17} parent=0 // loop_footer_branch
    %11 = sbr.rel target = $region3
  $region8: #{farnet_forward.17} parent=0 // loop_exit
    _

// kernel: farnet_forward.15
$region0: #{farnet_forward.15}
  #allocation0 [shape = 'u32[]', space=smem, size = 0x4, offset = 0x4, fixed_abs, tag = 'smem constant byte address 0x4 - core index']
  #allocation1 [shape = 'u32[72,128]{1,0:T(1,128)}', space=vmem, size = 0x9000, scoped, tag = 'internal scratch']
  %s0 = inlined_call_operand.vmem [shape: f32[512,32], index: 0, kind: input, shape index: {}]
  %s1 = inlined_call_operand.vmem [shape: bf16[32,32], index: 1, kind: input, shape index: {}]
  %s2 = inlined_call_operand.vmem [shape: f32[1,32], index: 2, kind: input, shape index: {}]
  %s3 = inlined_call_operand.vmem [shape: f32[512,32], index: 3, kind: input, shape index: {}]
  %s4 = inlined_call_operand.vmem [shape: f32[512,32], index: 4, kind: output, shape index: {}]
  %s5 = sld [smem:[#allocation0]]
  $region49: #{farnet_forward.15} parent=0
    _
  %s7 = ssub.s32 1, %s5
  %s8 = scalar_select 0, %s7, %s5
  loop: start=0, step=1, limit=4
  $region2: #{farnet_forward.15} parent=0 // loop_pre_header
    _
  $region3: #{farnet_forward.15} parent=0 // loop_header
    %s10 = sphi 0, %s14
    %p11 = scmp.ge.s32.totalorder %s10, 4
    %s20 = sphi 0, %s22
    %s23 = sphi 0, %s20
    %s24 = sphi 0, %s23
    %s40 = sphi 0, %s24
    %s44 = sphi 0, %s44
    %s46 = sphi 0, %s44
    %s47 = sphi 0, %s46
    %s61 = sphi 0, %s47
    %s65 = sphi 0, %s65
    %s67 = sphi 0, %s65
    %s68 = sphi 0, %s67
    %s82 = sphi 0, %s68
    %s88 = sphi 0, %s90
    %s91 = sphi 0, %s88
    %s92 = sphi 0, %s91
    %s108 = sphi 0, %s92
    %s114 = sphi 0, %s116
    %s117 = sphi 0, %s114
    %s118 = sphi 0, %s117
    %s134 = sphi 0, %s118
  $region4: #{farnet_forward.15} parent=0 // loop_header_branch
    %13 = sbr.rel (%p11) target = $region8
  $region5: #{farnet_forward.15} parent=0 // loop_body
    %s15 = ssub.s32 %s10, 1
    %s16 = ssub.s32 %s10, 2
    %s17 = sadd.s32 %s10, 1
    %s18 = ssub.s32 %s10, %s17
    %p19 = scmp.eq.s32.totalorder %s18, 0
    %s21 = sadd.s32 %s20, 1
    %s22 = scalar_select %p19, %s20, %s21
    %p25 = pneg %p19
    %p26 = scmp.eq.s32.totalorder %s10, 1
    %p27 = por %p25, %p26
    %p28 = scmp.ne.s32.totalorder %s20, %s23
    %p29 = scmp.eq.s32.totalorder %s10, 0
    %p30 = por %p28, %p29
    %p31 = scmp.ne.s32.totalorder %s20, %s23
    %p32 = scmp.eq.s32.totalorder %s15, 1
    %p33 = por %p31, %p32
    %p34 = scmp.ne.s32.totalorder %s23, %s24
    %p35 = scmp.eq.s32.totalorder %s15, 0
    %p36 = por %p34, %p35
    %p37 = scmp.ne.s32.totalorder %s23, %s24
    %p38 = scmp.eq.s32.totalorder %s16, 1
    %p39 = por %p37, %p38
    %p41 = scmp.ne.s32.totalorder %s24, %s40
    %p42 = scmp.eq.s32.totalorder %s16, 0
    %p43 = por %p41, %p42
    %s45 = sadd.s32 %s44, 1
    %p48 = scmp.eq.s32.totalorder %s10, 1
    %p49 = scmp.ne.s32.totalorder %s44, %s46
    %p50 = scmp.eq.s32.totalorder %s10, 0
    %p51 = por %p49, %p50
    %p52 = scmp.ne.s32.totalorder %s44, %s46
    %p53 = scmp.eq.s32.totalorder %s15, 1
    %p54 = por %p52, %p53
    %p55 = scmp.ne.s32.totalorder %s46, %s47
    %p56 = scmp.eq.s32.totalorder %s15, 0
    %p57 = por %p55, %p56
    %p58 = scmp.ne.s32.totalorder %s46, %s47
    %p59 = scmp.eq.s32.totalorder %s16, 1
    %p60 = por %p58, %p59
    %p62 = scmp.ne.s32.totalorder %s47, %s61
    %p63 = scmp.eq.s32.totalorder %s16, 0
    %p64 = por %p62, %p63
    %s66 = sadd.s32 %s65, 1
    %p69 = scmp.eq.s32.totalorder %s10, 1
    %p70 = scmp.ne.s32.totalorder %s65, %s67
    %p71 = scmp.eq.s32.totalorder %s10, 0
    %p72 = por %p70, %p71
    %p73 = scmp.ne.s32.totalorder %s65, %s67
    %p74 = scmp.eq.s32.totalorder %s15, 1
    %p75 = por %p73, %p74
    %p76 = scmp.ne.s32.totalorder %s67, %s68
    %p77 = scmp.eq.s32.totalorder %s15, 0
    %p78 = por %p76, %p77
    %p79 = scmp.ne.s32.totalorder %s67, %s68
    %p80 = scmp.eq.s32.totalorder %s16, 1
    %p81 = por %p79, %p80
    %p83 = scmp.ne.s32.totalorder %s68, %s82
    %p84 = scmp.eq.s32.totalorder %s16, 0
    %p85 = por %p83, %p84
    %s86 = ssub.s32 %s10, %s17
    %p87 = scmp.eq.s32.totalorder %s86, 0
    %s89 = sadd.s32 %s88, 1
    %s90 = scalar_select %p87, %s88, %s89
    %p93 = pneg %p87
    %p94 = scmp.eq.s32.totalorder %s10, 1
    %p95 = por %p93, %p94
    %p96 = scmp.ne.s32.totalorder %s88, %s91
    %p97 = scmp.eq.s32.totalorder %s10, 0
    %p98 = por %p96, %p97
    %p99 = scmp.ne.s32.totalorder %s88, %s91
    %p100 = scmp.eq.s32.totalorder %s15, 1
    %p101 = por %p99, %p100
    %p102 = scmp.ne.s32.totalorder %s91, %s92
    %p103 = scmp.eq.s32.totalorder %s15, 0
    %p104 = por %p102, %p103
    %p105 = scmp.ne.s32.totalorder %s91, %s92
    %p106 = scmp.eq.s32.totalorder %s16, 1
    %p107 = por %p105, %p106
    %p109 = scmp.ne.s32.totalorder %s92, %s108
    %p110 = scmp.eq.s32.totalorder %s16, 0
    %p111 = por %p109, %p110
    %s112 = ssub.s32 %s10, %s17
    %p113 = scmp.eq.s32.totalorder %s112, 0
    %s115 = sadd.s32 %s114, 1
    %s116 = scalar_select %p113, %s114, %s115
    %p119 = pneg %p113
    %p120 = scmp.eq.s32.totalorder %s10, 1
    %p121 = por %p119, %p120
    %p122 = scmp.ne.s32.totalorder %s114, %s117
    %p123 = scmp.eq.s32.totalorder %s10, 0
    %p124 = por %p122, %p123
    %p125 = scmp.ne.s32.totalorder %s114, %s117
    %p126 = scmp.eq.s32.totalorder %s15, 1
    %p127 = por %p125, %p126
    %p128 = scmp.ne.s32.totalorder %s117, %s118
    %p129 = scmp.eq.s32.totalorder %s15, 0
    %p130 = por %p128, %p129
    %p131 = scmp.ne.s32.totalorder %s117, %s118
    %p132 = scmp.eq.s32.totalorder %s16, 1
    %p133 = por %p131, %p132
    %p135 = scmp.ne.s32.totalorder %s118, %s134
    %p136 = scmp.eq.s32.totalorder %s16, 0
    %p137 = por %p135, %p136
    %p138 = scmp.le.s32.totalorder 1, %s10
    %p139 = scmp.lt.s32.totalorder %s10, 3
    %p140 = pnand %p138, %p139
    %p141 = pneg %p140
    // Predicated region
    $region9: #{farnet_forward.15} parent=5 // pred_check
      _
    $region10: #{farnet_forward.15} parent=5 // pred_check_branch
      %143 = sbr.rel (%p140) target = $region12
    $region11: #{farnet_forward.15} parent=5 // pred_region
      %s144 = ssub.s32 %s10, 1
      // Predicated region
      $region13: #{farnet_forward.15} parent=11 // pred_check
        %p145 = pneg %p57
      $region14: #{farnet_forward.15} parent=11 // pred_check_branch
        %147 = sbr.rel (%p145) target = $region16
      $region15: #{farnet_forward.15} parent=11 // pred_region
        _
      $region16: #{farnet_forward.15} parent=11 // pred_fallthru
        _
      // Predicated region
      $region17: #{farnet_forward.15} parent=11 // pred_check
        %p148 = pneg %p78
      $region18: #{farnet_forward.15} parent=11 // pred_check_branch
        %150 = sbr.rel (%p148) target = $region20
      $region19: #{farnet_forward.15} parent=11 // pred_region
        _
      $region20: #{farnet_forward.15} parent=11 // pred_fallthru
        _
    $region12: #{farnet_forward.15} parent=5 // pred_fallthru
      _
    %p151 = scmp.lt.s32.totalorder %s10, 2
    // Predicated region
    $region21: #{farnet_forward.15} parent=5 // pred_check
      %p152 = pneg %p151
    $region22: #{farnet_forward.15} parent=5 // pred_check_branch
      %154 = sbr.rel (%p152) target = $region24
    $region23: #{farnet_forward.15} parent=5 // pred_region
      // Predicated region
      $region25: #{farnet_forward.15} parent=23 // pred_check
        %p155 = pneg %p30
      $region26: #{farnet_forward.15} parent=23 // pred_check_branch
        %157 = sbr.rel (%p155) target = $region28
      $region27: #{farnet_forward.15} parent=23 // pred_region
        %s158 = smul.u32 32, %s10
        %p159 = scmp.lt.s32.totalorder %s158, 63
        %s160 = scalar_select %p159, %s158, 63
        %s161 = smul.addr %s160, 8
        %s162 = scalar_lea.vmem %s0, %s161
        %s163 = smul.u32 32, %s10
      $region28: #{farnet_forward.15} parent=23 // pred_fallthru
        _
      // Predicated region
      $region29: #{farnet_forward.15} parent=23 // pred_check
        %p164 = pneg %p98
      $region30: #{farnet_forward.15} parent=23 // pred_check_branch
        %166 = sbr.rel (%p164) target = $region32
      $region31: #{farnet_forward.15} parent=23 // pred_region
        %s167 = smul.u32 32, %s10
        %p168 = scmp.lt.s32.totalorder %s167, 63
        %s169 = scalar_select %p168, %s167, 63
        %s170 = smul.addr %s169, 8
        %s171 = scalar_lea.vmem %s3, %s170
        %s172 = smul.u32 32, %s10
      $region32: #{farnet_forward.15} parent=23 // pred_fallthru
        _
    $region24: #{farnet_forward.15} parent=5 // pred_fallthru
      _
    %p173 = scmp.le.s32.totalorder 1, %s10
    %p174 = scmp.lt.s32.totalorder %s10, 3
    %p175 = pnand %p173, %p174
    %p176 = pneg %p175
    // Predicated region
    $region33: #{farnet_forward.15} parent=5 // pred_check
      _
    $region34: #{farnet_forward.15} parent=5 // pred_check_branch
      %178 = sbr.rel (%p175) target = $region36
    $region35: #{farnet_forward.15} parent=5 // pred_region
      %s179 = ssub.s32 %s10, 1
      %s180 = smul.u32 32, %s15
      %p181 = scmp.lt.s32.totalorder %s180, 63
      %s182 = scalar_select %p181, %s180, 63
      %s183 = smul.addr %s182, 8
      %s184 = scalar_lea.vmem %s0, %s183
      %p185 = pneg %p36
      %p186 = pneg %p33
      %p187 = pneg %p57
      %p188 = pneg %p54
      %p189 = pneg %p78
      %p190 = pneg %p75
      %s191 = smul.u32 32, %s15
      %p192 = scmp.lt.s32.totalorder %s191, 63
      %s193 = scalar_select %p192, %s191, 63
      %s194 = smul.addr %s193, 8
      %s195 = scalar_lea.vmem %s3, %s194
      %p196 = pneg %p104
      %p197 = pneg %p101
      %p198 = pneg %p130
      %p199 = pneg %p127
      %s200 = smul.u32 32, %s15
      %p201 = scmp.lt.s32.totalorder %s200, 63
      %s202 = scalar_select %p201, %s200, 63
      %s203 = smul.addr %s202, 8
      %s204 = scalar_lea.vmem %s4, %s203
      %s205 = smul.u32 32, %s15
      %p206 = scmp.lt.s32.totalorder %s205, 63
      %s207 = scalar_select %p206, %s205, 63
      %s208 = smul.addr %s207, 8
      %s209 = scalar_lea.vmem %s0, %s208
      %s210 = smul.u32 32, %s15
      %s211 = smul.u32 32, %s15
      %p212 = scmp.lt.s32.totalorder %s211, 63
      %s213 = scalar_select %p212, %s211, 63
      %s214 = smul.addr %s213, 8
      %s215 = scalar_lea.vmem %s3, %s214
      %s216 = smul.u32 32, %s15
      %s217 = smul.u32 32, %s15
      %p218 = scmp.lt.s32.totalorder %s217, 63
      %s219 = scalar_select %p218, %s217, 63
      %s220 = smul.addr %s219, 8
      %s221 = scalar_lea.vmem %s4, %s220
      %s222 = smul.u32 32, %s15
      %v224 = vld [vmem:[%s209] sm:$0xff]
      %v225 = vld [vmem:[%s209 + $0x8] sm:$0xff]
      %v226 = vld [vmem:[%s209 + $0x10] sm:$0xff]
      %v227 = vld [vmem:[%s209 + $0x18] sm:$0xff]
      %v228 = vld [vmem:[%s209 + $0x20] sm:$0xff]
      %v229 = vld [vmem:[%s209 + $0x28] sm:$0xff]
      %v230 = vld [vmem:[%s209 + $0x30] sm:$0xff]
      %v231 = vld [vmem:[%s209 + $0x38] sm:$0xff]
      %v232 = vld [vmem:[%s209 + $0x40] sm:$0xff]
      %v233 = vld [vmem:[%s209 + $0x48] sm:$0xff]
      %v234 = vld [vmem:[%s209 + $0x50] sm:$0xff]
      %v235 = vld [vmem:[%s209 + $0x58] sm:$0xff]
      %v236 = vld [vmem:[%s209 + $0x60] sm:$0xff]
      %v237 = vld [vmem:[%s209 + $0x68] sm:$0xff]
      %v238 = vld [vmem:[%s209 + $0x70] sm:$0xff]
      %v239 = vld [vmem:[%s209 + $0x78] sm:$0xff]
      %v240 = vld [vmem:[%s209 + $0x80] sm:$0xff]
      %v241 = vld [vmem:[%s209 + $0x88] sm:$0xff]
      %v242 = vld [vmem:[%s209 + $0x90] sm:$0xff]
      %v243 = vld [vmem:[%s209 + $0x98] sm:$0xff]
      %v244 = vld [vmem:[%s209 + $0xa0] sm:$0xff]
      %v245 = vld [vmem:[%s209 + $0xa8] sm:$0xff]
      %v246 = vld [vmem:[%s209 + $0xb0] sm:$0xff]
      %v247 = vld [vmem:[%s209 + $0xb8] sm:$0xff]
      %v248 = vld [vmem:[%s209 + $0xc0] sm:$0xff]
      %v249 = vld [vmem:[%s209 + $0xc8] sm:$0xff]
      %v250 = vld [vmem:[%s209 + $0xd0] sm:$0xff]
      %v251 = vld [vmem:[%s209 + $0xd8] sm:$0xff]
      %v252 = vld [vmem:[%s209 + $0xe0] sm:$0xff]
      %v253 = vld [vmem:[%s209 + $0xe8] sm:$0xff]
      %v254 = vld [vmem:[%s209 + $0xf0] sm:$0xff]
      %v255 = vld [vmem:[%s209 + $0xf8] sm:$0xff]
      %v256 = vpack.c.bf16 %v225, %v224
      %v257 = vpack.c.bf16 %v227, %v226
      %v258 = vpack.c.bf16 %v229, %v228
      %v259 = vpack.c.bf16 %v231, %v230
      %v260 = vpack.c.bf16 %v233, %v232
      %v261 = vpack.c.bf16 %v235, %v234
      %v262 = vpack.c.bf16 %v237, %v236
      %v263 = vpack.c.bf16 %v239, %v238
      %v264 = vpack.c.bf16 %v241, %v240
      %v265 = vpack.c.bf16 %v243, %v242
      %v266 = vpack.c.bf16 %v245, %v244
      %v267 = vpack.c.bf16 %v247, %v246
      %v268 = vpack.c.bf16 %v249, %v248
      %v269 = vpack.c.bf16 %v251, %v250
      %v270 = vpack.c.bf16 %v253, %v252
      %v271 = vpack.c.bf16 %v255, %v254
      %v272 = vld [vmem:[%s1] sm:$0xf]
      %v273 = vld [vmem:[%s1 + $0x4] sm:$0xf]
      %v274 = vld [vmem:[%s1 + $0x8] sm:$0xf]
      %v275 = vld [vmem:[%s1 + $0xc] sm:$0xf]
      %v276 = vld [vmem:[%s2] sm:$0x1]
      %v278 = vperm.slane %v276, 0
      %v284 = vunpack.c.l.b16 %v272
      %v285 = vunpack.c.l.b16 %v273
      %v286 = vunpack.c.l.b16 %v274
      %v287 = vunpack.c.l.b16 %v275
      %v288 = vpack.c.b16 %v285, %v284
      %v289 = vpack.c.b16 %v287, %v286
      %vm292 = vcmask 261120
      %v294 = vsel %vm292, %v256, 0
      %v297 = vsel %vm292, %v257, 0
      %v300 = vsel %vm292, %v258, 0
      %v303 = vsel %vm292, %v259, 0
      %v306 = vsel %vm292, %v260, 0
      %v309 = vsel %vm292, %v261, 0
      %v312 = vsel %vm292, %v262, 0
      %v315 = vsel %vm292, %v263, 0
      %v318 = vsel %vm292, %v264, 0
      %v321 = vsel %vm292, %v265, 0
      %v324 = vsel %vm292, %v266, 0
      %v327 = vsel %vm292, %v267, 0
      %v330 = vsel %vm292, %v268, 0
      %v333 = vsel %vm292, %v269, 0
      %v336 = vsel %vm292, %v270, 0
      %v339 = vsel %vm292, %v271, 0
      %341 = vmatpush.bf16.msra.mxu0 0
      %342 = vmatpush.bf16.msra.mxu0 0
      %343 = vmatpush.bf16.msra.mxu0 0
      %344 = vmatpush.bf16.msra.mxu0 0
      %345 = vmatpush.bf16.msra.mxu0 0
      %346 = vmatpush.bf16.msra.mxu0 0
      %347 = vmatpush.bf16.msra.mxu0 %v289
      %348 = vmatpush.bf16.msra.mxu0 %v288
      %349 = vmatmul.bf16.gmra.mxu0 %v294
      %v350 = vpop.f32.mrf.mxu0
      %v351 = vadd.f32 %v278, %v350
      %v352 = vpop.f32.mrf.mxu0
      %v353 = vadd.f32 %v278, %v352
      %354 = vmatmul.bf16.gmra.mxu0 %v297
      %v355 = vpop.f32.mrf.mxu0
      %v356 = vadd.f32 %v278, %v355
      %v357 = vpop.f32.mrf.mxu0
      %v358 = vadd.f32 %v278, %v357
      %359 = vmatmul.bf16.gmra.mxu0 %v300
      %v360 = vpop.f32.mrf.mxu0
      %v361 = vadd.f32 %v278, %v360
      %v362 = vpop.f32.mrf.mxu0
      %v363 = vadd.f32 %v278, %v362
      %364 = vmatmul.bf16.gmra.mxu0 %v303
      %v365 = vpop.f32.mrf.mxu0
      %v366 = vadd.f32 %v278, %v365
      %v367 = vpop.f32.mrf.mxu0
      %v368 = vadd.f32 %v278, %v367
      %369 = vmatmul.bf16.gmra.mxu0 %v306
      %v370 = vpop.f32.mrf.mxu0
      %v371 = vadd.f32 %v278, %v370
      %v372 = vpop.f32.mrf.mxu0
      %v373 = vadd.f32 %v278, %v372
      %374 = vmatmul.bf16.gmra.mxu0 %v309
      %v375 = vpop.f32.mrf.mxu0
      %v376 = vadd.f32 %v278, %v375
      %v377 = vpop.f32.mrf.mxu0
      %v378 = vadd.f32 %v278, %v377
      %379 = vmatmul.bf16.gmra.mxu0 %v312
      %v380 = vpop.f32.mrf.mxu0
      %v381 = vadd.f32 %v278, %v380
      %v382 = vpop.f32.mrf.mxu0
      %v383 = vadd.f32 %v278, %v382
      %384 = vmatmul.bf16.gmra.mxu0 %v315
      %v385 = vpop.f32.mrf.mxu0
      %v386 = vadd.f32 %v278, %v385
      %v387 = vpop.f32.mrf.mxu0
      %v388 = vadd.f32 %v278, %v387
      %389 = vmatmul.bf16.gmra.mxu0 %v318
      %v390 = vpop.f32.mrf.mxu0
      %v391 = vadd.f32 %v278, %v390
      %v392 = vpop.f32.mrf.mxu0
      %v393 = vadd.f32 %v278, %v392
      %394 = vmatmul.bf16.gmra.mxu0 %v321
      %v395 = vpop.f32.mrf.mxu0
      %v396 = vadd.f32 %v278, %v395
      %v397 = vpop.f32.mrf.mxu0
      %v398 = vadd.f32 %v278, %v397
      %399 = vmatmul.bf16.gmra.mxu0 %v324
      %v400 = vpop.f32.mrf.mxu0
      %v401 = vadd.f32 %v278, %v400
      %v402 = vpop.f32.mrf.mxu0
      %v403 = vadd.f32 %v278, %v402
      %404 = vmatmul.bf16.gmra.mxu0 %v327
      %v405 = vpop.f32.mrf.mxu0
      %v406 = vadd.f32 %v278, %v405
      %v407 = vpop.f32.mrf.mxu0
      %v408 = vadd.f32 %v278, %v407
      %409 = vmatmul.bf16.gmra.mxu0 %v330
      %v410 = vpop.f32.mrf.mxu0
      %v411 = vadd.f32 %v278, %v410
      %v412 = vpop.f32.mrf.mxu0
      %v413 = vadd.f32 %v278, %v412
      %414 = vmatmul.bf16.gmra.mxu0 %v333
      %v415 = vpop.f32.mrf.mxu0
      %v416 = vadd.f32 %v278, %v415
      %v417 = vpop.f32.mrf.mxu0
      %v418 = vadd.f32 %v278, %v417
      %419 = vmatmul.bf16.gmra.mxu0 %v336
      %v420 = vpop.f32.mrf.mxu0
      %v421 = vadd.f32 %v278, %v420
      %v422 = vpop.f32.mrf.mxu0
      %v423 = vadd.f32 %v278, %v422
      %424 = vmatmul.bf16.gmra.mxu0 %v339
      %v425 = vpop.f32.mrf.mxu0
      %v426 = vadd.f32 %v278, %v425
      %v427 = vpop.f32.mrf.mxu0
      %v428 = vadd.f32 %v278, %v427
      %429 = vdwg.mxu0
      %v430 = vld [vmem:[%s215] sm:$0xff]
      %v431 = vld [vmem:[%s215 + $0x8] sm:$0xff]
      %v432 = vld [vmem:[%s215 + $0x10] sm:$0xff]
      %v433 = vld [vmem:[%s215 + $0x18] sm:$0xff]
      %v434 = vld [vmem:[%s215 + $0x20] sm:$0xff]
      %v435 = vld [vmem:[%s215 + $0x28] sm:$0xff]
      %v436 = vld [vmem:[%s215 + $0x30] sm:$0xff]
      %v437 = vld [vmem:[%s215 + $0x38] sm:$0xff]
      %v438 = vld [vmem:[%s215 + $0x40] sm:$0xff]
      %v439 = vld [vmem:[%s215 + $0x48] sm:$0xff]
      %v440 = vld [vmem:[%s215 + $0x50] sm:$0xff]
      %v441 = vld [vmem:[%s215 + $0x58] sm:$0xff]
      %v442 = vld [vmem:[%s215 + $0x60] sm:$0xff]
      %v443 = vld [vmem:[%s215 + $0x68] sm:$0xff]
      %v444 = vld [vmem:[%s215 + $0x70] sm:$0xff]
      %v445 = vld [vmem:[%s215 + $0x78] sm:$0xff]
      %v446 = vld [vmem:[%s215 + $0x80] sm:$0xff]
      %v447 = vld [vmem:[%s215 + $0x88] sm:$0xff]
      %v448 = vld [vmem:[%s215 + $0x90] sm:$0xff]
      %v449 = vld [vmem:[%s215 + $0x98] sm:$0xff]
      %v450 = vld [vmem:[%s215 + $0xa0] sm:$0xff]
      %v451 = vld [vmem:[%s215 + $0xa8] sm:$0xff]
      %v452 = vld [vmem:[%s215 + $0xb0] sm:$0xff]
      %v453 = vld [vmem:[%s215 + $0xb8] sm:$0xff]
      %v454 = vld [vmem:[%s215 + $0xc0] sm:$0xff]
      %v455 = vld [vmem:[%s215 + $0xc8] sm:$0xff]
      %v456 = vld [vmem:[%s215 + $0xd0] sm:$0xff]
      %v457 = vld [vmem:[%s215 + $0xd8] sm:$0xff]
      %v458 = vld [vmem:[%s215 + $0xe0] sm:$0xff]
      %v459 = vld [vmem:[%s215 + $0xe8] sm:$0xff]
      %v460 = vld [vmem:[%s215 + $0xf0] sm:$0xff]
      %v461 = vld [vmem:[%s215 + $0xf8] sm:$0xff]
      %v462 = vadd.f32 %v351, %v430
      %v463 = vadd.f32 %v353, %v431
      %v464 = vadd.f32 %v356, %v432
      %v465 = vadd.f32 %v358, %v433
      %v466 = vadd.f32 %v361, %v434
      %v467 = vadd.f32 %v363, %v435
      %v468 = vadd.f32 %v366, %v436
      %v469 = vadd.f32 %v368, %v437
      %v470 = vadd.f32 %v371, %v438
      %v471 = vadd.f32 %v373, %v439
      %v472 = vadd.f32 %v376, %v440
      %v473 = vadd.f32 %v378, %v441
      %v474 = vadd.f32 %v381, %v442
      %v475 = vadd.f32 %v383, %v443
      %v476 = vadd.f32 %v386, %v444
      %v477 = vadd.f32 %v388, %v445
      %v478 = vadd.f32 %v391, %v446
      %v479 = vadd.f32 %v393, %v447
      %v480 = vadd.f32 %v396, %v448
      %v481 = vadd.f32 %v398, %v449
      %v482 = vadd.f32 %v401, %v450
      %v483 = vadd.f32 %v403, %v451
      %v484 = vadd.f32 %v406, %v452
      %v485 = vadd.f32 %v408, %v453
      %v486 = vadd.f32 %v411, %v454
      %v487 = vadd.f32 %v413, %v455
      %v488 = vadd.f32 %v416, %v456
      %v489 = vadd.f32 %v418, %v457
      %v490 = vadd.f32 %v421, %v458
      %v491 = vadd.f32 %v423, %v459
      %v492 = vadd.f32 %v426, %v460
      %v493 = vadd.f32 %v428, %v461
      %v494 = vmul.f32 %v462, 0.5
      %v495 = vmul.f32 %v463, 0.5
      %v496 = vmul.f32 %v464, 0.5
      %v497 = vmul.f32 %v465, 0.5
      %v498 = vmul.f32 %v466, 0.5
      %v499 = vmul.f32 %v467, 0.5
      %v500 = vmul.f32 %v468, 0.5
      %v501 = vmul.f32 %v469, 0.5
      %v502 = vmul.f32 %v470, 0.5
      %v503 = vmul.f32 %v471, 0.5
      %v504 = vmul.f32 %v472, 0.5
      %v505 = vmul.f32 %v473, 0.5
      %v506 = vmul.f32 %v474, 0.5
      %v507 = vmul.f32 %v475, 0.5
      %v508 = vmul.f32 %v476, 0.5
      %v509 = vmul.f32 %v477, 0.5
      %v510 = vmul.f32 %v478, 0.5
      %v511 = vmul.f32 %v479, 0.5
      %v512 = vmul.f32 %v480, 0.5
      %v513 = vmul.f32 %v481, 0.5
      %v514 = vmul.f32 %v482, 0.5
      %v515 = vmul.f32 %v483, 0.5
      %v516 = vmul.f32 %v484, 0.5
      %v517 = vmul.f32 %v485, 0.5
      %v518 = vmul.f32 %v486, 0.5
      %v519 = vmul.f32 %v487, 0.5
      %v520 = vmul.f32 %v488, 0.5
      %v521 = vmul.f32 %v489, 0.5
      %v522 = vmul.f32 %v490, 0.5
      %v523 = vmul.f32 %v491, 0.5
      %v524 = vmul.f32 %v492, 0.5
      %v525 = vmul.f32 %v493, 0.5
      %526 = vst.msk [vmem:[%s221] sm:$0xff] %vm292, %v494
      %527 = vst.msk [vmem:[%s221 + $0x8] sm:$0xff] %vm292, %v495
      %528 = vst.msk [vmem:[%s221 + $0x10] sm:$0xff] %vm292, %v496
      %529 = vst.msk [vmem:[%s221 + $0x18] sm:$0xff] %vm292, %v497
      %530 = vst.msk [vmem:[%s221 + $0x20] sm:$0xff] %vm292, %v498
      %531 = vst.msk [vmem:[%s221 + $0x28] sm:$0xff] %vm292, %v499
      %532 = vst.msk [vmem:[%s221 + $0x30] sm:$0xff] %vm292, %v500
      %533 = vst.msk [vmem:[%s221 + $0x38] sm:$0xff] %vm292, %v501
      %534 = vst.msk [vmem:[%s221 + $0x40] sm:$0xff] %vm292, %v502
      %535 = vst.msk [vmem:[%s221 + $0x48] sm:$0xff] %vm292, %v503
      %536 = vst.msk [vmem:[%s221 + $0x50] sm:$0xff] %vm292, %v504
      %537 = vst.msk [vmem:[%s221 + $0x58] sm:$0xff] %vm292, %v505
      %538 = vst.msk [vmem:[%s221 + $0x60] sm:$0xff] %vm292, %v506
      %539 = vst.msk [vmem:[%s221 + $0x68] sm:$0xff] %vm292, %v507
      %540 = vst.msk [vmem:[%s221 + $0x70] sm:$0xff] %vm292, %v508
      %541 = vst.msk [vmem:[%s221 + $0x78] sm:$0xff] %vm292, %v509
      %542 = vst.msk [vmem:[%s221 + $0x80] sm:$0xff] %vm292, %v510
      %543 = vst.msk [vmem:[%s221 + $0x88] sm:$0xff] %vm292, %v511
      %544 = vst.msk [vmem:[%s221 + $0x90] sm:$0xff] %vm292, %v512
      %545 = vst.msk [vmem:[%s221 + $0x98] sm:$0xff] %vm292, %v513
      %546 = vst.msk [vmem:[%s221 + $0xa0] sm:$0xff] %vm292, %v514
      %547 = vst.msk [vmem:[%s221 + $0xa8] sm:$0xff] %vm292, %v515
      %548 = vst.msk [vmem:[%s221 + $0xb0] sm:$0xff] %vm292, %v516
      %549 = vst.msk [vmem:[%s221 + $0xb8] sm:$0xff] %vm292, %v517
      %550 = vst.msk [vmem:[%s221 + $0xc0] sm:$0xff] %vm292, %v518
      %551 = vst.msk [vmem:[%s221 + $0xc8] sm:$0xff] %vm292, %v519
      %552 = vst.msk [vmem:[%s221 + $0xd0] sm:$0xff] %vm292, %v520
      %553 = vst.msk [vmem:[%s221 + $0xd8] sm:$0xff] %vm292, %v521
      %554 = vst.msk [vmem:[%s221 + $0xe0] sm:$0xff] %vm292, %v522
      %555 = vst.msk [vmem:[%s221 + $0xe8] sm:$0xff] %vm292, %v523
      %556 = vst.msk [vmem:[%s221 + $0xf0] sm:$0xff] %vm292, %v524
      %557 = vst.msk [vmem:[%s221 + $0xf8] sm:$0xff] %vm292, %v525
      %s558 = smul.u32 32, %s15
      %p559 = scmp.lt.s32.totalorder %s558, 63
      %s560 = scalar_select %p559, %s558, 63
      %s561 = smul.addr %s560, 8
      %s562 = scalar_lea.vmem %s4, %s561
      // Predicated region
      $region37: #{farnet_forward.15} parent=35 // pred_check
        %p563 = pneg %p127
      $region38: #{farnet_forward.15} parent=35 // pred_check_branch
        %565 = sbr.rel (%p563) target = $region40
      $region39: #{farnet_forward.15} parent=35 // pred_region
        %s566 = smul.u32 32, %s15
      $region40: #{farnet_forward.15} parent=35 // pred_fallthru
        _
    $region36: #{farnet_forward.15} parent=5 // pred_fallthru
      _
    %p567 = scmp.le.s32.totalorder 2, %s10
    // Predicated region
    $region41: #{farnet_forward.15} parent=5 // pred_check
      %p568 = pneg %p567
    $region42: #{farnet_forward.15} parent=5 // pred_check_branch
      %570 = sbr.rel (%p568) target = $region44
    $region43: #{farnet_forward.15} parent=5 // pred_region
      %s571 = ssub.s32 %s10, 2
      // Predicated region
      $region45: #{farnet_forward.15} parent=43 // pred_check
        %p572 = pneg %p133
      $region46: #{farnet_forward.15} parent=43 // pred_check_branch
        %574 = sbr.rel (%p572) target = $region48
      $region47: #{farnet_forward.15} parent=43 // pred_region
        %s575 = smul.u32 32, %s16
        %p576 = scmp.lt.s32.totalorder %s575, 63
        %s577 = scalar_select %p576, %s575, 63
        %s578 = smul.addr %s577, 8
        %s579 = scalar_lea.vmem %s4, %s578
      $region48: #{farnet_forward.15} parent=43 // pred_fallthru
        _
    $region44: #{farnet_forward.15} parent=5 // pred_fallthru
      _
  $region6: #{farnet_forward.15} parent=0 // loop_footer
    %s14 = sadd.s32 1, %s10
  $region7: #{farnet_forward.15} parent=0 // loop_footer_branch
    %9 = sbr.rel target = $region3
  $region8: #{farnet_forward.15} parent=0 // loop_exit
    _

// kernel: farnet_forward.22
$region0: #{farnet_forward.22}
  #allocation0 [shape = 'u32[]', space=smem, size = 0x4, offset = 0x4, fixed_abs, tag = 'smem constant byte address 0x4 - core index']
  #allocation1 [shape = 'u32[72,128]{1,0:T(1,128)}', space=vmem, size = 0x9000, scoped, tag = 'internal scratch']
  %s0 = inlined_call_operand.vmem [shape: f32[128,128], index: 0, kind: input, shape index: {}]
  %s1 = inlined_call_operand.vmem [shape: f32[128,128], index: 1, kind: input, shape index: {}]
  %s2 = inlined_call_operand.vmem [shape: f32[128,128], index: 2, kind: input, shape index: {}]
  %s3 = inlined_call_operand.vmem [shape: f32[128,128], index: 3, kind: input, shape index: {}]
  %s4 = inlined_call_operand.vmem [shape: f32[128,128], index: 4, kind: output, shape index: {}]
  %s5 = sld [smem:[#allocation0]]
  $region49: #{farnet_forward.22} parent=0
    _
  %s7 = ssub.s32 1, %s5
  %s8 = scalar_select 0, %s7, %s5
  loop: start=0, step=1, limit=4
  $region2: #{farnet_forward.22} parent=0 // loop_pre_header
    _
  $region3: #{farnet_forward.22} parent=0 // loop_header
    %s10 = sphi 0, %s14
    %p11 = scmp.ge.s32.totalorder %s10, 4
    %s20 = sphi 0, %s22
    %s23 = sphi 0, %s20
    %s24 = sphi 0, %s23
    %s40 = sphi 0, %s24
    %s46 = sphi 0, %s48
    %s49 = sphi 0, %s46
    %s50 = sphi 0, %s49
    %s66 = sphi 0, %s50
    %s72 = sphi 0, %s74
    %s75 = sphi 0, %s72
    %s76 = sphi 0, %s75
    %s92 = sphi 0, %s76
    %s98 = sphi 0, %s100
    %s101 = sphi 0, %s98
    %s102 = sphi 0, %s101
    %s118 = sphi 0, %s102
    %s124 = sphi 0, %s126
    %s127 = sphi 0, %s124
    %s128 = sphi 0, %s127
    %s144 = sphi 0, %s128
  $region4: #{farnet_forward.22} parent=0 // loop_header_branch
    %13 = sbr.rel (%p11) target = $region8
  $region5: #{farnet_forward.22} parent=0 // loop_body
    %s15 = ssub.s32 %s10, 1
    %s16 = ssub.s32 %s10, 2
    %s17 = sadd.s32 %s10, 1
    %s18 = ssub.s32 %s10, %s17
    %p19 = scmp.eq.s32.totalorder %s18, 0
    %s21 = sadd.s32 %s20, 1
    %s22 = scalar_select %p19, %s20, %s21
    %p25 = pneg %p19
    %p26 = scmp.eq.s32.totalorder %s10, 1
    %p27 = por %p25, %p26
    %p28 = scmp.ne.s32.totalorder %s20, %s23
    %p29 = scmp.eq.s32.totalorder %s10, 0
    %p30 = por %p28, %p29
    %p31 = scmp.ne.s32.totalorder %s20, %s23
    %p32 = scmp.eq.s32.totalorder %s15, 1
    %p33 = por %p31, %p32
    %p34 = scmp.ne.s32.totalorder %s23, %s24
    %p35 = scmp.eq.s32.totalorder %s15, 0
    %p36 = por %p34, %p35
    %p37 = scmp.ne.s32.totalorder %s23, %s24
    %p38 = scmp.eq.s32.totalorder %s16, 1
    %p39 = por %p37, %p38
    %p41 = scmp.ne.s32.totalorder %s24, %s40
    %p42 = scmp.eq.s32.totalorder %s16, 0
    %p43 = por %p41, %p42
    %s44 = ssub.s32 %s10, %s17
    %p45 = scmp.eq.s32.totalorder %s44, 0
    %s47 = sadd.s32 %s46, 1
    %s48 = scalar_select %p45, %s46, %s47
    %p51 = pneg %p45
    %p52 = scmp.eq.s32.totalorder %s10, 1
    %p53 = por %p51, %p52
    %p54 = scmp.ne.s32.totalorder %s46, %s49
    %p55 = scmp.eq.s32.totalorder %s10, 0
    %p56 = por %p54, %p55
    %p57 = scmp.ne.s32.totalorder %s46, %s49
    %p58 = scmp.eq.s32.totalorder %s15, 1
    %p59 = por %p57, %p58
    %p60 = scmp.ne.s32.totalorder %s49, %s50
    %p61 = scmp.eq.s32.totalorder %s15, 0
    %p62 = por %p60, %p61
    %p63 = scmp.ne.s32.totalorder %s49, %s50
    %p64 = scmp.eq.s32.totalorder %s16, 1
    %p65 = por %p63, %p64
    %p67 = scmp.ne.s32.totalorder %s50, %s66
    %p68 = scmp.eq.s32.totalorder %s16, 0
    %p69 = por %p67, %p68
    %s70 = ssub.s32 %s10, %s17
    %p71 = scmp.eq.s32.totalorder %s70, 0
    %s73 = sadd.s32 %s72, 1
    %s74 = scalar_select %p71, %s72, %s73
    %p77 = pneg %p71
    %p78 = scmp.eq.s32.totalorder %s10, 1
    %p79 = por %p77, %p78
    %p80 = scmp.ne.s32.totalorder %s72, %s75
    %p81 = scmp.eq.s32.totalorder %s10, 0
    %p82 = por %p80, %p81
    %p83 = scmp.ne.s32.totalorder %s72, %s75
    %p84 = scmp.eq.s32.totalorder %s15, 1
    %p85 = por %p83, %p84
    %p86 = scmp.ne.s32.totalorder %s75, %s76
    %p87 = scmp.eq.s32.totalorder %s15, 0
    %p88 = por %p86, %p87
    %p89 = scmp.ne.s32.totalorder %s75, %s76
    %p90 = scmp.eq.s32.totalorder %s16, 1
    %p91 = por %p89, %p90
    %p93 = scmp.ne.s32.totalorder %s76, %s92
    %p94 = scmp.eq.s32.totalorder %s16, 0
    %p95 = por %p93, %p94
    %s96 = ssub.s32 %s10, %s17
    %p97 = scmp.eq.s32.totalorder %s96, 0
    %s99 = sadd.s32 %s98, 1
    %s100 = scalar_select %p97, %s98, %s99
    %p103 = pneg %p97
    %p104 = scmp.eq.s32.totalorder %s10, 1
    %p105 = por %p103, %p104
    %p106 = scmp.ne.s32.totalorder %s98, %s101
    %p107 = scmp.eq.s32.totalorder %s10, 0
    %p108 = por %p106, %p107
    %p109 = scmp.ne.s32.totalorder %s98, %s101
    %p110 = scmp.eq.s32.totalorder %s15, 1
    %p111 = por %p109, %p110
    %p112 = scmp.ne.s32.totalorder %s101, %s102
    %p113 = scmp.eq.s32.totalorder %s15, 0
    %p114 = por %p112, %p113
    %p115 = scmp.ne.s32.totalorder %s101, %s102
    %p116 = scmp.eq.s32.totalorder %s16, 1
    %p117 = por %p115, %p116
    %p119 = scmp.ne.s32.totalorder %s102, %s118
    %p120 = scmp.eq.s32.totalorder %s16, 0
    %p121 = por %p119, %p120
    %s122 = ssub.s32 %s10, %s17
    %p123 = scmp.eq.s32.totalorder %s122, 0
    %s125 = sadd.s32 %s124, 1
    %s126 = scalar_select %p123, %s124, %s125
    %p129 = pneg %p123
    %p130 = scmp.eq.s32.totalorder %s10, 1
    %p131 = por %p129, %p130
    %p132 = scmp.ne.s32.totalorder %s124, %s127
    %p133 = scmp.eq.s32.totalorder %s10, 0
    %p134 = por %p132, %p133
    %p135 = scmp.ne.s32.totalorder %s124, %s127
    %p136 = scmp.eq.s32.totalorder %s15, 1
    %p137 = por %p135, %p136
    %p138 = scmp.ne.s32.totalorder %s127, %s128
    %p139 = scmp.eq.s32.totalorder %s15, 0
    %p140 = por %p138, %p139
    %p141 = scmp.ne.s32.totalorder %s127, %s128
    %p142 = scmp.eq.s32.totalorder %s16, 1
    %p143 = por %p141, %p142
    %p145 = scmp.ne.s32.totalorder %s128, %s144
    %p146 = scmp.eq.s32.totalorder %s16, 0
    %p147 = por %p145, %p146
    %p148 = scmp.le.s32.totalorder 1, %s10
    %p149 = scmp.lt.s32.totalorder %s10, 3
    %p150 = pnand %p148, %p149
    %p151 = pneg %p150
    // Predicated region
    $region9: #{farnet_forward.22} parent=5 // pred_check
      _
    $region10: #{farnet_forward.22} parent=5 // pred_check_branch
      %153 = sbr.rel (%p150) target = $region12
    $region11: #{farnet_forward.22} parent=5 // pred_region
      %s154 = ssub.s32 %s10, 1
    $region12: #{farnet_forward.22} parent=5 // pred_fallthru
      _
    %p155 = scmp.lt.s32.totalorder %s10, 2
    // Predicated region
    $region13: #{farnet_forward.22} parent=5 // pred_check
      %p156 = pneg %p155
    $region14: #{farnet_forward.22} parent=5 // pred_check_branch
      %158 = sbr.rel (%p156) target = $region16
    $region15: #{farnet_forward.22} parent=5 // pred_region
      // Predicated region
      $region17: #{farnet_forward.22} parent=15 // pred_check
        %p159 = pneg %p30
      $region18: #{farnet_forward.22} parent=15 // pred_check_branch
        %161 = sbr.rel (%p159) target = $region20
      $region19: #{farnet_forward.22} parent=15 // pred_region
        %s162 = smul.u32 8, %s10
        %p163 = scmp.lt.s32.totalorder %s162, 15
        %s164 = scalar_select %p163, %s162, 15
        %s165 = smul.addr %s164, 8
        %s166 = scalar_lea.vmem %s0, %s165
        %s167 = smul.u32 8, %s10
      $region20: #{farnet_forward.22} parent=15 // pred_fallthru
        _
      // Predicated region
      $region21: #{farnet_forward.22} parent=15 // pred_check
        %p168 = pneg %p56
      $region22: #{farnet_forward.22} parent=15 // pred_check_branch
        %170 = sbr.rel (%p168) target = $region24
      $region23: #{farnet_forward.22} parent=15 // pred_region
        %s171 = smul.u32 8, %s10
        %p172 = scmp.lt.s32.totalorder %s171, 15
        %s173 = scalar_select %p172, %s171, 15
        %s174 = smul.addr %s173, 8
        %s175 = scalar_lea.vmem %s1, %s174
        %s176 = smul.u32 8, %s10
      $region24: #{farnet_forward.22} parent=15 // pred_fallthru
        _
      // Predicated region
      $region25: #{farnet_forward.22} parent=15 // pred_check
        %p177 = pneg %p82
      $region26: #{farnet_forward.22} parent=15 // pred_check_branch
        %179 = sbr.rel (%p177) target = $region28
      $region27: #{farnet_forward.22} parent=15 // pred_region
        %s180 = smul.u32 8, %s10
        %p181 = scmp.lt.s32.totalorder %s180, 15
        %s182 = scalar_select %p181, %s180, 15
        %s183 = smul.addr %s182, 8
        %s184 = scalar_lea.vmem %s2, %s183
        %s185 = smul.u32 8, %s10
      $region28: #{farnet_forward.22} parent=15 // pred_fallthru
        _
      // Predicated region
      $region29: #{farnet_forward.22} parent=15 // pred_check
        %p186 = pneg %p108
      $region30: #{farnet_forward.22} parent=15 // pred_check_branch
        %188 = sbr.rel (%p186) target = $region32
      $region31: #{farnet_forward.22} parent=15 // pred_region
        %s189 = smul.u32 8, %s10
        %p190 = scmp.lt.s32.totalorder %s189, 15
        %s191 = scalar_select %p190, %s189, 15
        %s192 = smul.addr %s191, 8
        %s193 = scalar_lea.vmem %s3, %s192
        %s194 = smul.u32 8, %s10
      $region32: #{farnet_forward.22} parent=15 // pred_fallthru
        _
    $region16: #{farnet_forward.22} parent=5 // pred_fallthru
      _
    %p195 = scmp.le.s32.totalorder 1, %s10
    %p196 = scmp.lt.s32.totalorder %s10, 3
    %p197 = pnand %p195, %p196
    %p198 = pneg %p197
    // Predicated region
    $region33: #{farnet_forward.22} parent=5 // pred_check
      _
    $region34: #{farnet_forward.22} parent=5 // pred_check_branch
      %200 = sbr.rel (%p197) target = $region36
    $region35: #{farnet_forward.22} parent=5 // pred_region
      %s201 = ssub.s32 %s10, 1
      %s202 = smul.u32 8, %s15
      %p203 = scmp.lt.s32.totalorder %s202, 15
      %s204 = scalar_select %p203, %s202, 15
      %s205 = smul.addr %s204, 8
      %s206 = scalar_lea.vmem %s0, %s205
      %p207 = pneg %p36
      %p208 = pneg %p33
      %s209 = smul.u32 8, %s15
      %p210 = scmp.lt.s32.totalorder %s209, 15
      %s211 = scalar_select %p210, %s209, 15
      %s212 = smul.addr %s211, 8
      %s213 = scalar_lea.vmem %s1, %s212
      %p214 = pneg %p62
      %p215 = pneg %p59
      %s216 = smul.u32 8, %s15
      %p217 = scmp.lt.s32.totalorder %s216, 15
      %s218 = scalar_select %p217, %s216, 15
      %s219 = smul.addr %s218, 8
      %s220 = scalar_lea.vmem %s2, %s219
      %p221 = pneg %p88
      %p222 = pneg %p85
      %s223 = smul.u32 8, %s15
      %p224 = scmp.lt.s32.totalorder %s223, 15
      %s225 = scalar_select %p224, %s223, 15
      %s226 = smul.addr %s225, 8
      %s227 = scalar_lea.vmem %s3, %s226
      %p228 = pneg %p114
      %p229 = pneg %p111
      %p230 = pneg %p140
      %p231 = pneg %p137
      %s232 = smul.u32 8, %s15
      %p233 = scmp.lt.s32.totalorder %s232, 15
      %s234 = scalar_select %p233, %s232, 15
      %s235 = smul.addr %s234, 8
      %s236 = scalar_lea.vmem %s4, %s235
      %s237 = smul.u32 8, %s15
      %p238 = scmp.lt.s32.totalorder %s237, 15
      %s239 = scalar_select %p238, %s237, 15
      %s240 = smul.addr %s239, 8
      %s241 = scalar_lea.vmem %s0, %s240
      %s242 = smul.u32 8, %s15
      %s243 = smul.u32 8, %s15
      %p244 = scmp.lt.s32.totalorder %s243, 15
      %s245 = scalar_select %p244, %s243, 15
      %s246 = smul.addr %s245, 8
      %s247 = scalar_lea.vmem %s1, %s246
      %s248 = smul.u32 8, %s15
      %s249 = smul.u32 8, %s15
      %p250 = scmp.lt.s32.totalorder %s249, 15
      %s251 = scalar_select %p250, %s249, 15
      %s252 = smul.addr %s251, 8
      %s253 = scalar_lea.vmem %s2, %s252
      %s254 = smul.u32 8, %s15
      %s255 = smul.u32 8, %s15
      %p256 = scmp.lt.s32.totalorder %s255, 15
      %s257 = scalar_select %p256, %s255, 15
      %s258 = smul.addr %s257, 8
      %s259 = scalar_lea.vmem %s3, %s258
      %s260 = smul.u32 8, %s15
      %s261 = smul.u32 8, %s15
      %p262 = scmp.lt.s32.totalorder %s261, 15
      %s263 = scalar_select %p262, %s261, 15
      %s264 = smul.addr %s263, 8
      %s265 = scalar_lea.vmem %s4, %s264
      %s266 = smul.u32 8, %s15
      %v267 = vld [vmem:[%s241] sm:$0xff]
      %v268 = vld [vmem:[%s241 + $0x8] sm:$0xff]
      %v269 = vld [vmem:[%s241 + $0x10] sm:$0xff]
      %v270 = vld [vmem:[%s241 + $0x18] sm:$0xff]
      %v271 = vld [vmem:[%s241 + $0x20] sm:$0xff]
      %v272 = vld [vmem:[%s241 + $0x28] sm:$0xff]
      %v273 = vld [vmem:[%s241 + $0x30] sm:$0xff]
      %v274 = vld [vmem:[%s241 + $0x38] sm:$0xff]
      %v275 = vld [vmem:[%s247] sm:$0xff]
      %v276 = vld [vmem:[%s247 + $0x8] sm:$0xff]
      %v277 = vld [vmem:[%s247 + $0x10] sm:$0xff]
      %v278 = vld [vmem:[%s247 + $0x18] sm:$0xff]
      %v279 = vld [vmem:[%s247 + $0x20] sm:$0xff]
      %v280 = vld [vmem:[%s247 + $0x28] sm:$0xff]
      %v281 = vld [vmem:[%s247 + $0x30] sm:$0xff]
      %v282 = vld [vmem:[%s247 + $0x38] sm:$0xff]
      %v283 = vadd.f32 %v267, %v275
      %v284 = vadd.f32 %v268, %v276
      %v285 = vadd.f32 %v269, %v277
      %v286 = vadd.f32 %v270, %v278
      %v287 = vadd.f32 %v271, %v279
      %v288 = vadd.f32 %v272, %v280
      %v289 = vadd.f32 %v273, %v281
      %v290 = vadd.f32 %v274, %v282
      %v291 = vld [vmem:[%s253] sm:$0xff]
      %v292 = vld [vmem:[%s253 + $0x8] sm:$0xff]
      %v293 = vld [vmem:[%s253 + $0x10] sm:$0xff]
      %v294 = vld [vmem:[%s253 + $0x18] sm:$0xff]
      %v295 = vld [vmem:[%s253 + $0x20] sm:$0xff]
      %v296 = vld [vmem:[%s253 + $0x28] sm:$0xff]
      %v297 = vld [vmem:[%s253 + $0x30] sm:$0xff]
      %v298 = vld [vmem:[%s253 + $0x38] sm:$0xff]
      %v299 = vadd.f32 %v283, %v291
      %v300 = vadd.f32 %v284, %v292
      %v301 = vadd.f32 %v285, %v293
      %v302 = vadd.f32 %v286, %v294
      %v303 = vadd.f32 %v287, %v295
      %v304 = vadd.f32 %v288, %v296
      %v305 = vadd.f32 %v289, %v297
      %v306 = vadd.f32 %v290, %v298
      %v307 = vld [vmem:[%s259] sm:$0xff]
      %v308 = vld [vmem:[%s259 + $0x8] sm:$0xff]
      %v309 = vld [vmem:[%s259 + $0x10] sm:$0xff]
      %v310 = vld [vmem:[%s259 + $0x18] sm:$0xff]
      %v311 = vld [vmem:[%s259 + $0x20] sm:$0xff]
      %v312 = vld [vmem:[%s259 + $0x28] sm:$0xff]
      %v313 = vld [vmem:[%s259 + $0x30] sm:$0xff]
      %v314 = vld [vmem:[%s259 + $0x38] sm:$0xff]
      %v315 = vadd.f32 %v299, %v307
      %v316 = vadd.f32 %v300, %v308
      %v317 = vadd.f32 %v301, %v309
      %v318 = vadd.f32 %v302, %v310
      %v319 = vadd.f32 %v303, %v311
      %v320 = vadd.f32 %v304, %v312
      %v321 = vadd.f32 %v305, %v313
      %v322 = vadd.f32 %v306, %v314
      %v323 = vmul.f32 %v315, 0.25
      %v324 = vmul.f32 %v316, 0.25
      %v325 = vmul.f32 %v317, 0.25
      %v326 = vmul.f32 %v318, 0.25
      %v327 = vmul.f32 %v319, 0.25
      %v328 = vmul.f32 %v320, 0.25
      %v329 = vmul.f32 %v321, 0.25
      %v330 = vmul.f32 %v322, 0.25
      %331 = vst [vmem:[%s265] sm:$0xff] %v323
      %332 = vst [vmem:[%s265 + $0x8] sm:$0xff] %v324
      %333 = vst [vmem:[%s265 + $0x10] sm:$0xff] %v325
      %334 = vst [vmem:[%s265 + $0x18] sm:$0xff] %v326
      %335 = vst [vmem:[%s265 + $0x20] sm:$0xff] %v327
      %336 = vst [vmem:[%s265 + $0x28] sm:$0xff] %v328
      %337 = vst [vmem:[%s265 + $0x30] sm:$0xff] %v329
      %338 = vst [vmem:[%s265 + $0x38] sm:$0xff] %v330
      %s339 = smul.u32 8, %s15
      %p340 = scmp.lt.s32.totalorder %s339, 15
      %s341 = scalar_select %p340, %s339, 15
      %s342 = smul.addr %s341, 8
      %s343 = scalar_lea.vmem %s4, %s342
      // Predicated region
      $region37: #{farnet_forward.22} parent=35 // pred_check
        %p344 = pneg %p137
      $region38: #{farnet_forward.22} parent=35 // pred_check_branch
        %346 = sbr.rel (%p344) target = $region40
      $region39: #{farnet_forward.22} parent=35 // pred_region
        %s347 = smul.u32 8, %s15
      $region40: #{farnet_forward.22} parent=35 // pred_fallthru
        _
    $region36: #{farnet_forward.22} parent=5 // pred_fallthru
      _
    %p348 = scmp.le.s32.totalorder 2, %s10
    // Predicated region
    $region41: #{farnet_forward.22} parent=5 // pred_check
      %p349 = pneg %p348
    $region42: #{farnet_forward.22} parent=5 // pred_check_branch
      %351 = sbr.rel (%p349) target = $region44
    $region43: #{farnet_forward.22} parent=5 // pred_region
      %s352 = ssub.s32 %s10, 2
      // Predicated region
      $region45: #{farnet_forward.22} parent=43 // pred_check
        %p353 = pneg %p143
      $region46: #{farnet_forward.22} parent=43 // pred_check_branch
        %355 = sbr.rel (%p353) target = $region48
      $region47: #{farnet_forward.22} parent=43 // pred_region
        %s356 = smul.u32 8, %s16
        %p357 = scmp.lt.s32.totalorder %s356, 15
        %s358 = scalar_select %p357, %s356, 15
        %s359 = smul.addr %s358, 8
        %s360 = scalar_lea.vmem %s4, %s359
      $region48: #{farnet_forward.22} parent=43 // pred_fallthru
        _
    $region44: #{farnet_forward.22} parent=5 // pred_fallthru
      _
  $region6: #{farnet_forward.22} parent=0 // loop_footer
    %s14 = sadd.s32 1, %s10
  $region7: #{farnet_forward.22} parent=0 // loop_footer_branch
    %9 = sbr.rel target = $region3
  $region8: #{farnet_forward.22} parent=0 // loop_exit
    _

// kernel: farnet_forward.21
$region0: #{farnet_forward.21}
  #allocation0 [shape = 'u32[]', space=smem, size = 0x4, offset = 0x4, fixed_abs, tag = 'smem constant byte address 0x4 - core index']
  #allocation1 [shape = 'u32[72,128]{1,0:T(1,128)}', space=vmem, size = 0x9000, scoped, tag = 'internal scratch']
  %s0 = inlined_call_operand.vmem [shape: bf16[512,288], index: 0, kind: input, shape index: {}]
  %s1 = inlined_call_operand.vmem [shape: bf16[288,32], index: 1, kind: input, shape index: {}]
  %s2 = inlined_call_operand.vmem [shape: f32[1,32], index: 2, kind: input, shape index: {}]
  %s3 = inlined_call_operand.vmem [shape: f32[512,32], index: 3, kind: output, shape index: {}]
  %s4 = sld [smem:[#allocation0]]
  $region45: #{farnet_forward.21} parent=0
    _
  %s6 = ssub.s32 1, %s4
  %s7 = scalar_select 0, %s6, %s4
  loop: start=0, step=1, limit=4
  $region2: #{farnet_forward.21} parent=0 // loop_pre_header
    _
  $region3: #{farnet_forward.21} parent=0 // loop_header
    %s9 = sphi 0, %s13
    %p10 = scmp.ge.s32.totalorder %s9, 4
    %s19 = sphi 0, %s21
    %s22 = sphi 0, %s19
    %s23 = sphi 0, %s22
    %s39 = sphi 0, %s23
    %s43 = sphi 0, %s43
    %s45 = sphi 0, %s43
    %s46 = sphi 0, %s45
    %s60 = sphi 0, %s46
    %s64 = sphi 0, %s64
    %s66 = sphi 0, %s64
    %s67 = sphi 0, %s66
    %s81 = sphi 0, %s67
    %s87 = sphi 0, %s89
    %s90 = sphi 0, %s87
    %s91 = sphi 0, %s90
    %s107 = sphi 0, %s91
  $region4: #{farnet_forward.21} parent=0 // loop_header_branch
    %12 = sbr.rel (%p10) target = $region8
  $region5: #{farnet_forward.21} parent=0 // loop_body
    %s14 = ssub.s32 %s9, 1
    %s15 = ssub.s32 %s9, 2
    %s16 = sadd.s32 %s9, 1
    %s17 = ssub.s32 %s9, %s16
    %p18 = scmp.eq.s32.totalorder %s17, 0
    %s20 = sadd.s32 %s19, 1
    %s21 = scalar_select %p18, %s19, %s20
    %p24 = pneg %p18
    %p25 = scmp.eq.s32.totalorder %s9, 1
    %p26 = por %p24, %p25
    %p27 = scmp.ne.s32.totalorder %s19, %s22
    %p28 = scmp.eq.s32.totalorder %s9, 0
    %p29 = por %p27, %p28
    %p30 = scmp.ne.s32.totalorder %s19, %s22
    %p31 = scmp.eq.s32.totalorder %s14, 1
    %p32 = por %p30, %p31
    %p33 = scmp.ne.s32.totalorder %s22, %s23
    %p34 = scmp.eq.s32.totalorder %s14, 0
    %p35 = por %p33, %p34
    %p36 = scmp.ne.s32.totalorder %s22, %s23
    %p37 = scmp.eq.s32.totalorder %s15, 1
    %p38 = por %p36, %p37
    %p40 = scmp.ne.s32.totalorder %s23, %s39
    %p41 = scmp.eq.s32.totalorder %s15, 0
    %p42 = por %p40, %p41
    %s44 = sadd.s32 %s43, 1
    %p47 = scmp.eq.s32.totalorder %s9, 1
    %p48 = scmp.ne.s32.totalorder %s43, %s45
    %p49 = scmp.eq.s32.totalorder %s9, 0
    %p50 = por %p48, %p49
    %p51 = scmp.ne.s32.totalorder %s43, %s45
    %p52 = scmp.eq.s32.totalorder %s14, 1
    %p53 = por %p51, %p52
    %p54 = scmp.ne.s32.totalorder %s45, %s46
    %p55 = scmp.eq.s32.totalorder %s14, 0
    %p56 = por %p54, %p55
    %p57 = scmp.ne.s32.totalorder %s45, %s46
    %p58 = scmp.eq.s32.totalorder %s15, 1
    %p59 = por %p57, %p58
    %p61 = scmp.ne.s32.totalorder %s46, %s60
    %p62 = scmp.eq.s32.totalorder %s15, 0
    %p63 = por %p61, %p62
    %s65 = sadd.s32 %s64, 1
    %p68 = scmp.eq.s32.totalorder %s9, 1
    %p69 = scmp.ne.s32.totalorder %s64, %s66
    %p70 = scmp.eq.s32.totalorder %s9, 0
    %p71 = por %p69, %p70
    %p72 = scmp.ne.s32.totalorder %s64, %s66
    %p73 = scmp.eq.s32.totalorder %s14, 1
    %p74 = por %p72, %p73
    %p75 = scmp.ne.s32.totalorder %s66, %s67
    %p76 = scmp.eq.s32.totalorder %s14, 0
    %p77 = por %p75, %p76
    %p78 = scmp.ne.s32.totalorder %s66, %s67
    %p79 = scmp.eq.s32.totalorder %s15, 1
    %p80 = por %p78, %p79
    %p82 = scmp.ne.s32.totalorder %s67, %s81
    %p83 = scmp.eq.s32.totalorder %s15, 0
    %p84 = por %p82, %p83
    %s85 = ssub.s32 %s9, %s16
    %p86 = scmp.eq.s32.totalorder %s85, 0
    %s88 = sadd.s32 %s87, 1
    %s89 = scalar_select %p86, %s87, %s88
    %p92 = pneg %p86
    %p93 = scmp.eq.s32.totalorder %s9, 1
    %p94 = por %p92, %p93
    %p95 = scmp.ne.s32.totalorder %s87, %s90
    %p96 = scmp.eq.s32.totalorder %s9, 0
    %p97 = por %p95, %p96
    %p98 = scmp.ne.s32.totalorder %s87, %s90
    %p99 = scmp.eq.s32.totalorder %s14, 1
    %p100 = por %p98, %p99
    %p101 = scmp.ne.s32.totalorder %s90, %s91
    %p102 = scmp.eq.s32.totalorder %s14, 0
    %p103 = por %p101, %p102
    %p104 = scmp.ne.s32.totalorder %s90, %s91
    %p105 = scmp.eq.s32.totalorder %s15, 1
    %p106 = por %p104, %p105
    %p108 = scmp.ne.s32.totalorder %s91, %s107
    %p109 = scmp.eq.s32.totalorder %s15, 0
    %p110 = por %p108, %p109
    %p111 = scmp.le.s32.totalorder 1, %s9
    %p112 = scmp.lt.s32.totalorder %s9, 3
    %p113 = pnand %p111, %p112
    %p114 = pneg %p113
    // Predicated region
    $region9: #{farnet_forward.21} parent=5 // pred_check
      _
    $region10: #{farnet_forward.21} parent=5 // pred_check_branch
      %116 = sbr.rel (%p113) target = $region12
    $region11: #{farnet_forward.21} parent=5 // pred_region
      %s117 = ssub.s32 %s9, 1
      // Predicated region
      $region13: #{farnet_forward.21} parent=11 // pred_check
        %p118 = pneg %p56
      $region14: #{farnet_forward.21} parent=11 // pred_check_branch
        %120 = sbr.rel (%p118) target = $region16
      $region15: #{farnet_forward.21} parent=11 // pred_region
        _
      $region16: #{farnet_forward.21} parent=11 // pred_fallthru
        _
      // Predicated region
      $region17: #{farnet_forward.21} parent=11 // pred_check
        %p121 = pneg %p77
      $region18: #{farnet_forward.21} parent=11 // pred_check_branch
        %123 = sbr.rel (%p121) target = $region20
      $region19: #{farnet_forward.21} parent=11 // pred_region
        _
      $region20: #{farnet_forward.21} parent=11 // pred_fallthru
        _
    $region12: #{farnet_forward.21} parent=5 // pred_fallthru
      _
    %p124 = scmp.lt.s32.totalorder %s9, 2
    // Predicated region
    $region21: #{farnet_forward.21} parent=5 // pred_check
      %p125 = pneg %p124
    $region22: #{farnet_forward.21} parent=5 // pred_check_branch
      %127 = sbr.rel (%p125) target = $region24
    $region23: #{farnet_forward.21} parent=5 // pred_region
      // Predicated region
      $region25: #{farnet_forward.21} parent=23 // pred_check
        %p128 = pneg %p29
      $region26: #{farnet_forward.21} parent=23 // pred_check_branch
        %130 = sbr.rel (%p128) target = $region28
      $region27: #{farnet_forward.21} parent=23 // pred_region
        %s131 = smul.u32 32, %s9
        %p132 = scmp.lt.s32.totalorder %s131, 63
        %s133 = scalar_select %p132, %s131, 63
        %s134 = smul.addr %s133, 3
        %s135 = smul.addr %s134, 4
        %s136 = scalar_lea.vmem %s0, %s135
        %s137 = smul.u32 32, %s9
      $region28: #{farnet_forward.21} parent=23 // pred_fallthru
        _
    $region24: #{farnet_forward.21} parent=5 // pred_fallthru
      _
    %p138 = scmp.le.s32.totalorder 1, %s9
    %p139 = scmp.lt.s32.totalorder %s9, 3
    %p140 = pnand %p138, %p139
    %p141 = pneg %p140
    // Predicated region
    $region29: #{farnet_forward.21} parent=5 // pred_check
      _
    $region30: #{farnet_forward.21} parent=5 // pred_check_branch
      %143 = sbr.rel (%p140) target = $region32
    $region31: #{farnet_forward.21} parent=5 // pred_region
      %s144 = ssub.s32 %s9, 1
      %s145 = smul.u32 32, %s14
      %p146 = scmp.lt.s32.totalorder %s145, 63
      %s147 = scalar_select %p146, %s145, 63
      %s148 = smul.addr %s147, 3
      %s149 = smul.addr %s148, 4
      %s150 = scalar_lea.vmem %s0, %s149
      %p151 = pneg %p35
      %p152 = pneg %p32
      %p153 = pneg %p56
      %p154 = pneg %p53
      %p155 = pneg %p77
      %p156 = pneg %p74
      %p157 = pneg %p103
      %p158 = pneg %p100
      %s159 = smul.u32 32, %s14
      %p160 = scmp.lt.s32.totalorder %s159, 63
      %s161 = scalar_select %p160, %s159, 63
      %s162 = smul.addr %s161, 8
      %s163 = scalar_lea.vmem %s3, %s162
      %s164 = smul.u32 32, %s14
      %p165 = scmp.lt.s32.totalorder %s164, 63
      %s166 = scalar_select %p165, %s164, 63
      %s167 = smul.addr %s166, 3
      %s168 = smul.addr %s167, 4
      %s169 = scalar_lea.vmem %s0, %s168
      %s170 = smul.u32 32, %s14
      %s171 = smul.u32 32, %s14
      %p172 = scmp.lt.s32.totalorder %s171, 63
      %s173 = scalar_select %p172, %s171, 63
      %s174 = smul.addr %s173, 8
      %s175 = scalar_lea.vmem %s3, %s174
      %s176 = smul.u32 32, %s14
      %v178 = vld [vmem:[%s169] sm:$0xff]
      %v179 = vld [vmem:[%s169 + $0x8] sm:$0xf]
      %v180 = vld [vmem:[%s169 + $0xc] sm:$0xff]
      %v181 = vld [vmem:[%s169 + $0x14] sm:$0xf]
      %v182 = vld [vmem:[%s169 + $0x18] sm:$0xff]
      %v183 = vld [vmem:[%s169 + $0x20] sm:$0xf]
      %v184 = vld [vmem:[%s169 + $0x24] sm:$0xff]
      %v185 = vld [vmem:[%s169 + $0x2c] sm:$0xf]
      %v186 = vld [vmem:[%s169 + $0x30] sm:$0xff]
      %v187 = vld [vmem:[%s169 + $0x38] sm:$0xf]
      %v188 = vld [vmem:[%s169 + $0x3c] sm:$0xff]
      %v189 = vld [vmem:[%s169 + $0x44] sm:$0xf]
      %v190 = vld [vmem:[%s169 + $0x48] sm:$0xff]
      %v191 = vld [vmem:[%s169 + $0x50] sm:$0xf]
      %v192 = vld [vmem:[%s169 + $0x54] sm:$0xff]
      %v193 = vld [vmem:[%s169 + $0x5c] sm:$0xf]
      %v194 = vld [vmem:[%s169 + $0x60] sm:$0xff]
      %v195 = vld [vmem:[%s169 + $0x68] sm:$0xf]
      %v196 = vld [vmem:[%s169 + $0x6c] sm:$0xff]
      %v197 = vld [vmem:[%s169 + $0x74] sm:$0xf]
      %v198 = vld [vmem:[%s169 + $0x78] sm:$0xff]
      %v199 = vld [vmem:[%s169 + $0x80] sm:$0xf]
      %v200 = vld [vmem:[%s169 + $0x84] sm:$0xff]
      %v201 = vld [vmem:[%s169 + $0x8c] sm:$0xf]
      %v202 = vld [vmem:[%s169 + $0x90] sm:$0xff]
      %v203 = vld [vmem:[%s169 + $0x98] sm:$0xf]
      %v204 = vld [vmem:[%s169 + $0x9c] sm:$0xff]
      %v205 = vld [vmem:[%s169 + $0xa4] sm:$0xf]
      %v206 = vld [vmem:[%s169 + $0xa8] sm:$0xff]
      %v207 = vld [vmem:[%s169 + $0xb0] sm:$0xf]
      %v208 = vld [vmem:[%s169 + $0xb4] sm:$0xff]
      %v209 = vld [vmem:[%s169 + $0xbc] sm:$0xf]
      %v210 = vld [vmem:[%s169 + $0xc0] sm:$0xff]
      %v211 = vld [vmem:[%s169 + $0xc8] sm:$0xf]
      %v212 = vld [vmem:[%s169 + $0xcc] sm:$0xff]
      %v213 = vld [vmem:[%s169 + $0xd4] sm:$0xf]
      %v214 = vld [vmem:[%s169 + $0xd8] sm:$0xff]
      %v215 = vld [vmem:[%s169 + $0xe0] sm:$0xf]
      %v216 = vld [vmem:[%s169 + $0xe4] sm:$0xff]
      %v217 = vld [vmem:[%s169 + $0xec] sm:$0xf]
      %v218 = vld [vmem:[%s169 + $0xf0] sm:$0xff]
      %v219 = vld [vmem:[%s169 + $0xf8] sm:$0xf]
      %v220 = vld [vmem:[%s169 + $0xfc] sm:$0xff]
      %v221 = vld [vmem:[%s169 + $0x104] sm:$0xf]
      %v222 = vld [vmem:[%s169 + $0x108] sm:$0xff]
      %v223 = vld [vmem:[%s169 + $0x110] sm:$0xf]
      %v224 = vld [vmem:[%s169 + $0x114] sm:$0xff]
      %v225 = vld [vmem:[%s169 + $0x11c] sm:$0xf]
      %v226 = vld [vmem:[%s169 + $0x120] sm:$0xff]
      %v227 = vld [vmem:[%s169 + $0x128] sm:$0xf]
      %v228 = vld [vmem:[%s169 + $0x12c] sm:$0xff]
      %v229 = vld [vmem:[%s169 + $0x134] sm:$0xf]
      %v230 = vld [vmem:[%s169 + $0x138] sm:$0xff]
      %v231 = vld [vmem:[%s169 + $0x140] sm:$0xf]
      %v232 = vld [vmem:[%s169 + $0x144] sm:$0xff]
      %v233 = vld [vmem:[%s169 + $0x14c] sm:$0xf]
      %v234 = vld [vmem:[%s169 + $0x150] sm:$0xff]
      %v235 = vld [vmem:[%s169 + $0x158] sm:$0xf]
      %v236 = vld [vmem:[%s169 + $0x15c] sm:$0xff]
      %v237 = vld [vmem:[%s169 + $0x164] sm:$0xf]
      %v238 = vld [vmem:[%s169 + $0x168] sm:$0xff]
      %v239 = vld [vmem:[%s169 + $0x170] sm:$0xf]
      %v240 = vld [vmem:[%s169 + $0x174] sm:$0xff]
      %v241 = vld [vmem:[%s169 + $0x17c] sm:$0xf]
      %v242 = vld [vmem:[%s1] sm:$0xf]
      %v243 = vld [vmem:[%s1 + $0x4] sm:$0xf]
      %v244 = vld [vmem:[%s1 + $0x8] sm:$0xf]
      %v245 = vld [vmem:[%s1 + $0xc] sm:$0xf]
      %v246 = vld [vmem:[%s1 + $0x10] sm:$0xf]
      %v247 = vld [vmem:[%s1 + $0x14] sm:$0xf]
      %v248 = vld [vmem:[%s1 + $0x18] sm:$0xf]
      %v249 = vld [vmem:[%s1 + $0x1c] sm:$0xf]
      %v250 = vld [vmem:[%s1 + $0x20] sm:$0xf]
      %v251 = vld [vmem:[%s1 + $0x24] sm:$0xf]
      %v252 = vld [vmem:[%s1 + $0x28] sm:$0xf]
      %v253 = vld [vmem:[%s1 + $0x2c] sm:$0xf]
      %v254 = vld [vmem:[%s1 + $0x30] sm:$0xf]
      %v255 = vld [vmem:[%s1 + $0x34] sm:$0xf]
      %v256 = vld [vmem:[%s1 + $0x38] sm:$0xf]
      %v257 = vld [vmem:[%s1 + $0x3c] sm:$0xf]
      %v258 = vld [vmem:[%s1 + $0x40] sm:$0xf]
      %v259 = vld [vmem:[%s1 + $0x44] sm:$0xf]
      %v260 = vld [vmem:[%s1 + $0x48] sm:$0xf]
      %v261 = vld [vmem:[%s1 + $0x4c] sm:$0xf]
      %v262 = vld [vmem:[%s1 + $0x50] sm:$0xf]
      %v263 = vld [vmem:[%s1 + $0x54] sm:$0xf]
      %v264 = vld [vmem:[%s1 + $0x58] sm:$0xf]
      %v265 = vld [vmem:[%s1 + $0x5c] sm:$0xf]
      %v266 = vld [vmem:[%s1 + $0x60] sm:$0xf]
      %v267 = vld [vmem:[%s1 + $0x64] sm:$0xf]
      %v268 = vld [vmem:[%s1 + $0x68] sm:$0xf]
      %v269 = vld [vmem:[%s1 + $0x6c] sm:$0xf]
      %v270 = vld [vmem:[%s1 + $0x70] sm:$0xf]
      %v271 = vld [vmem:[%s1 + $0x74] sm:$0xf]
      %v272 = vld [vmem:[%s1 + $0x78] sm:$0xf]
      %v273 = vld [vmem:[%s1 + $0x7c] sm:$0xf]
      %v274 = vld [vmem:[%s1 + $0x80] sm:$0xf]
      %v275 = vld [vmem:[%s1 + $0x84] sm:$0xf]
      %v276 = vld [vmem:[%s1 + $0x88] sm:$0xf]
      %v277 = vld [vmem:[%s1 + $0x8c] sm:$0xf]
      %v278 = vld [vmem:[%s2] sm:$0x1]
      %v280 = vperm.slane %v278, 0
      %v346 = vunpack.c.l.b16 %v178
      %v347 = vunpack.c.h.b16 %v178
      %v348 = vunpack.c.l.b16 %v179
      %v349 = vunpack.c.l.b16 %v180
      %v350 = vunpack.c.h.b16 %v180
      %v351 = vunpack.c.l.b16 %v181
      %v352 = vunpack.c.l.b16 %v182
      %v353 = vunpack.c.h.b16 %v182
      %v354 = vunpack.c.l.b16 %v183
      %v355 = vunpack.c.l.b16 %v184
      %v356 = vunpack.c.h.b16 %v184
      %v357 = vunpack.c.l.b16 %v185
      %v358 = vunpack.c.l.b16 %v186
      %v359 = vunpack.c.h.b16 %v186
      %v360 = vunpack.c.l.b16 %v187
      %v361 = vunpack.c.l.b16 %v188
      %v362 = vunpack.c.h.b16 %v188
      %v363 = vunpack.c.l.b16 %v189
      %v364 = vunpack.c.l.b16 %v190
      %v365 = vunpack.c.h.b16 %v190
      %v366 = vunpack.c.l.b16 %v191
      %v367 = vunpack.c.l.b16 %v192
      %v368 = vunpack.c.h.b16 %v192
      %v369 = vunpack.c.l.b16 %v193
      %v370 = vunpack.c.l.b16 %v194
      %v371 = vunpack.c.h.b16 %v194
      %v372 = vunpack.c.l.b16 %v195
      %v373 = vunpack.c.l.b16 %v196
      %v374 = vunpack.c.h.b16 %v196
      %v375 = vunpack.c.l.b16 %v197
      %v376 = vunpack.c.l.b16 %v198
      %v377 = vunpack.c.h.b16 %v198
      %v378 = vunpack.c.l.b16 %v199
      %v379 = vunpack.c.l.b16 %v200
      %v380 = vunpack.c.h.b16 %v200
      %v381 = vunpack.c.l.b16 %v201
      %v382 = vunpack.c.l.b16 %v202
      %v383 = vunpack.c.h.b16 %v202
      %v384 = vunpack.c.l.b16 %v203
      %v385 = vunpack.c.l.b16 %v204
      %v386 = vunpack.c.h.b16 %v204
      %v387 = vunpack.c.l.b16 %v205
      %v388 = vunpack.c.l.b16 %v206
      %v389 = vunpack.c.h.b16 %v206
      %v390 = vunpack.c.l.b16 %v207
      %v391 = vunpack.c.l.b16 %v208
      %v392 = vunpack.c.h.b16 %v208
      %v393 = vunpack.c.l.b16 %v209
      %v394 = vunpack.c.l.b16 %v210
      %v395 = vunpack.c.h.b16 %v210
      %v396 = vunpack.c.l.b16 %v211
      %v397 = vunpack.c.l.b16 %v212
      %v398 = vunpack.c.h.b16 %v212
      %v399 = vunpack.c.l.b16 %v213
      %v400 = vunpack.c.l.b16 %v214
      %v401 = vunpack.c.h.b16 %v214
      %v402 = vunpack.c.l.b16 %v215
      %v403 = vunpack.c.l.b16 %v216
      %v404 = vunpack.c.h.b16 %v216
      %v405 = vunpack.c.l.b16 %v217
      %v406 = vunpack.c.l.b16 %v218
      %v407 = vunpack.c.h.b16 %v218
      %v408 = vunpack.c.l.b16 %v219
      %v409 = vunpack.c.l.b16 %v220
      %v410 = vunpack.c.h.b16 %v220
      %v411 = vunpack.c.l.b16 %v221
      %v412 = vunpack.c.l.b16 %v222
      %v413 = vunpack.c.h.b16 %v222
      %v414 = vunpack.c.l.b16 %v223
      %v415 = vunpack.c.l.b16 %v224
      %v416 = vunpack.c.h.b16 %v224
      %v417 = vunpack.c.l.b16 %v225
      %v418 = vunpack.c.l.b16 %v226
      %v419 = vunpack.c.h.b16 %v226
      %v420 = vunpack.c.l.b16 %v227
      %v421 = vunpack.c.l.b16 %v228
      %v422 = vunpack.c.h.b16 %v228
      %v423 = vunpack.c.l.b16 %v229
      %v424 = vunpack.c.l.b16 %v230
      %v425 = vunpack.c.h.b16 %v230
      %v426 = vunpack.c.l.b16 %v231
      %v427 = vunpack.c.l.b16 %v232
      %v428 = vunpack.c.h.b16 %v232
      %v429 = vunpack.c.l.b16 %v233
      %v430 = vunpack.c.l.b16 %v234
      %v431 = vunpack.c.h.b16 %v234
      %v432 = vunpack.c.l.b16 %v235
      %v433 = vunpack.c.l.b16 %v236
      %v434 = vunpack.c.h.b16 %v236
      %v435 = vunpack.c.l.b16 %v237
      %v436 = vunpack.c.l.b16 %v238
      %v437 = vunpack.c.h.b16 %v238
      %v438 = vunpack.c.l.b16 %v239
      %v439 = vunpack.c.l.b16 %v240
      %v440 = vunpack.c.h.b16 %v240
      %v441 = vunpack.c.l.b16 %v241
      %v442 = vpack.c.b16 %v349, %v346
      %v443 = vpack.c.b16 %v350, %v347
      %v444 = vpack.c.b16 %v351, %v348
      %v445 = vpack.c.b16 %v355, %v352
      %v446 = vpack.c.b16 %v356, %v353
      %v447 = vpack.c.b16 %v357, %v354
      %v448 = vpack.c.b16 %v361, %v358
      %v449 = vpack.c.b16 %v362, %v359
      %v450 = vpack.c.b16 %v363, %v360
      %v451 = vpack.c.b16 %v367, %v364
      %v452 = vpack.c.b16 %v368, %v365
      %v453 = vpack.c.b16 %v369, %v366
      %v454 = vpack.c.b16 %v373, %v370
      %v455 = vpack.c.b16 %v374, %v371
      %v456 = vpack.c.b16 %v375, %v372
      %v457 = vpack.c.b16 %v379, %v376
      %v458 = vpack.c.b16 %v380, %v377
      %v459 = vpack.c.b16 %v381, %v378
      %v460 = vpack.c.b16 %v385, %v382
      %v461 = vpack.c.b16 %v386, %v383
      %v462 = vpack.c.b16 %v387, %v384
      %v463 = vpack.c.b16 %v391, %v388
      %v464 = vpack.c.b16 %v392, %v389
      %v465 = vpack.c.b16 %v393, %v390
      %v466 = vpack.c.b16 %v397, %v394
      %v467 = vpack.c.b16 %v398, %v395
      %v468 = vpack.c.b16 %v399, %v396
      %v469 = vpack.c.b16 %v403, %v400
      %v470 = vpack.c.b16 %v404, %v401
      %v471 = vpack.c.b16 %v405, %v402
      %v472 = vpack.c.b16 %v409, %v406
      %v473 = vpack.c.b16 %v410, %v407
      %v474 = vpack.c.b16 %v411, %v408
      %v475 = vpack.c.b16 %v415, %v412
      %v476 = vpack.c.b16 %v416, %v413
      %v477 = vpack.c.b16 %v417, %v414
      %v478 = vpack.c.b16 %v421, %v418
      %v479 = vpack.c.b16 %v422, %v419
      %v480 = vpack.c.b16 %v423, %v420
      %v481 = vpack.c.b16 %v427, %v424
      %v482 = vpack.c.b16 %v428, %v425
      %v483 = vpack.c.b16 %v429, %v426
      %v484 = vpack.c.b16 %v433, %v430
      %v485 = vpack.c.b16 %v434, %v431
      %v486 = vpack.c.b16 %v435, %v432
      %v487 = vpack.c.b16 %v439, %v436
      %v488 = vpack.c.b16 %v440, %v437
      %v489 = vpack.c.b16 %v441, %v438
      %v558 = vunpack.c.l.b16 %v242
      %v559 = vunpack.c.l.b16 %v243
      %v560 = vunpack.c.l.b16 %v244
      %v561 = vunpack.c.l.b16 %v245
      %v562 = vunpack.c.l.b16 %v246
      %v563 = vunpack.c.l.b16 %v247
      %v564 = vunpack.c.l.b16 %v248
      %v565 = vunpack.c.l.b16 %v249
      %v566 = vunpack.c.l.b16 %v250
      %v567 = vunpack.c.l.b16 %v251
      %v568 = vunpack.c.l.b16 %v252
      %v569 = vunpack.c.l.b16 %v253
      %v570 = vunpack.c.l.b16 %v254
      %v571 = vunpack.c.l.b16 %v255
      %v572 = vunpack.c.l.b16 %v256
      %v573 = vunpack.c.l.b16 %v257
      %v574 = vunpack.c.l.b16 %v258
      %v575 = vunpack.c.l.b16 %v259
      %v576 = vunpack.c.l.b16 %v260
      %v577 = vunpack.c.l.b16 %v261
      %v578 = vunpack.c.l.b16 %v262
      %v579 = vunpack.c.l.b16 %v263
      %v580 = vunpack.c.l.b16 %v264
      %v581 = vunpack.c.l.b16 %v265
      %v582 = vunpack.c.l.b16 %v266
      %v583 = vunpack.c.l.b16 %v267
      %v584 = vunpack.c.l.b16 %v268
      %v585 = vunpack.c.l.b16 %v269
      %v586 = vunpack.c.l.b16 %v270
      %v587 = vunpack.c.l.b16 %v271
      %v588 = vunpack.c.l.b16 %v272
      %v589 = vunpack.c.l.b16 %v273
      %v590 = vunpack.c.l.b16 %v274
      %v591 = vunpack.c.l.b16 %v275
      %v592 = vunpack.c.l.b16 %v276
      %v593 = vunpack.c.l.b16 %v277
      %v594 = vpack.c.b16 %v559, %v558
      %v595 = vpack.c.b16 %v561, %v560
      %v596 = vpack.c.b16 %v563, %v562
      %v597 = vpack.c.b16 %v565, %v564
      %v598 = vpack.c.b16 %v567, %v566
      %v599 = vpack.c.b16 %v569, %v568
      %v600 = vpack.c.b16 %v571, %v570
      %v601 = vpack.c.b16 %v573, %v572
      %v602 = vpack.c.b16 %v575, %v574
      %v603 = vpack.c.b16 %v577, %v576
      %v604 = vpack.c.b16 %v579, %v578
      %v605 = vpack.c.b16 %v581, %v580
      %v606 = vpack.c.b16 %v583, %v582
      %v607 = vpack.c.b16 %v585, %v584
      %v608 = vpack.c.b16 %v587, %v586
      %v609 = vpack.c.b16 %v589, %v588
      %v610 = vpack.c.b16 %v591, %v590
      %v611 = vpack.c.b16 %v593, %v592
      %vm630 = vcmask 261120
      %v632 = vsel %vm630, %v444, 0
      %v635 = vsel %vm630, %v447, 0
      %v638 = vsel %vm630, %v450, 0
      %v641 = vsel %vm630, %v453, 0
      %v644 = vsel %vm630, %v456, 0
      %v647 = vsel %vm630, %v459, 0
      %v650 = vsel %vm630, %v462, 0
      %v653 = vsel %vm630, %v465, 0
      %v656 = vsel %vm630, %v468, 0
      %v659 = vsel %vm630, %v471, 0
      %v662 = vsel %vm630, %v474, 0
      %v665 = vsel %vm630, %v477, 0
      %v668 = vsel %vm630, %v480, 0
      %v671 = vsel %vm630, %v483, 0
      %v674 = vsel %vm630, %v486, 0
      %v677 = vsel %vm630, %v489, 0
      %679 = vmatpush.bf16.msra.mxu0 %v601
      %680 = vmatpush.bf16.msra.mxu0 %v600
      %681 = vmatpush.bf16.msra.mxu0 %v599
      %682 = vmatpush.bf16.msra.mxu0 %v598
      %683 = vmatpush.bf16.msra.mxu0 %v597
      %684 = vmatpush.bf16.msra.mxu0 %v596
      %685 = vmatpush.bf16.msra.mxu0 %v595
      %686 = vmatpush.bf16.msra.mxu0 %v594
      %687 = vmatmul.bf16.gmra.mxu0 %v442
      %v688 = vpop.f32.mrf.mxu0
      %v689 = vadd.f32 %v280, %v688
      %v690 = vpop.f32.mrf.mxu0
      %v691 = vadd.f32 %v280, %v690
      %692 = vmatmul.bf16.gmra.mxu0 %v445
      %v693 = vpop.f32.mrf.mxu0
      %v694 = vadd.f32 %v280, %v693
      %v695 = vpop.f32.mrf.mxu0
      %v696 = vadd.f32 %v280, %v695
      %697 = vmatmul.bf16.gmra.mxu0 %v448
      %v698 = vpop.f32.mrf.mxu0
      %v699 = vadd.f32 %v280, %v698
      %v700 = vpop.f32.mrf.mxu0
      %v701 = vadd.f32 %v280, %v700
      %702 = vmatmul.bf16.gmra.mxu0 %v451
      %v703 = vpop.f32.mrf.mxu0
      %v704 = vadd.f32 %v280, %v703
      %v705 = vpop.f32.mrf.mxu0
      %v706 = vadd.f32 %v280, %v705
      %707 = vmatmul.bf16.gmra.mxu0 %v454
      %v708 = vpop.f32.mrf.mxu0
      %v709 = vadd.f32 %v280, %v708
      %v710 = vpop.f32.mrf.mxu0
      %v711 = vadd.f32 %v280, %v710
      %712 = vmatmul.bf16.gmra.mxu0 %v457
      %v713 = vpop.f32.mrf.mxu0
      %v714 = vadd.f32 %v280, %v713
      %v715 = vpop.f32.mrf.mxu0
      %v716 = vadd.f32 %v280, %v715
      %717 = vmatmul.bf16.gmra.mxu0 %v460
      %v718 = vpop.f32.mrf.mxu0
      %v719 = vadd.f32 %v280, %v718
      %v720 = vpop.f32.mrf.mxu0
      %v721 = vadd.f32 %v280, %v720
      %722 = vmatmul.bf16.gmra.mxu0 %v463
      %v723 = vpop.f32.mrf.mxu0
      %v724 = vadd.f32 %v280, %v723
      %v725 = vpop.f32.mrf.mxu0
      %v726 = vadd.f32 %v280, %v725
      %727 = vmatmul.bf16.gmra.mxu0 %v466
      %v728 = vpop.f32.mrf.mxu0
      %v729 = vadd.f32 %v280, %v728
      %v730 = vpop.f32.mrf.mxu0
      %v731 = vadd.f32 %v280, %v730
      %732 = vmatmul.bf16.gmra.mxu0 %v469
      %v733 = vpop.f32.mrf.mxu0
      %v734 = vadd.f32 %v280, %v733
      %v735 = vpop.f32.mrf.mxu0
      %v736 = vadd.f32 %v280, %v735
      %737 = vmatmul.bf16.gmra.mxu0 %v472
      %v738 = vpop.f32.mrf.mxu0
      %v739 = vadd.f32 %v280, %v738
      %v740 = vpop.f32.mrf.mxu0
      %v741 = vadd.f32 %v280, %v740
      %742 = vmatmul.bf16.gmra.mxu0 %v475
      %v743 = vpop.f32.mrf.mxu0
      %v744 = vadd.f32 %v280, %v743
      %v745 = vpop.f32.mrf.mxu0
      %v746 = vadd.f32 %v280, %v745
      %747 = vmatmul.bf16.gmra.mxu0 %v478
      %v748 = vpop.f32.mrf.mxu0
      %v749 = vadd.f32 %v280, %v748
      %v750 = vpop.f32.mrf.mxu0
      %v751 = vadd.f32 %v280, %v750
      %752 = vmatmul.bf16.gmra.mxu0 %v481
      %v753 = vpop.f32.mrf.mxu0
      %v754 = vadd.f32 %v280, %v753
      %v755 = vpop.f32.mrf.mxu0
      %v756 = vadd.f32 %v280, %v755
      %757 = vmatmul.bf16.gmra.mxu0 %v484
      %v758 = vpop.f32.mrf.mxu0
      %v759 = vadd.f32 %v280, %v758
      %v760 = vpop.f32.mrf.mxu0
      %v761 = vadd.f32 %v280, %v760
      %762 = vmatmul.bf16.gmra.mxu0 %v487
      %v763 = vpop.f32.mrf.mxu0
      %v764 = vadd.f32 %v280, %v763
      %v765 = vpop.f32.mrf.mxu0
      %v766 = vadd.f32 %v280, %v765
      %767 = vdwg.mxu0
      %768 = vmatpush.bf16.msra.mxu0 %v609
      %769 = vmatpush.bf16.msra.mxu0 %v608
      %770 = vmatpush.bf16.msra.mxu0 %v607
      %771 = vmatpush.bf16.msra.mxu0 %v606
      %772 = vmatpush.bf16.msra.mxu0 %v605
      %773 = vmatpush.bf16.msra.mxu0 %v604
      %774 = vmatpush.bf16.msra.mxu0 %v603
      %775 = vmatpush.bf16.msra.mxu0 %v602
      %776 = vmatmul.bf16.gmra.mxu0 %v443
      %v777 = vpop.f32.mrf.mxu0
      %v778 = vadd.f32 %v689, %v777
      %v779 = vpop.f32.mrf.mxu0
      %v780 = vadd.f32 %v691, %v779
      %781 = vmatmul.bf16.gmra.mxu0 %v446
      %v782 = vpop.f32.mrf.mxu0
      %v783 = vadd.f32 %v694, %v782
      %v784 = vpop.f32.mrf.mxu0
      %v785 = vadd.f32 %v696, %v784
      %786 = vmatmul.bf16.gmra.mxu0 %v449
      %v787 = vpop.f32.mrf.mxu0
      %v788 = vadd.f32 %v699, %v787
      %v789 = vpop.f32.mrf.mxu0
      %v790 = vadd.f32 %v701, %v789
      %791 = vmatmul.bf16.gmra.mxu0 %v452
      %v792 = vpop.f32.mrf.mxu0
      %v793 = vadd.f32 %v704, %v792
      %v794 = vpop.f32.mrf.mxu0
      %v795 = vadd.f32 %v706, %v794
      %796 = vmatmul.bf16.gmra.mxu0 %v455
      %v797 = vpop.f32.mrf.mxu0
      %v798 = vadd.f32 %v709, %v797
      %v799 = vpop.f32.mrf.mxu0
      %v800 = vadd.f32 %v711, %v799
      %801 = vmatmul.bf16.gmra.mxu0 %v458
      %v802 = vpop.f32.mrf.mxu0
      %v803 = vadd.f32 %v714, %v802
      %v804 = vpop.f32.mrf.mxu0
      %v805 = vadd.f32 %v716, %v804
      %806 = vmatmul.bf16.gmra.mxu0 %v461
      %v807 = vpop.f32.mrf.mxu0
      %v808 = vadd.f32 %v719, %v807
      %v809 = vpop.f32.mrf.mxu0
      %v810 = vadd.f32 %v721, %v809
      %811 = vmatmul.bf16.gmra.mxu0 %v464
      %v812 = vpop.f32.mrf.mxu0
      %v813 = vadd.f32 %v724, %v812
      %v814 = vpop.f32.mrf.mxu0
      %v815 = vadd.f32 %v726, %v814
      %816 = vmatmul.bf16.gmra.mxu0 %v467
      %v817 = vpop.f32.mrf.mxu0
      %v818 = vadd.f32 %v729, %v817
      %v819 = vpop.f32.mrf.mxu0
      %v820 = vadd.f32 %v731, %v819
      %821 = vmatmul.bf16.gmra.mxu0 %v470
      %v822 = vpop.f32.mrf.mxu0
      %v823 = vadd.f32 %v734, %v822
      %v824 = vpop.f32.mrf.mxu0
      %v825 = vadd.f32 %v736, %v824
      %826 = vmatmul.bf16.gmra.mxu0 %v473
      %v827 = vpop.f32.mrf.mxu0
      %v828 = vadd.f32 %v739, %v827
      %v829 = vpop.f32.mrf.mxu0
      %v830 = vadd.f32 %v741, %v829
      %831 = vmatmul.bf16.gmra.mxu0 %v476
      %v832 = vpop.f32.mrf.mxu0
      %v833 = vadd.f32 %v744, %v832
      %v834 = vpop.f32.mrf.mxu0
      %v835 = vadd.f32 %v746, %v834
      %836 = vmatmul.bf16.gmra.mxu0 %v479
      %v837 = vpop.f32.mrf.mxu0
      %v838 = vadd.f32 %v749, %v837
      %v839 = vpop.f32.mrf.mxu0
      %v840 = vadd.f32 %v751, %v839
      %841 = vmatmul.bf16.gmra.mxu0 %v482
      %v842 = vpop.f32.mrf.mxu0
      %v843 = vadd.f32 %v754, %v842
      %v844 = vpop.f32.mrf.mxu0
      %v845 = vadd.f32 %v756, %v844
      %846 = vmatmul.bf16.gmra.mxu0 %v485
      %v847 = vpop.f32.mrf.mxu0
      %v848 = vadd.f32 %v759, %v847
      %v849 = vpop.f32.mrf.mxu0
      %v850 = vadd.f32 %v761, %v849
      %851 = vmatmul.bf16.gmra.mxu0 %v488
      %v852 = vpop.f32.mrf.mxu0
      %v853 = vadd.f32 %v764, %v852
      %v854 = vpop.f32.mrf.mxu0
      %v855 = vadd.f32 %v766, %v854
      %856 = vdwg.mxu0
      %857 = vmatpush.bf16.msra.mxu0 0
      %858 = vmatpush.bf16.msra.mxu0 0
      %859 = vmatpush.bf16.msra.mxu0 0
      %860 = vmatpush.bf16.msra.mxu0 0
      %861 = vmatpush.bf16.msra.mxu0 0
      %862 = vmatpush.bf16.msra.mxu0 0
      %863 = vmatpush.bf16.msra.mxu0 %v611
      %864 = vmatpush.bf16.msra.mxu0 %v610
      %865 = vmatmul.bf16.gmra.mxu0 %v632
      %v866 = vpop.f32.mrf.mxu0
      %v867 = vadd.f32 %v778, %v866
      %v868 = vpop.f32.mrf.mxu0
      %v869 = vadd.f32 %v780, %v868
      %870 = vmatmul.bf16.gmra.mxu0 %v635
      %v871 = vpop.f32.mrf.mxu0
      %v872 = vadd.f32 %v783, %v871
      %v873 = vpop.f32.mrf.mxu0
      %v874 = vadd.f32 %v785, %v873
      %875 = vmatmul.bf16.gmra.mxu0 %v638
      %v876 = vpop.f32.mrf.mxu0
      %v877 = vadd.f32 %v788, %v876
      %v878 = vpop.f32.mrf.mxu0
      %v879 = vadd.f32 %v790, %v878
      %880 = vmatmul.bf16.gmra.mxu0 %v641
      %v881 = vpop.f32.mrf.mxu0
      %v882 = vadd.f32 %v793, %v881
      %v883 = vpop.f32.mrf.mxu0
      %v884 = vadd.f32 %v795, %v883
      %885 = vmatmul.bf16.gmra.mxu0 %v644
      %v886 = vpop.f32.mrf.mxu0
      %v887 = vadd.f32 %v798, %v886
      %v888 = vpop.f32.mrf.mxu0
      %v889 = vadd.f32 %v800, %v888
      %890 = vmatmul.bf16.gmra.mxu0 %v647
      %v891 = vpop.f32.mrf.mxu0
      %v892 = vadd.f32 %v803, %v891
      %v893 = vpop.f32.mrf.mxu0
      %v894 = vadd.f32 %v805, %v893
      %895 = vmatmul.bf16.gmra.mxu0 %v650
      %v896 = vpop.f32.mrf.mxu0
      %v897 = vadd.f32 %v808, %v896
      %v898 = vpop.f32.mrf.mxu0
      %v899 = vadd.f32 %v810, %v898
      %900 = vmatmul.bf16.gmra.mxu0 %v653
      %v901 = vpop.f32.mrf.mxu0
      %v902 = vadd.f32 %v813, %v901
      %v903 = vpop.f32.mrf.mxu0
      %v904 = vadd.f32 %v815, %v903
      %905 = vmatmul.bf16.gmra.mxu0 %v656
      %v906 = vpop.f32.mrf.mxu0
      %v907 = vadd.f32 %v818, %v906
      %v908 = vpop.f32.mrf.mxu0
      %v909 = vadd.f32 %v820, %v908
      %910 = vmatmul.bf16.gmra.mxu0 %v659
      %v911 = vpop.f32.mrf.mxu0
      %v912 = vadd.f32 %v823, %v911
      %v913 = vpop.f32.mrf.mxu0
      %v914 = vadd.f32 %v825, %v913
      %915 = vmatmul.bf16.gmra.mxu0 %v662
      %v916 = vpop.f32.mrf.mxu0
      %v917 = vadd.f32 %v828, %v916
      %v918 = vpop.f32.mrf.mxu0
      %v919 = vadd.f32 %v830, %v918
      %920 = vmatmul.bf16.gmra.mxu0 %v665
      %v921 = vpop.f32.mrf.mxu0
      %v922 = vadd.f32 %v833, %v921
      %v923 = vpop.f32.mrf.mxu0
      %v924 = vadd.f32 %v835, %v923
      %925 = vmatmul.bf16.gmra.mxu0 %v668
      %v926 = vpop.f32.mrf.mxu0
      %v927 = vadd.f32 %v838, %v926
      %v928 = vpop.f32.mrf.mxu0
      %v929 = vadd.f32 %v840, %v928
      %930 = vmatmul.bf16.gmra.mxu0 %v671
      %v931 = vpop.f32.mrf.mxu0
      %v932 = vadd.f32 %v843, %v931
      %v933 = vpop.f32.mrf.mxu0
      %v934 = vadd.f32 %v845, %v933
      %935 = vmatmul.bf16.gmra.mxu0 %v674
      %v936 = vpop.f32.mrf.mxu0
      %v937 = vadd.f32 %v848, %v936
      %v938 = vpop.f32.mrf.mxu0
      %v939 = vadd.f32 %v850, %v938
      %940 = vmatmul.bf16.gmra.mxu0 %v677
      %v941 = vpop.f32.mrf.mxu0
      %v942 = vadd.f32 %v853, %v941
      %v943 = vpop.f32.mrf.mxu0
      %v944 = vadd.f32 %v855, %v943
      %945 = vdwg.mxu0
      %v946 = vmax.f32 %v867, 0.0
      %v947 = vmax.f32 %v869, 0.0
      %v948 = vmax.f32 %v872, 0.0
      %v949 = vmax.f32 %v874, 0.0
      %v950 = vmax.f32 %v877, 0.0
      %v951 = vmax.f32 %v879, 0.0
      %v952 = vmax.f32 %v882, 0.0
      %v953 = vmax.f32 %v884, 0.0
      %v954 = vmax.f32 %v887, 0.0
      %v955 = vmax.f32 %v889, 0.0
      %v956 = vmax.f32 %v892, 0.0
      %v957 = vmax.f32 %v894, 0.0
      %v958 = vmax.f32 %v897, 0.0
      %v959 = vmax.f32 %v899, 0.0
      %v960 = vmax.f32 %v902, 0.0
      %v961 = vmax.f32 %v904, 0.0
      %v962 = vmax.f32 %v907, 0.0
      %v963 = vmax.f32 %v909, 0.0
      %v964 = vmax.f32 %v912, 0.0
      %v965 = vmax.f32 %v914, 0.0
      %v966 = vmax.f32 %v917, 0.0
      %v967 = vmax.f32 %v919, 0.0
      %v968 = vmax.f32 %v922, 0.0
      %v969 = vmax.f32 %v924, 0.0
      %v970 = vmax.f32 %v927, 0.0
      %v971 = vmax.f32 %v929, 0.0
      %v972 = vmax.f32 %v932, 0.0
      %v973 = vmax.f32 %v934, 0.0
      %v974 = vmax.f32 %v937, 0.0
      %v975 = vmax.f32 %v939, 0.0
      %v976 = vmax.f32 %v942, 0.0
      %v977 = vmax.f32 %v944, 0.0
      %978 = vst.msk [vmem:[%s175] sm:$0xff] %vm630, %v946
      %979 = vst.msk [vmem:[%s175 + $0x8] sm:$0xff] %vm630, %v947
      %980 = vst.msk [vmem:[%s175 + $0x10] sm:$0xff] %vm630, %v948
      %981 = vst.msk [vmem:[%s175 + $0x18] sm:$0xff] %vm630, %v949
      %982 = vst.msk [vmem:[%s175 + $0x20] sm:$0xff] %vm630, %v950
      %983 = vst.msk [vmem:[%s175 + $0x28] sm:$0xff] %vm630, %v951
      %984 = vst.msk [vmem:[%s175 + $0x30] sm:$0xff] %vm630, %v952
      %985 = vst.msk [vmem:[%s175 + $0x38] sm:$0xff] %vm630, %v953
      %986 = vst.msk [vmem:[%s175 + $0x40] sm:$0xff] %vm630, %v954
      %987 = vst.msk [vmem:[%s175 + $0x48] sm:$0xff] %vm630, %v955
      %988 = vst.msk [vmem:[%s175 + $0x50] sm:$0xff] %vm630, %v956
      %989 = vst.msk [vmem:[%s175 + $0x58] sm:$0xff] %vm630, %v957
      %990 = vst.msk [vmem:[%s175 + $0x60] sm:$0xff] %vm630, %v958
      %991 = vst.msk [vmem:[%s175 + $0x68] sm:$0xff] %vm630, %v959
      %992 = vst.msk [vmem:[%s175 + $0x70] sm:$0xff] %vm630, %v960
      %993 = vst.msk [vmem:[%s175 + $0x78] sm:$0xff] %vm630, %v961
      %994 = vst.msk [vmem:[%s175 + $0x80] sm:$0xff] %vm630, %v962
      %995 = vst.msk [vmem:[%s175 + $0x88] sm:$0xff] %vm630, %v963
      %996 = vst.msk [vmem:[%s175 + $0x90] sm:$0xff] %vm630, %v964
      %997 = vst.msk [vmem:[%s175 + $0x98] sm:$0xff] %vm630, %v965
      %998 = vst.msk [vmem:[%s175 + $0xa0] sm:$0xff] %vm630, %v966
      %999 = vst.msk [vmem:[%s175 + $0xa8] sm:$0xff] %vm630, %v967
      %1000 = vst.msk [vmem:[%s175 + $0xb0] sm:$0xff] %vm630, %v968
      %1001 = vst.msk [vmem:[%s175 + $0xb8] sm:$0xff] %vm630, %v969
      %1002 = vst.msk [vmem:[%s175 + $0xc0] sm:$0xff] %vm630, %v970
      %1003 = vst.msk [vmem:[%s175 + $0xc8] sm:$0xff] %vm630, %v971
      %1004 = vst.msk [vmem:[%s175 + $0xd0] sm:$0xff] %vm630, %v972
      %1005 = vst.msk [vmem:[%s175 + $0xd8] sm:$0xff] %vm630, %v973
      %1006 = vst.msk [vmem:[%s175 + $0xe0] sm:$0xff] %vm630, %v974
      %1007 = vst.msk [vmem:[%s175 + $0xe8] sm:$0xff] %vm630, %v975
      %1008 = vst.msk [vmem:[%s175 + $0xf0] sm:$0xff] %vm630, %v976
      %1009 = vst.msk [vmem:[%s175 + $0xf8] sm:$0xff] %vm630, %v977
      %s1010 = smul.u32 32, %s14
      %p1011 = scmp.lt.s32.totalorder %s1010, 63
      %s1012 = scalar_select %p1011, %s1010, 63
      %s1013 = smul.addr %s1012, 8
      %s1014 = scalar_lea.vmem %s3, %s1013
      // Predicated region
      $region33: #{farnet_forward.21} parent=31 // pred_check
        %p1015 = pneg %p100
      $region34: #{farnet_forward.21} parent=31 // pred_check_branch
        %1017 = sbr.rel (%p1015) target = $region36
      $region35: #{farnet_forward.21} parent=31 // pred_region
        %s1018 = smul.u32 32, %s14
      $region36: #{farnet_forward.21} parent=31 // pred_fallthru
        _
    $region32: #{farnet_forward.21} parent=5 // pred_fallthru
      _
    %p1019 = scmp.le.s32.totalorder 2, %s9
    // Predicated region
    $region37: #{farnet_forward.21} parent=5 // pred_check
      %p1020 = pneg %p1019
    $region38: #{farnet_forward.21} parent=5 // pred_check_branch
      %1022 = sbr.rel (%p1020) target = $region40
    $region39: #{farnet_forward.21} parent=5 // pred_region
      %s1023 = ssub.s32 %s9, 2
      // Predicated region
      $region41: #{farnet_forward.21} parent=39 // pred_check
        %p1024 = pneg %p106
      $region42: #{farnet_forward.21} parent=39 // pred_check_branch
        %1026 = sbr.rel (%p1024) target = $region44
      $region43: #{farnet_forward.21} parent=39 // pred_region
        %s1027 = smul.u32 32, %s15
        %p1028 = scmp.lt.s32.totalorder %s1027, 63
        %s1029 = scalar_select %p1028, %s1027, 63
        %s1030 = smul.addr %s1029, 8
        %s1031 = scalar_lea.vmem %s3, %s1030
      $region44: #{farnet_forward.21} parent=39 // pred_fallthru
        _
    $region40: #{farnet_forward.21} parent=5 // pred_fallthru
      _
  $region6: #{farnet_forward.21} parent=0 // loop_footer
    %s13 = sadd.s32 1, %s9
  $region7: #{farnet_forward.21} parent=0 // loop_footer_branch
    %8 = sbr.rel target = $region3
  $region8: #{farnet_forward.21} parent=0 // loop_exit
    _

// kernel: farnet_forward.23
$region0: #{farnet_forward.23}
  #allocation0 [shape = 'u32[]', space=smem, size = 0x4, offset = 0x4, fixed_abs, tag = 'smem constant byte address 0x4 - core index']
  #allocation1 [shape = 'u32[72,128]{1,0:T(1,128)}', space=vmem, size = 0x9000, scoped, tag = 'internal scratch']
  %s0 = inlined_call_operand.vmem [shape: bf16[8192,288], index: 0, kind: input, shape index: {}]
  %s1 = inlined_call_operand.vmem [shape: bf16[288,128], index: 1, kind: input, shape index: {}]
  %s2 = inlined_call_operand.vmem [shape: f32[1,128], index: 2, kind: input, shape index: {}]
  %s3 = inlined_call_operand.vmem [shape: f32[8192,128], index: 3, kind: output, shape index: {}]
  %s4 = sld [smem:[#allocation0]]
  $region45: #{farnet_forward.23} parent=0
    _
  %s6 = ssub.s32 1, %s4
  %s7 = scalar_select 0, %s6, %s4
  loop: start=0, step=1, limit=18
  $region2: #{farnet_forward.23} parent=0 // loop_pre_header
    _
  $region3: #{farnet_forward.23} parent=0 // loop_header
    %s9 = sphi 0, %s13
    %p10 = scmp.ge.s32.totalorder %s9, 18
    %s19 = sphi 0, %s21
    %s22 = sphi 0, %s19
    %s23 = sphi 0, %s22
    %s39 = sphi 0, %s23
    %s43 = sphi 0, %s43
    %s45 = sphi 0, %s43
    %s46 = sphi 0, %s45
    %s60 = sphi 0, %s46
    %s64 = sphi 0, %s64
    %s66 = sphi 0, %s64
    %s67 = sphi 0, %s66
    %s81 = sphi 0, %s67
    %s87 = sphi 0, %s89
    %s90 = sphi 0, %s87
    %s91 = sphi 0, %s90
    %s107 = sphi 0, %s91
  $region4: #{farnet_forward.23} parent=0 // loop_header_branch
    %12 = sbr.rel (%p10) target = $region8
  $region5: #{farnet_forward.23} parent=0 // loop_body
    %s14 = ssub.s32 %s9, 1
    %s15 = ssub.s32 %s9, 2
    %s16 = sadd.s32 %s9, 1
    %s17 = ssub.s32 %s9, %s16
    %p18 = scmp.eq.s32.totalorder %s17, 0
    %s20 = sadd.s32 %s19, 1
    %s21 = scalar_select %p18, %s19, %s20
    %p24 = pneg %p18
    %p25 = scmp.eq.s32.totalorder %s9, 15
    %p26 = por %p24, %p25
    %p27 = scmp.ne.s32.totalorder %s19, %s22
    %p28 = scmp.eq.s32.totalorder %s9, 0
    %p29 = por %p27, %p28
    %p30 = scmp.ne.s32.totalorder %s19, %s22
    %p31 = scmp.eq.s32.totalorder %s14, 15
    %p32 = por %p30, %p31
    %p33 = scmp.ne.s32.totalorder %s22, %s23
    %p34 = scmp.eq.s32.totalorder %s14, 0
    %p35 = por %p33, %p34
    %p36 = scmp.ne.s32.totalorder %s22, %s23
    %p37 = scmp.eq.s32.totalorder %s15, 15
    %p38 = por %p36, %p37
    %p40 = scmp.ne.s32.totalorder %s23, %s39
    %p41 = scmp.eq.s32.totalorder %s15, 0
    %p42 = por %p40, %p41
    %s44 = sadd.s32 %s43, 1
    %p47 = scmp.eq.s32.totalorder %s9, 15
    %p48 = scmp.ne.s32.totalorder %s43, %s45
    %p49 = scmp.eq.s32.totalorder %s9, 0
    %p50 = por %p48, %p49
    %p51 = scmp.ne.s32.totalorder %s43, %s45
    %p52 = scmp.eq.s32.totalorder %s14, 15
    %p53 = por %p51, %p52
    %p54 = scmp.ne.s32.totalorder %s45, %s46
    %p55 = scmp.eq.s32.totalorder %s14, 0
    %p56 = por %p54, %p55
    %p57 = scmp.ne.s32.totalorder %s45, %s46
    %p58 = scmp.eq.s32.totalorder %s15, 15
    %p59 = por %p57, %p58
    %p61 = scmp.ne.s32.totalorder %s46, %s60
    %p62 = scmp.eq.s32.totalorder %s15, 0
    %p63 = por %p61, %p62
    %s65 = sadd.s32 %s64, 1
    %p68 = scmp.eq.s32.totalorder %s9, 15
    %p69 = scmp.ne.s32.totalorder %s64, %s66
    %p70 = scmp.eq.s32.totalorder %s9, 0
    %p71 = por %p69, %p70
    %p72 = scmp.ne.s32.totalorder %s64, %s66
    %p73 = scmp.eq.s32.totalorder %s14, 15
    %p74 = por %p72, %p73
    %p75 = scmp.ne.s32.totalorder %s66, %s67
    %p76 = scmp.eq.s32.totalorder %s14, 0
    %p77 = por %p75, %p76
    %p78 = scmp.ne.s32.totalorder %s66, %s67
    %p79 = scmp.eq.s32.totalorder %s15, 15
    %p80 = por %p78, %p79
    %p82 = scmp.ne.s32.totalorder %s67, %s81
    %p83 = scmp.eq.s32.totalorder %s15, 0
    %p84 = por %p82, %p83
    %s85 = ssub.s32 %s9, %s16
    %p86 = scmp.eq.s32.totalorder %s85, 0
    %s88 = sadd.s32 %s87, 1
    %s89 = scalar_select %p86, %s87, %s88
    %p92 = pneg %p86
    %p93 = scmp.eq.s32.totalorder %s9, 15
    %p94 = por %p92, %p93
    %p95 = scmp.ne.s32.totalorder %s87, %s90
    %p96 = scmp.eq.s32.totalorder %s9, 0
    %p97 = por %p95, %p96
    %p98 = scmp.ne.s32.totalorder %s87, %s90
    %p99 = scmp.eq.s32.totalorder %s14, 15
    %p100 = por %p98, %p99
    %p101 = scmp.ne.s32.totalorder %s90, %s91
    %p102 = scmp.eq.s32.totalorder %s14, 0
    %p103 = por %p101, %p102
    %p104 = scmp.ne.s32.totalorder %s90, %s91
    %p105 = scmp.eq.s32.totalorder %s15, 15
    %p106 = por %p104, %p105
    %p108 = scmp.ne.s32.totalorder %s91, %s107
    %p109 = scmp.eq.s32.totalorder %s15, 0
    %p110 = por %p108, %p109
    %p111 = scmp.le.s32.totalorder 1, %s9
    %p112 = scmp.lt.s32.totalorder %s9, 17
    %p113 = pnand %p111, %p112
    %p114 = pneg %p113
    // Predicated region
    $region9: #{farnet_forward.23} parent=5 // pred_check
      _
    $region10: #{farnet_forward.23} parent=5 // pred_check_branch
      %116 = sbr.rel (%p113) target = $region12
    $region11: #{farnet_forward.23} parent=5 // pred_region
      %s117 = ssub.s32 %s9, 1
      // Predicated region
      $region13: #{farnet_forward.23} parent=11 // pred_check
        %p118 = pneg %p56
      $region14: #{farnet_forward.23} parent=11 // pred_check_branch
        %120 = sbr.rel (%p118) target = $region16
      $region15: #{farnet_forward.23} parent=11 // pred_region
        _
      $region16: #{farnet_forward.23} parent=11 // pred_fallthru
        _
      // Predicated region
      $region17: #{farnet_forward.23} parent=11 // pred_check
        %p121 = pneg %p77
      $region18: #{farnet_forward.23} parent=11 // pred_check_branch
        %123 = sbr.rel (%p121) target = $region20
      $region19: #{farnet_forward.23} parent=11 // pred_region
        _
      $region20: #{farnet_forward.23} parent=11 // pred_fallthru
        _
    $region12: #{farnet_forward.23} parent=5 // pred_fallthru
      _
    %p124 = scmp.lt.s32.totalorder %s9, 16
    // Predicated region
    $region21: #{farnet_forward.23} parent=5 // pred_check
      %p125 = pneg %p124
    $region22: #{farnet_forward.23} parent=5 // pred_check_branch
      %127 = sbr.rel (%p125) target = $region24
    $region23: #{farnet_forward.23} parent=5 // pred_region
      // Predicated region
      $region25: #{farnet_forward.23} parent=23 // pred_check
        %p128 = pneg %p29
      $region26: #{farnet_forward.23} parent=23 // pred_check_branch
        %130 = sbr.rel (%p128) target = $region28
      $region27: #{farnet_forward.23} parent=23 // pred_region
        %s131 = smul.u32 64, %s9
        %p132 = scmp.lt.s32.totalorder %s131, 1023
        %s133 = scalar_select %p132, %s131, 1023
        %s134 = smul.addr %s133, 3
        %s135 = smul.addr %s134, 4
        %s136 = scalar_lea.vmem %s0, %s135
        %s137 = smul.u32 64, %s9
      $region28: #{farnet_forward.23} parent=23 // pred_fallthru
        _
    $region24: #{farnet_forward.23} parent=5 // pred_fallthru
      _
    %p138 = scmp.le.s32.totalorder 1, %s9
    %p139 = scmp.lt.s32.totalorder %s9, 17
    %p140 = pnand %p138, %p139
    %p141 = pneg %p140
    // Predicated region
    $region29: #{farnet_forward.23} parent=5 // pred_check
      _
    $region30: #{farnet_forward.23} parent=5 // pred_check_branch
      %143 = sbr.rel (%p140) target = $region32
    $region31: #{farnet_forward.23} parent=5 // pred_region
      %s144 = ssub.s32 %s9, 1
      %s145 = smul.u32 64, %s14
      %p146 = scmp.lt.s32.totalorder %s145, 1023
      %s147 = scalar_select %p146, %s145, 1023
      %s148 = smul.addr %s147, 3
      %s149 = smul.addr %s148, 4
      %s150 = scalar_lea.vmem %s0, %s149
      %p151 = pneg %p35
      %p152 = pneg %p32
      %p153 = pneg %p56
      %p154 = pneg %p53
      %p155 = pneg %p77
      %p156 = pneg %p74
      %p157 = pneg %p103
      %p158 = pneg %p100
      %s159 = smul.u32 64, %s14
      %p160 = scmp.lt.s32.totalorder %s159, 1023
      %s161 = scalar_select %p160, %s159, 1023
      %s162 = smul.addr %s161, 8
      %s163 = scalar_lea.vmem %s3, %s162
      %s164 = smul.u32 64, %s14
      %p165 = scmp.lt.s32.totalorder %s164, 1023
      %s166 = scalar_select %p165, %s164, 1023
      %s167 = smul.addr %s166, 3
      %s168 = smul.addr %s167, 4
      %s169 = scalar_lea.vmem %s0, %s168
      %s170 = smul.u32 64, %s14
      %s171 = smul.u32 64, %s14
      %p172 = scmp.lt.s32.totalorder %s171, 1023
      %s173 = scalar_select %p172, %s171, 1023
      %s174 = smul.addr %s173, 8
      %s175 = scalar_lea.vmem %s3, %s174
      %s176 = smul.u32 64, %s14
      %v178 = vld [vmem:[%s169] sm:$0xff]
      %v179 = vld [vmem:[%s169 + $0x8] sm:$0xf]
      %v180 = vld [vmem:[%s169 + $0xc] sm:$0xff]
      %v181 = vld [vmem:[%s169 + $0x14] sm:$0xf]
      %v182 = vld [vmem:[%s169 + $0x18] sm:$0xff]
      %v183 = vld [vmem:[%s169 + $0x20] sm:$0xf]
      %v184 = vld [vmem:[%s169 + $0x24] sm:$0xff]
      %v185 = vld [vmem:[%s169 + $0x2c] sm:$0xf]
      %v186 = vld [vmem:[%s169 + $0x30] sm:$0xff]
      %v187 = vld [vmem:[%s169 + $0x38] sm:$0xf]
      %v188 = vld [vmem:[%s169 + $0x3c] sm:$0xff]
      %v189 = vld [vmem:[%s169 + $0x44] sm:$0xf]
      %v190 = vld [vmem:[%s169 + $0x48] sm:$0xff]
      %v191 = vld [vmem:[%s169 + $0x50] sm:$0xf]
      %v192 = vld [vmem:[%s169 + $0x54] sm:$0xff]
      %v193 = vld [vmem:[%s169 + $0x5c] sm:$0xf]
      %v194 = vld [vmem:[%s169 + $0x60] sm:$0xff]
      %v195 = vld [vmem:[%s169 + $0x68] sm:$0xf]
      %v196 = vld [vmem:[%s169 + $0x6c] sm:$0xff]
      %v197 = vld [vmem:[%s169 + $0x74] sm:$0xf]
      %v198 = vld [vmem:[%s169 + $0x78] sm:$0xff]
      %v199 = vld [vmem:[%s169 + $0x80] sm:$0xf]
      %v200 = vld [vmem:[%s169 + $0x84] sm:$0xff]
      %v201 = vld [vmem:[%s169 + $0x8c] sm:$0xf]
      %v202 = vld [vmem:[%s169 + $0x90] sm:$0xff]
      %v203 = vld [vmem:[%s169 + $0x98] sm:$0xf]
      %v204 = vld [vmem:[%s169 + $0x9c] sm:$0xff]
      %v205 = vld [vmem:[%s169 + $0xa4] sm:$0xf]
      %v206 = vld [vmem:[%s169 + $0xa8] sm:$0xff]
      %v207 = vld [vmem:[%s169 + $0xb0] sm:$0xf]
      %v208 = vld [vmem:[%s169 + $0xb4] sm:$0xff]
      %v209 = vld [vmem:[%s169 + $0xbc] sm:$0xf]
      %v210 = vld [vmem:[%s169 + $0xc0] sm:$0xff]
      %v211 = vld [vmem:[%s169 + $0xc8] sm:$0xf]
      %v212 = vld [vmem:[%s169 + $0xcc] sm:$0xff]
      %v213 = vld [vmem:[%s169 + $0xd4] sm:$0xf]
      %v214 = vld [vmem:[%s169 + $0xd8] sm:$0xff]
      %v215 = vld [vmem:[%s169 + $0xe0] sm:$0xf]
      %v216 = vld [vmem:[%s169 + $0xe4] sm:$0xff]
      %v217 = vld [vmem:[%s169 + $0xec] sm:$0xf]
      %v218 = vld [vmem:[%s169 + $0xf0] sm:$0xff]
      %v219 = vld [vmem:[%s169 + $0xf8] sm:$0xf]
      %v220 = vld [vmem:[%s169 + $0xfc] sm:$0xff]
      %v221 = vld [vmem:[%s169 + $0x104] sm:$0xf]
      %v222 = vld [vmem:[%s169 + $0x108] sm:$0xff]
      %v223 = vld [vmem:[%s169 + $0x110] sm:$0xf]
      %v224 = vld [vmem:[%s169 + $0x114] sm:$0xff]
      %v225 = vld [vmem:[%s169 + $0x11c] sm:$0xf]
      %v226 = vld [vmem:[%s169 + $0x120] sm:$0xff]
      %v227 = vld [vmem:[%s169 + $0x128] sm:$0xf]
      %v228 = vld [vmem:[%s169 + $0x12c] sm:$0xff]
      %v229 = vld [vmem:[%s169 + $0x134] sm:$0xf]
      %v230 = vld [vmem:[%s169 + $0x138] sm:$0xff]
      %v231 = vld [vmem:[%s169 + $0x140] sm:$0xf]
      %v232 = vld [vmem:[%s169 + $0x144] sm:$0xff]
      %v233 = vld [vmem:[%s169 + $0x14c] sm:$0xf]
      %v234 = vld [vmem:[%s169 + $0x150] sm:$0xff]
      %v235 = vld [vmem:[%s169 + $0x158] sm:$0xf]
      %v236 = vld [vmem:[%s169 + $0x15c] sm:$0xff]
      %v237 = vld [vmem:[%s169 + $0x164] sm:$0xf]
      %v238 = vld [vmem:[%s169 + $0x168] sm:$0xff]
      %v239 = vld [vmem:[%s169 + $0x170] sm:$0xf]
      %v240 = vld [vmem:[%s169 + $0x174] sm:$0xff]
      %v241 = vld [vmem:[%s169 + $0x17c] sm:$0xf]
      %v242 = vld [vmem:[%s169 + $0x180] sm:$0xff]
      %v243 = vld [vmem:[%s169 + $0x188] sm:$0xf]
      %v244 = vld [vmem:[%s169 + $0x18c] sm:$0xff]
      %v245 = vld [vmem:[%s169 + $0x194] sm:$0xf]
      %v246 = vld [vmem:[%s169 + $0x198] sm:$0xff]
      %v247 = vld [vmem:[%s169 + $0x1a0] sm:$0xf]
      %v248 = vld [vmem:[%s169 + $0x1a4] sm:$0xff]
      %v249 = vld [vmem:[%s169 + $0x1ac] sm:$0xf]
      %v250 = vld [vmem:[%s169 + $0x1b0] sm:$0xff]
      %v251 = vld [vmem:[%s169 + $0x1b8] sm:$0xf]
      %v252 = vld [vmem:[%s169 + $0x1bc] sm:$0xff]
      %v253 = vld [vmem:[%s169 + $0x1c4] sm:$0xf]
      %v254 = vld [vmem:[%s169 + $0x1c8] sm:$0xff]
      %v255 = vld [vmem:[%s169 + $0x1d0] sm:$0xf]
      %v256 = vld [vmem:[%s169 + $0x1d4] sm:$0xff]
      %v257 = vld [vmem:[%s169 + $0x1dc] sm:$0xf]
      %v258 = vld [vmem:[%s169 + $0x1e0] sm:$0xff]
      %v259 = vld [vmem:[%s169 + $0x1e8] sm:$0xf]
      %v260 = vld [vmem:[%s169 + $0x1ec] sm:$0xff]
      %v261 = vld [vmem:[%s169 + $0x1f4] sm:$0xf]
      %v262 = vld [vmem:[%s169 + $0x1f8] sm:$0xff]
      %v263 = vld [vmem:[%s169 + $0x200] sm:$0xf]
      %v264 = vld [vmem:[%s169 + $0x204] sm:$0xff]
      %v265 = vld [vmem:[%s169 + $0x20c] sm:$0xf]
      %v266 = vld [vmem:[%s169 + $0x210] sm:$0xff]
      %v267 = vld [vmem:[%s169 + $0x218] sm:$0xf]
      %v268 = vld [vmem:[%s169 + $0x21c] sm:$0xff]
      %v269 = vld [vmem:[%s169 + $0x224] sm:$0xf]
      %v270 = vld [vmem:[%s169 + $0x228] sm:$0xff]
      %v271 = vld [vmem:[%s169 + $0x230] sm:$0xf]
      %v272 = vld [vmem:[%s169 + $0x234] sm:$0xff]
      %v273 = vld [vmem:[%s169 + $0x23c] sm:$0xf]
      %v274 = vld [vmem:[%s169 + $0x240] sm:$0xff]
      %v275 = vld [vmem:[%s169 + $0x248] sm:$0xf]
      %v276 = vld [vmem:[%s169 + $0x24c] sm:$0xff]
      %v277 = vld [vmem:[%s169 + $0x254] sm:$0xf]
      %v278 = vld [vmem:[%s169 + $0x258] sm:$0xff]
      %v279 = vld [vmem:[%s169 + $0x260] sm:$0xf]
      %v280 = vld [vmem:[%s169 + $0x264] sm:$0xff]
      %v281 = vld [vmem:[%s169 + $0x26c] sm:$0xf]
      %v282 = vld [vmem:[%s169 + $0x270] sm:$0xff]
      %v283 = vld [vmem:[%s169 + $0x278] sm:$0xf]
      %v284 = vld [vmem:[%s169 + $0x27c] sm:$0xff]
      %v285 = vld [vmem:[%s169 + $0x284] sm:$0xf]
      %v286 = vld [vmem:[%s169 + $0x288] sm:$0xff]
      %v287 = vld [vmem:[%s169 + $0x290] sm:$0xf]
      %v288 = vld [vmem:[%s169 + $0x294] sm:$0xff]
      %v289 = vld [vmem:[%s169 + $0x29c] sm:$0xf]
      %v290 = vld [vmem:[%s169 + $0x2a0] sm:$0xff]
      %v291 = vld [vmem:[%s169 + $0x2a8] sm:$0xf]
      %v292 = vld [vmem:[%s169 + $0x2ac] sm:$0xff]
      %v293 = vld [vmem:[%s169 + $0x2b4] sm:$0xf]
      %v294 = vld [vmem:[%s169 + $0x2b8] sm:$0xff]
      %v295 = vld [vmem:[%s169 + $0x2c0] sm:$0xf]
      %v296 = vld [vmem:[%s169 + $0x2c4] sm:$0xff]
      %v297 = vld [vmem:[%s169 + $0x2cc] sm:$0xf]
      %v298 = vld [vmem:[%s169 + $0x2d0] sm:$0xff]
      %v299 = vld [vmem:[%s169 + $0x2d8] sm:$0xf]
      %v300 = vld [vmem:[%s169 + $0x2dc] sm:$0xff]
      %v301 = vld [vmem:[%s169 + $0x2e4] sm:$0xf]
      %v302 = vld [vmem:[%s169 + $0x2e8] sm:$0xff]
      %v303 = vld [vmem:[%s169 + $0x2f0] sm:$0xf]
      %v304 = vld [vmem:[%s169 + $0x2f4] sm:$0xff]
      %v305 = vld [vmem:[%s169 + $0x2fc] sm:$0xf]
      %v306 = vld [vmem:[%s1] sm:$0xf]
      %v307 = vld [vmem:[%s1 + $0x4] sm:$0xf]
      %v308 = vld [vmem:[%s1 + $0x8] sm:$0xf]
      %v309 = vld [vmem:[%s1 + $0xc] sm:$0xf]
      %v310 = vld [vmem:[%s1 + $0x10] sm:$0xf]
      %v311 = vld [vmem:[%s1 + $0x14] sm:$0xf]
      %v312 = vld [vmem:[%s1 + $0x18] sm:$0xf]
      %v313 = vld [vmem:[%s1 + $0x1c] sm:$0xf]
      %v314 = vld [vmem:[%s1 + $0x20] sm:$0xf]
      %v315 = vld [vmem:[%s1 + $0x24] sm:$0xf]
      %v316 = vld [vmem:[%s1 + $0x28] sm:$0xf]
      %v317 = vld [vmem:[%s1 + $0x2c] sm:$0xf]
      %v318 = vld [vmem:[%s1 + $0x30] sm:$0xf]
      %v319 = vld [vmem:[%s1 + $0x34] sm:$0xf]
      %v320 = vld [vmem:[%s1 + $0x38] sm:$0xf]
      %v321 = vld [vmem:[%s1 + $0x3c] sm:$0xf]
      %v322 = vld [vmem:[%s1 + $0x40] sm:$0xf]
      %v323 = vld [vmem:[%s1 + $0x44] sm:$0xf]
      %v324 = vld [vmem:[%s1 + $0x48] sm:$0xf]
      %v325 = vld [vmem:[%s1 + $0x4c] sm:$0xf]
      %v326 = vld [vmem:[%s1 + $0x50] sm:$0xf]
      %v327 = vld [vmem:[%s1 + $0x54] sm:$0xf]
      %v328 = vld [vmem:[%s1 + $0x58] sm:$0xf]
      %v329 = vld [vmem:[%s1 + $0x5c] sm:$0xf]
      %v330 = vld [vmem:[%s1 + $0x60] sm:$0xf]
      %v331 = vld [vmem:[%s1 + $0x64] sm:$0xf]
      %v332 = vld [vmem:[%s1 + $0x68] sm:$0xf]
      %v333 = vld [vmem:[%s1 + $0x6c] sm:$0xf]
      %v334 = vld [vmem:[%s1 + $0x70] sm:$0xf]
      %v335 = vld [vmem:[%s1 + $0x74] sm:$0xf]
      %v336 = vld [vmem:[%s1 + $0x78] sm:$0xf]
      %v337 = vld [vmem:[%s1 + $0x7c] sm:$0xf]
      %v338 = vld [vmem:[%s1 + $0x80] sm:$0xf]
      %v339 = vld [vmem:[%s1 + $0x84] sm:$0xf]
      %v340 = vld [vmem:[%s1 + $0x88] sm:$0xf]
      %v341 = vld [vmem:[%s1 + $0x8c] sm:$0xf]
      %v342 = vld [vmem:[%s2] sm:$0x1]
      %v344 = vperm.slane %v342, 0
      %v474 = vunpack.c.l.b16 %v178
      %v475 = vunpack.c.h.b16 %v178
      %v476 = vunpack.c.l.b16 %v179
      %v477 = vunpack.c.l.b16 %v180
      %v478 = vunpack.c.h.b16 %v180
      %v479 = vunpack.c.l.b16 %v181
      %v480 = vunpack.c.l.b16 %v182
      %v481 = vunpack.c.h.b16 %v182
      %v482 = vunpack.c.l.b16 %v183
      %v483 = vunpack.c.l.b16 %v184
      %v484 = vunpack.c.h.b16 %v184
      %v485 = vunpack.c.l.b16 %v185
      %v486 = vunpack.c.l.b16 %v186
      %v487 = vunpack.c.h.b16 %v186
      %v488 = vunpack.c.l.b16 %v187
      %v489 = vunpack.c.l.b16 %v188
      %v490 = vunpack.c.h.b16 %v188
      %v491 = vunpack.c.l.b16 %v189
      %v492 = vunpack.c.l.b16 %v190
      %v493 = vunpack.c.h.b16 %v190
      %v494 = vunpack.c.l.b16 %v191
      %v495 = vunpack.c.l.b16 %v192
      %v496 = vunpack.c.h.b16 %v192
      %v497 = vunpack.c.l.b16 %v193
      %v498 = vunpack.c.l.b16 %v194
      %v499 = vunpack.c.h.b16 %v194
      %v500 = vunpack.c.l.b16 %v195
      %v501 = vunpack.c.l.b16 %v196
      %v502 = vunpack.c.h.b16 %v196
      %v503 = vunpack.c.l.b16 %v197
      %v504 = vunpack.c.l.b16 %v198
      %v505 = vunpack.c.h.b16 %v198
      %v506 = vunpack.c.l.b16 %v199
      %v507 = vunpack.c.l.b16 %v200
      %v508 = vunpack.c.h.b16 %v200
      %v509 = vunpack.c.l.b16 %v201
      %v510 = vunpack.c.l.b16 %v202
      %v511 = vunpack.c.h.b16 %v202
      %v512 = vunpack.c.l.b16 %v203
      %v513 = vunpack.c.l.b16 %v204
      %v514 = vunpack.c.h.b16 %v204
      %v515 = vunpack.c.l.b16 %v205
      %v516 = vunpack.c.l.b16 %v206
      %v517 = vunpack.c.h.b16 %v206
      %v518 = vunpack.c.l.b16 %v207
      %v519 = vunpack.c.l.b16 %v208
      %v520 = vunpack.c.h.b16 %v208
      %v521 = vunpack.c.l.b16 %v209
      %v522 = vunpack.c.l.b16 %v210
      %v523 = vunpack.c.h.b16 %v210
      %v524 = vunpack.c.l.b16 %v211
      %v525 = vunpack.c.l.b16 %v212
      %v526 = vunpack.c.h.b16 %v212
      %v527 = vunpack.c.l.b16 %v213
      %v528 = vunpack.c.l.b16 %v214
      %v529 = vunpack.c.h.b16 %v214
      %v530 = vunpack.c.l.b16 %v215
      %v531 = vunpack.c.l.b16 %v216
      %v532 = vunpack.c.h.b16 %v216
      %v533 = vunpack.c.l.b16 %v217
      %v534 = vunpack.c.l.b16 %v218
      %v535 = vunpack.c.h.b16 %v218
      %v536 = vunpack.c.l.b16 %v219
      %v537 = vunpack.c.l.b16 %v220
      %v538 = vunpack.c.h.b16 %v220
      %v539 = vunpack.c.l.b16 %v221
      %v540 = vunpack.c.l.b16 %v222
      %v541 = vunpack.c.h.b16 %v222
      %v542 = vunpack.c.l.b16 %v223
      %v543 = vunpack.c.l.b16 %v224
      %v544 = vunpack.c.h.b16 %v224
      %v545 = vunpack.c.l.b16 %v225
      %v546 = vunpack.c.l.b16 %v226
      %v547 = vunpack.c.h.b16 %v226
      %v548 = vunpack.c.l.b16 %v227
      %v549 = vunpack.c.l.b16 %v228
      %v550 = vunpack.c.h.b16 %v228
      %v551 = vunpack.c.l.b16 %v229
      %v552 = vunpack.c.l.b16 %v230
      %v553 = vunpack.c.h.b16 %v230
      %v554 = vunpack.c.l.b16 %v231
      %v555 = vunpack.c.l.b16 %v232
      %v556 = vunpack.c.h.b16 %v232
      %v557 = vunpack.c.l.b16 %v233
      %v558 = vunpack.c.l.b16 %v234
      %v559 = vunpack.c.h.b16 %v234
      %v560 = vunpack.c.l.b16 %v235
      %v561 = vunpack.c.l.b16 %v236
      %v562 = vunpack.c.h.b16 %v236
      %v563 = vunpack.c.l.b16 %v237
      %v564 = vunpack.c.l.b16 %v238
      %v565 = vunpack.c.h.b16 %v238
      %v566 = vunpack.c.l.b16 %v239
      %v567 = vunpack.c.l.b16 %v240
      %v568 = vunpack.c.h.b16 %v240
      %v569 = vunpack.c.l.b16 %v241
      %v570 = vunpack.c.l.b16 %v242
      %v571 = vunpack.c.h.b16 %v242
      %v572 = vunpack.c.l.b16 %v243
      %v573 = vunpack.c.l.b16 %v244
      %v574 = vunpack.c.h.b16 %v244
      %v575 = vunpack.c.l.b16 %v245
      %v576 = vunpack.c.l.b16 %v246
      %v577 = vunpack.c.h.b16 %v246
      %v578 = vunpack.c.l.b16 %v247
      %v579 = vunpack.c.l.b16 %v248
      %v580 = vunpack.c.h.b16 %v248
      %v581 = vunpack.c.l.b16 %v249
      %v582 = vunpack.c.l.b16 %v250
      %v583 = vunpack.c.h.b16 %v250
      %v584 = vunpack.c.l.b16 %v251
      %v585 = vunpack.c.l.b16 %v252
      %v586 = vunpack.c.h.b16 %v252
      %v587 = vunpack.c.l.b16 %v253
      %v588 = vunpack.c.l.b16 %v254
      %v589 = vunpack.c.h.b16 %v254
      %v590 = vunpack.c.l.b16 %v255
      %v591 = vunpack.c.l.b16 %v256
      %v592 = vunpack.c.h.b16 %v256
      %v593 = vunpack.c.l.b16 %v257
      %v594 = vunpack.c.l.b16 %v258
      %v595 = vunpack.c.h.b16 %v258
      %v596 = vunpack.c.l.b16 %v259
      %v597 = vunpack.c.l.b16 %v260
      %v598 = vunpack.c.h.b16 %v260
      %v599 = vunpack.c.l.b16 %v261
      %v600 = vunpack.c.l.b16 %v262
      %v601 = vunpack.c.h.b16 %v262
      %v602 = vunpack.c.l.b16 %v263
      %v603 = vunpack.c.l.b16 %v264
      %v604 = vunpack.c.h.b16 %v264
      %v605 = vunpack.c.l.b16 %v265
      %v606 = vunpack.c.l.b16 %v266
      %v607 = vunpack.c.h.b16 %v266
      %v608 = vunpack.c.l.b16 %v267
      %v609 = vunpack.c.l.b16 %v268
      %v610 = vunpack.c.h.b16 %v268
      %v611 = vunpack.c.l.b16 %v269
      %v612 = vunpack.c.l.b16 %v270
      %v613 = vunpack.c.h.b16 %v270
      %v614 = vunpack.c.l.b16 %v271
      %v615 = vunpack.c.l.b16 %v272
      %v616 = vunpack.c.h.b16 %v272
      %v617 = vunpack.c.l.b16 %v273
      %v618 = vunpack.c.l.b16 %v274
      %v619 = vunpack.c.h.b16 %v274
      %v620 = vunpack.c.l.b16 %v275
      %v621 = vunpack.c.l.b16 %v276
      %v622 = vunpack.c.h.b16 %v276
      %v623 = vunpack.c.l.b16 %v277
      %v624 = vunpack.c.l.b16 %v278
      %v625 = vunpack.c.h.b16 %v278
      %v626 = vunpack.c.l.b16 %v279
      %v627 = vunpack.c.l.b16 %v280
      %v628 = vunpack.c.h.b16 %v280
      %v629 = vunpack.c.l.b16 %v281
      %v630 = vunpack.c.l.b16 %v282
      %v631 = vunpack.c.h.b16 %v282
      %v632 = vunpack.c.l.b16 %v283
      %v633 = vunpack.c.l.b16 %v284
      %v634 = vunpack.c.h.b16 %v284
      %v635 = vunpack.c.l.b16 %v285
      %v636 = vunpack.c.l.b16 %v286
      %v637 = vunpack.c.h.b16 %v286
      %v638 = vunpack.c.l.b16 %v287
      %v639 = vunpack.c.l.b16 %v288
      %v640 = vunpack.c.h.b16 %v288
      %v641 = vunpack.c.l.b16 %v289
      %v642 = vunpack.c.l.b16 %v290
      %v643 = vunpack.c.h.b16 %v290
      %v644 = vunpack.c.l.b16 %v291
      %v645 = vunpack.c.l.b16 %v292
      %v646 = vunpack.c.h.b16 %v292
      %v647 = vunpack.c.l.b16 %v293
      %v648 = vunpack.c.l.b16 %v294
      %v649 = vunpack.c.h.b16 %v294
      %v650 = vunpack.c.l.b16 %v295
      %v651 = vunpack.c.l.b16 %v296
      %v652 = vunpack.c.h.b16 %v296
      %v653 = vunpack.c.l.b16 %v297
      %v654 = vunpack.c.l.b16 %v298
      %v655 = vunpack.c.h.b16 %v298
      %v656 = vunpack.c.l.b16 %v299
      %v657 = vunpack.c.l.b16 %v300
      %v658 = vunpack.c.h.b16 %v300
      %v659 = vunpack.c.l.b16 %v301
      %v660 = vunpack.c.l.b16 %v302
      %v661 = vunpack.c.h.b16 %v302
      %v662 = vunpack.c.l.b16 %v303
      %v663 = vunpack.c.l.b16 %v304
      %v664 = vunpack.c.h.b16 %v304
      %v665 = vunpack.c.l.b16 %v305
      %v666 = vpack.c.b16 %v477, %v474
      %v667 = vpack.c.b16 %v478, %v475
      %v668 = vpack.c.b16 %v479, %v476
      %v669 = vpack.c.b16 %v483, %v480
      %v670 = vpack.c.b16 %v484, %v481
      %v671 = vpack.c.b16 %v485, %v482
      %v672 = vpack.c.b16 %v489, %v486
      %v673 = vpack.c.b16 %v490, %v487
      %v674 = vpack.c.b16 %v491, %v488
      %v675 = vpack.c.b16 %v495, %v492
      %v676 = vpack.c.b16 %v496, %v493
      %v677 = vpack.c.b16 %v497, %v494
      %v678 = vpack.c.b16 %v501, %v498
      %v679 = vpack.c.b16 %v502, %v499
      %v680 = vpack.c.b16 %v503, %v500
      %v681 = vpack.c.b16 %v507, %v504
      %v682 = vpack.c.b16 %v508, %v505
      %v683 = vpack.c.b16 %v509, %v506
      %v684 = vpack.c.b16 %v513, %v510
      %v685 = vpack.c.b16 %v514, %v511
      %v686 = vpack.c.b16 %v515, %v512
      %v687 = vpack.c.b16 %v519, %v516
      %v688 = vpack.c.b16 %v520, %v517
      %v689 = vpack.c.b16 %v521, %v518
      %v690 = vpack.c.b16 %v525, %v522
      %v691 = vpack.c.b16 %v526, %v523
      %v692 = vpack.c.b16 %v527, %v524
      %v693 = vpack.c.b16 %v531, %v528
      %v694 = vpack.c.b16 %v532, %v529
      %v695 = vpack.c.b16 %v533, %v530
      %v696 = vpack.c.b16 %v537, %v534
      %v697 = vpack.c.b16 %v538, %v535
      %v698 = vpack.c.b16 %v539, %v536
      %v699 = vpack.c.b16 %v543, %v540
      %v700 = vpack.c.b16 %v544, %v541
      %v701 = vpack.c.b16 %v545, %v542
      %v702 = vpack.c.b16 %v549, %v546
      %v703 = vpack.c.b16 %v550, %v547
      %v704 = vpack.c.b16 %v551, %v548
      %v705 = vpack.c.b16 %v555, %v552
      %v706 = vpack.c.b16 %v556, %v553
      %v707 = vpack.c.b16 %v557, %v554
      %v708 = vpack.c.b16 %v561, %v558
      %v709 = vpack.c.b16 %v562, %v559
      %v710 = vpack.c.b16 %v563, %v560
      %v711 = vpack.c.b16 %v567, %v564
      %v712 = vpack.c.b16 %v568, %v565
      %v713 = vpack.c.b16 %v569, %v566
      %v714 = vpack.c.b16 %v573, %v570
      %v715 = vpack.c.b16 %v574, %v571
      %v716 = vpack.c.b16 %v575, %v572
      %v717 = vpack.c.b16 %v579, %v576
      %v718 = vpack.c.b16 %v580, %v577
      %v719 = vpack.c.b16 %v581, %v578
      %v720 = vpack.c.b16 %v585, %v582
      %v721 = vpack.c.b16 %v586, %v583
      %v722 = vpack.c.b16 %v587, %v584
      %v723 = vpack.c.b16 %v591, %v588
      %v724 = vpack.c.b16 %v592, %v589
      %v725 = vpack.c.b16 %v593, %v590
      %v726 = vpack.c.b16 %v597, %v594
      %v727 = vpack.c.b16 %v598, %v595
      %v728 = vpack.c.b16 %v599, %v596
      %v729 = vpack.c.b16 %v603, %v600
      %v730 = vpack.c.b16 %v604, %v601
      %v731 = vpack.c.b16 %v605, %v602
      %v732 = vpack.c.b16 %v609, %v606
      %v733 = vpack.c.b16 %v610, %v607
      %v734 = vpack.c.b16 %v611, %v608
      %v735 = vpack.c.b16 %v615, %v612
      %v736 = vpack.c.b16 %v616, %v613
      %v737 = vpack.c.b16 %v617, %v614
      %v738 = vpack.c.b16 %v621, %v618
      %v739 = vpack.c.b16 %v622, %v619
      %v740 = vpack.c.b16 %v623, %v620
      %v741 = vpack.c.b16 %v627, %v624
      %v742 = vpack.c.b16 %v628, %v625
      %v743 = vpack.c.b16 %v629, %v626
      %v744 = vpack.c.b16 %v633, %v630
      %v745 = vpack.c.b16 %v634, %v631
      %v746 = vpack.c.b16 %v635, %v632
      %v747 = vpack.c.b16 %v639, %v636
      %v748 = vpack.c.b16 %v640, %v637
      %v749 = vpack.c.b16 %v641, %v638
      %v750 = vpack.c.b16 %v645, %v642
      %v751 = vpack.c.b16 %v646, %v643
      %v752 = vpack.c.b16 %v647, %v644
      %v753 = vpack.c.b16 %v651, %v648
      %v754 = vpack.c.b16 %v652, %v649
      %v755 = vpack.c.b16 %v653, %v650
      %v756 = vpack.c.b16 %v657, %v654
      %v757 = vpack.c.b16 %v658, %v655
      %v758 = vpack.c.b16 %v659, %v656
      %v759 = vpack.c.b16 %v663, %v660
      %v760 = vpack.c.b16 %v664, %v661
      %v761 = vpack.c.b16 %v665, %v662
      %v862 = vunpack.c.l.b16 %v306
      %v863 = vunpack.c.l.b16 %v307
      %v864 = vunpack.c.l.b16 %v308
      %v865 = vunpack.c.l.b16 %v309
      %v866 = vunpack.c.l.b16 %v310
      %v867 = vunpack.c.l.b16 %v311
      %v868 = vunpack.c.l.b16 %v312
      %v869 = vunpack.c.l.b16 %v313
      %v870 = vunpack.c.l.b16 %v314
      %v871 = vunpack.c.l.b16 %v315
      %v872 = vunpack.c.l.b16 %v316
      %v873 = vunpack.c.l.b16 %v317
      %v874 = vunpack.c.l.b16 %v318
      %v875 = vunpack.c.l.b16 %v319
      %v876 = vunpack.c.l.b16 %v320
      %v877 = vunpack.c.l.b16 %v321
      %v878 = vunpack.c.l.b16 %v322
      %v879 = vunpack.c.l.b16 %v323
      %v880 = vunpack.c.l.b16 %v324
      %v881 = vunpack.c.l.b16 %v325
      %v882 = vunpack.c.l.b16 %v326
      %v883 = vunpack.c.l.b16 %v327
      %v884 = vunpack.c.l.b16 %v328
      %v885 = vunpack.c.l.b16 %v329
      %v886 = vunpack.c.l.b16 %v330
      %v887 = vunpack.c.l.b16 %v331
      %v888 = vunpack.c.l.b16 %v332
      %v889 = vunpack.c.l.b16 %v333
      %v890 = vunpack.c.l.b16 %v334
      %v891 = vunpack.c.l.b16 %v335
      %v892 = vunpack.c.l.b16 %v336
      %v893 = vunpack.c.l.b16 %v337
      %v894 = vunpack.c.l.b16 %v338
      %v895 = vunpack.c.l.b16 %v339
      %v896 = vunpack.c.l.b16 %v340
      %v897 = vunpack.c.l.b16 %v341
      %v898 = vpack.c.b16 %v863, %v862
      %v899 = vpack.c.b16 %v865, %v864
      %v900 = vpack.c.b16 %v867, %v866
      %v901 = vpack.c.b16 %v869, %v868
      %v902 = vpack.c.b16 %v871, %v870
      %v903 = vpack.c.b16 %v873, %v872
      %v904 = vpack.c.b16 %v875, %v874
      %v905 = vpack.c.b16 %v877, %v876
      %v906 = vpack.c.b16 %v879, %v878
      %v907 = vpack.c.b16 %v881, %v880
      %v908 = vpack.c.b16 %v883, %v882
      %v909 = vpack.c.b16 %v885, %v884
      %v910 = vpack.c.b16 %v887, %v886
      %v911 = vpack.c.b16 %v889, %v888
      %v912 = vpack.c.b16 %v891, %v890
      %v913 = vpack.c.b16 %v893, %v892
      %v914 = vpack.c.b16 %v895, %v894
      %v915 = vpack.c.b16 %v897, %v896
      %vm934 = vcmask 261120
      %v936 = vsel %vm934, %v668, 0
      %v939 = vsel %vm934, %v671, 0
      %v942 = vsel %vm934, %v674, 0
      %v945 = vsel %vm934, %v677, 0
      %v948 = vsel %vm934, %v680, 0
      %v951 = vsel %vm934, %v683, 0
      %v954 = vsel %vm934, %v686, 0
      %v957 = vsel %vm934, %v689, 0
      %v960 = vsel %vm934, %v692, 0
      %v963 = vsel %vm934, %v695, 0
      %v966 = vsel %vm934, %v698, 0
      %v969 = vsel %vm934, %v701, 0
      %v972 = vsel %vm934, %v704, 0
      %v975 = vsel %vm934, %v707, 0
      %v978 = vsel %vm934, %v710, 0
      %v981 = vsel %vm934, %v713, 0
      %v984 = vsel %vm934, %v716, 0
      %v987 = vsel %vm934, %v719, 0
      %v990 = vsel %vm934, %v722, 0
      %v993 = vsel %vm934, %v725, 0
      %v996 = vsel %vm934, %v728, 0
      %v999 = vsel %vm934, %v731, 0
      %v1002 = vsel %vm934, %v734, 0
      %v1005 = vsel %vm934, %v737, 0
      %v1008 = vsel %vm934, %v740, 0
      %v1011 = vsel %vm934, %v743, 0
      %v1014 = vsel %vm934, %v746, 0
      %v1017 = vsel %vm934, %v749, 0
      %v1020 = vsel %vm934, %v752, 0
      %v1023 = vsel %vm934, %v755, 0
      %v1026 = vsel %vm934, %v758, 0
      %v1029 = vsel %vm934, %v761, 0
      %1031 = vmatpush.bf16.msra.mxu0 %v905
      %1032 = vmatpush.bf16.msra.mxu0 %v904
      %1033 = vmatpush.bf16.msra.mxu0 %v903
      %1034 = vmatpush.bf16.msra.mxu0 %v902
      %1035 = vmatpush.bf16.msra.mxu0 %v901
      %1036 = vmatpush.bf16.msra.mxu0 %v900
      %1037 = vmatpush.bf16.msra.mxu0 %v899
      %1038 = vmatpush.bf16.msra.mxu0 %v898
      %1039 = vmatmul.bf16.gmra.mxu0 %v666
      %v1040 = vpop.f32.mrf.mxu0
      %v1041 = vadd.f32 %v344, %v1040
      %v1042 = vpop.f32.mrf.mxu0
      %v1043 = vadd.f32 %v344, %v1042
      %1044 = vmatmul.bf16.gmra.mxu0 %v669
      %v1045 = vpop.f32.mrf.mxu0
      %v1046 = vadd.f32 %v344, %v1045
      %v1047 = vpop.f32.mrf.mxu0
      %v1048 = vadd.f32 %v344, %v1047
      %1049 = vmatmul.bf16.gmra.mxu0 %v672
      %v1050 = vpop.f32.mrf.mxu0
      %v1051 = vadd.f32 %v344, %v1050
      %v1052 = vpop.f32.mrf.mxu0
      %v1053 = vadd.f32 %v344, %v1052
      %1054 = vmatmul.bf16.gmra.mxu0 %v675
      %v1055 = vpop.f32.mrf.mxu0
      %v1056 = vadd.f32 %v344, %v1055
      %v1057 = vpop.f32.mrf.mxu0
      %v1058 = vadd.f32 %v344, %v1057
      %1059 = vmatmul.bf16.gmra.mxu0 %v678
      %v1060 = vpop.f32.mrf.mxu0
      %v1061 = vadd.f32 %v344, %v1060
      %v1062 = vpop.f32.mrf.mxu0
      %v1063 = vadd.f32 %v344, %v1062
      %1064 = vmatmul.bf16.gmra.mxu0 %v681
      %v1065 = vpop.f32.mrf.mxu0
      %v1066 = vadd.f32 %v344, %v1065
      %v1067 = vpop.f32.mrf.mxu0
      %v1068 = vadd.f32 %v344, %v1067
      %1069 = vmatmul.bf16.gmra.mxu0 %v684
      %v1070 = vpop.f32.mrf.mxu0
      %v1071 = vadd.f32 %v344, %v1070
      %v1072 = vpop.f32.mrf.mxu0
      %v1073 = vadd.f32 %v344, %v1072
      %1074 = vmatmul.bf16.gmra.mxu0 %v687
      %v1075 = vpop.f32.mrf.mxu0
      %v1076 = vadd.f32 %v344, %v1075
      %v1077 = vpop.f32.mrf.mxu0
      %v1078 = vadd.f32 %v344, %v1077
      %1079 = vmatmul.bf16.gmra.mxu0 %v690
      %v1080 = vpop.f32.mrf.mxu0
      %v1081 = vadd.f32 %v344, %v1080
      %v1082 = vpop.f32.mrf.mxu0
      %v1083 = vadd.f32 %v344, %v1082
      %1084 = vmatmul.bf16.gmra.mxu0 %v693
      %v1085 = vpop.f32.mrf.mxu0
      %v1086 = vadd.f32 %v344, %v1085
      %v1087 = vpop.f32.mrf.mxu0
      %v1088 = vadd.f32 %v344, %v1087
      %1089 = vmatmul.bf16.gmra.mxu0 %v696
      %v1090 = vpop.f32.mrf.mxu0
      %v1091 = vadd.f32 %v344, %v1090
      %v1092 = vpop.f32.mrf.mxu0
      %v1093 = vadd.f32 %v344, %v1092
      %1094 = vmatmul.bf16.gmra.mxu0 %v699
      %v1095 = vpop.f32.mrf.mxu0
      %v1096 = vadd.f32 %v344, %v1095
      %v1097 = vpop.f32.mrf.mxu0
      %v1098 = vadd.f32 %v344, %v1097
      %1099 = vmatmul.bf16.gmra.mxu0 %v702
      %v1100 = vpop.f32.mrf.mxu0
      %v1101 = vadd.f32 %v344, %v1100
      %v1102 = vpop.f32.mrf.mxu0
      %v1103 = vadd.f32 %v344, %v1102
      %1104 = vmatmul.bf16.gmra.mxu0 %v705
      %v1105 = vpop.f32.mrf.mxu0
      %v1106 = vadd.f32 %v344, %v1105
      %v1107 = vpop.f32.mrf.mxu0
      %v1108 = vadd.f32 %v344, %v1107
      %1109 = vmatmul.bf16.gmra.mxu0 %v708
      %v1110 = vpop.f32.mrf.mxu0
      %v1111 = vadd.f32 %v344, %v1110
      %v1112 = vpop.f32.mrf.mxu0
      %v1113 = vadd.f32 %v344, %v1112
      %1114 = vmatmul.bf16.gmra.mxu0 %v711
      %v1115 = vpop.f32.mrf.mxu0
      %v1116 = vadd.f32 %v344, %v1115
      %v1117 = vpop.f32.mrf.mxu0
      %v1118 = vadd.f32 %v344, %v1117
      %1119 = vmatmul.bf16.gmra.mxu0 %v714
      %v1120 = vpop.f32.mrf.mxu0
      %v1121 = vadd.f32 %v344, %v1120
      %v1122 = vpop.f32.mrf.mxu0
      %v1123 = vadd.f32 %v344, %v1122
      %1124 = vmatmul.bf16.gmra.mxu0 %v717
      %v1125 = vpop.f32.mrf.mxu0
      %v1126 = vadd.f32 %v344, %v1125
      %v1127 = vpop.f32.mrf.mxu0
      %v1128 = vadd.f32 %v344, %v1127
      %1129 = vmatmul.bf16.gmra.mxu0 %v720
      %v1130 = vpop.f32.mrf.mxu0
      %v1131 = vadd.f32 %v344, %v1130
      %v1132 = vpop.f32.mrf.mxu0
      %v1133 = vadd.f32 %v344, %v1132
      %1134 = vmatmul.bf16.gmra.mxu0 %v723
      %v1135 = vpop.f32.mrf.mxu0
      %v1136 = vadd.f32 %v344, %v1135
      %v1137 = vpop.f32.mrf.mxu0
      %v1138 = vadd.f32 %v344, %v1137
      %1139 = vmatmul.bf16.gmra.mxu0 %v726
      %v1140 = vpop.f32.mrf.mxu0
      %v1141 = vadd.f32 %v344, %v1140
      %v1142 = vpop.f32.mrf.mxu0
      %v1143 = vadd.f32 %v344, %v1142
      %1144 = vmatmul.bf16.gmra.mxu0 %v729
      %v1145 = vpop.f32.mrf.mxu0
      %v1146 = vadd.f32 %v344, %v1145
      %v1147 = vpop.f32.mrf.mxu0
      %v1148 = vadd.f32 %v344, %v1147
      %1149 = vmatmul.bf16.gmra.mxu0 %v732
      %v1150 = vpop.f32.mrf.mxu0
      %v1151 = vadd.f32 %v344, %v1150
      %v1152 = vpop.f32.mrf.mxu0
      %v1153 = vadd.f32 %v344, %v1152
      %1154 = vmatmul.bf16.gmra.mxu0 %v735
      %v1155 = vpop.f32.mrf.mxu0
      %v1156 = vadd.f32 %v344, %v1155
      %v1157 = vpop.f32.mrf.mxu0
      %v1158 = vadd.f32 %v344, %v1157
      %1159 = vmatmul.bf16.gmra.mxu0 %v738
      %v1160 = vpop.f32.mrf.mxu0
      %v1161 = vadd.f32 %v344, %v1160
      %v1162 = vpop.f32.mrf.mxu0
      %v1163 = vadd.f32 %v344, %v1162
      %1164 = vmatmul.bf16.gmra.mxu0 %v741
      %v1165 = vpop.f32.mrf.mxu0
      %v1166 = vadd.f32 %v344, %v1165
      %v1167 = vpop.f32.mrf.mxu0
      %v1168 = vadd.f32 %v344, %v1167
      %1169 = vmatmul.bf16.gmra.mxu0 %v744
      %v1170 = vpop.f32.mrf.mxu0
      %v1171 = vadd.f32 %v344, %v1170
      %v1172 = vpop.f32.mrf.mxu0
      %v1173 = vadd.f32 %v344, %v1172
      %1174 = vmatmul.bf16.gmra.mxu0 %v747
      %v1175 = vpop.f32.mrf.mxu0
      %v1176 = vadd.f32 %v344, %v1175
      %v1177 = vpop.f32.mrf.mxu0
      %v1178 = vadd.f32 %v344, %v1177
      %1179 = vmatmul.bf16.gmra.mxu0 %v750
      %v1180 = vpop.f32.mrf.mxu0
      %v1181 = vadd.f32 %v344, %v1180
      %v1182 = vpop.f32.mrf.mxu0
      %v1183 = vadd.f32 %v344, %v1182
      %1184 = vmatmul.bf16.gmra.mxu0 %v753
      %v1185 = vpop.f32.mrf.mxu0
      %v1186 = vadd.f32 %v344, %v1185
      %v1187 = vpop.f32.mrf.mxu0
      %v1188 = vadd.f32 %v344, %v1187
      %1189 = vmatmul.bf16.gmra.mxu0 %v756
      %v1190 = vpop.f32.mrf.mxu0
      %v1191 = vadd.f32 %v344, %v1190
      %v1192 = vpop.f32.mrf.mxu0
      %v1193 = vadd.f32 %v344, %v1192
      %1194 = vmatmul.bf16.gmra.mxu0 %v759
      %v1195 = vpop.f32.mrf.mxu0
      %v1196 = vadd.f32 %v344, %v1195
      %v1197 = vpop.f32.mrf.mxu0
      %v1198 = vadd.f32 %v344, %v1197
      %1199 = vdwg.mxu0
      %1200 = vmatpush.bf16.msra.mxu0 %v913
      %1201 = vmatpush.bf16.msra.mxu0 %v912
      %1202 = vmatpush.bf16.msra.mxu0 %v911
      %1203 = vmatpush.bf16.msra.mxu0 %v910
      %1204 = vmatpush.bf16.msra.mxu0 %v909
      %1205 = vmatpush.bf16.msra.mxu0 %v908
      %1206 = vmatpush.bf16.msra.mxu0 %v907
      %1207 = vmatpush.bf16.msra.mxu0 %v906
      %1208 = vmatmul.bf16.gmra.mxu0 %v667
      %v1209 = vpop.f32.mrf.mxu0
      %v1210 = vadd.f32 %v1041, %v1209
      %v1211 = vpop.f32.mrf.mxu0
      %v1212 = vadd.f32 %v1043, %v1211
      %1213 = vmatmul.bf16.gmra.mxu0 %v670
      %v1214 = vpop.f32.mrf.mxu0
      %v1215 = vadd.f32 %v1046, %v1214
      %v1216 = vpop.f32.mrf.mxu0
      %v1217 = vadd.f32 %v1048, %v1216
      %1218 = vmatmul.bf16.gmra.mxu0 %v673
      %v1219 = vpop.f32.mrf.mxu0
      %v1220 = vadd.f32 %v1051, %v1219
      %v1221 = vpop.f32.mrf.mxu0
      %v1222 = vadd.f32 %v1053, %v1221
      %1223 = vmatmul.bf16.gmra.mxu0 %v676
      %v1224 = vpop.f32.mrf.mxu0
      %v1225 = vadd.f32 %v1056, %v1224
      %v1226 = vpop.f32.mrf.mxu0
      %v1227 = vadd.f32 %v1058, %v1226
      %1228 = vmatmul.bf16.gmra.mxu0 %v679
      %v1229 = vpop.f32.mrf.mxu0
      %v1230 = vadd.f32 %v1061, %v1229
      %v1231 = vpop.f32.mrf.mxu0
      %v1232 = vadd.f32 %v1063, %v1231
      %1233 = vmatmul.bf16.gmra.mxu0 %v682
      %v1234 = vpop.f32.mrf.mxu0
      %v1235 = vadd.f32 %v1066, %v1234
      %v1236 = vpop.f32.mrf.mxu0
      %v1237 = vadd.f32 %v1068, %v1236
      %1238 = vmatmul.bf16.gmra.mxu0 %v685
      %v1239 = vpop.f32.mrf.mxu0
      %v1240 = vadd.f32 %v1071, %v1239
      %v1241 = vpop.f32.mrf.mxu0
      %v1242 = vadd.f32 %v1073, %v1241
      %1243 = vmatmul.bf16.gmra.mxu0 %v688
      %v1244 = vpop.f32.mrf.mxu0
      %v1245 = vadd.f32 %v1076, %v1244
      %v1246 = vpop.f32.mrf.mxu0
      %v1247 = vadd.f32 %v1078, %v1246
      %1248 = vmatmul.bf16.gmra.mxu0 %v691
      %v1249 = vpop.f32.mrf.mxu0
      %v1250 = vadd.f32 %v1081, %v1249
      %v1251 = vpop.f32.mrf.mxu0
      %v1252 = vadd.f32 %v1083, %v1251
      %1253 = vmatmul.bf16.gmra.mxu0 %v694
      %v1254 = vpop.f32.mrf.mxu0
      %v1255 = vadd.f32 %v1086, %v1254
      %v1256 = vpop.f32.mrf.mxu0
      %v1257 = vadd.f32 %v1088, %v1256
      %1258 = vmatmul.bf16.gmra.mxu0 %v697
      %v1259 = vpop.f32.mrf.mxu0
      %v1260 = vadd.f32 %v1091, %v1259
      %v1261 = vpop.f32.mrf.mxu0
      %v1262 = vadd.f32 %v1093, %v1261
      %1263 = vmatmul.bf16.gmra.mxu0 %v700
      %v1264 = vpop.f32.mrf.mxu0
      %v1265 = vadd.f32 %v1096, %v1264
      %v1266 = vpop.f32.mrf.mxu0
      %v1267 = vadd.f32 %v1098, %v1266
      %1268 = vmatmul.bf16.gmra.mxu0 %v703
      %v1269 = vpop.f32.mrf.mxu0
      %v1270 = vadd.f32 %v1101, %v1269
      %v1271 = vpop.f32.mrf.mxu0
      %v1272 = vadd.f32 %v1103, %v1271
      %1273 = vmatmul.bf16.gmra.mxu0 %v706
      %v1274 = vpop.f32.mrf.mxu0
      %v1275 = vadd.f32 %v1106, %v1274
      %v1276 = vpop.f32.mrf.mxu0
      %v1277 = vadd.f32 %v1108, %v1276
      %1278 = vmatmul.bf16.gmra.mxu0 %v709
      %v1279 = vpop.f32.mrf.mxu0
      %v1280 = vadd.f32 %v1111, %v1279
      %v1281 = vpop.f32.mrf.mxu0
      %v1282 = vadd.f32 %v1113, %v1281
      %1283 = vmatmul.bf16.gmra.mxu0 %v712
      %v1284 = vpop.f32.mrf.mxu0
      %v1285 = vadd.f32 %v1116, %v1284
      %v1286 = vpop.f32.mrf.mxu0
      %v1287 = vadd.f32 %v1118, %v1286
      %1288 = vmatmul.bf16.gmra.mxu0 %v715
      %v1289 = vpop.f32.mrf.mxu0
      %v1290 = vadd.f32 %v1121, %v1289
      %v1291 = vpop.f32.mrf.mxu0
      %v1292 = vadd.f32 %v1123, %v1291
      %1293 = vmatmul.bf16.gmra.mxu0 %v718
      %v1294 = vpop.f32.mrf.mxu0
      %v1295 = vadd.f32 %v1126, %v1294
      %v1296 = vpop.f32.mrf.mxu0
      %v1297 = vadd.f32 %v1128, %v1296
      %1298 = vmatmul.bf16.gmra.mxu0 %v721
      %v1299 = vpop.f32.mrf.mxu0
      %v1300 = vadd.f32 %v1131, %v1299
      %v1301 = vpop.f32.mrf.mxu0
      %v1302 = vadd.f32 %v1133, %v1301
      %1303 = vmatmul.bf16.gmra.mxu0 %v724
      %v1304 = vpop.f32.mrf.mxu0
      %v1305 = vadd.f32 %v1136, %v1304
      %v1306 = vpop.f32.mrf.mxu0
      %v1307 = vadd.f32 %v1138, %v1306
      %1308 = vmatmul.bf16.gmra.mxu0 %v727
      %v1309 = vpop.f32.mrf.mxu0
      %v1310 = vadd.f32 %v1141, %v1309
      %v1311 = vpop.f32.mrf.mxu0
      %v1312 = vadd.f32 %v1143, %v1311
      %1313 = vmatmul.bf16.gmra.mxu0 %v730
      %v1314 = vpop.f32.mrf.mxu0
      %v1315 = vadd.f32 %v1146, %v1314
      %v1316 = vpop.f32.mrf.mxu0
      %v1317 = vadd.f32 %v1148, %v1316
      %1318 = vmatmul.bf16.gmra.mxu0 %v733
      %v1319 = vpop.f32.mrf.mxu0
      %v1320 = vadd.f32 %v1151, %v1319
      %v1321 = vpop.f32.mrf.mxu0
      %v1322 = vadd.f32 %v1153, %v1321
      %1323 = vmatmul.bf16.gmra.mxu0 %v736
      %v1324 = vpop.f32.mrf.mxu0
      %v1325 = vadd.f32 %v1156, %v1324
      %v1326 = vpop.f32.mrf.mxu0
      %v1327 = vadd.f32 %v1158, %v1326
      %1328 = vmatmul.bf16.gmra.mxu0 %v739
      %v1329 = vpop.f32.mrf.mxu0
      %v1330 = vadd.f32 %v1161, %v1329
      %v1331 = vpop.f32.mrf.mxu0
      %v1332 = vadd.f32 %v1163, %v1331
      %1333 = vmatmul.bf16.gmra.mxu0 %v742
      %v1334 = vpop.f32.mrf.mxu0
      %v1335 = vadd.f32 %v1166, %v1334
      %v1336 = vpop.f32.mrf.mxu0
      %v1337 = vadd.f32 %v1168, %v1336
      %1338 = vmatmul.bf16.gmra.mxu0 %v745
      %v1339 = vpop.f32.mrf.mxu0
      %v1340 = vadd.f32 %v1171, %v1339
      %v1341 = vpop.f32.mrf.mxu0
      %v1342 = vadd.f32 %v1173, %v1341
      %1343 = vmatmul.bf16.gmra.mxu0 %v748
      %v1344 = vpop.f32.mrf.mxu0
      %v1345 = vadd.f32 %v1176, %v1344
      %v1346 = vpop.f32.mrf.mxu0
      %v1347 = vadd.f32 %v1178, %v1346
      %1348 = vmatmul.bf16.gmra.mxu0 %v751
      %v1349 = vpop.f32.mrf.mxu0
      %v1350 = vadd.f32 %v1181, %v1349
      %v1351 = vpop.f32.mrf.mxu0
      %v1352 = vadd.f32 %v1183, %v1351
      %1353 = vmatmul.bf16.gmra.mxu0 %v754
      %v1354 = vpop.f32.mrf.mxu0
      %v1355 = vadd.f32 %v1186, %v1354
      %v1356 = vpop.f32.mrf.mxu0
      %v1357 = vadd.f32 %v1188, %v1356
      %1358 = vmatmul.bf16.gmra.mxu0 %v757
      %v1359 = vpop.f32.mrf.mxu0
      %v1360 = vadd.f32 %v1191, %v1359
      %v1361 = vpop.f32.mrf.mxu0
      %v1362 = vadd.f32 %v1193, %v1361
      %1363 = vmatmul.bf16.gmra.mxu0 %v760
      %v1364 = vpop.f32.mrf.mxu0
      %v1365 = vadd.f32 %v1196, %v1364
      %v1366 = vpop.f32.mrf.mxu0
      %v1367 = vadd.f32 %v1198, %v1366
      %1368 = vdwg.mxu0
      %1369 = vmatpush.bf16.msra.mxu0 0
      %1370 = vmatpush.bf16.msra.mxu0 0
      %1371 = vmatpush.bf16.msra.mxu0 0
      %1372 = vmatpush.bf16.msra.mxu0 0
      %1373 = vmatpush.bf16.msra.mxu0 0
      %1374 = vmatpush.bf16.msra.mxu0 0
      %1375 = vmatpush.bf16.msra.mxu0 %v915
      %1376 = vmatpush.bf16.msra.mxu0 %v914
      %1377 = vmatmul.bf16.gmra.mxu0 %v936
      %v1378 = vpop.f32.mrf.mxu0
      %v1379 = vadd.f32 %v1210, %v1378
      %v1380 = vpop.f32.mrf.mxu0
      %v1381 = vadd.f32 %v1212, %v1380
      %1382 = vmatmul.bf16.gmra.mxu0 %v939
      %v1383 = vpop.f32.mrf.mxu0
      %v1384 = vadd.f32 %v1215, %v1383
      %v1385 = vpop.f32.mrf.mxu0
      %v1386 = vadd.f32 %v1217, %v1385
      %1387 = vmatmul.bf16.gmra.mxu0 %v942
      %v1388 = vpop.f32.mrf.mxu0
      %v1389 = vadd.f32 %v1220, %v1388
      %v1390 = vpop.f32.mrf.mxu0
      %v1391 = vadd.f32 %v1222, %v1390
      %1392 = vmatmul.bf16.gmra.mxu0 %v945
      %v1393 = vpop.f32.mrf.mxu0
      %v1394 = vadd.f32 %v1225, %v1393
      %v1395 = vpop.f32.mrf.mxu0
      %v1396 = vadd.f32 %v1227, %v1395
      %1397 = vmatmul.bf16.gmra.mxu0 %v948
      %v1398 = vpop.f32.mrf.mxu0
      %v1399 = vadd.f32 %v1230, %v1398
      %v1400 = vpop.f32.mrf.mxu0
      %v1401 = vadd.f32 %v1232, %v1400
      %1402 = vmatmul.bf16.gmra.mxu0 %v951
      %v1403 = vpop.f32.mrf.mxu0
      %v1404 = vadd.f32 %v1235, %v1403
      %v1405 = vpop.f32.mrf.mxu0
      %v1406 = vadd.f32 %v1237, %v1405
      %1407 = vmatmul.bf16.gmra.mxu0 %v954
      %v1408 = vpop.f32.mrf.mxu0
      %v1409 = vadd.f32 %v1240, %v1408
      %v1410 = vpop.f32.mrf.mxu0
      %v1411 = vadd.f32 %v1242, %v1410
      %1412 = vmatmul.bf16.gmra.mxu0 %v957
      %v1413 = vpop.f32.mrf.mxu0
      %v1414 = vadd.f32 %v1245, %v1413
      %v1415 = vpop.f32.mrf.mxu0
      %v1416 = vadd.f32 %v1247, %v1415
      %1417 = vmatmul.bf16.gmra.mxu0 %v960
      %v1418 = vpop.f32.mrf.mxu0
      %v1419 = vadd.f32 %v1250, %v1418
      %v1420 = vpop.f32.mrf.mxu0
      %v1421 = vadd.f32 %v1252, %v1420
      %1422 = vmatmul.bf16.gmra.mxu0 %v963
      %v1423 = vpop.f32.mrf.mxu0
      %v1424 = vadd.f32 %v1255, %v1423
      %v1425 = vpop.f32.mrf.mxu0
      %v1426 = vadd.f32 %v1257, %v1425
      %1427 = vmatmul.bf16.gmra.mxu0 %v966
      %v1428 = vpop.f32.mrf.mxu0
      %v1429 = vadd.f32 %v1260, %v1428
      %v1430 = vpop.f32.mrf.mxu0
      %v1431 = vadd.f32 %v1262, %v1430
      %1432 = vmatmul.bf16.gmra.mxu0 %v969
      %v1433 = vpop.f32.mrf.mxu0
      %v1434 = vadd.f32 %v1265, %v1433
      %v1435 = vpop.f32.mrf.mxu0
      %v1436 = vadd.f32 %v1267, %v1435
      %1437 = vmatmul.bf16.gmra.mxu0 %v972
      %v1438 = vpop.f32.mrf.mxu0
      %v1439 = vadd.f32 %v1270, %v1438
      %v1440 = vpop.f32.mrf.mxu0
      %v1441 = vadd.f32 %v1272, %v1440
      %1442 = vmatmul.bf16.gmra.mxu0 %v975
      %v1443 = vpop.f32.mrf.mxu0
      %v1444 = vadd.f32 %v1275, %v1443
      %v1445 = vpop.f32.mrf.mxu0
      %v1446 = vadd.f32 %v1277, %v1445
      %1447 = vmatmul.bf16.gmra.mxu0 %v978
      %v1448 = vpop.f32.mrf.mxu0
      %v1449 = vadd.f32 %v1280, %v1448
      %v1450 = vpop.f32.mrf.mxu0
      %v1451 = vadd.f32 %v1282, %v1450
      %1452 = vmatmul.bf16.gmra.mxu0 %v981
      %v1453 = vpop.f32.mrf.mxu0
      %v1454 = vadd.f32 %v1285, %v1453
      %v1455 = vpop.f32.mrf.mxu0
      %v1456 = vadd.f32 %v1287, %v1455
      %1457 = vmatmul.bf16.gmra.mxu0 %v984
      %v1458 = vpop.f32.mrf.mxu0
      %v1459 = vadd.f32 %v1290, %v1458
      %v1460 = vpop.f32.mrf.mxu0
      %v1461 = vadd.f32 %v1292, %v1460
      %1462 = vmatmul.bf16.gmra.mxu0 %v987
      %v1463 = vpop.f32.mrf.mxu0
      %v1464 = vadd.f32 %v1295, %v1463
      %v1465 = vpop.f32.mrf.mxu0
      %v1466 = vadd.f32 %v1297, %v1465
      %1467 = vmatmul.bf16.gmra.mxu0 %v990
      %v1468 = vpop.f32.mrf.mxu0
      %v1469 = vadd.f32 %v1300, %v1468
      %v1470 = vpop.f32.mrf.mxu0
      %v1471 = vadd.f32 %v1302, %v1470
      %1472 = vmatmul.bf16.gmra.mxu0 %v993
      %v1473 = vpop.f32.mrf.mxu0
      %v1474 = vadd.f32 %v1305, %v1473
      %v1475 = vpop.f32.mrf.mxu0
      %v1476 = vadd.f32 %v1307, %v1475
      %1477 = vmatmul.bf16.gmra.mxu0 %v996
      %v1478 = vpop.f32.mrf.mxu0
      %v1479 = vadd.f32 %v1310, %v1478
      %v1480 = vpop.f32.mrf.mxu0
      %v1481 = vadd.f32 %v1312, %v1480
      %1482 = vmatmul.bf16.gmra.mxu0 %v999
      %v1483 = vpop.f32.mrf.mxu0
      %v1484 = vadd.f32 %v1315, %v1483
      %v1485 = vpop.f32.mrf.mxu0
      %v1486 = vadd.f32 %v1317, %v1485
      %1487 = vmatmul.bf16.gmra.mxu0 %v1002
      %v1488 = vpop.f32.mrf.mxu0
      %v1489 = vadd.f32 %v1320, %v1488
      %v1490 = vpop.f32.mrf.mxu0
      %v1491 = vadd.f32 %v1322, %v1490
      %1492 = vmatmul.bf16.gmra.mxu0 %v1005
      %v1493 = vpop.f32.mrf.mxu0
      %v1494 = vadd.f32 %v1325, %v1493
      %v1495 = vpop.f32.mrf.mxu0
      %v1496 = vadd.f32 %v1327, %v1495
      %1497 = vmatmul.bf16.gmra.mxu0 %v1008
      %v1498 = vpop.f32.mrf.mxu0
      %v1499 = vadd.f32 %v1330, %v1498
      %v1500 = vpop.f32.mrf.mxu0
      %v1501 = vadd.f32 %v1332, %v1500
      %1502 = vmatmul.bf16.gmra.mxu0 %v1011
      %v1503 = vpop.f32.mrf.mxu0
      %v1504 = vadd.f32 %v1335, %v1503
      %v1505 = vpop.f32.mrf.mxu0
      %v1506 = vadd.f32 %v1337, %v1505
      %1507 = vmatmul.bf16.gmra.mxu0 %v1014
      %v1508 = vpop.f32.mrf.mxu0
      %v1509 = vadd.f32 %v1340, %v1508
      %v1510 = vpop.f32.mrf.mxu0
      %v1511 = vadd.f32 %v1342, %v1510
      %1512 = vmatmul.bf16.gmra.mxu0 %v1017
      %v1513 = vpop.f32.mrf.mxu0
      %v1514 = vadd.f32 %v1345, %v1513
      %v1515 = vpop.f32.mrf.mxu0
      %v1516 = vadd.f32 %v1347, %v1515
      %1517 = vmatmul.bf16.gmra.mxu0 %v1020
      %v1518 = vpop.f32.mrf.mxu0
      %v1519 = vadd.f32 %v1350, %v1518
      %v1520 = vpop.f32.mrf.mxu0
      %v1521 = vadd.f32 %v1352, %v1520
      %1522 = vmatmul.bf16.gmra.mxu0 %v1023
      %v1523 = vpop.f32.mrf.mxu0
      %v1524 = vadd.f32 %v1355, %v1523
      %v1525 = vpop.f32.mrf.mxu0
      %v1526 = vadd.f32 %v1357, %v1525
      %1527 = vmatmul.bf16.gmra.mxu0 %v1026
      %v1528 = vpop.f32.mrf.mxu0
      %v1529 = vadd.f32 %v1360, %v1528
      %v1530 = vpop.f32.mrf.mxu0
      %v1531 = vadd.f32 %v1362, %v1530
      %1532 = vmatmul.bf16.gmra.mxu0 %v1029
      %v1533 = vpop.f32.mrf.mxu0
      %v1534 = vadd.f32 %v1365, %v1533
      %v1535 = vpop.f32.mrf.mxu0
      %v1536 = vadd.f32 %v1367, %v1535
      %1537 = vdwg.mxu0
      %1538 = vst [vmem:[%s175] sm:$0xff] %v1379
      %1539 = vst [vmem:[%s175 + $0x8] sm:$0xff] %v1381
      %1540 = vst [vmem:[%s175 + $0x10] sm:$0xff] %v1384
      %1541 = vst [vmem:[%s175 + $0x18] sm:$0xff] %v1386
      %1542 = vst [vmem:[%s175 + $0x20] sm:$0xff] %v1389
      %1543 = vst [vmem:[%s175 + $0x28] sm:$0xff] %v1391
      %1544 = vst [vmem:[%s175 + $0x30] sm:$0xff] %v1394
      %1545 = vst [vmem:[%s175 + $0x38] sm:$0xff] %v1396
      %1546 = vst [vmem:[%s175 + $0x40] sm:$0xff] %v1399
      %1547 = vst [vmem:[%s175 + $0x48] sm:$0xff] %v1401
      %1548 = vst [vmem:[%s175 + $0x50] sm:$0xff] %v1404
      %1549 = vst [vmem:[%s175 + $0x58] sm:$0xff] %v1406
      %1550 = vst [vmem:[%s175 + $0x60] sm:$0xff] %v1409
      %1551 = vst [vmem:[%s175 + $0x68] sm:$0xff] %v1411
      %1552 = vst [vmem:[%s175 + $0x70] sm:$0xff] %v1414
      %1553 = vst [vmem:[%s175 + $0x78] sm:$0xff] %v1416
      %1554 = vst [vmem:[%s175 + $0x80] sm:$0xff] %v1419
      %1555 = vst [vmem:[%s175 + $0x88] sm:$0xff] %v1421
      %1556 = vst [vmem:[%s175 + $0x90] sm:$0xff] %v1424
      %1557 = vst [vmem:[%s175 + $0x98] sm:$0xff] %v1426
      %1558 = vst [vmem:[%s175 + $0xa0] sm:$0xff] %v1429
      %1559 = vst [vmem:[%s175 + $0xa8] sm:$0xff] %v1431
      %1560 = vst [vmem:[%s175 + $0xb0] sm:$0xff] %v1434
      %1561 = vst [vmem:[%s175 + $0xb8] sm:$0xff] %v1436
      %1562 = vst [vmem:[%s175 + $0xc0] sm:$0xff] %v1439
      %1563 = vst [vmem:[%s175 + $0xc8] sm:$0xff] %v1441
      %1564 = vst [vmem:[%s175 + $0xd0] sm:$0xff] %v1444
      %1565 = vst [vmem:[%s175 + $0xd8] sm:$0xff] %v1446
      %1566 = vst [vmem:[%s175 + $0xe0] sm:$0xff] %v1449
      %1567 = vst [vmem:[%s175 + $0xe8] sm:$0xff] %v1451
      %1568 = vst [vmem:[%s175 + $0xf0] sm:$0xff] %v1454
      %1569 = vst [vmem:[%s175 + $0xf8] sm:$0xff] %v1456
      %1570 = vst [vmem:[%s175 + $0x100] sm:$0xff] %v1459
      %1571 = vst [vmem:[%s175 + $0x108] sm:$0xff] %v1461
      %1572 = vst [vmem:[%s175 + $0x110] sm:$0xff] %v1464
      %1573 = vst [vmem:[%s175 + $0x118] sm:$0xff] %v1466
      %1574 = vst [vmem:[%s175 + $0x120] sm:$0xff] %v1469
      %1575 = vst [vmem:[%s175 + $0x128] sm:$0xff] %v1471
      %1576 = vst [vmem:[%s175 + $0x130] sm:$0xff] %v1474
      %1577 = vst [vmem:[%s175 + $0x138] sm:$0xff] %v1476
      %1578 = vst [vmem:[%s175 + $0x140] sm:$0xff] %v1479
      %1579 = vst [vmem:[%s175 + $0x148] sm:$0xff] %v1481
      %1580 = vst [vmem:[%s175 + $0x150] sm:$0xff] %v1484
      %1581 = vst [vmem:[%s175 + $0x158] sm:$0xff] %v1486
      %1582 = vst [vmem:[%s175 + $0x160] sm:$0xff] %v1489
      %1583 = vst [vmem:[%s175 + $0x168] sm:$0xff] %v1491
      %1584 = vst [vmem:[%s175 + $0x170] sm:$0xff] %v1494
      %1585 = vst [vmem:[%s175 + $0x178] sm:$0xff] %v1496
      %1586 = vst [vmem:[%s175 + $0x180] sm:$0xff] %v1499
      %1587 = vst [vmem:[%s175 + $0x188] sm:$0xff] %v1501
      %1588 = vst [vmem:[%s175 + $0x190] sm:$0xff] %v1504
      %1589 = vst [vmem:[%s175 + $0x198] sm:$0xff] %v1506
      %1590 = vst [vmem:[%s175 + $0x1a0] sm:$0xff] %v1509
      %1591 = vst [vmem:[%s175 + $0x1a8] sm:$0xff] %v1511
      %1592 = vst [vmem:[%s175 + $0x1b0] sm:$0xff] %v1514
      %1593 = vst [vmem:[%s175 + $0x1b8] sm:$0xff] %v1516
      %1594 = vst [vmem:[%s175 + $0x1c0] sm:$0xff] %v1519
      %1595 = vst [vmem:[%s175 + $0x1c8] sm:$0xff] %v1521
      %1596 = vst [vmem:[%s175 + $0x1d0] sm:$0xff] %v1524
      %1597 = vst [vmem:[%s175 + $0x1d8] sm:$0xff] %v1526
      %1598 = vst [vmem:[%s175 + $0x1e0] sm:$0xff] %v1529
      %1599 = vst [vmem:[%s175 + $0x1e8] sm:$0xff] %v1531
      %1600 = vst [vmem:[%s175 + $0x1f0] sm:$0xff] %v1534
      %1601 = vst [vmem:[%s175 + $0x1f8] sm:$0xff] %v1536
      %s1602 = smul.u32 64, %s14
      %p1603 = scmp.lt.s32.totalorder %s1602, 1023
      %s1604 = scalar_select %p1603, %s1602, 1023
      %s1605 = smul.addr %s1604, 8
      %s1606 = scalar_lea.vmem %s3, %s1605
      // Predicated region
      $region33: #{farnet_forward.23} parent=31 // pred_check
        %p1607 = pneg %p100
      $region34: #{farnet_forward.23} parent=31 // pred_check_branch
        %1609 = sbr.rel (%p1607) target = $region36
      $region35: #{farnet_forward.23} parent=31 // pred_region
        %s1610 = smul.u32 64, %s14
      $region36: #{farnet_forward.23} parent=31 // pred_fallthru
        _
    $region32: #{farnet_forward.23} parent=5 // pred_fallthru
      _
    %p1611 = scmp.le.s32.totalorder 2, %s9
    // Predicated region
    $region37: #{farnet_forward.23} parent=5 // pred_check
      %p1612 = pneg %p1611
    $region38: #{farnet_forward.23} parent=5 // pred_check_branch
      %1614 = sbr.rel (%p1612) target = $region40
    $region39: #{farnet_forward.23} parent=5 // pred_region
      %s1615 = ssub.s32 %s9, 2
      // Predicated region
      $region41: #{farnet_forward.23} parent=39 // pred_check
        %p1616 = pneg %p106
      $region42: #{farnet_forward.23} parent=39 // pred_check_branch
        %1618 = sbr.rel (%p1616) target = $region44
      $region43: #{farnet_forward.23} parent=39 // pred_region
        %s1619 = smul.u32 64, %s15
        %p1620 = scmp.lt.s32.totalorder %s1619, 1023
        %s1621 = scalar_select %p1620, %s1619, 1023
        %s1622 = smul.addr %s1621, 8
        %s1623 = scalar_lea.vmem %s3, %s1622
      $region44: #{farnet_forward.23} parent=39 // pred_fallthru
        _
    $region40: #{farnet_forward.23} parent=5 // pred_fallthru
      _
  $region6: #{farnet_forward.23} parent=0 // loop_footer
    %s13 = sadd.s32 1, %s9
  $region7: #{farnet_forward.23} parent=0 // loop_footer_branch
    %8 = sbr.rel target = $region3
  $region8: #{farnet_forward.23} parent=0 // loop_exit
    _

</llo_original>
